<compile_context>
chip_gen: v7x
topology: tpu7x:2x2x1
jax: 0.10.0
libtpu: 0.0.40
codegen_flags: <defaults>
</compile_context>

<pallas_src>
import functools

import jax
import jax.numpy as jnp
from jax import lax
from jax.experimental import pallas as pl
from jax.experimental.pallas import tpu as pltpu


# ---------------------------------------------------------------------------
# Bilinear interpolation matrix (PyTorch align_corners=False, half-pixel)
# ---------------------------------------------------------------------------
def _resize_matrix(in_size, out_size):
    scale = in_size / out_size
    src = jnp.maximum((jnp.arange(out_size, dtype=jnp.float32) + 0.5) * scale - 0.5, 0.0)
    i0 = jnp.minimum(jnp.floor(src).astype(jnp.int32), in_size - 1)
    i1 = jnp.minimum(i0 + 1, in_size - 1)
    w1 = src - i0.astype(jnp.float32)
    w0 = 1.0 - w1
    m = (jax.nn.one_hot(i0, in_size, dtype=jnp.float32) * w0[:, None]
         + jax.nn.one_hot(i1, in_size, dtype=jnp.float32) * w1[:, None])
    return m  # (out_size, in_size)


# ---------------------------------------------------------------------------
# In-kernel helpers (traced / unrolled, all ops on VMEM-resident values)
# ---------------------------------------------------------------------------
def _se(xm, w1_ref, w2_ref):
    # xm: (H*W, C).  SEBlock: global-avg-pool -> fc1 -> relu -> fc2 -> sigmoid -> scale
    y = jnp.mean(xm, axis=0, keepdims=True)                                    # (1, C)
    h = jnp.maximum(jnp.dot(y, w1_ref[...], preferred_element_type=jnp.float32), 0.0)
    s = jax.nn.sigmoid(jnp.dot(h, w2_ref[...], preferred_element_type=jnp.float32))
    return xm * s                                                              # (H*W, C)


def _im2col_3x3(src_img, pad_ref, col_ref):
    # src_img: (H, W, Cin) value; pad_ref: (H+2, W+2, Cin); col_ref: (H*W, 9*Cin)
    H, W, Cin = src_img.shape
    pad_ref[...] = jnp.zeros_like(pad_ref)
    pad_ref[1:1 + H, 1:1 + W, :] = src_img
    k = 0
    for dy in range(3):
        for dx in range(3):
            col_ref[:, k * Cin:(k + 1) * Cin] = (
                pad_ref[dy:dy + H, dx:dx + W, :].reshape(H * W, Cin))
            k += 1


# ---------------------------------------------------------------------------
# Fused per-batch kernel
# ---------------------------------------------------------------------------
def _vision_kernel(x_ref, caw1_ref, caw2_ref, saw1_ref, saw2_ref, sacw_ref,
                   w1_ref, b1_ref, w2_ref, b2_ref, w3t_ref, b3_ref, ktr_ref,
                   o_ref,
                   pad7_ref, padc1_ref, padc2_ref, padc3_ref,
                   col1_ref, col2_ref, col3_ref, *, H, W):
    f32 = jnp.float32
    C = x_ref.shape[1]

    # ---- NCHW feature map (C, H*W) -> channels-last (H*W, C): one 2-D transpose ----
    xm = x_ref[0].astype(f32).T                                                # (HW, C)

    # ---- ChannelSENet ----------------------------------------------------------
    attn = _se(xm, caw1_ref, caw2_ref)                                         # (HW, C)

    # ---- SpatialSENet ----------------------------------------------------------
    ch_out = _se(attn, saw1_ref, saw2_ref)                                     # (HW, C)

    attn_img = attn.reshape(H, W, C)
    pad7_ref[...] = jnp.zeros_like(pad7_ref)
    pad7_ref[3:3 + H, 3:3 + W, :] = attn_img
    # 7x7 conv with Cout=1, bias=False: VPU tap-accumulate over channels,
    # single lane-reduction at the end (keeps the MXU free).
    acc = jnp.zeros((H, W, C), f32)
    for dy in range(7):
        for dx in range(7):
            acc = acc + pad7_ref[dy:dy + H, dx:dx + W, :] * sacw_ref[dy, dx]   # (1,C) bcast
    spatial = jax.nn.sigmoid(jnp.sum(acc, axis=-1, keepdims=True))             # (H, W, 1)
    sa_img = ch_out.reshape(H, W, C) * spatial                                 # (H, W, C)

    # ---- Reconstruction: conv3x3(relu) -> conv3x3(relu) -> conv3x3(sigmoid) ----
    _im2col_3x3(sa_img, padc1_ref, col1_ref)
    h1 = jnp.maximum(
        jnp.dot(col1_ref[...], w1_ref[...], preferred_element_type=f32) + b1_ref[...],
        0.0)                                                                   # (HW, 64)

    _im2col_3x3(h1.reshape(H, W, h1.shape[-1]), padc2_ref, col2_ref)
    h2 = jnp.maximum(
        jnp.dot(col2_ref[...], w2_ref[...], preferred_element_type=f32) + b2_ref[...],
        0.0)                                                                   # (HW, 32)

    _im2col_3x3(h2.reshape(H, W, h2.shape[-1]), padc3_ref, col3_ref)
    # conv3 computed channel-major (3, HW) via an NT matmul so the upsample output
    # can be written straight in NCHW (lane-dense along OH*OW).
    z3t = lax.dot_general(w3t_ref[...], col3_ref[...],
                          dimension_numbers=(((1,), (1,)), ((), ())),
                          preferred_element_type=f32)                          # (3, HW)
    r_t = jax.nn.sigmoid(z3t + b3_ref[...])                                    # (3, HW)

    # ---- Bilinear upsample to (OH, OW) as one matmul against kron(RH, RW)^T ----
    out = jnp.dot(r_t, ktr_ref[...], preferred_element_type=f32)               # (3, OH*OW)
    o_ref[0] = out.astype(o_ref.dtype)


# ---------------------------------------------------------------------------
# Parameters (deterministic synthetic init) and forward pass
# ---------------------------------------------------------------------------
def init_params(key, channels, reduction=16):
    cr = max(channels // reduction, 1)
    ks = jax.random.split(key, 11)
    n = lambda k, shape: 0.1 * jax.random.normal(k, shape, dtype=jnp.float32)
    return {
        # SEBlock FCs stored pre-transposed for x @ W (bias=False, matching the spec)
        "ca_w1": n(ks[0], (channels, cr)),
        "ca_w2": n(ks[1], (cr, channels)),
        "sa_w1": n(ks[2], (channels, cr)),
        "sa_w2": n(ks[3], (cr, channels)),
        # SpatialSENet 7x7 conv, no bias; stored (7, 7, 1, C) so [dy, dx] -> (1, C)
        "sa_conv_w": n(ks[4], (7, 7, 1, channels)),
        # Reconstruction convs (HWIO) + biases
        "rc_w1": n(ks[5], (3, 3, channels, 64)), "rc_b1": n(ks[6], (64,)),
        "rc_w2": n(ks[7], (3, 3, 64, 32)),       "rc_b2": n(ks[8], (32,)),
        "rc_w3": n(ks[9], (3, 3, 32, 3)),        "rc_b3": n(ks[10], (3,)),
    }


@jax.jit
def vision_module_forward(x_nchw, params):
    # x_nchw: (B, C, H, W) backbone feature map (iresnet18 output, see TODO at top)
    B, C, H, W = x_nchw.shape
    HW = H * W
    OH, OW = 100, 100
    cr = params["ca_w1"].shape[1]

    # Free (bitcast) reshape only; the actual layout transpose happens in-kernel.
    x_flat = x_nchw.reshape(B, C, HW)

    # Combined bilinear interpolation matrix: (H*W, OH*OW)
    rh = _resize_matrix(H, OH)                       # (OH, H)
    rw = _resize_matrix(W, OW)                       # (OW, W)
    ktr = jnp.kron(rh, rw).T                         # (H*W, OH*OW)

    # Conv weights as im2col matmul matrices (free XLA reshapes).
    w1m = params["rc_w1"].reshape(9 * C, 64)
    b1 = params["rc_b1"].reshape(1, 64)
    w2m = params["rc_w2"].reshape(9 * 64, 32)
    b2 = params["rc_b2"].reshape(1, 32)
    w3t = params["rc_w3"].reshape(9 * 32, 3).T       # (3, 288) for the NT matmul
    b3 = params["rc_b3"].reshape(3, 1)

    kernel = functools.partial(_vision_kernel, H=H, W=W)

    out_flat = pl.pallas_call(
        kernel,
        out_shape=jax.ShapeDtypeStruct((B, 3, OH * OW), jnp.float32),
        grid=(B,),
        in_specs=[
            pl.BlockSpec((1, C, HW), lambda i: (i, 0, 0)),
            pl.BlockSpec((C, cr), lambda i: (0, 0)),
            pl.BlockSpec((cr, C), lambda i: (0, 0)),
            pl.BlockSpec((C, cr), lambda i: (0, 0)),
            pl.BlockSpec((cr, C), lambda i: (0, 0)),
            pl.BlockSpec((7, 7, 1, C), lambda i: (0, 0, 0, 0)),
            pl.BlockSpec((9 * C, 64), lambda i: (0, 0)),
            pl.BlockSpec((1, 64), lambda i: (0, 0)),
            pl.BlockSpec((9 * 64, 32), lambda i: (0, 0)),
            pl.BlockSpec((1, 32), lambda i: (0, 0)),
            pl.BlockSpec((3, 9 * 32), lambda i: (0, 0)),
            pl.BlockSpec((3, 1), lambda i: (0, 0)),
            pl.BlockSpec((HW, OH * OW), lambda i: (0, 0)),
        ],
        out_specs=pl.BlockSpec((1, 3, OH * OW), lambda i: (i, 0, 0)),
        scratch_shapes=[
            pltpu.VMEM((H + 6, W + 6, C), jnp.float32),    # 7x7 conv halo pad
            pltpu.VMEM((H + 2, W + 2, C), jnp.float32),    # conv1 halo pad
            pltpu.VMEM((H + 2, W + 2, 64), jnp.float32),   # conv2 halo pad
            pltpu.VMEM((H + 2, W + 2, 32), jnp.float32),   # conv3 halo pad
            pltpu.VMEM((HW, 9 * C), jnp.float32),          # conv1 im2col
            pltpu.VMEM((HW, 9 * 64), jnp.float32),         # conv2 im2col
            pltpu.VMEM((HW, 9 * 32), jnp.float32),         # conv3 im2col
        ],
        compiler_params=pltpu.CompilerParams(
            dimension_semantics=("parallel",)),
    )(x_flat, params["ca_w1"], params["ca_w2"], params["sa_w1"], params["sa_w2"],
      params["sa_conv_w"], w1m, b1, w2m, b2, w3t, b3, ktr)

    fake_view = out_flat.reshape(B, 3, OH, OW)       # free reshape, already NCHW
    return x_nchw, fake_view


if __name__ == "__main__":
    key = jax.random.PRNGKey(0)
    k_x, k_p = jax.random.split(key)
    # small feature-map-like input: batch=2, channels=64 (map_embedding_size), 8x8 spatial
    x = jax.random.normal(k_x, (2, 64, 8, 8), dtype=jnp.float32)
    params = init_params(k_p, channels=64, reduction=16)

    feats, fake_view = vision_module_forward(x, params)
    jax.block_until_ready((feats, fake_view))

    assert feats.shape == (2, 64, 8, 8)
    assert fake_view.shape == (2, 3, 100, 100)
    assert bool(jnp.all(jnp.isfinite(fake_view)))
    # sigmoid output followed by convex bilinear interpolation must stay in [0, 1]
    assert float(fake_view.min()) >= -1e-5 and float(fake_view.max()) <= 1.0 + 1e-5
    print("KERNEL_OK")
</pallas_src>

<mosaic_0001>
module attributes {stable_mosaic.version = 11 : i64} {
  func.func @_vision_kernel(%arg0: i32, %arg1: memref<1x64x64xf32, #tpu.memory_space<vmem>>, %arg2: memref<64x4xf32, #tpu.memory_space<vmem>>, %arg3: memref<4x64xf32, #tpu.memory_space<vmem>>, %arg4: memref<64x4xf32, #tpu.memory_space<vmem>>, %arg5: memref<4x64xf32, #tpu.memory_space<vmem>>, %arg6: memref<7x7x1x64xf32, #tpu.memory_space<vmem>>, %arg7: memref<576x64xf32, #tpu.memory_space<vmem>>, %arg8: memref<1x64xf32, #tpu.memory_space<vmem>>, %arg9: memref<576x32xf32, #tpu.memory_space<vmem>>, %arg10: memref<1x32xf32, #tpu.memory_space<vmem>>, %arg11: memref<3x288xf32, #tpu.memory_space<vmem>>, %arg12: memref<3x1xf32, #tpu.memory_space<vmem>>, %arg13: memref<64x10000xf32, #tpu.memory_space<vmem>>, %arg14: memref<1x3x10000xf32, #tpu.memory_space<vmem>>, %arg15: memref<14x14x64xf32, #tpu.memory_space<vmem>>, %arg16: memref<10x10x64xf32, #tpu.memory_space<vmem>>, %arg17: memref<10x10x64xf32, #tpu.memory_space<vmem>>, %arg18: memref<10x10x32xf32, #tpu.memory_space<vmem>>, %arg19: memref<64x576xf32, #tpu.memory_space<vmem>>, %arg20: memref<64x576xf32, #tpu.memory_space<vmem>>, %arg21: memref<64x288xf32, #tpu.memory_space<vmem>>) attributes {dimension_semantics = [#tpu.dimension_semantics<parallel>], iteration_bounds = array<i64: 2>, scalar_prefetch = 0 : i64, scratch_operands = 7 : i64, tpu.core_type = #tpu.core_type<tc>, window_params = [{transform_indices = @transform_0, window_bounds = array<i64: 1, 64, 64>}, {pipeline_mode = #tpu.pipeline_mode<synchronous>, transform_indices = @transform_1, window_bounds = array<i64: 64, 4>}, {pipeline_mode = #tpu.pipeline_mode<synchronous>, transform_indices = @transform_2, window_bounds = array<i64: 4, 64>}, {pipeline_mode = #tpu.pipeline_mode<synchronous>, transform_indices = @transform_3, window_bounds = array<i64: 64, 4>}, {pipeline_mode = #tpu.pipeline_mode<synchronous>, transform_indices = @transform_4, window_bounds = array<i64: 4, 64>}, {pipeline_mode = #tpu.pipeline_mode<synchronous>, transform_indices = @transform_5, window_bounds = array<i64: 7, 7, 1, 64>}, {pipeline_mode = #tpu.pipeline_mode<synchronous>, transform_indices = @transform_6, window_bounds = array<i64: 576, 64>}, {pipeline_mode = #tpu.pipeline_mode<synchronous>, transform_indices = @transform_7, window_bounds = array<i64: 1, 64>}, {pipeline_mode = #tpu.pipeline_mode<synchronous>, transform_indices = @transform_8, window_bounds = array<i64: 576, 32>}, {pipeline_mode = #tpu.pipeline_mode<synchronous>, transform_indices = @transform_9, window_bounds = array<i64: 1, 32>}, {pipeline_mode = #tpu.pipeline_mode<synchronous>, transform_indices = @transform_10, window_bounds = array<i64: 3, 288>}, {pipeline_mode = #tpu.pipeline_mode<synchronous>, transform_indices = @transform_11, window_bounds = array<i64: 3, 1>}, {pipeline_mode = #tpu.pipeline_mode<synchronous>, transform_indices = @transform_12, window_bounds = array<i64: 64, 10000>}, {transform_indices = @transform_13, window_bounds = array<i64: 1, 3, 10000>}]} {
    %c0 = arith.constant 0 : index
    %c0_0 = arith.constant 0 : index
    %c0_1 = arith.constant 0 : index
    %0 = vector.load %arg1[%c0, %c0_0, %c0_1] : memref<1x64x64xf32, #tpu.memory_space<vmem>>, vector<1x64x64xf32>
    %1 = vector.shape_cast %0 : vector<1x64x64xf32> to vector<64x64xf32>
    %2 = tpu.transpose %1, [1, 0] : vector<64x64xf32> -> vector<64x64xf32>
    %cst = arith.constant dense<0.000000e+00> : vector<64xf32>
    %3 = vector.multi_reduction <add>, %2, %cst [0] : vector<64x64xf32> to vector<64xf32>
    %4 = vector.shape_cast %3 : vector<64xf32> to vector<1x64xf32>
    %cst_2 = arith.constant 6.400000e+01 : f32
    %5 = vector.broadcast %cst_2 : f32 to vector<1x64xf32>
    %6 = arith.divf %4, %5 : vector<1x64xf32>
    %c0_3 = arith.constant 0 : index
    %c0_4 = arith.constant 0 : index
    %7 = vector.load %arg2[%c0_3, %c0_4] : memref<64x4xf32, #tpu.memory_space<vmem>>, vector<64x4xf32>
    %cst_5 = arith.constant dense<0.000000e+00> : vector<1x4xf32>
    %8 = tpu.matmul %6, %7, %cst_5 {dimension_numbers = #tpu.dot_dimension_numbers<[1], [0], [0], [1], [0, 0, 1, 1], [], []>} : vector<1x64xf32>, vector<64x4xf32>, vector<1x4xf32> -> vector<1x4xf32>
    %cst_6 = arith.constant 0.000000e+00 : f32
    %9 = vector.broadcast %cst_6 : f32 to vector<1x4xf32>
    %10 = arith.maximumf %8, %9 : vector<1x4xf32>
    %c0_7 = arith.constant 0 : index
    %c0_8 = arith.constant 0 : index
    %11 = vector.load %arg3[%c0_7, %c0_8] : memref<4x64xf32, #tpu.memory_space<vmem>>, vector<4x64xf32>
    %cst_9 = arith.constant dense<0.000000e+00> : vector<1x64xf32>
    %12 = tpu.matmul %10, %11, %cst_9 {dimension_numbers = #tpu.dot_dimension_numbers<[1], [0], [0], [1], [0, 0, 1, 1], [], []>} : vector<1x4xf32>, vector<4x64xf32>, vector<1x64xf32> -> vector<1x64xf32>
    %13 = arith.negf %12 : vector<1x64xf32>
    %14 = math.exp %13 : vector<1x64xf32>
    %cst_10 = arith.constant 1.000000e+00 : f32
    %15 = vector.broadcast %cst_10 : f32 to vector<1x64xf32>
    %16 = arith.addf %15, %14 : vector<1x64xf32>
    %17 = arith.divf %15, %16 : vector<1x64xf32>
    %18 = vector.broadcast %17 : vector<1x64xf32> to vector<64x64xf32>
    %19 = arith.mulf %2, %18 : vector<64x64xf32>
    %cst_11 = arith.constant dense<0.000000e+00> : vector<64xf32>
    %20 = vector.multi_reduction <add>, %19, %cst_11 [0] : vector<64x64xf32> to vector<64xf32>
    %21 = vector.shape_cast %20 : vector<64xf32> to vector<1x64xf32>
    %cst_12 = arith.constant 6.400000e+01 : f32
    %22 = vector.broadcast %cst_12 : f32 to vector<1x64xf32>
    %23 = arith.divf %21, %22 : vector<1x64xf32>
    %c0_13 = arith.constant 0 : index
    %c0_14 = arith.constant 0 : index
    %24 = vector.load %arg4[%c0_13, %c0_14] : memref<64x4xf32, #tpu.memory_space<vmem>>, vector<64x4xf32>
    %cst_15 = arith.constant dense<0.000000e+00> : vector<1x4xf32>
    %25 = tpu.matmul %23, %24, %cst_15 {dimension_numbers = #tpu.dot_dimension_numbers<[1], [0], [0], [1], [0, 0, 1, 1], [], []>} : vector<1x64xf32>, vector<64x4xf32>, vector<1x4xf32> -> vector<1x4xf32>
    %cst_16 = arith.constant 0.000000e+00 : f32
    %26 = vector.broadcast %cst_16 : f32 to vector<1x4xf32>
    %27 = arith.maximumf %25, %26 : vector<1x4xf32>
    %c0_17 = arith.constant 0 : index
    %c0_18 = arith.constant 0 : index
    %28 = vector.load %arg5[%c0_17, %c0_18] : memref<4x64xf32, #tpu.memory_space<vmem>>, vector<4x64xf32>
    %cst_19 = arith.constant dense<0.000000e+00> : vector<1x64xf32>
    %29 = tpu.matmul %27, %28, %cst_19 {dimension_numbers = #tpu.dot_dimension_numbers<[1], [0], [0], [1], [0, 0, 1, 1], [], []>} : vector<1x4xf32>, vector<4x64xf32>, vector<1x64xf32> -> vector<1x64xf32>
    %30 = arith.negf %29 : vector<1x64xf32>
    %31 = math.exp %30 : vector<1x64xf32>
    %cst_20 = arith.constant 1.000000e+00 : f32
    %32 = vector.broadcast %cst_20 : f32 to vector<1x64xf32>
    %33 = arith.addf %32, %31 : vector<1x64xf32>
    %34 = arith.divf %32, %33 : vector<1x64xf32>
    %35 = vector.broadcast %34 : vector<1x64xf32> to vector<64x64xf32>
    %36 = arith.mulf %19, %35 : vector<64x64xf32>
    %37 = vector.shape_cast %19 : vector<64x64xf32> to vector<8x8x64xf32>
    %cst_21 = arith.constant 0.000000e+00 : f32
    %38 = vector.broadcast %cst_21 : f32 to vector<14x14x64xf32>
    %c0_22 = arith.constant 0 : index
    %c0_23 = arith.constant 0 : index
    %c0_24 = arith.constant 0 : index
    %39 = vector.load %arg15[%c0_22, %c0_23, %c0_24] : memref<14x14x64xf32, #tpu.memory_space<vmem>>, vector<14x14x64xf32>
    tpu.vector_store %arg15[%c0_22, %c0_23, %c0_24], %38 {strides = array<i32>} : memref<14x14x64xf32, #tpu.memory_space<vmem>>, vector<14x14x64xf32>,
    %c3 = arith.constant 3 : index
    %c3_25 = arith.constant 3 : index
    %c0_26 = arith.constant 0 : index
    %40 = vector.load %arg15[%c3, %c3_25, %c0_26] : memref<14x14x64xf32, #tpu.memory_space<vmem>>, vector<8x8x64xf32>
    tpu.vector_store %arg15[%c3, %c3_25, %c0_26], %37 {strides = array<i32>} : memref<14x14x64xf32, #tpu.memory_space<vmem>>, vector<8x8x64xf32>,
    %cst_27 = arith.constant 0.000000e+00 : f32
    %41 = vector.broadcast %cst_27 : f32 to vector<8x8x64xf32>
    %c0_28 = arith.constant 0 : index
    %c0_29 = arith.constant 0 : index
    %c0_30 = arith.constant 0 : index
    %42 = vector.load %arg15[%c0_28, %c0_29, %c0_30] : memref<14x14x64xf32, #tpu.memory_space<vmem>>, vector<8x8x64xf32>
    %c0_31 = arith.constant 0 : index
    %c0_32 = arith.constant 0 : index
    %c0_33 = arith.constant 0 : index
    %c0_34 = arith.constant 0 : index
    %43 = vector.load %arg6[%c0_31, %c0_32, %c0_33, %c0_34] : memref<7x7x1x64xf32, #tpu.memory_space<vmem>>, vector<1x1x1x64xf32>
    %44 = vector.shape_cast %43 : vector<1x1x1x64xf32> to vector<1x64xf32>
    %45 = vector.shape_cast %44 : vector<1x64xf32> to vector<1x1x64xf32>
    %46 = vector.broadcast %45 : vector<1x1x64xf32> to vector<8x8x64xf32>
    %47 = arith.mulf %42, %46 : vector<8x8x64xf32>
    %48 = arith.addf %41, %47 : vector<8x8x64xf32>
    %c0_35 = arith.constant 0 : index
    %c1 = arith.constant 1 : index
    %c0_36 = arith.constant 0 : index
    %49 = vector.load %arg15[%c0_35, %c1, %c0_36] : memref<14x14x64xf32, #tpu.memory_space<vmem>>, vector<8x8x64xf32>
    %c0_37 = arith.constant 0 : index
    %c1_38 = arith.constant 1 : index
    %c0_39 = arith.constant 0 : index
    %c0_40 = arith.constant 0 : index
    %50 = vector.load %arg6[%c0_37, %c1_38, %c0_39, %c0_40] : memref<7x7x1x64xf32, #tpu.memory_space<vmem>>, vector<1x1x1x64xf32>
    %51 = vector.shape_cast %50 : vector<1x1x1x64xf32> to vector<1x64xf32>
    %52 = vector.shape_cast %51 : vector<1x64xf32> to vector<1x1x64xf32>
    %53 = vector.broadcast %52 : vector<1x1x64xf32> to vector<8x8x64xf32>
    %54 = arith.mulf %49, %53 : vector<8x8x64xf32>
    %55 = arith.addf %48, %54 : vector<8x8x64xf32>
    %c0_41 = arith.constant 0 : index
    %c2 = arith.constant 2 : index
    %c0_42 = arith.constant 0 : index
    %56 = vector.load %arg15[%c0_41, %c2, %c0_42] : memref<14x14x64xf32, #tpu.memory_space<vmem>>, vector<8x8x64xf32>
    %c0_43 = arith.constant 0 : index
    %c2_44 = arith.constant 2 : index
    %c0_45 = arith.constant 0 : index
    %c0_46 = arith.constant 0 : index
    %57 = vector.load %arg6[%c0_43, %c2_44, %c0_45, %c0_46] : memref<7x7x1x64xf32, #tpu.memory_space<vmem>>, vector<1x1x1x64xf32>
    %58 = vector.shape_cast %57 : vector<1x1x1x64xf32> to vector<1x64xf32>
    %59 = vector.shape_cast %58 : vector<1x64xf32> to vector<1x1x64xf32>
    %60 = vector.broadcast %59 : vector<1x1x64xf32> to vector<8x8x64xf32>
    %61 = arith.mulf %56, %60 : vector<8x8x64xf32>
    %62 = arith.addf %55, %61 : vector<8x8x64xf32>
    %c0_47 = arith.constant 0 : index
    %c3_48 = arith.constant 3 : index
    %c0_49 = arith.constant 0 : index
    %63 = vector.load %arg15[%c0_47, %c3_48, %c0_49] : memref<14x14x64xf32, #tpu.memory_space<vmem>>, vector<8x8x64xf32>
    %c0_50 = arith.constant 0 : index
    %c3_51 = arith.constant 3 : index
    %c0_52 = arith.constant 0 : index
    %c0_53 = arith.constant 0 : index
    %64 = vector.load %arg6[%c0_50, %c3_51, %c0_52, %c0_53] : memref<7x7x1x64xf32, #tpu.memory_space<vmem>>, vector<1x1x1x64xf32>
    %65 = vector.shape_cast %64 : vector<1x1x1x64xf32> to vector<1x64xf32>
    %66 = vector.shape_cast %65 : vector<1x64xf32> to vector<1x1x64xf32>
    %67 = vector.broadcast %66 : vector<1x1x64xf32> to vector<8x8x64xf32>
    %68 = arith.mulf %63, %67 : vector<8x8x64xf32>
    %69 = arith.addf %62, %68 : vector<8x8x64xf32>
    %c0_54 = arith.constant 0 : index
    %c4 = arith.constant 4 : index
    %c0_55 = arith.constant 0 : index
    %70 = vector.load %arg15[%c0_54, %c4, %c0_55] : memref<14x14x64xf32, #tpu.memory_space<vmem>>, vector<8x8x64xf32>
    %c0_56 = arith.constant 0 : index
    %c4_57 = arith.constant 4 : index
    %c0_58 = arith.constant 0 : index
    %c0_59 = arith.constant 0 : index
    %71 = vector.load %arg6[%c0_56, %c4_57, %c0_58, %c0_59] : memref<7x7x1x64xf32, #tpu.memory_space<vmem>>, vector<1x1x1x64xf32>
    %72 = vector.shape_cast %71 : vector<1x1x1x64xf32> to vector<1x64xf32>
    %73 = vector.shape_cast %72 : vector<1x64xf32> to vector<1x1x64xf32>
    %74 = vector.broadcast %73 : vector<1x1x64xf32> to vector<8x8x64xf32>
    %75 = arith.mulf %70, %74 : vector<8x8x64xf32>
    %76 = arith.addf %69, %75 : vector<8x8x64xf32>
    %c0_60 = arith.constant 0 : index
    %c5 = arith.constant 5 : index
    %c0_61 = arith.constant 0 : index
    %77 = vector.load %arg15[%c0_60, %c5, %c0_61] : memref<14x14x64xf32, #tpu.memory_space<vmem>>, vector<8x8x64xf32>
    %c0_62 = arith.constant 0 : index
    %c5_63 = arith.constant 5 : index
    %c0_64 = arith.constant 0 : index
    %c0_65 = arith.constant 0 : index
    %78 = vector.load %arg6[%c0_62, %c5_63, %c0_64, %c0_65] : memref<7x7x1x64xf32, #tpu.memory_space<vmem>>, vector<1x1x1x64xf32>
    %79 = vector.shape_cast %78 : vector<1x1x1x64xf32> to vector<1x64xf32>
    %80 = vector.shape_cast %79 : vector<1x64xf32> to vector<1x1x64xf32>
    %81 = vector.broadcast %80 : vector<1x1x64xf32> to vector<8x8x64xf32>
    %82 = arith.mulf %77, %81 : vector<8x8x64xf32>
    %83 = arith.addf %76, %82 : vector<8x8x64xf32>
    %c0_66 = arith.constant 0 : index
    %c6 = arith.constant 6 : index
    %c0_67 = arith.constant 0 : index
    %84 = vector.load %arg15[%c0_66, %c6, %c0_67] : memref<14x14x64xf32, #tpu.memory_space<vmem>>, vector<8x8x64xf32>
    %c0_68 = arith.constant 0 : index
    %c6_69 = arith.constant 6 : index
    %c0_70 = arith.constant 0 : index
    %c0_71 = arith.constant 0 : index
    %85 = vector.load %arg6[%c0_68, %c6_69, %c0_70, %c0_71] : memref<7x7x1x64xf32, #tpu.memory_space<vmem>>, vector<1x1x1x64xf32>
    %86 = vector.shape_cast %85 : vector<1x1x1x64xf32> to vector<1x64xf32>
    %87 = vector.shape_cast %86 : vector<1x64xf32> to vector<1x1x64xf32>
    %88 = vector.broadcast %87 : vector<1x1x64xf32> to vector<8x8x64xf32>
    %89 = arith.mulf %84, %88 : vector<8x8x64xf32>
    %90 = arith.addf %83, %89 : vector<8x8x64xf32>
    %c1_72 = arith.constant 1 : index
    %c0_73 = arith.constant 0 : index
    %c0_74 = arith.constant 0 : index
    %91 = vector.load %arg15[%c1_72, %c0_73, %c0_74] : memref<14x14x64xf32, #tpu.memory_space<vmem>>, vector<8x8x64xf32>
    %c1_75 = arith.constant 1 : index
    %c0_76 = arith.constant 0 : index
    %c0_77 = arith.constant 0 : index
    %c0_78 = arith.constant 0 : index
    %92 = vector.load %arg6[%c1_75, %c0_76, %c0_77, %c0_78] : memref<7x7x1x64xf32, #tpu.memory_space<vmem>>, vector<1x1x1x64xf32>
    %93 = vector.shape_cast %92 : vector<1x1x1x64xf32> to vector<1x64xf32>
    %94 = vector.shape_cast %93 : vector<1x64xf32> to vector<1x1x64xf32>
    %95 = vector.broadcast %94 : vector<1x1x64xf32> to vector<8x8x64xf32>
    %96 = arith.mulf %91, %95 : vector<8x8x64xf32>
    %97 = arith.addf %90, %96 : vector<8x8x64xf32>
    %c1_79 = arith.constant 1 : index
    %c1_80 = arith.constant 1 : index
    %c0_81 = arith.constant 0 : index
    %98 = vector.load %arg15[%c1_79, %c1_80, %c0_81] : memref<14x14x64xf32, #tpu.memory_space<vmem>>, vector<8x8x64xf32>
    %c1_82 = arith.constant 1 : index
    %c1_83 = arith.constant 1 : index
    %c0_84 = arith.constant 0 : index
    %c0_85 = arith.constant 0 : index
    %99 = vector.load %arg6[%c1_82, %c1_83, %c0_84, %c0_85] : memref<7x7x1x64xf32, #tpu.memory_space<vmem>>, vector<1x1x1x64xf32>
    %100 = vector.shape_cast %99 : vector<1x1x1x64xf32> to vector<1x64xf32>
    %101 = vector.shape_cast %100 : vector<1x64xf32> to vector<1x1x64xf32>
    %102 = vector.broadcast %101 : vector<1x1x64xf32> to vector<8x8x64xf32>
    %103 = arith.mulf %98, %102 : vector<8x8x64xf32>
    %104 = arith.addf %97, %103 : vector<8x8x64xf32>
    %c1_86 = arith.constant 1 : index
    %c2_87 = arith.constant 2 : index
    %c0_88 = arith.constant 0 : index
    %105 = vector.load %arg15[%c1_86, %c2_87, %c0_88] : memref<14x14x64xf32, #tpu.memory_space<vmem>>, vector<8x8x64xf32>
    %c1_89 = arith.constant 1 : index
    %c2_90 = arith.constant 2 : index
    %c0_91 = arith.constant 0 : index
    %c0_92 = arith.constant 0 : index
    %106 = vector.load %arg6[%c1_89, %c2_90, %c0_91, %c0_92] : memref<7x7x1x64xf32, #tpu.memory_space<vmem>>, vector<1x1x1x64xf32>
    %107 = vector.shape_cast %106 : vector<1x1x1x64xf32> to vector<1x64xf32>
    %108 = vector.shape_cast %107 : vector<1x64xf32> to vector<1x1x64xf32>
    %109 = vector.broadcast %108 : vector<1x1x64xf32> to vector<8x8x64xf32>
    %110 = arith.mulf %105, %109 : vector<8x8x64xf32>
    %111 = arith.addf %104, %110 : vector<8x8x64xf32>
    %c1_93 = arith.constant 1 : index
    %c3_94 = arith.constant 3 : index
    %c0_95 = arith.constant 0 : index
    %112 = vector.load %arg15[%c1_93, %c3_94, %c0_95] : memref<14x14x64xf32, #tpu.memory_space<vmem>>, vector<8x8x64xf32>
    %c1_96 = arith.constant 1 : index
    %c3_97 = arith.constant 3 : index
    %c0_98 = arith.constant 0 : index
    %c0_99 = arith.constant 0 : index
    %113 = vector.load %arg6[%c1_96, %c3_97, %c0_98, %c0_99] : memref<7x7x1x64xf32, #tpu.memory_space<vmem>>, vector<1x1x1x64xf32>
    %114 = vector.shape_cast %113 : vector<1x1x1x64xf32> to vector<1x64xf32>
    %115 = vector.shape_cast %114 : vector<1x64xf32> to vector<1x1x64xf32>
    %116 = vector.broadcast %115 : vector<1x1x64xf32> to vector<8x8x64xf32>
    %117 = arith.mulf %112, %116 : vector<8x8x64xf32>
    %118 = arith.addf %111, %117 : vector<8x8x64xf32>
    %c1_100 = arith.constant 1 : index
    %c4_101 = arith.constant 4 : index
    %c0_102 = arith.constant 0 : index
    %119 = vector.load %arg15[%c1_100, %c4_101, %c0_102] : memref<14x14x64xf32, #tpu.memory_space<vmem>>, vector<8x8x64xf32>
    %c1_103 = arith.constant 1 : index
    %c4_104 = arith.constant 4 : index
    %c0_105 = arith.constant 0 : index
    %c0_106 = arith.constant 0 : index
    %120 = vector.load %arg6[%c1_103, %c4_104, %c0_105, %c0_106] : memref<7x7x1x64xf32, #tpu.memory_space<vmem>>, vector<1x1x1x64xf32>
    %121 = vector.shape_cast %120 : vector<1x1x1x64xf32> to vector<1x64xf32>
    %122 = vector.shape_cast %121 : vector<1x64xf32> to vector<1x1x64xf32>
    %123 = vector.broadcast %122 : vector<1x1x64xf32> to vector<8x8x64xf32>
    %124 = arith.mulf %119, %123 : vector<8x8x64xf32>
    %125 = arith.addf %118, %124 : vector<8x8x64xf32>
    %c1_107 = arith.constant 1 : index
    %c5_108 = arith.constant 5 : index
    %c0_109 = arith.constant 0 : index
    %126 = vector.load %arg15[%c1_107, %c5_108, %c0_109] : memref<14x14x64xf32, #tpu.memory_space<vmem>>, vector<8x8x64xf32>
    %c1_110 = arith.constant 1 : index
    %c5_111 = arith.constant 5 : index
    %c0_112 = arith.constant 0 : index
    %c0_113 = arith.constant 0 : index
    %127 = vector.load %arg6[%c1_110, %c5_111, %c0_112, %c0_113] : memref<7x7x1x64xf32, #tpu.memory_space<vmem>>, vector<1x1x1x64xf32>
    %128 = vector.shape_cast %127 : vector<1x1x1x64xf32> to vector<1x64xf32>
    %129 = vector.shape_cast %128 : vector<1x64xf32> to vector<1x1x64xf32>
    %130 = vector.broadcast %129 : vector<1x1x64xf32> to vector<8x8x64xf32>
    %131 = arith.mulf %126, %130 : vector<8x8x64xf32>
    %132 = arith.addf %125, %131 : vector<8x8x64xf32>
    %c1_114 = arith.constant 1 : index
    %c6_115 = arith.constant 6 : index
    %c0_116 = arith.constant 0 : index
    %133 = vector.load %arg15[%c1_114, %c6_115, %c0_116] : memref<14x14x64xf32, #tpu.memory_space<vmem>>, vector<8x8x64xf32>
    %c1_117 = arith.constant 1 : index
    %c6_118 = arith.constant 6 : index
    %c0_119 = arith.constant 0 : index
    %c0_120 = arith.constant 0 : index
    %134 = vector.load %arg6[%c1_117, %c6_118, %c0_119, %c0_120] : memref<7x7x1x64xf32, #tpu.memory_space<vmem>>, vector<1x1x1x64xf32>
    %135 = vector.shape_cast %134 : vector<1x1x1x64xf32> to vector<1x64xf32>
    %136 = vector.shape_cast %135 : vector<1x64xf32> to vector<1x1x64xf32>
    %137 = vector.broadcast %136 : vector<1x1x64xf32> to vector<8x8x64xf32>
    %138 = arith.mulf %133, %137 : vector<8x8x64xf32>
    %139 = arith.addf %132, %138 : vector<8x8x64xf32>
    %c2_121 = arith.constant 2 : index
    %c0_122 = arith.constant 0 : index
    %c0_123 = arith.constant 0 : index
    %140 = vector.load %arg15[%c2_121, %c0_122, %c0_123] : memref<14x14x64xf32, #tpu.memory_space<vmem>>, vector<8x8x64xf32>
    %c2_124 = arith.constant 2 : index
    %c0_125 = arith.constant 0 : index
    %c0_126 = arith.constant 0 : index
    %c0_127 = arith.constant 0 : index
    %141 = vector.load %arg6[%c2_124, %c0_125, %c0_126, %c0_127] : memref<7x7x1x64xf32, #tpu.memory_space<vmem>>, vector<1x1x1x64xf32>
    %142 = vector.shape_cast %141 : vector<1x1x1x64xf32> to vector<1x64xf32>
    %143 = vector.shape_cast %142 : vector<1x64xf32> to vector<1x1x64xf32>
    %144 = vector.broadcast %143 : vector<1x1x64xf32> to vector<8x8x64xf32>
    %145 = arith.mulf %140, %144 : vector<8x8x64xf32>
    %146 = arith.addf %139, %145 : vector<8x8x64xf32>
    %c2_128 = arith.constant 2 : index
    %c1_129 = arith.constant 1 : index
    %c0_130 = arith.constant 0 : index
    %147 = vector.load %arg15[%c2_128, %c1_129, %c0_130] : memref<14x14x64xf32, #tpu.memory_space<vmem>>, vector<8x8x64xf32>
    %c2_131 = arith.constant 2 : index
    %c1_132 = arith.constant 1 : index
    %c0_133 = arith.constant 0 : index
    %c0_134 = arith.constant 0 : index
    %148 = vector.load %arg6[%c2_131, %c1_132, %c0_133, %c0_134] : memref<7x7x1x64xf32, #tpu.memory_space<vmem>>, vector<1x1x1x64xf32>
    %149 = vector.shape_cast %148 : vector<1x1x1x64xf32> to vector<1x64xf32>
    %150 = vector.shape_cast %149 : vector<1x64xf32> to vector<1x1x64xf32>
    %151 = vector.broadcast %150 : vector<1x1x64xf32> to vector<8x8x64xf32>
    %152 = arith.mulf %147, %151 : vector<8x8x64xf32>
    %153 = arith.addf %146, %152 : vector<8x8x64xf32>
    %c2_135 = arith.constant 2 : index
    %c2_136 = arith.constant 2 : index
    %c0_137 = arith.constant 0 : index
    %154 = vector.load %arg15[%c2_135, %c2_136, %c0_137] : memref<14x14x64xf32, #tpu.memory_space<vmem>>, vector<8x8x64xf32>
    %c2_138 = arith.constant 2 : index
    %c2_139 = arith.constant 2 : index
    %c0_140 = arith.constant 0 : index
    %c0_141 = arith.constant 0 : index
    %155 = vector.load %arg6[%c2_138, %c2_139, %c0_140, %c0_141] : memref<7x7x1x64xf32, #tpu.memory_space<vmem>>, vector<1x1x1x64xf32>
    %156 = vector.shape_cast %155 : vector<1x1x1x64xf32> to vector<1x64xf32>
    %157 = vector.shape_cast %156 : vector<1x64xf32> to vector<1x1x64xf32>
    %158 = vector.broadcast %157 : vector<1x1x64xf32> to vector<8x8x64xf32>
    %159 = arith.mulf %154, %158 : vector<8x8x64xf32>
    %160 = arith.addf %153, %159 : vector<8x8x64xf32>
    %c2_142 = arith.constant 2 : index
    %c3_143 = arith.constant 3 : index
    %c0_144 = arith.constant 0 : index
    %161 = vector.load %arg15[%c2_142, %c3_143, %c0_144] : memref<14x14x64xf32, #tpu.memory_space<vmem>>, vector<8x8x64xf32>
    %c2_145 = arith.constant 2 : index
    %c3_146 = arith.constant 3 : index
    %c0_147 = arith.constant 0 : index
    %c0_148 = arith.constant 0 : index
    %162 = vector.load %arg6[%c2_145, %c3_146, %c0_147, %c0_148] : memref<7x7x1x64xf32, #tpu.memory_space<vmem>>, vector<1x1x1x64xf32>
    %163 = vector.shape_cast %162 : vector<1x1x1x64xf32> to vector<1x64xf32>
    %164 = vector.shape_cast %163 : vector<1x64xf32> to vector<1x1x64xf32>
    %165 = vector.broadcast %164 : vector<1x1x64xf32> to vector<8x8x64xf32>
    %166 = arith.mulf %161, %165 : vector<8x8x64xf32>
    %167 = arith.addf %160, %166 : vector<8x8x64xf32>
    %c2_149 = arith.constant 2 : index
    %c4_150 = arith.constant 4 : index
    %c0_151 = arith.constant 0 : index
    %168 = vector.load %arg15[%c2_149, %c4_150, %c0_151] : memref<14x14x64xf32, #tpu.memory_space<vmem>>, vector<8x8x64xf32>
    %c2_152 = arith.constant 2 : index
    %c4_153 = arith.constant 4 : index
    %c0_154 = arith.constant 0 : index
    %c0_155 = arith.constant 0 : index
    %169 = vector.load %arg6[%c2_152, %c4_153, %c0_154, %c0_155] : memref<7x7x1x64xf32, #tpu.memory_space<vmem>>, vector<1x1x1x64xf32>
    %170 = vector.shape_cast %169 : vector<1x1x1x64xf32> to vector<1x64xf32>
    %171 = vector.shape_cast %170 : vector<1x64xf32> to vector<1x1x64xf32>
    %172 = vector.broadcast %171 : vector<1x1x64xf32> to vector<8x8x64xf32>
    %173 = arith.mulf %168, %172 : vector<8x8x64xf32>
    %174 = arith.addf %167, %173 : vector<8x8x64xf32>
    %c2_156 = arith.constant 2 : index
    %c5_157 = arith.constant 5 : index
    %c0_158 = arith.constant 0 : index
    %175 = vector.load %arg15[%c2_156, %c5_157, %c0_158] : memref<14x14x64xf32, #tpu.memory_space<vmem>>, vector<8x8x64xf32>
    %c2_159 = arith.constant 2 : index
    %c5_160 = arith.constant 5 : index
    %c0_161 = arith.constant 0 : index
    %c0_162 = arith.constant 0 : index
    %176 = vector.load %arg6[%c2_159, %c5_160, %c0_161, %c0_162] : memref<7x7x1x64xf32, #tpu.memory_space<vmem>>, vector<1x1x1x64xf32>
    %177 = vector.shape_cast %176 : vector<1x1x1x64xf32> to vector<1x64xf32>
    %178 = vector.shape_cast %177 : vector<1x64xf32> to vector<1x1x64xf32>
    %179 = vector.broadcast %178 : vector<1x1x64xf32> to vector<8x8x64xf32>
    %180 = arith.mulf %175, %179 : vector<8x8x64xf32>
    %181 = arith.addf %174, %180 : vector<8x8x64xf32>
    %c2_163 = arith.constant 2 : index
    %c6_164 = arith.constant 6 : index
    %c0_165 = arith.constant 0 : index
    %182 = vector.load %arg15[%c2_163, %c6_164, %c0_165] : memref<14x14x64xf32, #tpu.memory_space<vmem>>, vector<8x8x64xf32>
    %c2_166 = arith.constant 2 : index
    %c6_167 = arith.constant 6 : index
    %c0_168 = arith.constant 0 : index
    %c0_169 = arith.constant 0 : index
    %183 = vector.load %arg6[%c2_166, %c6_167, %c0_168, %c0_169] : memref<7x7x1x64xf32, #tpu.memory_space<vmem>>, vector<1x1x1x64xf32>
    %184 = vector.shape_cast %183 : vector<1x1x1x64xf32> to vector<1x64xf32>
    %185 = vector.shape_cast %184 : vector<1x64xf32> to vector<1x1x64xf32>
    %186 = vector.broadcast %185 : vector<1x1x64xf32> to vector<8x8x64xf32>
    %187 = arith.mulf %182, %186 : vector<8x8x64xf32>
    %188 = arith.addf %181, %187 : vector<8x8x64xf32>
    %c3_170 = arith.constant 3 : index
    %c0_171 = arith.constant 0 : index
    %c0_172 = arith.constant 0 : index
    %189 = vector.load %arg15[%c3_170, %c0_171, %c0_172] : memref<14x14x64xf32, #tpu.memory_space<vmem>>, vector<8x8x64xf32>
    %c3_173 = arith.constant 3 : index
    %c0_174 = arith.constant 0 : index
    %c0_175 = arith.constant 0 : index
    %c0_176 = arith.constant 0 : index
    %190 = vector.load %arg6[%c3_173, %c0_174, %c0_175, %c0_176] : memref<7x7x1x64xf32, #tpu.memory_space<vmem>>, vector<1x1x1x64xf32>
    %191 = vector.shape_cast %190 : vector<1x1x1x64xf32> to vector<1x64xf32>
    %192 = vector.shape_cast %191 : vector<1x64xf32> to vector<1x1x64xf32>
    %193 = vector.broadcast %192 : vector<1x1x64xf32> to vector<8x8x64xf32>
    %194 = arith.mulf %189, %193 : vector<8x8x64xf32>
    %195 = arith.addf %188, %194 : vector<8x8x64xf32>
    %c3_177 = arith.constant 3 : index
    %c1_178 = arith.constant 1 : index
    %c0_179 = arith.constant 0 : index
    %196 = vector.load %arg15[%c3_177, %c1_178, %c0_179] : memref<14x14x64xf32, #tpu.memory_space<vmem>>, vector<8x8x64xf32>
    %c3_180 = arith.constant 3 : index
    %c1_181 = arith.constant 1 : index
    %c0_182 = arith.constant 0 : index
    %c0_183 = arith.constant 0 : index
    %197 = vector.load %arg6[%c3_180, %c1_181, %c0_182, %c0_183] : memref<7x7x1x64xf32, #tpu.memory_space<vmem>>, vector<1x1x1x64xf32>
    %198 = vector.shape_cast %197 : vector<1x1x1x64xf32> to vector<1x64xf32>
    %199 = vector.shape_cast %198 : vector<1x64xf32> to vector<1x1x64xf32>
    %200 = vector.broadcast %199 : vector<1x1x64xf32> to vector<8x8x64xf32>
    %201 = arith.mulf %196, %200 : vector<8x8x64xf32>
    %202 = arith.addf %195, %201 : vector<8x8x64xf32>
    %c3_184 = arith.constant 3 : index
    %c2_185 = arith.constant 2 : index
    %c0_186 = arith.constant 0 : index
    %203 = vector.load %arg15[%c3_184, %c2_185, %c0_186] : memref<14x14x64xf32, #tpu.memory_space<vmem>>, vector<8x8x64xf32>
    %c3_187 = arith.constant 3 : index
    %c2_188 = arith.constant 2 : index
    %c0_189 = arith.constant 0 : index
    %c0_190 = arith.constant 0 : index
    %204 = vector.load %arg6[%c3_187, %c2_188, %c0_189, %c0_190] : memref<7x7x1x64xf32, #tpu.memory_space<vmem>>, vector<1x1x1x64xf32>
    %205 = vector.shape_cast %204 : vector<1x1x1x64xf32> to vector<1x64xf32>
    %206 = vector.shape_cast %205 : vector<1x64xf32> to vector<1x1x64xf32>
    %207 = vector.broadcast %206 : vector<1x1x64xf32> to vector<8x8x64xf32>
    %208 = arith.mulf %203, %207 : vector<8x8x64xf32>
    %209 = arith.addf %202, %208 : vector<8x8x64xf32>
    %c3_191 = arith.constant 3 : index
    %c3_192 = arith.constant 3 : index
    %c0_193 = arith.constant 0 : index
    %210 = vector.load %arg15[%c3_191, %c3_192, %c0_193] : memref<14x14x64xf32, #tpu.memory_space<vmem>>, vector<8x8x64xf32>
    %c3_194 = arith.constant 3 : index
    %c3_195 = arith.constant 3 : index
    %c0_196 = arith.constant 0 : index
    %c0_197 = arith.constant 0 : index
    %211 = vector.load %arg6[%c3_194, %c3_195, %c0_196, %c0_197] : memref<7x7x1x64xf32, #tpu.memory_space<vmem>>, vector<1x1x1x64xf32>
    %212 = vector.shape_cast %211 : vector<1x1x1x64xf32> to vector<1x64xf32>
    %213 = vector.shape_cast %212 : vector<1x64xf32> to vector<1x1x64xf32>
    %214 = vector.broadcast %213 : vector<1x1x64xf32> to vector<8x8x64xf32>
    %215 = arith.mulf %210, %214 : vector<8x8x64xf32>
    %216 = arith.addf %209, %215 : vector<8x8x64xf32>
    %c3_198 = arith.constant 3 : index
    %c4_199 = arith.constant 4 : index
    %c0_200 = arith.constant 0 : index
    %217 = vector.load %arg15[%c3_198, %c4_199, %c0_200] : memref<14x14x64xf32, #tpu.memory_space<vmem>>, vector<8x8x64xf32>
    %c3_201 = arith.constant 3 : index
    %c4_202 = arith.constant 4 : index
    %c0_203 = arith.constant 0 : index
    %c0_204 = arith.constant 0 : index
    %218 = vector.load %arg6[%c3_201, %c4_202, %c0_203, %c0_204] : memref<7x7x1x64xf32, #tpu.memory_space<vmem>>, vector<1x1x1x64xf32>
    %219 = vector.shape_cast %218 : vector<1x1x1x64xf32> to vector<1x64xf32>
    %220 = vector.shape_cast %219 : vector<1x64xf32> to vector<1x1x64xf32>
    %221 = vector.broadcast %220 : vector<1x1x64xf32> to vector<8x8x64xf32>
    %222 = arith.mulf %217, %221 : vector<8x8x64xf32>
    %223 = arith.addf %216, %222 : vector<8x8x64xf32>
    %c3_205 = arith.constant 3 : index
    %c5_206 = arith.constant 5 : index
    %c0_207 = arith.constant 0 : index
    %224 = vector.load %arg15[%c3_205, %c5_206, %c0_207] : memref<14x14x64xf32, #tpu.memory_space<vmem>>, vector<8x8x64xf32>
    %c3_208 = arith.constant 3 : index
    %c5_209 = arith.constant 5 : index
    %c0_210 = arith.constant 0 : index
    %c0_211 = arith.constant 0 : index
    %225 = vector.load %arg6[%c3_208, %c5_209, %c0_210, %c0_211] : memref<7x7x1x64xf32, #tpu.memory_space<vmem>>, vector<1x1x1x64xf32>
    %226 = vector.shape_cast %225 : vector<1x1x1x64xf32> to vector<1x64xf32>
    %227 = vector.shape_cast %226 : vector<1x64xf32> to vector<1x1x64xf32>
    %228 = vector.broadcast %227 : vector<1x1x64xf32> to vector<8x8x64xf32>
    %229 = arith.mulf %224, %228 : vector<8x8x64xf32>
    %230 = arith.addf %223, %229 : vector<8x8x64xf32>
    %c3_212 = arith.constant 3 : index
    %c6_213 = arith.constant 6 : index
    %c0_214 = arith.constant 0 : index
    %231 = vector.load %arg15[%c3_212, %c6_213, %c0_214] : memref<14x14x64xf32, #tpu.memory_space<vmem>>, vector<8x8x64xf32>
    %c3_215 = arith.constant 3 : index
    %c6_216 = arith.constant 6 : index
    %c0_217 = arith.constant 0 : index
    %c0_218 = arith.constant 0 : index
    %232 = vector.load %arg6[%c3_215, %c6_216, %c0_217, %c0_218] : memref<7x7x1x64xf32, #tpu.memory_space<vmem>>, vector<1x1x1x64xf32>
    %233 = vector.shape_cast %232 : vector<1x1x1x64xf32> to vector<1x64xf32>
    %234 = vector.shape_cast %233 : vector<1x64xf32> to vector<1x1x64xf32>
    %235 = vector.broadcast %234 : vector<1x1x64xf32> to vector<8x8x64xf32>
    %236 = arith.mulf %231, %235 : vector<8x8x64xf32>
    %237 = arith.addf %230, %236 : vector<8x8x64xf32>
    %c4_219 = arith.constant 4 : index
    %c0_220 = arith.constant 0 : index
    %c0_221 = arith.constant 0 : index
    %238 = vector.load %arg15[%c4_219, %c0_220, %c0_221] : memref<14x14x64xf32, #tpu.memory_space<vmem>>, vector<8x8x64xf32>
    %c4_222 = arith.constant 4 : index
    %c0_223 = arith.constant 0 : index
    %c0_224 = arith.constant 0 : index
    %c0_225 = arith.constant 0 : index
    %239 = vector.load %arg6[%c4_222, %c0_223, %c0_224, %c0_225] : memref<7x7x1x64xf32, #tpu.memory_space<vmem>>, vector<1x1x1x64xf32>
    %240 = vector.shape_cast %239 : vector<1x1x1x64xf32> to vector<1x64xf32>
    %241 = vector.shape_cast %240 : vector<1x64xf32> to vector<1x1x64xf32>
    %242 = vector.broadcast %241 : vector<1x1x64xf32> to vector<8x8x64xf32>
    %243 = arith.mulf %238, %242 : vector<8x8x64xf32>
    %244 = arith.addf %237, %243 : vector<8x8x64xf32>
    %c4_226 = arith.constant 4 : index
    %c1_227 = arith.constant 1 : index
    %c0_228 = arith.constant 0 : index
    %245 = vector.load %arg15[%c4_226, %c1_227, %c0_228] : memref<14x14x64xf32, #tpu.memory_space<vmem>>, vector<8x8x64xf32>
    %c4_229 = arith.constant 4 : index
    %c1_230 = arith.constant 1 : index
    %c0_231 = arith.constant 0 : index
    %c0_232 = arith.constant 0 : index
    %246 = vector.load %arg6[%c4_229, %c1_230, %c0_231, %c0_232] : memref<7x7x1x64xf32, #tpu.memory_space<vmem>>, vector<1x1x1x64xf32>
    %247 = vector.shape_cast %246 : vector<1x1x1x64xf32> to vector<1x64xf32>
    %248 = vector.shape_cast %247 : vector<1x64xf32> to vector<1x1x64xf32>
    %249 = vector.broadcast %248 : vector<1x1x64xf32> to vector<8x8x64xf32>
    %250 = arith.mulf %245, %249 : vector<8x8x64xf32>
    %251 = arith.addf %244, %250 : vector<8x8x64xf32>
    %c4_233 = arith.constant 4 : index
    %c2_234 = arith.constant 2 : index
    %c0_235 = arith.constant 0 : index
    %252 = vector.load %arg15[%c4_233, %c2_234, %c0_235] : memref<14x14x64xf32, #tpu.memory_space<vmem>>, vector<8x8x64xf32>
    %c4_236 = arith.constant 4 : index
    %c2_237 = arith.constant 2 : index
    %c0_238 = arith.constant 0 : index
    %c0_239 = arith.constant 0 : index
    %253 = vector.load %arg6[%c4_236, %c2_237, %c0_238, %c0_239] : memref<7x7x1x64xf32, #tpu.memory_space<vmem>>, vector<1x1x1x64xf32>
    %254 = vector.shape_cast %253 : vector<1x1x1x64xf32> to vector<1x64xf32>
    %255 = vector.shape_cast %254 : vector<1x64xf32> to vector<1x1x64xf32>
    %256 = vector.broadcast %255 : vector<1x1x64xf32> to vector<8x8x64xf32>
    %257 = arith.mulf %252, %256 : vector<8x8x64xf32>
    %258 = arith.addf %251, %257 : vector<8x8x64xf32>
    %c4_240 = arith.constant 4 : index
    %c3_241 = arith.constant 3 : index
    %c0_242 = arith.constant 0 : index
    %259 = vector.load %arg15[%c4_240, %c3_241, %c0_242] : memref<14x14x64xf32, #tpu.memory_space<vmem>>, vector<8x8x64xf32>
    %c4_243 = arith.constant 4 : index
    %c3_244 = arith.constant 3 : index
    %c0_245 = arith.constant 0 : index
    %c0_246 = arith.constant 0 : index
    %260 = vector.load %arg6[%c4_243, %c3_244, %c0_245, %c0_246] : memref<7x7x1x64xf32, #tpu.memory_space<vmem>>, vector<1x1x1x64xf32>
    %261 = vector.shape_cast %260 : vector<1x1x1x64xf32> to vector<1x64xf32>
    %262 = vector.shape_cast %261 : vector<1x64xf32> to vector<1x1x64xf32>
    %263 = vector.broadcast %262 : vector<1x1x64xf32> to vector<8x8x64xf32>
    %264 = arith.mulf %259, %263 : vector<8x8x64xf32>
    %265 = arith.addf %258, %264 : vector<8x8x64xf32>
    %c4_247 = arith.constant 4 : index
    %c4_248 = arith.constant 4 : index
    %c0_249 = arith.constant 0 : index
    %266 = vector.load %arg15[%c4_247, %c4_248, %c0_249] : memref<14x14x64xf32, #tpu.memory_space<vmem>>, vector<8x8x64xf32>
    %c4_250 = arith.constant 4 : index
    %c4_251 = arith.constant 4 : index
    %c0_252 = arith.constant 0 : index
    %c0_253 = arith.constant 0 : index
    %267 = vector.load %arg6[%c4_250, %c4_251, %c0_252, %c0_253] : memref<7x7x1x64xf32, #tpu.memory_space<vmem>>, vector<1x1x1x64xf32>
    %268 = vector.shape_cast %267 : vector<1x1x1x64xf32> to vector<1x64xf32>
    %269 = vector.shape_cast %268 : vector<1x64xf32> to vector<1x1x64xf32>
    %270 = vector.broadcast %269 : vector<1x1x64xf32> to vector<8x8x64xf32>
    %271 = arith.mulf %266, %270 : vector<8x8x64xf32>
    %272 = arith.addf %265, %271 : vector<8x8x64xf32>
    %c4_254 = arith.constant 4 : index
    %c5_255 = arith.constant 5 : index
    %c0_256 = arith.constant 0 : index
    %273 = vector.load %arg15[%c4_254, %c5_255, %c0_256] : memref<14x14x64xf32, #tpu.memory_space<vmem>>, vector<8x8x64xf32>
    %c4_257 = arith.constant 4 : index
    %c5_258 = arith.constant 5 : index
    %c0_259 = arith.constant 0 : index
    %c0_260 = arith.constant 0 : index
    %274 = vector.load %arg6[%c4_257, %c5_258, %c0_259, %c0_260] : memref<7x7x1x64xf32, #tpu.memory_space<vmem>>, vector<1x1x1x64xf32>
    %275 = vector.shape_cast %274 : vector<1x1x1x64xf32> to vector<1x64xf32>
    %276 = vector.shape_cast %275 : vector<1x64xf32> to vector<1x1x64xf32>
    %277 = vector.broadcast %276 : vector<1x1x64xf32> to vector<8x8x64xf32>
    %278 = arith.mulf %273, %277 : vector<8x8x64xf32>
    %279 = arith.addf %272, %278 : vector<8x8x64xf32>
    %c4_261 = arith.constant 4 : index
    %c6_262 = arith.constant 6 : index
    %c0_263 = arith.constant 0 : index
    %280 = vector.load %arg15[%c4_261, %c6_262, %c0_263] : memref<14x14x64xf32, #tpu.memory_space<vmem>>, vector<8x8x64xf32>
    %c4_264 = arith.constant 4 : index
    %c6_265 = arith.constant 6 : index
    %c0_266 = arith.constant 0 : index
    %c0_267 = arith.constant 0 : index
    %281 = vector.load %arg6[%c4_264, %c6_265, %c0_266, %c0_267] : memref<7x7x1x64xf32, #tpu.memory_space<vmem>>, vector<1x1x1x64xf32>
    %282 = vector.shape_cast %281 : vector<1x1x1x64xf32> to vector<1x64xf32>
    %283 = vector.shape_cast %282 : vector<1x64xf32> to vector<1x1x64xf32>
    %284 = vector.broadcast %283 : vector<1x1x64xf32> to vector<8x8x64xf32>
    %285 = arith.mulf %280, %284 : vector<8x8x64xf32>
    %286 = arith.addf %279, %285 : vector<8x8x64xf32>
    %c5_268 = arith.constant 5 : index
    %c0_269 = arith.constant 0 : index
    %c0_270 = arith.constant 0 : index
    %287 = vector.load %arg15[%c5_268, %c0_269, %c0_270] : memref<14x14x64xf32, #tpu.memory_space<vmem>>, vector<8x8x64xf32>
    %c5_271 = arith.constant 5 : index
    %c0_272 = arith.constant 0 : index
    %c0_273 = arith.constant 0 : index
    %c0_274 = arith.constant 0 : index
    %288 = vector.load %arg6[%c5_271, %c0_272, %c0_273, %c0_274] : memref<7x7x1x64xf32, #tpu.memory_space<vmem>>, vector<1x1x1x64xf32>
    %289 = vector.shape_cast %288 : vector<1x1x1x64xf32> to vector<1x64xf32>
    %290 = vector.shape_cast %289 : vector<1x64xf32> to vector<1x1x64xf32>
    %291 = vector.broadcast %290 : vector<1x1x64xf32> to vector<8x8x64xf32>
    %292 = arith.mulf %287, %291 : vector<8x8x64xf32>
    %293 = arith.addf %286, %292 : vector<8x8x64xf32>
    %c5_275 = arith.constant 5 : index
    %c1_276 = arith.constant 1 : index
    %c0_277 = arith.constant 0 : index
    %294 = vector.load %arg15[%c5_275, %c1_276, %c0_277] : memref<14x14x64xf32, #tpu.memory_space<vmem>>, vector<8x8x64xf32>
    %c5_278 = arith.constant 5 : index
    %c1_279 = arith.constant 1 : index
    %c0_280 = arith.constant 0 : index
    %c0_281 = arith.constant 0 : index
    %295 = vector.load %arg6[%c5_278, %c1_279, %c0_280, %c0_281] : memref<7x7x1x64xf32, #tpu.memory_space<vmem>>, vector<1x1x1x64xf32>
    %296 = vector.shape_cast %295 : vector<1x1x1x64xf32> to vector<1x64xf32>
    %297 = vector.shape_cast %296 : vector<1x64xf32> to vector<1x1x64xf32>
    %298 = vector.broadcast %297 : vector<1x1x64xf32> to vector<8x8x64xf32>
    %299 = arith.mulf %294, %298 : vector<8x8x64xf32>
    %300 = arith.addf %293, %299 : vector<8x8x64xf32>
    %c5_282 = arith.constant 5 : index
    %c2_283 = arith.constant 2 : index
    %c0_284 = arith.constant 0 : index
    %301 = vector.load %arg15[%c5_282, %c2_283, %c0_284] : memref<14x14x64xf32, #tpu.memory_space<vmem>>, vector<8x8x64xf32>
    %c5_285 = arith.constant 5 : index
    %c2_286 = arith.constant 2 : index
    %c0_287 = arith.constant 0 : index
    %c0_288 = arith.constant 0 : index
    %302 = vector.load %arg6[%c5_285, %c2_286, %c0_287, %c0_288] : memref<7x7x1x64xf32, #tpu.memory_space<vmem>>, vector<1x1x1x64xf32>
    %303 = vector.shape_cast %302 : vector<1x1x1x64xf32> to vector<1x64xf32>
    %304 = vector.shape_cast %303 : vector<1x64xf32> to vector<1x1x64xf32>
    %305 = vector.broadcast %304 : vector<1x1x64xf32> to vector<8x8x64xf32>
    %306 = arith.mulf %301, %305 : vector<8x8x64xf32>
    %307 = arith.addf %300, %306 : vector<8x8x64xf32>
    %c5_289 = arith.constant 5 : index
    %c3_290 = arith.constant 3 : index
    %c0_291 = arith.constant 0 : index
    %308 = vector.load %arg15[%c5_289, %c3_290, %c0_291] : memref<14x14x64xf32, #tpu.memory_space<vmem>>, vector<8x8x64xf32>
    %c5_292 = arith.constant 5 : index
    %c3_293 = arith.constant 3 : index
    %c0_294 = arith.constant 0 : index
    %c0_295 = arith.constant 0 : index
    %309 = vector.load %arg6[%c5_292, %c3_293, %c0_294, %c0_295] : memref<7x7x1x64xf32, #tpu.memory_space<vmem>>, vector<1x1x1x64xf32>
    %310 = vector.shape_cast %309 : vector<1x1x1x64xf32> to vector<1x64xf32>
    %311 = vector.shape_cast %310 : vector<1x64xf32> to vector<1x1x64xf32>
    %312 = vector.broadcast %311 : vector<1x1x64xf32> to vector<8x8x64xf32>
    %313 = arith.mulf %308, %312 : vector<8x8x64xf32>
    %314 = arith.addf %307, %313 : vector<8x8x64xf32>
    %c5_296 = arith.constant 5 : index
    %c4_297 = arith.constant 4 : index
    %c0_298 = arith.constant 0 : index
    %315 = vector.load %arg15[%c5_296, %c4_297, %c0_298] : memref<14x14x64xf32, #tpu.memory_space<vmem>>, vector<8x8x64xf32>
    %c5_299 = arith.constant 5 : index
    %c4_300 = arith.constant 4 : index
    %c0_301 = arith.constant 0 : index
    %c0_302 = arith.constant 0 : index
    %316 = vector.load %arg6[%c5_299, %c4_300, %c0_301, %c0_302] : memref<7x7x1x64xf32, #tpu.memory_space<vmem>>, vector<1x1x1x64xf32>
    %317 = vector.shape_cast %316 : vector<1x1x1x64xf32> to vector<1x64xf32>
    %318 = vector.shape_cast %317 : vector<1x64xf32> to vector<1x1x64xf32>
    %319 = vector.broadcast %318 : vector<1x1x64xf32> to vector<8x8x64xf32>
    %320 = arith.mulf %315, %319 : vector<8x8x64xf32>
    %321 = arith.addf %314, %320 : vector<8x8x64xf32>
    %c5_303 = arith.constant 5 : index
    %c5_304 = arith.constant 5 : index
    %c0_305 = arith.constant 0 : index
    %322 = vector.load %arg15[%c5_303, %c5_304, %c0_305] : memref<14x14x64xf32, #tpu.memory_space<vmem>>, vector<8x8x64xf32>
    %c5_306 = arith.constant 5 : index
    %c5_307 = arith.constant 5 : index
    %c0_308 = arith.constant 0 : index
    %c0_309 = arith.constant 0 : index
    %323 = vector.load %arg6[%c5_306, %c5_307, %c0_308, %c0_309] : memref<7x7x1x64xf32, #tpu.memory_space<vmem>>, vector<1x1x1x64xf32>
    %324 = vector.shape_cast %323 : vector<1x1x1x64xf32> to vector<1x64xf32>
    %325 = vector.shape_cast %324 : vector<1x64xf32> to vector<1x1x64xf32>
    %326 = vector.broadcast %325 : vector<1x1x64xf32> to vector<8x8x64xf32>
    %327 = arith.mulf %322, %326 : vector<8x8x64xf32>
    %328 = arith.addf %321, %327 : vector<8x8x64xf32>
    %c5_310 = arith.constant 5 : index
    %c6_311 = arith.constant 6 : index
    %c0_312 = arith.constant 0 : index
    %329 = vector.load %arg15[%c5_310, %c6_311, %c0_312] : memref<14x14x64xf32, #tpu.memory_space<vmem>>, vector<8x8x64xf32>
    %c5_313 = arith.constant 5 : index
    %c6_314 = arith.constant 6 : index
    %c0_315 = arith.constant 0 : index
    %c0_316 = arith.constant 0 : index
    %330 = vector.load %arg6[%c5_313, %c6_314, %c0_315, %c0_316] : memref<7x7x1x64xf32, #tpu.memory_space<vmem>>, vector<1x1x1x64xf32>
    %331 = vector.shape_cast %330 : vector<1x1x1x64xf32> to vector<1x64xf32>
    %332 = vector.shape_cast %331 : vector<1x64xf32> to vector<1x1x64xf32>
    %333 = vector.broadcast %332 : vector<1x1x64xf32> to vector<8x8x64xf32>
    %334 = arith.mulf %329, %333 : vector<8x8x64xf32>
    %335 = arith.addf %328, %334 : vector<8x8x64xf32>
    %c6_317 = arith.constant 6 : index
    %c0_318 = arith.constant 0 : index
    %c0_319 = arith.constant 0 : index
    %336 = vector.load %arg15[%c6_317, %c0_318, %c0_319] : memref<14x14x64xf32, #tpu.memory_space<vmem>>, vector<8x8x64xf32>
    %c6_320 = arith.constant 6 : index
    %c0_321 = arith.constant 0 : index
    %c0_322 = arith.constant 0 : index
    %c0_323 = arith.constant 0 : index
    %337 = vector.load %arg6[%c6_320, %c0_321, %c0_322, %c0_323] : memref<7x7x1x64xf32, #tpu.memory_space<vmem>>, vector<1x1x1x64xf32>
    %338 = vector.shape_cast %337 : vector<1x1x1x64xf32> to vector<1x64xf32>
    %339 = vector.shape_cast %338 : vector<1x64xf32> to vector<1x1x64xf32>
    %340 = vector.broadcast %339 : vector<1x1x64xf32> to vector<8x8x64xf32>
    %341 = arith.mulf %336, %340 : vector<8x8x64xf32>
    %342 = arith.addf %335, %341 : vector<8x8x64xf32>
    %c6_324 = arith.constant 6 : index
    %c1_325 = arith.constant 1 : index
    %c0_326 = arith.constant 0 : index
    %343 = vector.load %arg15[%c6_324, %c1_325, %c0_326] : memref<14x14x64xf32, #tpu.memory_space<vmem>>, vector<8x8x64xf32>
    %c6_327 = arith.constant 6 : index
    %c1_328 = arith.constant 1 : index
    %c0_329 = arith.constant 0 : index
    %c0_330 = arith.constant 0 : index
    %344 = vector.load %arg6[%c6_327, %c1_328, %c0_329, %c0_330] : memref<7x7x1x64xf32, #tpu.memory_space<vmem>>, vector<1x1x1x64xf32>
    %345 = vector.shape_cast %344 : vector<1x1x1x64xf32> to vector<1x64xf32>
    %346 = vector.shape_cast %345 : vector<1x64xf32> to vector<1x1x64xf32>
    %347 = vector.broadcast %346 : vector<1x1x64xf32> to vector<8x8x64xf32>
    %348 = arith.mulf %343, %347 : vector<8x8x64xf32>
    %349 = arith.addf %342, %348 : vector<8x8x64xf32>
    %c6_331 = arith.constant 6 : index
    %c2_332 = arith.constant 2 : index
    %c0_333 = arith.constant 0 : index
    %350 = vector.load %arg15[%c6_331, %c2_332, %c0_333] : memref<14x14x64xf32, #tpu.memory_space<vmem>>, vector<8x8x64xf32>
    %c6_334 = arith.constant 6 : index
    %c2_335 = arith.constant 2 : index
    %c0_336 = arith.constant 0 : index
    %c0_337 = arith.constant 0 : index
    %351 = vector.load %arg6[%c6_334, %c2_335, %c0_336, %c0_337] : memref<7x7x1x64xf32, #tpu.memory_space<vmem>>, vector<1x1x1x64xf32>
    %352 = vector.shape_cast %351 : vector<1x1x1x64xf32> to vector<1x64xf32>
    %353 = vector.shape_cast %352 : vector<1x64xf32> to vector<1x1x64xf32>
    %354 = vector.broadcast %353 : vector<1x1x64xf32> to vector<8x8x64xf32>
    %355 = arith.mulf %350, %354 : vector<8x8x64xf32>
    %356 = arith.addf %349, %355 : vector<8x8x64xf32>
    %c6_338 = arith.constant 6 : index
    %c3_339 = arith.constant 3 : index
    %c0_340 = arith.constant 0 : index
    %357 = vector.load %arg15[%c6_338, %c3_339, %c0_340] : memref<14x14x64xf32, #tpu.memory_space<vmem>>, vector<8x8x64xf32>
    %c6_341 = arith.constant 6 : index
    %c3_342 = arith.constant 3 : index
    %c0_343 = arith.constant 0 : index
    %c0_344 = arith.constant 0 : index
    %358 = vector.load %arg6[%c6_341, %c3_342, %c0_343, %c0_344] : memref<7x7x1x64xf32, #tpu.memory_space<vmem>>, vector<1x1x1x64xf32>
    %359 = vector.shape_cast %358 : vector<1x1x1x64xf32> to vector<1x64xf32>
    %360 = vector.shape_cast %359 : vector<1x64xf32> to vector<1x1x64xf32>
    %361 = vector.broadcast %360 : vector<1x1x64xf32> to vector<8x8x64xf32>
    %362 = arith.mulf %357, %361 : vector<8x8x64xf32>
    %363 = arith.addf %356, %362 : vector<8x8x64xf32>
    %c6_345 = arith.constant 6 : index
    %c4_346 = arith.constant 4 : index
    %c0_347 = arith.constant 0 : index
    %364 = vector.load %arg15[%c6_345, %c4_346, %c0_347] : memref<14x14x64xf32, #tpu.memory_space<vmem>>, vector<8x8x64xf32>
    %c6_348 = arith.constant 6 : index
    %c4_349 = arith.constant 4 : index
    %c0_350 = arith.constant 0 : index
    %c0_351 = arith.constant 0 : index
    %365 = vector.load %arg6[%c6_348, %c4_349, %c0_350, %c0_351] : memref<7x7x1x64xf32, #tpu.memory_space<vmem>>, vector<1x1x1x64xf32>
    %366 = vector.shape_cast %365 : vector<1x1x1x64xf32> to vector<1x64xf32>
    %367 = vector.shape_cast %366 : vector<1x64xf32> to vector<1x1x64xf32>
    %368 = vector.broadcast %367 : vector<1x1x64xf32> to vector<8x8x64xf32>
    %369 = arith.mulf %364, %368 : vector<8x8x64xf32>
    %370 = arith.addf %363, %369 : vector<8x8x64xf32>
    %c6_352 = arith.constant 6 : index
    %c5_353 = arith.constant 5 : index
    %c0_354 = arith.constant 0 : index
    %371 = vector.load %arg15[%c6_352, %c5_353, %c0_354] : memref<14x14x64xf32, #tpu.memory_space<vmem>>, vector<8x8x64xf32>
    %c6_355 = arith.constant 6 : index
    %c5_356 = arith.constant 5 : index
    %c0_357 = arith.constant 0 : index
    %c0_358 = arith.constant 0 : index
    %372 = vector.load %arg6[%c6_355, %c5_356, %c0_357, %c0_358] : memref<7x7x1x64xf32, #tpu.memory_space<vmem>>, vector<1x1x1x64xf32>
    %373 = vector.shape_cast %372 : vector<1x1x1x64xf32> to vector<1x64xf32>
    %374 = vector.shape_cast %373 : vector<1x64xf32> to vector<1x1x64xf32>
    %375 = vector.broadcast %374 : vector<1x1x64xf32> to vector<8x8x64xf32>
    %376 = arith.mulf %371, %375 : vector<8x8x64xf32>
    %377 = arith.addf %370, %376 : vector<8x8x64xf32>
    %c6_359 = arith.constant 6 : index
    %c6_360 = arith.constant 6 : index
    %c0_361 = arith.constant 0 : index
    %378 = vector.load %arg15[%c6_359, %c6_360, %c0_361] : memref<14x14x64xf32, #tpu.memory_space<vmem>>, vector<8x8x64xf32>
    %c6_362 = arith.constant 6 : index
    %c6_363 = arith.constant 6 : index
    %c0_364 = arith.constant 0 : index
    %c0_365 = arith.constant 0 : index
    %379 = vector.load %arg6[%c6_362, %c6_363, %c0_364, %c0_365] : memref<7x7x1x64xf32, #tpu.memory_space<vmem>>, vector<1x1x1x64xf32>
    %380 = vector.shape_cast %379 : vector<1x1x1x64xf32> to vector<1x64xf32>
    %381 = vector.shape_cast %380 : vector<1x64xf32> to vector<1x1x64xf32>
    %382 = vector.broadcast %381 : vector<1x1x64xf32> to vector<8x8x64xf32>
    %383 = arith.mulf %378, %382 : vector<8x8x64xf32>
    %384 = arith.addf %377, %383 : vector<8x8x64xf32>
    %cst_366 = arith.constant dense<0.000000e+00> : vector<8x8xf32>
    %385 = vector.multi_reduction <add>, %384, %cst_366 [2] : vector<8x8x64xf32> to vector<8x8xf32>
    %386 = vector.shape_cast %385 : vector<8x8xf32> to vector<8x8x1xf32>
    %387 = arith.negf %386 : vector<8x8x1xf32>
    %388 = math.exp %387 : vector<8x8x1xf32>
    %cst_367 = arith.constant 1.000000e+00 : f32
    %389 = vector.broadcast %cst_367 : f32 to vector<8x8x1xf32>
    %390 = arith.addf %389, %388 : vector<8x8x1xf32>
    %391 = arith.divf %389, %390 : vector<8x8x1xf32>
    %392 = vector.shape_cast %36 : vector<64x64xf32> to vector<8x8x64xf32>
    %393 = vector.broadcast %391 : vector<8x8x1xf32> to vector<8x8x64xf32>
    %394 = arith.mulf %392, %393 : vector<8x8x64xf32>
    %cst_368 = arith.constant 0.000000e+00 : f32
    %395 = vector.broadcast %cst_368 : f32 to vector<10x10x64xf32>
    %c0_369 = arith.constant 0 : index
    %c0_370 = arith.constant 0 : index
    %c0_371 = arith.constant 0 : index
    %396 = vector.load %arg16[%c0_369, %c0_370, %c0_371] : memref<10x10x64xf32, #tpu.memory_space<vmem>>, vector<10x10x64xf32>
    tpu.vector_store %arg16[%c0_369, %c0_370, %c0_371], %395 {strides = array<i32>} : memref<10x10x64xf32, #tpu.memory_space<vmem>>, vector<10x10x64xf32>,
    %c1_372 = arith.constant 1 : index
    %c1_373 = arith.constant 1 : index
    %c0_374 = arith.constant 0 : index
    %397 = vector.load %arg16[%c1_372, %c1_373, %c0_374] : memref<10x10x64xf32, #tpu.memory_space<vmem>>, vector<8x8x64xf32>
    tpu.vector_store %arg16[%c1_372, %c1_373, %c0_374], %394 {strides = array<i32>} : memref<10x10x64xf32, #tpu.memory_space<vmem>>, vector<8x8x64xf32>,
    %c0_375 = arith.constant 0 : index
    %c0_376 = arith.constant 0 : index
    %c0_377 = arith.constant 0 : index
    %398 = vector.load %arg16[%c0_375, %c0_376, %c0_377] : memref<10x10x64xf32, #tpu.memory_space<vmem>>, vector<8x8x64xf32>
    %399 = vector.shape_cast %398 : vector<8x8x64xf32> to vector<64x64xf32>
    %c0_378 = arith.constant 0 : index
    %c0_379 = arith.constant 0 : index
    %400 = vector.load %arg19[%c0_378, %c0_379] : memref<64x576xf32, #tpu.memory_space<vmem>>, vector<64x64xf32>
    tpu.vector_store %arg19[%c0_378, %c0_379], %399 {strides = array<i32>} : memref<64x576xf32, #tpu.memory_space<vmem>>, vector<64x64xf32>,
    %c0_380 = arith.constant 0 : index
    %c1_381 = arith.constant 1 : index
    %c0_382 = arith.constant 0 : index
    %401 = vector.load %arg16[%c0_380, %c1_381, %c0_382] : memref<10x10x64xf32, #tpu.memory_space<vmem>>, vector<8x8x64xf32>
    %402 = vector.shape_cast %401 : vector<8x8x64xf32> to vector<64x64xf32>
    %c0_383 = arith.constant 0 : index
    %c64 = arith.constant 64 : index
    %403 = vector.load %arg19[%c0_383, %c64] : memref<64x576xf32, #tpu.memory_space<vmem>>, vector<64x64xf32>
    tpu.vector_store %arg19[%c0_383, %c64], %402 {strides = array<i32>} : memref<64x576xf32, #tpu.memory_space<vmem>>, vector<64x64xf32>,
    %c0_384 = arith.constant 0 : index
    %c2_385 = arith.constant 2 : index
    %c0_386 = arith.constant 0 : index
    %404 = vector.load %arg16[%c0_384, %c2_385, %c0_386] : memref<10x10x64xf32, #tpu.memory_space<vmem>>, vector<8x8x64xf32>
    %405 = vector.shape_cast %404 : vector<8x8x64xf32> to vector<64x64xf32>
    %c0_387 = arith.constant 0 : index
    %c128 = arith.constant 128 : index
    %406 = vector.load %arg19[%c0_387, %c128] : memref<64x576xf32, #tpu.memory_space<vmem>>, vector<64x64xf32>
    tpu.vector_store %arg19[%c0_387, %c128], %405 {strides = array<i32>} : memref<64x576xf32, #tpu.memory_space<vmem>>, vector<64x64xf32>,
    %c1_388 = arith.constant 1 : index
    %c0_389 = arith.constant 0 : index
    %c0_390 = arith.constant 0 : index
    %407 = vector.load %arg16[%c1_388, %c0_389, %c0_390] : memref<10x10x64xf32, #tpu.memory_space<vmem>>, vector<8x8x64xf32>
    %408 = vector.shape_cast %407 : vector<8x8x64xf32> to vector<64x64xf32>
    %c0_391 = arith.constant 0 : index
    %c192 = arith.constant 192 : index
    %409 = vector.load %arg19[%c0_391, %c192] : memref<64x576xf32, #tpu.memory_space<vmem>>, vector<64x64xf32>
    tpu.vector_store %arg19[%c0_391, %c192], %408 {strides = array<i32>} : memref<64x576xf32, #tpu.memory_space<vmem>>, vector<64x64xf32>,
    %c1_392 = arith.constant 1 : index
    %c1_393 = arith.constant 1 : index
    %c0_394 = arith.constant 0 : index
    %410 = vector.load %arg16[%c1_392, %c1_393, %c0_394] : memref<10x10x64xf32, #tpu.memory_space<vmem>>, vector<8x8x64xf32>
    %411 = vector.shape_cast %410 : vector<8x8x64xf32> to vector<64x64xf32>
    %c0_395 = arith.constant 0 : index
    %c256 = arith.constant 256 : index
    %412 = vector.load %arg19[%c0_395, %c256] : memref<64x576xf32, #tpu.memory_space<vmem>>, vector<64x64xf32>
    tpu.vector_store %arg19[%c0_395, %c256], %411 {strides = array<i32>} : memref<64x576xf32, #tpu.memory_space<vmem>>, vector<64x64xf32>,
    %c1_396 = arith.constant 1 : index
    %c2_397 = arith.constant 2 : index
    %c0_398 = arith.constant 0 : index
    %413 = vector.load %arg16[%c1_396, %c2_397, %c0_398] : memref<10x10x64xf32, #tpu.memory_space<vmem>>, vector<8x8x64xf32>
    %414 = vector.shape_cast %413 : vector<8x8x64xf32> to vector<64x64xf32>
    %c0_399 = arith.constant 0 : index
    %c320 = arith.constant 320 : index
    %415 = vector.load %arg19[%c0_399, %c320] : memref<64x576xf32, #tpu.memory_space<vmem>>, vector<64x64xf32>
    tpu.vector_store %arg19[%c0_399, %c320], %414 {strides = array<i32>} : memref<64x576xf32, #tpu.memory_space<vmem>>, vector<64x64xf32>,
    %c2_400 = arith.constant 2 : index
    %c0_401 = arith.constant 0 : index
    %c0_402 = arith.constant 0 : index
    %416 = vector.load %arg16[%c2_400, %c0_401, %c0_402] : memref<10x10x64xf32, #tpu.memory_space<vmem>>, vector<8x8x64xf32>
    %417 = vector.shape_cast %416 : vector<8x8x64xf32> to vector<64x64xf32>
    %c0_403 = arith.constant 0 : index
    %c384 = arith.constant 384 : index
    %418 = vector.load %arg19[%c0_403, %c384] : memref<64x576xf32, #tpu.memory_space<vmem>>, vector<64x64xf32>
    tpu.vector_store %arg19[%c0_403, %c384], %417 {strides = array<i32>} : memref<64x576xf32, #tpu.memory_space<vmem>>, vector<64x64xf32>,
    %c2_404 = arith.constant 2 : index
    %c1_405 = arith.constant 1 : index
    %c0_406 = arith.constant 0 : index
    %419 = vector.load %arg16[%c2_404, %c1_405, %c0_406] : memref<10x10x64xf32, #tpu.memory_space<vmem>>, vector<8x8x64xf32>
    %420 = vector.shape_cast %419 : vector<8x8x64xf32> to vector<64x64xf32>
    %c0_407 = arith.constant 0 : index
    %c448 = arith.constant 448 : index
    %421 = vector.load %arg19[%c0_407, %c448] : memref<64x576xf32, #tpu.memory_space<vmem>>, vector<64x64xf32>
    tpu.vector_store %arg19[%c0_407, %c448], %420 {strides = array<i32>} : memref<64x576xf32, #tpu.memory_space<vmem>>, vector<64x64xf32>,
    %c2_408 = arith.constant 2 : index
    %c2_409 = arith.constant 2 : index
    %c0_410 = arith.constant 0 : index
    %422 = vector.load %arg16[%c2_408, %c2_409, %c0_410] : memref<10x10x64xf32, #tpu.memory_space<vmem>>, vector<8x8x64xf32>
    %423 = vector.shape_cast %422 : vector<8x8x64xf32> to vector<64x64xf32>
    %c0_411 = arith.constant 0 : index
    %c512 = arith.constant 512 : index
    %424 = vector.load %arg19[%c0_411, %c512] : memref<64x576xf32, #tpu.memory_space<vmem>>, vector<64x64xf32>
    tpu.vector_store %arg19[%c0_411, %c512], %423 {strides = array<i32>} : memref<64x576xf32, #tpu.memory_space<vmem>>, vector<64x64xf32>,
    %c0_412 = arith.constant 0 : index
    %c0_413 = arith.constant 0 : index
    %425 = vector.load %arg19[%c0_412, %c0_413] : memref<64x576xf32, #tpu.memory_space<vmem>>, vector<64x576xf32>
    %c0_414 = arith.constant 0 : index
    %c0_415 = arith.constant 0 : index
    %426 = vector.load %arg7[%c0_414, %c0_415] : memref<576x64xf32, #tpu.memory_space<vmem>>, vector<576x64xf32>
    %cst_416 = arith.constant dense<0.000000e+00> : vector<64x64xf32>
    %427 = tpu.matmul %425, %426, %cst_416 {dimension_numbers = #tpu.dot_dimension_numbers<[1], [0], [0], [1], [0, 0, 1, 1], [], []>} : vector<64x576xf32>, vector<576x64xf32>, vector<64x64xf32> -> vector<64x64xf32>
    %c0_417 = arith.constant 0 : index
    %c0_418 = arith.constant 0 : index
    %428 = vector.load %arg8[%c0_417, %c0_418] : memref<1x64xf32, #tpu.memory_space<vmem>>, vector<1x64xf32>
    %429 = vector.broadcast %428 : vector<1x64xf32> to vector<64x64xf32>
    %430 = arith.addf %427, %429 : vector<64x64xf32>
    %cst_419 = arith.constant 0.000000e+00 : f32
    %431 = vector.broadcast %cst_419 : f32 to vector<64x64xf32>
    %432 = arith.maximumf %430, %431 : vector<64x64xf32>
    %433 = vector.shape_cast %432 : vector<64x64xf32> to vector<8x8x64xf32>
    %cst_420 = arith.constant 0.000000e+00 : f32
    %434 = vector.broadcast %cst_420 : f32 to vector<10x10x64xf32>
    %c0_421 = arith.constant 0 : index
    %c0_422 = arith.constant 0 : index
    %c0_423 = arith.constant 0 : index
    %435 = vector.load %arg17[%c0_421, %c0_422, %c0_423] : memref<10x10x64xf32, #tpu.memory_space<vmem>>, vector<10x10x64xf32>
    tpu.vector_store %arg17[%c0_421, %c0_422, %c0_423], %434 {strides = array<i32>} : memref<10x10x64xf32, #tpu.memory_space<vmem>>, vector<10x10x64xf32>,
    %c1_424 = arith.constant 1 : index
    %c1_425 = arith.constant 1 : index
    %c0_426 = arith.constant 0 : index
    %436 = vector.load %arg17[%c1_424, %c1_425, %c0_426] : memref<10x10x64xf32, #tpu.memory_space<vmem>>, vector<8x8x64xf32>
    tpu.vector_store %arg17[%c1_424, %c1_425, %c0_426], %433 {strides = array<i32>} : memref<10x10x64xf32, #tpu.memory_space<vmem>>, vector<8x8x64xf32>,
    %c0_427 = arith.constant 0 : index
    %c0_428 = arith.constant 0 : index
    %c0_429 = arith.constant 0 : index
    %437 = vector.load %arg17[%c0_427, %c0_428, %c0_429] : memref<10x10x64xf32, #tpu.memory_space<vmem>>, vector<8x8x64xf32>
    %438 = vector.shape_cast %437 : vector<8x8x64xf32> to vector<64x64xf32>
    %c0_430 = arith.constant 0 : index
    %c0_431 = arith.constant 0 : index
    %439 = vector.load %arg20[%c0_430, %c0_431] : memref<64x576xf32, #tpu.memory_space<vmem>>, vector<64x64xf32>
    tpu.vector_store %arg20[%c0_430, %c0_431], %438 {strides = array<i32>} : memref<64x576xf32, #tpu.memory_space<vmem>>, vector<64x64xf32>,
    %c0_432 = arith.constant 0 : index
    %c1_433 = arith.constant 1 : index
    %c0_434 = arith.constant 0 : index
    %440 = vector.load %arg17[%c0_432, %c1_433, %c0_434] : memref<10x10x64xf32, #tpu.memory_space<vmem>>, vector<8x8x64xf32>
    %441 = vector.shape_cast %440 : vector<8x8x64xf32> to vector<64x64xf32>
    %c0_435 = arith.constant 0 : index
    %c64_436 = arith.constant 64 : index
    %442 = vector.load %arg20[%c0_435, %c64_436] : memref<64x576xf32, #tpu.memory_space<vmem>>, vector<64x64xf32>
    tpu.vector_store %arg20[%c0_435, %c64_436], %441 {strides = array<i32>} : memref<64x576xf32, #tpu.memory_space<vmem>>, vector<64x64xf32>,
    %c0_437 = arith.constant 0 : index
    %c2_438 = arith.constant 2 : index
    %c0_439 = arith.constant 0 : index
    %443 = vector.load %arg17[%c0_437, %c2_438, %c0_439] : memref<10x10x64xf32, #tpu.memory_space<vmem>>, vector<8x8x64xf32>
    %444 = vector.shape_cast %443 : vector<8x8x64xf32> to vector<64x64xf32>
    %c0_440 = arith.constant 0 : index
    %c128_441 = arith.constant 128 : index
    %445 = vector.load %arg20[%c0_440, %c128_441] : memref<64x576xf32, #tpu.memory_space<vmem>>, vector<64x64xf32>
    tpu.vector_store %arg20[%c0_440, %c128_441], %444 {strides = array<i32>} : memref<64x576xf32, #tpu.memory_space<vmem>>, vector<64x64xf32>,
    %c1_442 = arith.constant 1 : index
    %c0_443 = arith.constant 0 : index
    %c0_444 = arith.constant 0 : index
    %446 = vector.load %arg17[%c1_442, %c0_443, %c0_444] : memref<10x10x64xf32, #tpu.memory_space<vmem>>, vector<8x8x64xf32>
    %447 = vector.shape_cast %446 : vector<8x8x64xf32> to vector<64x64xf32>
    %c0_445 = arith.constant 0 : index
    %c192_446 = arith.constant 192 : index
    %448 = vector.load %arg20[%c0_445, %c192_446] : memref<64x576xf32, #tpu.memory_space<vmem>>, vector<64x64xf32>
    tpu.vector_store %arg20[%c0_445, %c192_446], %447 {strides = array<i32>} : memref<64x576xf32, #tpu.memory_space<vmem>>, vector<64x64xf32>,
    %c1_447 = arith.constant 1 : index
    %c1_448 = arith.constant 1 : index
    %c0_449 = arith.constant 0 : index
    %449 = vector.load %arg17[%c1_447, %c1_448, %c0_449] : memref<10x10x64xf32, #tpu.memory_space<vmem>>, vector<8x8x64xf32>
    %450 = vector.shape_cast %449 : vector<8x8x64xf32> to vector<64x64xf32>
    %c0_450 = arith.constant 0 : index
    %c256_451 = arith.constant 256 : index
    %451 = vector.load %arg20[%c0_450, %c256_451] : memref<64x576xf32, #tpu.memory_space<vmem>>, vector<64x64xf32>
    tpu.vector_store %arg20[%c0_450, %c256_451], %450 {strides = array<i32>} : memref<64x576xf32, #tpu.memory_space<vmem>>, vector<64x64xf32>,
    %c1_452 = arith.constant 1 : index
    %c2_453 = arith.constant 2 : index
    %c0_454 = arith.constant 0 : index
    %452 = vector.load %arg17[%c1_452, %c2_453, %c0_454] : memref<10x10x64xf32, #tpu.memory_space<vmem>>, vector<8x8x64xf32>
    %453 = vector.shape_cast %452 : vector<8x8x64xf32> to vector<64x64xf32>
    %c0_455 = arith.constant 0 : index
    %c320_456 = arith.constant 320 : index
    %454 = vector.load %arg20[%c0_455, %c320_456] : memref<64x576xf32, #tpu.memory_space<vmem>>, vector<64x64xf32>
    tpu.vector_store %arg20[%c0_455, %c320_456], %453 {strides = array<i32>} : memref<64x576xf32, #tpu.memory_space<vmem>>, vector<64x64xf32>,
    %c2_457 = arith.constant 2 : index
    %c0_458 = arith.constant 0 : index
    %c0_459 = arith.constant 0 : index
    %455 = vector.load %arg17[%c2_457, %c0_458, %c0_459] : memref<10x10x64xf32, #tpu.memory_space<vmem>>, vector<8x8x64xf32>
    %456 = vector.shape_cast %455 : vector<8x8x64xf32> to vector<64x64xf32>
    %c0_460 = arith.constant 0 : index
    %c384_461 = arith.constant 384 : index
    %457 = vector.load %arg20[%c0_460, %c384_461] : memref<64x576xf32, #tpu.memory_space<vmem>>, vector<64x64xf32>
    tpu.vector_store %arg20[%c0_460, %c384_461], %456 {strides = array<i32>} : memref<64x576xf32, #tpu.memory_space<vmem>>, vector<64x64xf32>,
    %c2_462 = arith.constant 2 : index
    %c1_463 = arith.constant 1 : index
    %c0_464 = arith.constant 0 : index
    %458 = vector.load %arg17[%c2_462, %c1_463, %c0_464] : memref<10x10x64xf32, #tpu.memory_space<vmem>>, vector<8x8x64xf32>
    %459 = vector.shape_cast %458 : vector<8x8x64xf32> to vector<64x64xf32>
    %c0_465 = arith.constant 0 : index
    %c448_466 = arith.constant 448 : index
    %460 = vector.load %arg20[%c0_465, %c448_466] : memref<64x576xf32, #tpu.memory_space<vmem>>, vector<64x64xf32>
    tpu.vector_store %arg20[%c0_465, %c448_466], %459 {strides = array<i32>} : memref<64x576xf32, #tpu.memory_space<vmem>>, vector<64x64xf32>,
    %c2_467 = arith.constant 2 : index
    %c2_468 = arith.constant 2 : index
    %c0_469 = arith.constant 0 : index
    %461 = vector.load %arg17[%c2_467, %c2_468, %c0_469] : memref<10x10x64xf32, #tpu.memory_space<vmem>>, vector<8x8x64xf32>
    %462 = vector.shape_cast %461 : vector<8x8x64xf32> to vector<64x64xf32>
    %c0_470 = arith.constant 0 : index
    %c512_471 = arith.constant 512 : index
    %463 = vector.load %arg20[%c0_470, %c512_471] : memref<64x576xf32, #tpu.memory_space<vmem>>, vector<64x64xf32>
    tpu.vector_store %arg20[%c0_470, %c512_471], %462 {strides = array<i32>} : memref<64x576xf32, #tpu.memory_space<vmem>>, vector<64x64xf32>,
    %c0_472 = arith.constant 0 : index
    %c0_473 = arith.constant 0 : index
    %464 = vector.load %arg20[%c0_472, %c0_473] : memref<64x576xf32, #tpu.memory_space<vmem>>, vector<64x576xf32>
    %c0_474 = arith.constant 0 : index
    %c0_475 = arith.constant 0 : index
    %465 = vector.load %arg9[%c0_474, %c0_475] : memref<576x32xf32, #tpu.memory_space<vmem>>, vector<576x32xf32>
    %cst_476 = arith.constant dense<0.000000e+00> : vector<64x32xf32>
    %466 = tpu.matmul %464, %465, %cst_476 {dimension_numbers = #tpu.dot_dimension_numbers<[1], [0], [0], [1], [0, 0, 1, 1], [], []>} : vector<64x576xf32>, vector<576x32xf32>, vector<64x32xf32> -> vector<64x32xf32>
    %c0_477 = arith.constant 0 : index
    %c0_478 = arith.constant 0 : index
    %467 = vector.load %arg10[%c0_477, %c0_478] : memref<1x32xf32, #tpu.memory_space<vmem>>, vector<1x32xf32>
    %468 = vector.broadcast %467 : vector<1x32xf32> to vector<64x32xf32>
    %469 = arith.addf %466, %468 : vector<64x32xf32>
    %cst_479 = arith.constant 0.000000e+00 : f32
    %470 = vector.broadcast %cst_479 : f32 to vector<64x32xf32>
    %471 = arith.maximumf %469, %470 : vector<64x32xf32>
    %472 = vector.shape_cast %471 : vector<64x32xf32> to vector<8x8x32xf32>
    %cst_480 = arith.constant 0.000000e+00 : f32
    %473 = vector.broadcast %cst_480 : f32 to vector<10x10x32xf32>
    %c0_481 = arith.constant 0 : index
    %c0_482 = arith.constant 0 : index
    %c0_483 = arith.constant 0 : index
    %474 = vector.load %arg18[%c0_481, %c0_482, %c0_483] : memref<10x10x32xf32, #tpu.memory_space<vmem>>, vector<10x10x32xf32>
    tpu.vector_store %arg18[%c0_481, %c0_482, %c0_483], %473 {strides = array<i32>} : memref<10x10x32xf32, #tpu.memory_space<vmem>>, vector<10x10x32xf32>,
    %c1_484 = arith.constant 1 : index
    %c1_485 = arith.constant 1 : index
    %c0_486 = arith.constant 0 : index
    %475 = vector.load %arg18[%c1_484, %c1_485, %c0_486] : memref<10x10x32xf32, #tpu.memory_space<vmem>>, vector<8x8x32xf32>
    tpu.vector_store %arg18[%c1_484, %c1_485, %c0_486], %472 {strides = array<i32>} : memref<10x10x32xf32, #tpu.memory_space<vmem>>, vector<8x8x32xf32>,
    %c0_487 = arith.constant 0 : index
    %c0_488 = arith.constant 0 : index
    %c0_489 = arith.constant 0 : index
    %476 = vector.load %arg18[%c0_487, %c0_488, %c0_489] : memref<10x10x32xf32, #tpu.memory_space<vmem>>, vector<8x8x32xf32>
    %477 = vector.shape_cast %476 : vector<8x8x32xf32> to vector<64x32xf32>
    %c0_490 = arith.constant 0 : index
    %c0_491 = arith.constant 0 : index
    %478 = vector.load %arg21[%c0_490, %c0_491] : memref<64x288xf32, #tpu.memory_space<vmem>>, vector<64x32xf32>
    tpu.vector_store %arg21[%c0_490, %c0_491], %477 {strides = array<i32>} : memref<64x288xf32, #tpu.memory_space<vmem>>, vector<64x32xf32>,
    %c0_492 = arith.constant 0 : index
    %c1_493 = arith.constant 1 : index
    %c0_494 = arith.constant 0 : index
    %479 = vector.load %arg18[%c0_492, %c1_493, %c0_494] : memref<10x10x32xf32, #tpu.memory_space<vmem>>, vector<8x8x32xf32>
    %480 = vector.shape_cast %479 : vector<8x8x32xf32> to vector<64x32xf32>
    %c0_495 = arith.constant 0 : index
    %c32 = arith.constant 32 : index
    %481 = vector.load %arg21[%c0_495, %c32] : memref<64x288xf32, #tpu.memory_space<vmem>>, vector<64x32xf32>
    tpu.vector_store %arg21[%c0_495, %c32], %480 {strides = array<i32>} : memref<64x288xf32, #tpu.memory_space<vmem>>, vector<64x32xf32>,
    %c0_496 = arith.constant 0 : index
    %c2_497 = arith.constant 2 : index
    %c0_498 = arith.constant 0 : index
    %482 = vector.load %arg18[%c0_496, %c2_497, %c0_498] : memref<10x10x32xf32, #tpu.memory_space<vmem>>, vector<8x8x32xf32>
    %483 = vector.shape_cast %482 : vector<8x8x32xf32> to vector<64x32xf32>
    %c0_499 = arith.constant 0 : index
    %c64_500 = arith.constant 64 : index
    %484 = vector.load %arg21[%c0_499, %c64_500] : memref<64x288xf32, #tpu.memory_space<vmem>>, vector<64x32xf32>
    tpu.vector_store %arg21[%c0_499, %c64_500], %483 {strides = array<i32>} : memref<64x288xf32, #tpu.memory_space<vmem>>, vector<64x32xf32>,
    %c1_501 = arith.constant 1 : index
    %c0_502 = arith.constant 0 : index
    %c0_503 = arith.constant 0 : index
    %485 = vector.load %arg18[%c1_501, %c0_502, %c0_503] : memref<10x10x32xf32, #tpu.memory_space<vmem>>, vector<8x8x32xf32>
    %486 = vector.shape_cast %485 : vector<8x8x32xf32> to vector<64x32xf32>
    %c0_504 = arith.constant 0 : index
    %c96 = arith.constant 96 : index
    %487 = vector.load %arg21[%c0_504, %c96] : memref<64x288xf32, #tpu.memory_space<vmem>>, vector<64x32xf32>
    tpu.vector_store %arg21[%c0_504, %c96], %486 {strides = array<i32>} : memref<64x288xf32, #tpu.memory_space<vmem>>, vector<64x32xf32>,
    %c1_505 = arith.constant 1 : index
    %c1_506 = arith.constant 1 : index
    %c0_507 = arith.constant 0 : index
    %488 = vector.load %arg18[%c1_505, %c1_506, %c0_507] : memref<10x10x32xf32, #tpu.memory_space<vmem>>, vector<8x8x32xf32>
    %489 = vector.shape_cast %488 : vector<8x8x32xf32> to vector<64x32xf32>
    %c0_508 = arith.constant 0 : index
    %c128_509 = arith.constant 128 : index
    %490 = vector.load %arg21[%c0_508, %c128_509] : memref<64x288xf32, #tpu.memory_space<vmem>>, vector<64x32xf32>
    tpu.vector_store %arg21[%c0_508, %c128_509], %489 {strides = array<i32>} : memref<64x288xf32, #tpu.memory_space<vmem>>, vector<64x32xf32>,
    %c1_510 = arith.constant 1 : index
    %c2_511 = arith.constant 2 : index
    %c0_512 = arith.constant 0 : index
    %491 = vector.load %arg18[%c1_510, %c2_511, %c0_512] : memref<10x10x32xf32, #tpu.memory_space<vmem>>, vector<8x8x32xf32>
    %492 = vector.shape_cast %491 : vector<8x8x32xf32> to vector<64x32xf32>
    %c0_513 = arith.constant 0 : index
    %c160 = arith.constant 160 : index
    %493 = vector.load %arg21[%c0_513, %c160] : memref<64x288xf32, #tpu.memory_space<vmem>>, vector<64x32xf32>
    tpu.vector_store %arg21[%c0_513, %c160], %492 {strides = array<i32>} : memref<64x288xf32, #tpu.memory_space<vmem>>, vector<64x32xf32>,
    %c2_514 = arith.constant 2 : index
    %c0_515 = arith.constant 0 : index
    %c0_516 = arith.constant 0 : index
    %494 = vector.load %arg18[%c2_514, %c0_515, %c0_516] : memref<10x10x32xf32, #tpu.memory_space<vmem>>, vector<8x8x32xf32>
    %495 = vector.shape_cast %494 : vector<8x8x32xf32> to vector<64x32xf32>
    %c0_517 = arith.constant 0 : index
    %c192_518 = arith.constant 192 : index
    %496 = vector.load %arg21[%c0_517, %c192_518] : memref<64x288xf32, #tpu.memory_space<vmem>>, vector<64x32xf32>
    tpu.vector_store %arg21[%c0_517, %c192_518], %495 {strides = array<i32>} : memref<64x288xf32, #tpu.memory_space<vmem>>, vector<64x32xf32>,
    %c2_519 = arith.constant 2 : index
    %c1_520 = arith.constant 1 : index
    %c0_521 = arith.constant 0 : index
    %497 = vector.load %arg18[%c2_519, %c1_520, %c0_521] : memref<10x10x32xf32, #tpu.memory_space<vmem>>, vector<8x8x32xf32>
    %498 = vector.shape_cast %497 : vector<8x8x32xf32> to vector<64x32xf32>
    %c0_522 = arith.constant 0 : index
    %c224 = arith.constant 224 : index
    %499 = vector.load %arg21[%c0_522, %c224] : memref<64x288xf32, #tpu.memory_space<vmem>>, vector<64x32xf32>
    tpu.vector_store %arg21[%c0_522, %c224], %498 {strides = array<i32>} : memref<64x288xf32, #tpu.memory_space<vmem>>, vector<64x32xf32>,
    %c2_523 = arith.constant 2 : index
    %c2_524 = arith.constant 2 : index
    %c0_525 = arith.constant 0 : index
    %500 = vector.load %arg18[%c2_523, %c2_524, %c0_525] : memref<10x10x32xf32, #tpu.memory_space<vmem>>, vector<8x8x32xf32>
    %501 = vector.shape_cast %500 : vector<8x8x32xf32> to vector<64x32xf32>
    %c0_526 = arith.constant 0 : index
    %c256_527 = arith.constant 256 : index
    %502 = vector.load %arg21[%c0_526, %c256_527] : memref<64x288xf32, #tpu.memory_space<vmem>>, vector<64x32xf32>
    tpu.vector_store %arg21[%c0_526, %c256_527], %501 {strides = array<i32>} : memref<64x288xf32, #tpu.memory_space<vmem>>, vector<64x32xf32>,
    %c0_528 = arith.constant 0 : index
    %c0_529 = arith.constant 0 : index
    %503 = vector.load %arg11[%c0_528, %c0_529] : memref<3x288xf32, #tpu.memory_space<vmem>>, vector<3x288xf32>
    %c0_530 = arith.constant 0 : index
    %c0_531 = arith.constant 0 : index
    %504 = vector.load %arg21[%c0_530, %c0_531] : memref<64x288xf32, #tpu.memory_space<vmem>>, vector<64x288xf32>
    %cst_532 = arith.constant dense<0.000000e+00> : vector<3x64xf32>
    %505 = tpu.matmul %503, %504, %cst_532 {dimension_numbers = #tpu.dot_dimension_numbers<[1], [1], [0], [0], [0, 0, 1, 0], [], []>} : vector<3x288xf32>, vector<64x288xf32>, vector<3x64xf32> -> vector<3x64xf32>
    %c0_533 = arith.constant 0 : index
    %c0_534 = arith.constant 0 : index
    %506 = vector.load %arg12[%c0_533, %c0_534] : memref<3x1xf32, #tpu.memory_space<vmem>>, vector<3x1xf32>
    %507 = vector.broadcast %506 : vector<3x1xf32> to vector<3x64xf32>
    %508 = arith.addf %505, %507 : vector<3x64xf32>
    %509 = arith.negf %508 : vector<3x64xf32>
    %510 = math.exp %509 : vector<3x64xf32>
    %cst_535 = arith.constant 1.000000e+00 : f32
    %511 = vector.broadcast %cst_535 : f32 to vector<3x64xf32>
    %512 = arith.addf %511, %510 : vector<3x64xf32>
    %513 = arith.divf %511, %512 : vector<3x64xf32>
    %c0_536 = arith.constant 0 : index
    %c0_537 = arith.constant 0 : index
    %514 = vector.load %arg13[%c0_536, %c0_537] : memref<64x10000xf32, #tpu.memory_space<vmem>>, vector<64x10000xf32>
    %cst_538 = arith.constant dense<0.000000e+00> : vector<3x10000xf32>
    %515 = tpu.matmul %513, %514, %cst_538 {dimension_numbers = #tpu.dot_dimension_numbers<[1], [0], [0], [1], [0, 0, 1, 1], [], []>} : vector<3x64xf32>, vector<64x10000xf32>, vector<3x10000xf32> -> vector<3x10000xf32>
    %c0_539 = arith.constant 0 : index
    %c0_540 = arith.constant 0 : index
    %c0_541 = arith.constant 0 : index
    %516 = vector.load %arg14[%c0_539, %c0_540, %c0_541] : memref<1x3x10000xf32, #tpu.memory_space<vmem>>, vector<1x3x10000xf32>
    %517 = vector.shape_cast %516 : vector<1x3x10000xf32> to vector<3x10000xf32>
    %518 = vector.shape_cast %515 : vector<3x10000xf32> to vector<1x3x10000xf32>
    tpu.vector_store %arg14[%c0_539, %c0_540, %c0_541], %518 {strides = array<i32>} : memref<1x3x10000xf32, #tpu.memory_space<vmem>>, vector<1x3x10000xf32>,
    return
  }
  func.func @transform_0(%arg0: i32) -> (i32, i32, i32) {
    %c0_i32 = arith.constant 0 : i32
    %c0_i32_0 = arith.constant 0 : i32
    %c0_i32_1 = arith.constant 0 : i32
    return %arg0, %c0_i32, %c0_i32_0 : i32, i32, i32
  }
  func.func @transform_1(%arg0: i32) -> (i32, i32) {
    %c0_i32 = arith.constant 0 : i32
    %c0_i32_0 = arith.constant 0 : i32
    %c0_i32_1 = arith.constant 0 : i32
    return %c0_i32, %c0_i32_0 : i32, i32
  }
  func.func @transform_2(%arg0: i32) -> (i32, i32) {
    %c0_i32 = arith.constant 0 : i32
    %c0_i32_0 = arith.constant 0 : i32
    %c0_i32_1 = arith.constant 0 : i32
    return %c0_i32, %c0_i32_0 : i32, i32
  }
  func.func @transform_3(%arg0: i32) -> (i32, i32) {
    %c0_i32 = arith.constant 0 : i32
    %c0_i32_0 = arith.constant 0 : i32
    %c0_i32_1 = arith.constant 0 : i32
    return %c0_i32, %c0_i32_0 : i32, i32
  }
  func.func @transform_4(%arg0: i32) -> (i32, i32) {
    %c0_i32 = arith.constant 0 : i32
    %c0_i32_0 = arith.constant 0 : i32
    %c0_i32_1 = arith.constant 0 : i32
    return %c0_i32, %c0_i32_0 : i32, i32
  }
  func.func @transform_5(%arg0: i32) -> (i32, i32, i32, i32) {
    %c0_i32 = arith.constant 0 : i32
    %c0_i32_0 = arith.constant 0 : i32
    %c0_i32_1 = arith.constant 0 : i32
    %c0_i32_2 = arith.constant 0 : i32
    %c0_i32_3 = arith.constant 0 : i32
    return %c0_i32, %c0_i32_0, %c0_i32_1, %c0_i32_2 : i32, i32, i32, i32
  }
  func.func @transform_6(%arg0: i32) -> (i32, i32) {
    %c0_i32 = arith.constant 0 : i32
    %c0_i32_0 = arith.constant 0 : i32
    %c0_i32_1 = arith.constant 0 : i32
    return %c0_i32, %c0_i32_0 : i32, i32
  }
  func.func @transform_7(%arg0: i32) -> (i32, i32) {
    %c0_i32 = arith.constant 0 : i32
    %c0_i32_0 = arith.constant 0 : i32
    %c0_i32_1 = arith.constant 0 : i32
    return %c0_i32, %c0_i32_0 : i32, i32
  }
  func.func @transform_8(%arg0: i32) -> (i32, i32) {
    %c0_i32 = arith.constant 0 : i32
    %c0_i32_0 = arith.constant 0 : i32
    %c0_i32_1 = arith.constant 0 : i32
    return %c0_i32, %c0_i32_0 : i32, i32
  }
  func.func @transform_9(%arg0: i32) -> (i32, i32) {
    %c0_i32 = arith.constant 0 : i32
    %c0_i32_0 = arith.constant 0 : i32
    %c0_i32_1 = arith.constant 0 : i32
    return %c0_i32, %c0_i32_0 : i32, i32
  }
  func.func @transform_10(%arg0: i32) -> (i32, i32) {
    %c0_i32 = arith.constant 0 : i32
    %c0_i32_0 = arith.constant 0 : i32
    %c0_i32_1 = arith.constant 0 : i32
    return %c0_i32, %c0_i32_0 : i32, i32
  }
  func.func @transform_11(%arg0: i32) -> (i32, i32) {
    %c0_i32 = arith.constant 0 : i32
    %c0_i32_0 = arith.constant 0 : i32
    %c0_i32_1 = arith.constant 0 : i32
    return %c0_i32, %c0_i32_0 : i32, i32
  }
  func.func @transform_12(%arg0: i32) -> (i32, i32) {
    %c0_i32 = arith.constant 0 : i32
    %c0_i32_0 = arith.constant 0 : i32
    %c0_i32_1 = arith.constant 0 : i32
    return %c0_i32, %c0_i32_0 : i32, i32
  }
  func.func @transform_13(%arg0: i32) -> (i32, i32, i32) {
    %c0_i32 = arith.constant 0 : i32
    %c0_i32_0 = arith.constant 0 : i32
    %c0_i32_1 = arith.constant 0 : i32
    return %arg0, %c0_i32, %c0_i32_0 : i32, i32, i32
  }
}

</mosaic_0001>

<llo_original>
// kernel: vision_module_forward.1
$region0: #{vision_module_forward.1}
  #allocation0 [shape = 'u32[]', space=smem, size = 0x4, offset = 0x4, fixed_abs, tag = 'smem constant byte address 0x4 - core index']
  #allocation1 [shape = 'u32[144,128]{1,0:T(1,128)}', space=vmem, size = 0x12000, scoped, tag = 'internal scratch']
  #allocation2 [shape = 'f32[14,14,64]{2,1,0:T(8,128)}', space=vmem, size = 0x1c000, scoped, tag = 'scratch operand']
  #allocation3 [shape = 'f32[10,10,64]{2,1,0:T(8,128)}', space=vmem, size = 0x14000, scoped, tag = 'scratch operand']
  #allocation4 [shape = 'f32[10,10,64]{2,1,0:T(8,128)}', space=vmem, size = 0x14000, scoped, tag = 'scratch operand']
  #allocation5 [shape = 'f32[10,10,32]{2,1,0:T(8,128)}', space=vmem, size = 0x14000, scoped, tag = 'scratch operand']
  #allocation6 [shape = 'f32[64,576]{1,0:T(8,128)}', space=vmem, size = 0x28000, scoped, tag = 'scratch operand']
  #allocation7 [shape = 'f32[64,576]{1,0:T(8,128)}', space=vmem, size = 0x28000, scoped, tag = 'scratch operand']
  #allocation8 [shape = 'f32[64,288]{1,0:T(8,128)}', space=vmem, size = 0x18000, scoped, tag = 'scratch operand']
  %s0 = inlined_call_operand.vmem [shape: f32[2,64,64], index: 0, kind: input, shape index: {}]
  %s1 = inlined_call_operand.vmem [shape: f32[64,4], index: 1, kind: input, shape index: {}]
  %s2 = inlined_call_operand.vmem [shape: f32[4,64], index: 2, kind: input, shape index: {}]
  %s3 = inlined_call_operand.vmem [shape: f32[64,4], index: 3, kind: input, shape index: {}]
  %s4 = inlined_call_operand.vmem [shape: f32[4,64], index: 4, kind: input, shape index: {}]
  %s5 = inlined_call_operand.vmem [shape: f32[7,7,1,64], index: 5, kind: input, shape index: {}]
  %s6 = inlined_call_operand.vmem [shape: f32[576,64], index: 6, kind: input, shape index: {}]
  %s7 = inlined_call_operand.vmem [shape: f32[1,64], index: 7, kind: input, shape index: {}]
  %s8 = inlined_call_operand.vmem [shape: f32[576,32], index: 8, kind: input, shape index: {}]
  %s9 = inlined_call_operand.vmem [shape: f32[1,32], index: 9, kind: input, shape index: {}]
  %s10 = inlined_call_operand.vmem [shape: f32[3,288], index: 10, kind: input, shape index: {}]
  %s11 = inlined_call_operand.vmem [shape: f32[3,1], index: 11, kind: input, shape index: {}]
  %s12 = inlined_call_operand.vmem [shape: f32[64,10000], index: 12, kind: input, shape index: {}]
  %s13 = inlined_call_operand.vmem [shape: f32[2,3,10000], index: 13, kind: output, shape index: {}]
  %s14 = sld [smem:[#allocation0]]
  $region85: #{vision_module_forward.1} parent=0
    _
  %s16 = ssub.s32 1, %s14
  %s17 = scalar_select 0, %s16, %s14
  loop: start=0, step=1, limit=4
  $region2: #{vision_module_forward.1} parent=0 // loop_pre_header
    _
  $region3: #{vision_module_forward.1} parent=0 // loop_header
    %s19 = sphi 0, %s23
    %p20 = scmp.ge.s32.totalorder %s19, 4
    %s29 = sphi 0, %s31
    %s32 = sphi 0, %s29
    %s33 = sphi 0, %s32
    %s49 = sphi 0, %s33
    %s53 = sphi 0, %s53
    %s55 = sphi 0, %s53
    %s56 = sphi 0, %s55
    %s70 = sphi 0, %s56
    %s74 = sphi 0, %s74
    %s76 = sphi 0, %s74
    %s77 = sphi 0, %s76
    %s91 = sphi 0, %s77
    %s95 = sphi 0, %s95
    %s97 = sphi 0, %s95
    %s98 = sphi 0, %s97
    %s112 = sphi 0, %s98
    %s116 = sphi 0, %s116
    %s118 = sphi 0, %s116
    %s119 = sphi 0, %s118
    %s133 = sphi 0, %s119
    %s137 = sphi 0, %s137
    %s139 = sphi 0, %s137
    %s140 = sphi 0, %s139
    %s154 = sphi 0, %s140
    %s158 = sphi 0, %s158
    %s160 = sphi 0, %s158
    %s161 = sphi 0, %s160
    %s175 = sphi 0, %s161
    %s179 = sphi 0, %s179
    %s181 = sphi 0, %s179
    %s182 = sphi 0, %s181
    %s196 = sphi 0, %s182
    %s200 = sphi 0, %s200
    %s202 = sphi 0, %s200
    %s203 = sphi 0, %s202
    %s217 = sphi 0, %s203
    %s221 = sphi 0, %s221
    %s223 = sphi 0, %s221
    %s224 = sphi 0, %s223
    %s238 = sphi 0, %s224
    %s242 = sphi 0, %s242
    %s244 = sphi 0, %s242
    %s245 = sphi 0, %s244
    %s259 = sphi 0, %s245
    %s263 = sphi 0, %s263
    %s265 = sphi 0, %s263
    %s266 = sphi 0, %s265
    %s280 = sphi 0, %s266
    %s284 = sphi 0, %s284
    %s286 = sphi 0, %s284
    %s287 = sphi 0, %s286
    %s301 = sphi 0, %s287
    %s307 = sphi 0, %s309
    %s310 = sphi 0, %s307
    %s311 = sphi 0, %s310
    %s327 = sphi 0, %s311
  $region4: #{vision_module_forward.1} parent=0 // loop_header_branch
    %22 = sbr.rel (%p20) target = $region8
  $region5: #{vision_module_forward.1} parent=0 // loop_body
    %s24 = ssub.s32 %s19, 1
    %s25 = ssub.s32 %s19, 2
    %s26 = sadd.s32 %s19, 1
    %s27 = ssub.s32 %s19, %s26
    %p28 = scmp.eq.s32.totalorder %s27, 0
    %s30 = sadd.s32 %s29, 1
    %s31 = scalar_select %p28, %s29, %s30
    %p34 = pneg %p28
    %p35 = scmp.eq.s32.totalorder %s19, 1
    %p36 = por %p34, %p35
    %p37 = scmp.ne.s32.totalorder %s29, %s32
    %p38 = scmp.eq.s32.totalorder %s19, 0
    %p39 = por %p37, %p38
    %p40 = scmp.ne.s32.totalorder %s29, %s32
    %p41 = scmp.eq.s32.totalorder %s24, 1
    %p42 = por %p40, %p41
    %p43 = scmp.ne.s32.totalorder %s32, %s33
    %p44 = scmp.eq.s32.totalorder %s24, 0
    %p45 = por %p43, %p44
    %p46 = scmp.ne.s32.totalorder %s32, %s33
    %p47 = scmp.eq.s32.totalorder %s25, 1
    %p48 = por %p46, %p47
    %p50 = scmp.ne.s32.totalorder %s33, %s49
    %p51 = scmp.eq.s32.totalorder %s25, 0
    %p52 = por %p50, %p51
    %s54 = sadd.s32 %s53, 1
    %p57 = scmp.eq.s32.totalorder %s19, 1
    %p58 = scmp.ne.s32.totalorder %s53, %s55
    %p59 = scmp.eq.s32.totalorder %s19, 0
    %p60 = por %p58, %p59
    %p61 = scmp.ne.s32.totalorder %s53, %s55
    %p62 = scmp.eq.s32.totalorder %s24, 1
    %p63 = por %p61, %p62
    %p64 = scmp.ne.s32.totalorder %s55, %s56
    %p65 = scmp.eq.s32.totalorder %s24, 0
    %p66 = por %p64, %p65
    %p67 = scmp.ne.s32.totalorder %s55, %s56
    %p68 = scmp.eq.s32.totalorder %s25, 1
    %p69 = por %p67, %p68
    %p71 = scmp.ne.s32.totalorder %s56, %s70
    %p72 = scmp.eq.s32.totalorder %s25, 0
    %p73 = por %p71, %p72
    %s75 = sadd.s32 %s74, 1
    %p78 = scmp.eq.s32.totalorder %s19, 1
    %p79 = scmp.ne.s32.totalorder %s74, %s76
    %p80 = scmp.eq.s32.totalorder %s19, 0
    %p81 = por %p79, %p80
    %p82 = scmp.ne.s32.totalorder %s74, %s76
    %p83 = scmp.eq.s32.totalorder %s24, 1
    %p84 = por %p82, %p83
    %p85 = scmp.ne.s32.totalorder %s76, %s77
    %p86 = scmp.eq.s32.totalorder %s24, 0
    %p87 = por %p85, %p86
    %p88 = scmp.ne.s32.totalorder %s76, %s77
    %p89 = scmp.eq.s32.totalorder %s25, 1
    %p90 = por %p88, %p89
    %p92 = scmp.ne.s32.totalorder %s77, %s91
    %p93 = scmp.eq.s32.totalorder %s25, 0
    %p94 = por %p92, %p93
    %s96 = sadd.s32 %s95, 1
    %p99 = scmp.eq.s32.totalorder %s19, 1
    %p100 = scmp.ne.s32.totalorder %s95, %s97
    %p101 = scmp.eq.s32.totalorder %s19, 0
    %p102 = por %p100, %p101
    %p103 = scmp.ne.s32.totalorder %s95, %s97
    %p104 = scmp.eq.s32.totalorder %s24, 1
    %p105 = por %p103, %p104
    %p106 = scmp.ne.s32.totalorder %s97, %s98
    %p107 = scmp.eq.s32.totalorder %s24, 0
    %p108 = por %p106, %p107
    %p109 = scmp.ne.s32.totalorder %s97, %s98
    %p110 = scmp.eq.s32.totalorder %s25, 1
    %p111 = por %p109, %p110
    %p113 = scmp.ne.s32.totalorder %s98, %s112
    %p114 = scmp.eq.s32.totalorder %s25, 0
    %p115 = por %p113, %p114
    %s117 = sadd.s32 %s116, 1
    %p120 = scmp.eq.s32.totalorder %s19, 1
    %p121 = scmp.ne.s32.totalorder %s116, %s118
    %p122 = scmp.eq.s32.totalorder %s19, 0
    %p123 = por %p121, %p122
    %p124 = scmp.ne.s32.totalorder %s116, %s118
    %p125 = scmp.eq.s32.totalorder %s24, 1
    %p126 = por %p124, %p125
    %p127 = scmp.ne.s32.totalorder %s118, %s119
    %p128 = scmp.eq.s32.totalorder %s24, 0
    %p129 = por %p127, %p128
    %p130 = scmp.ne.s32.totalorder %s118, %s119
    %p131 = scmp.eq.s32.totalorder %s25, 1
    %p132 = por %p130, %p131
    %p134 = scmp.ne.s32.totalorder %s119, %s133
    %p135 = scmp.eq.s32.totalorder %s25, 0
    %p136 = por %p134, %p135
    %s138 = sadd.s32 %s137, 1
    %p141 = scmp.eq.s32.totalorder %s19, 1
    %p142 = scmp.ne.s32.totalorder %s137, %s139
    %p143 = scmp.eq.s32.totalorder %s19, 0
    %p144 = por %p142, %p143
    %p145 = scmp.ne.s32.totalorder %s137, %s139
    %p146 = scmp.eq.s32.totalorder %s24, 1
    %p147 = por %p145, %p146
    %p148 = scmp.ne.s32.totalorder %s139, %s140
    %p149 = scmp.eq.s32.totalorder %s24, 0
    %p150 = por %p148, %p149
    %p151 = scmp.ne.s32.totalorder %s139, %s140
    %p152 = scmp.eq.s32.totalorder %s25, 1
    %p153 = por %p151, %p152
    %p155 = scmp.ne.s32.totalorder %s140, %s154
    %p156 = scmp.eq.s32.totalorder %s25, 0
    %p157 = por %p155, %p156
    %s159 = sadd.s32 %s158, 1
    %p162 = scmp.eq.s32.totalorder %s19, 1
    %p163 = scmp.ne.s32.totalorder %s158, %s160
    %p164 = scmp.eq.s32.totalorder %s19, 0
    %p165 = por %p163, %p164
    %p166 = scmp.ne.s32.totalorder %s158, %s160
    %p167 = scmp.eq.s32.totalorder %s24, 1
    %p168 = por %p166, %p167
    %p169 = scmp.ne.s32.totalorder %s160, %s161
    %p170 = scmp.eq.s32.totalorder %s24, 0
    %p171 = por %p169, %p170
    %p172 = scmp.ne.s32.totalorder %s160, %s161
    %p173 = scmp.eq.s32.totalorder %s25, 1
    %p174 = por %p172, %p173
    %p176 = scmp.ne.s32.totalorder %s161, %s175
    %p177 = scmp.eq.s32.totalorder %s25, 0
    %p178 = por %p176, %p177
    %s180 = sadd.s32 %s179, 1
    %p183 = scmp.eq.s32.totalorder %s19, 1
    %p184 = scmp.ne.s32.totalorder %s179, %s181
    %p185 = scmp.eq.s32.totalorder %s19, 0
    %p186 = por %p184, %p185
    %p187 = scmp.ne.s32.totalorder %s179, %s181
    %p188 = scmp.eq.s32.totalorder %s24, 1
    %p189 = por %p187, %p188
    %p190 = scmp.ne.s32.totalorder %s181, %s182
    %p191 = scmp.eq.s32.totalorder %s24, 0
    %p192 = por %p190, %p191
    %p193 = scmp.ne.s32.totalorder %s181, %s182
    %p194 = scmp.eq.s32.totalorder %s25, 1
    %p195 = por %p193, %p194
    %p197 = scmp.ne.s32.totalorder %s182, %s196
    %p198 = scmp.eq.s32.totalorder %s25, 0
    %p199 = por %p197, %p198
    %s201 = sadd.s32 %s200, 1
    %p204 = scmp.eq.s32.totalorder %s19, 1
    %p205 = scmp.ne.s32.totalorder %s200, %s202
    %p206 = scmp.eq.s32.totalorder %s19, 0
    %p207 = por %p205, %p206
    %p208 = scmp.ne.s32.totalorder %s200, %s202
    %p209 = scmp.eq.s32.totalorder %s24, 1
    %p210 = por %p208, %p209
    %p211 = scmp.ne.s32.totalorder %s202, %s203
    %p212 = scmp.eq.s32.totalorder %s24, 0
    %p213 = por %p211, %p212
    %p214 = scmp.ne.s32.totalorder %s202, %s203
    %p215 = scmp.eq.s32.totalorder %s25, 1
    %p216 = por %p214, %p215
    %p218 = scmp.ne.s32.totalorder %s203, %s217
    %p219 = scmp.eq.s32.totalorder %s25, 0
    %p220 = por %p218, %p219
    %s222 = sadd.s32 %s221, 1
    %p225 = scmp.eq.s32.totalorder %s19, 1
    %p226 = scmp.ne.s32.totalorder %s221, %s223
    %p227 = scmp.eq.s32.totalorder %s19, 0
    %p228 = por %p226, %p227
    %p229 = scmp.ne.s32.totalorder %s221, %s223
    %p230 = scmp.eq.s32.totalorder %s24, 1
    %p231 = por %p229, %p230
    %p232 = scmp.ne.s32.totalorder %s223, %s224
    %p233 = scmp.eq.s32.totalorder %s24, 0
    %p234 = por %p232, %p233
    %p235 = scmp.ne.s32.totalorder %s223, %s224
    %p236 = scmp.eq.s32.totalorder %s25, 1
    %p237 = por %p235, %p236
    %p239 = scmp.ne.s32.totalorder %s224, %s238
    %p240 = scmp.eq.s32.totalorder %s25, 0
    %p241 = por %p239, %p240
    %s243 = sadd.s32 %s242, 1
    %p246 = scmp.eq.s32.totalorder %s19, 1
    %p247 = scmp.ne.s32.totalorder %s242, %s244
    %p248 = scmp.eq.s32.totalorder %s19, 0
    %p249 = por %p247, %p248
    %p250 = scmp.ne.s32.totalorder %s242, %s244
    %p251 = scmp.eq.s32.totalorder %s24, 1
    %p252 = por %p250, %p251
    %p253 = scmp.ne.s32.totalorder %s244, %s245
    %p254 = scmp.eq.s32.totalorder %s24, 0
    %p255 = por %p253, %p254
    %p256 = scmp.ne.s32.totalorder %s244, %s245
    %p257 = scmp.eq.s32.totalorder %s25, 1
    %p258 = por %p256, %p257
    %p260 = scmp.ne.s32.totalorder %s245, %s259
    %p261 = scmp.eq.s32.totalorder %s25, 0
    %p262 = por %p260, %p261
    %s264 = sadd.s32 %s263, 1
    %p267 = scmp.eq.s32.totalorder %s19, 1
    %p268 = scmp.ne.s32.totalorder %s263, %s265
    %p269 = scmp.eq.s32.totalorder %s19, 0
    %p270 = por %p268, %p269
    %p271 = scmp.ne.s32.totalorder %s263, %s265
    %p272 = scmp.eq.s32.totalorder %s24, 1
    %p273 = por %p271, %p272
    %p274 = scmp.ne.s32.totalorder %s265, %s266
    %p275 = scmp.eq.s32.totalorder %s24, 0
    %p276 = por %p274, %p275
    %p277 = scmp.ne.s32.totalorder %s265, %s266
    %p278 = scmp.eq.s32.totalorder %s25, 1
    %p279 = por %p277, %p278
    %p281 = scmp.ne.s32.totalorder %s266, %s280
    %p282 = scmp.eq.s32.totalorder %s25, 0
    %p283 = por %p281, %p282
    %s285 = sadd.s32 %s284, 1
    %p288 = scmp.eq.s32.totalorder %s19, 1
    %p289 = scmp.ne.s32.totalorder %s284, %s286
    %p290 = scmp.eq.s32.totalorder %s19, 0
    %p291 = por %p289, %p290
    %p292 = scmp.ne.s32.totalorder %s284, %s286
    %p293 = scmp.eq.s32.totalorder %s24, 1
    %p294 = por %p292, %p293
    %p295 = scmp.ne.s32.totalorder %s286, %s287
    %p296 = scmp.eq.s32.totalorder %s24, 0
    %p297 = por %p295, %p296
    %p298 = scmp.ne.s32.totalorder %s286, %s287
    %p299 = scmp.eq.s32.totalorder %s25, 1
    %p300 = por %p298, %p299
    %p302 = scmp.ne.s32.totalorder %s287, %s301
    %p303 = scmp.eq.s32.totalorder %s25, 0
    %p304 = por %p302, %p303
    %s305 = ssub.s32 %s19, %s26
    %p306 = scmp.eq.s32.totalorder %s305, 0
    %s308 = sadd.s32 %s307, 1
    %s309 = scalar_select %p306, %s307, %s308
    %p312 = pneg %p306
    %p313 = scmp.eq.s32.totalorder %s19, 1
    %p314 = por %p312, %p313
    %p315 = scmp.ne.s32.totalorder %s307, %s310
    %p316 = scmp.eq.s32.totalorder %s19, 0
    %p317 = por %p315, %p316
    %p318 = scmp.ne.s32.totalorder %s307, %s310
    %p319 = scmp.eq.s32.totalorder %s24, 1
    %p320 = por %p318, %p319
    %p321 = scmp.ne.s32.totalorder %s310, %s311
    %p322 = scmp.eq.s32.totalorder %s24, 0
    %p323 = por %p321, %p322
    %p324 = scmp.ne.s32.totalorder %s310, %s311
    %p325 = scmp.eq.s32.totalorder %s25, 1
    %p326 = por %p324, %p325
    %p328 = scmp.ne.s32.totalorder %s311, %s327
    %p329 = scmp.eq.s32.totalorder %s25, 0
    %p330 = por %p328, %p329
    %p331 = scmp.le.s32.totalorder 1, %s19
    %p332 = scmp.lt.s32.totalorder %s19, 3
    %p333 = pnand %p331, %p332
    %p334 = pneg %p333
    // Predicated region
    $region9: #{vision_module_forward.1} parent=5 // pred_check
      _
    $region10: #{vision_module_forward.1} parent=5 // pred_check_branch
      %336 = sbr.rel (%p333) target = $region12
    $region11: #{vision_module_forward.1} parent=5 // pred_region
      %s337 = ssub.s32 %s19, 1
      // Predicated region
      $region13: #{vision_module_forward.1} parent=11 // pred_check
        %p338 = pneg %p66
      $region14: #{vision_module_forward.1} parent=11 // pred_check_branch
        %340 = sbr.rel (%p338) target = $region16
      $region15: #{vision_module_forward.1} parent=11 // pred_region
        _
      $region16: #{vision_module_forward.1} parent=11 // pred_fallthru
        _
      // Predicated region
      $region17: #{vision_module_forward.1} parent=11 // pred_check
        %p341 = pneg %p87
      $region18: #{vision_module_forward.1} parent=11 // pred_check_branch
        %343 = sbr.rel (%p341) target = $region20
      $region19: #{vision_module_forward.1} parent=11 // pred_region
        _
      $region20: #{vision_module_forward.1} parent=11 // pred_fallthru
        _
      // Predicated region
      $region21: #{vision_module_forward.1} parent=11 // pred_check
        %p344 = pneg %p108
      $region22: #{vision_module_forward.1} parent=11 // pred_check_branch
        %346 = sbr.rel (%p344) target = $region24
      $region23: #{vision_module_forward.1} parent=11 // pred_region
        _
      $region24: #{vision_module_forward.1} parent=11 // pred_fallthru
        _
      // Predicated region
      $region25: #{vision_module_forward.1} parent=11 // pred_check
        %p347 = pneg %p129
      $region26: #{vision_module_forward.1} parent=11 // pred_check_branch
        %349 = sbr.rel (%p347) target = $region28
      $region27: #{vision_module_forward.1} parent=11 // pred_region
        _
      $region28: #{vision_module_forward.1} parent=11 // pred_fallthru
        _
      // Predicated region
      $region29: #{vision_module_forward.1} parent=11 // pred_check
        %p350 = pneg %p150
      $region30: #{vision_module_forward.1} parent=11 // pred_check_branch
        %352 = sbr.rel (%p350) target = $region32
      $region31: #{vision_module_forward.1} parent=11 // pred_region
        _
      $region32: #{vision_module_forward.1} parent=11 // pred_fallthru
        _
      // Predicated region
      $region33: #{vision_module_forward.1} parent=11 // pred_check
        %p353 = pneg %p171
      $region34: #{vision_module_forward.1} parent=11 // pred_check_branch
        %355 = sbr.rel (%p353) target = $region36
      $region35: #{vision_module_forward.1} parent=11 // pred_region
        _
      $region36: #{vision_module_forward.1} parent=11 // pred_fallthru
        _
      // Predicated region
      $region37: #{vision_module_forward.1} parent=11 // pred_check
        %p356 = pneg %p192
      $region38: #{vision_module_forward.1} parent=11 // pred_check_branch
        %358 = sbr.rel (%p356) target = $region40
      $region39: #{vision_module_forward.1} parent=11 // pred_region
        _
      $region40: #{vision_module_forward.1} parent=11 // pred_fallthru
        _
      // Predicated region
      $region41: #{vision_module_forward.1} parent=11 // pred_check
        %p359 = pneg %p213
      $region42: #{vision_module_forward.1} parent=11 // pred_check_branch
        %361 = sbr.rel (%p359) target = $region44
      $region43: #{vision_module_forward.1} parent=11 // pred_region
        _
      $region44: #{vision_module_forward.1} parent=11 // pred_fallthru
        _
      // Predicated region
      $region45: #{vision_module_forward.1} parent=11 // pred_check
        %p362 = pneg %p234
      $region46: #{vision_module_forward.1} parent=11 // pred_check_branch
        %364 = sbr.rel (%p362) target = $region48
      $region47: #{vision_module_forward.1} parent=11 // pred_region
        _
      $region48: #{vision_module_forward.1} parent=11 // pred_fallthru
        _
      // Predicated region
      $region49: #{vision_module_forward.1} parent=11 // pred_check
        %p365 = pneg %p255
      $region50: #{vision_module_forward.1} parent=11 // pred_check_branch
        %367 = sbr.rel (%p365) target = $region52
      $region51: #{vision_module_forward.1} parent=11 // pred_region
        _
      $region52: #{vision_module_forward.1} parent=11 // pred_fallthru
        _
      // Predicated region
      $region53: #{vision_module_forward.1} parent=11 // pred_check
        %p368 = pneg %p276
      $region54: #{vision_module_forward.1} parent=11 // pred_check_branch
        %370 = sbr.rel (%p368) target = $region56
      $region55: #{vision_module_forward.1} parent=11 // pred_region
        _
      $region56: #{vision_module_forward.1} parent=11 // pred_fallthru
        _
      // Predicated region
      $region57: #{vision_module_forward.1} parent=11 // pred_check
        %p371 = pneg %p297
      $region58: #{vision_module_forward.1} parent=11 // pred_check_branch
        %373 = sbr.rel (%p371) target = $region60
      $region59: #{vision_module_forward.1} parent=11 // pred_region
        _
      $region60: #{vision_module_forward.1} parent=11 // pred_fallthru
        _
    $region12: #{vision_module_forward.1} parent=5 // pred_fallthru
      _
    %p374 = scmp.lt.s32.totalorder %s19, 2
    // Predicated region
    $region61: #{vision_module_forward.1} parent=5 // pred_check
      %p375 = pneg %p374
    $region62: #{vision_module_forward.1} parent=5 // pred_check_branch
      %377 = sbr.rel (%p375) target = $region64
    $region63: #{vision_module_forward.1} parent=5 // pred_region
      // Predicated region
      $region65: #{vision_module_forward.1} parent=63 // pred_check
        %p378 = pneg %p39
      $region66: #{vision_module_forward.1} parent=63 // pred_check_branch
        %380 = sbr.rel (%p378) target = $region68
      $region67: #{vision_module_forward.1} parent=63 // pred_region
        %p381 = scmp.lt.s32.totalorder %s19, 1
        %s382 = scalar_select %p381, %s19, 1
        %s383 = smul.addr %s382, 8
        %s384 = smul.addr %s383, 8
        %s385 = scalar_lea.vmem %s0, %s384
      $region68: #{vision_module_forward.1} parent=63 // pred_fallthru
        _
    $region64: #{vision_module_forward.1} parent=5 // pred_fallthru
      _
    %p386 = scmp.le.s32.totalorder 1, %s19
    %p387 = scmp.lt.s32.totalorder %s19, 3
    %p388 = pnand %p386, %p387
    %p389 = pneg %p388
    // Predicated region
    $region69: #{vision_module_forward.1} parent=5 // pred_check
      _
    $region70: #{vision_module_forward.1} parent=5 // pred_check_branch
      %391 = sbr.rel (%p388) target = $region72
    $region71: #{vision_module_forward.1} parent=5 // pred_region
      %s392 = ssub.s32 %s19, 1
      %p393 = scmp.lt.s32.totalorder %s24, 1
      %s394 = scalar_select %p393, %s24, 1
      %s395 = smul.addr %s394, 8
      %s396 = smul.addr %s395, 8
      %s397 = scalar_lea.vmem %s0, %s396
      %p398 = pneg %p45
      %p399 = pneg %p42
      %p400 = pneg %p66
      %p401 = pneg %p63
      %p402 = pneg %p87
      %p403 = pneg %p84
      %p404 = pneg %p108
      %p405 = pneg %p105
      %p406 = pneg %p129
      %p407 = pneg %p126
      %p408 = pneg %p150
      %p409 = pneg %p147
      %p410 = pneg %p171
      %p411 = pneg %p168
      %p412 = pneg %p192
      %p413 = pneg %p189
      %p414 = pneg %p213
      %p415 = pneg %p210
      %p416 = pneg %p234
      %p417 = pneg %p231
      %p418 = pneg %p255
      %p419 = pneg %p252
      %p420 = pneg %p276
      %p421 = pneg %p273
      %p422 = pneg %p297
      %p423 = pneg %p294
      %p424 = pneg %p323
      %p425 = pneg %p320
      %p426 = scmp.lt.s32.totalorder %s24, 1
      %s427 = scalar_select %p426, %s24, 1
      %s428 = smul.addr %s427, 79
      %s429 = smul.addr %s428, 4
      %s430 = scalar_lea.vmem %s13, %s429
      %p431 = scmp.lt.s32.totalorder %s24, 1
      %s432 = scalar_select %p431, %s24, 1
      %s433 = smul.addr %s432, 8
      %s434 = smul.addr %s433, 8
      %s435 = scalar_lea.vmem %s0, %s434
      %p436 = scmp.lt.s32.totalorder %s24, 1
      %s437 = scalar_select %p436, %s24, 1
      %s438 = smul.addr %s437, 79
      %s439 = smul.addr %s438, 4
      %s440 = scalar_lea.vmem %s13, %s439
      %v441 = vld [vmem:[%s435] sm:$0xff]
      %v442 = vld [vmem:[%s435 + $0x8] sm:$0xff]
      %v443 = vld [vmem:[%s435 + $0x10] sm:$0xff]
      %v444 = vld [vmem:[%s435 + $0x18] sm:$0xff]
      %v445 = vld [vmem:[%s435 + $0x20] sm:$0xff]
      %v446 = vld [vmem:[%s435 + $0x28] sm:$0xff]
      %v447 = vld [vmem:[%s435 + $0x30] sm:$0xff]
      %v448 = vld [vmem:[%s435 + $0x38] sm:$0xff]
      %449 = vxpose.xlu0.b32.start [1/16] %v441, 128
      %450 = vxpose.xlu0.b32.cont [2/16] %v442, 128
      %451 = vxpose.xlu0.b32.cont [3/16] %v443, 128
      %452 = vxpose.xlu0.b32.cont [4/16] %v444, 128
      %453 = vxpose.xlu0.b32.cont [5/16] %v445, 128
      %454 = vxpose.xlu0.b32.cont [6/16] %v446, 128
      %455 = vxpose.xlu0.b32.cont [7/16] %v447, 128
      %456 = vxpose.xlu0.b32.cont [8/16] %v448, 128
      %457 = vxpose.xlu0.b32.cont [9/16] 0.0, 128
      %458 = vxpose.xlu0.b32.cont [10/16] 0.0, 128
      %459 = vxpose.xlu0.b32.cont [11/16] 0.0, 128
      %460 = vxpose.xlu0.b32.cont [12/16] 0.0, 128
      %461 = vxpose.xlu0.b32.cont [13/16] 0.0, 128
      %462 = vxpose.xlu0.b32.cont [14/16] 0.0, 128
      %463 = vxpose.xlu0.b32.cont [15/16] 0.0, 128
      %464 = vxpose.xlu0.b32.end [16/16] 0.0, 128
      %v465 = vpop.trf.xlu0
      %v466 = vpop.trf.xlu0
      %v467 = vpop.trf.xlu0
      %v468 = vpop.trf.xlu0
      %v469 = vpop.trf.xlu0
      %v470 = vpop.trf.xlu0
      %v471 = vpop.trf.xlu0
      %v472 = vpop.trf.xlu0
      %v473 = vpop.trf.xlu0
      %v474 = vpop.trf.xlu0
      %v475 = vpop.trf.xlu0
      %v476 = vpop.trf.xlu0
      %v477 = vpop.trf.xlu0
      %v478 = vpop.trf.xlu0
      %v479 = vpop.trf.xlu0
      %v480 = vpop.trf.xlu0
      %vm481 = vcmask 523264
      %v482 = vsel %vm481, %v465, 0.0
      %v483 = vsel %vm481, %v466, 0.0
      %v484 = vadd.f32 %v482, %v483
      %v485 = vsel %vm481, %v467, 0.0
      %v486 = vadd.f32 %v484, %v485
      %v487 = vsel %vm481, %v468, 0.0
      %v488 = vadd.f32 %v486, %v487
      %v489 = vsel %vm481, %v469, 0.0
      %v490 = vadd.f32 %v488, %v489
      %v491 = vsel %vm481, %v470, 0.0
      %v492 = vadd.f32 %v490, %v491
      %v493 = vsel %vm481, %v471, 0.0
      %v494 = vadd.f32 %v492, %v493
      %v495 = vsel %vm481, %v472, 0.0
      %v496 = vadd.f32 %v494, %v495
      %v497 = vrot.slane %v496, 4
      %v498 = vadd.f32 %v496, %v497
      %v499 = vrot.slane %v498, 2
      %v500 = vadd.f32 %v498, %v499
      %v501 = vrot.slane %v500, 1
      %v502 = vadd.f32 %v500, %v501
      %v503 = vrcp.pop 64.0
      %v504 = vmul.f32 %v502, %v503
      %v505 = vld [vmem:[%s1] sm:$0xff]
      %v506 = vld [vmem:[%s1 + $0x8] sm:$0xff]
      %v507 = vld [vmem:[%s1 + $0x10] sm:$0xff]
      %v508 = vld [vmem:[%s1 + $0x18] sm:$0xff]
      %v509 = vld [vmem:[%s1 + $0x20] sm:$0xff]
      %v510 = vld [vmem:[%s1 + $0x28] sm:$0xff]
      %v511 = vld [vmem:[%s1 + $0x30] sm:$0xff]
      %v512 = vld [vmem:[%s1 + $0x38] sm:$0xff]
      %v514 = vsel %vm481, %v504, 0
      %516 = vmatprep.subr.mxu0 0.0
      %517 = vmatpush1.msra.mxu0 %v505
      %518 = vmatprep.subr.mxu0 0.0
      %519 = vmatpush1.msra.mxu0 %v506
      %520 = vmatprep.subr.mxu0 0.0
      %521 = vmatpush1.msra.mxu0 %v507
      %522 = vmatprep.subr.mxu0 0.0
      %523 = vmatpush1.msra.mxu0 %v508
      %524 = vmatprep.subr.mxu0 0.0
      %525 = vmatpush1.msra.mxu0 %v509
      %526 = vmatprep.subr.mxu0 0.0
      %527 = vmatpush1.msra.mxu0 %v510
      %528 = vmatprep.subr.mxu0 0.0
      %529 = vmatpush1.msra.mxu0 %v511
      %530 = vmatprep.subr.mxu0 0.0
      %531 = vmatpush1.msra.mxu0 %v512
      %532 = vmatprep.subr.mxu0 0.0
      %533 = vmatpush1.msra.mxu0 0.0
      %534 = vmatprep.subr.mxu0 0.0
      %535 = vmatpush1.msra.mxu0 0.0
      %536 = vmatprep.subr.mxu0 0.0
      %537 = vmatpush1.msra.mxu0 0.0
      %538 = vmatprep.subr.mxu0 0.0
      %539 = vmatpush1.msra.mxu0 0.0
      %540 = vmatprep.subr.mxu0 0.0
      %541 = vmatpush1.msra.mxu0 0.0
      %542 = vmatprep.subr.mxu0 0.0
      %543 = vmatpush1.msra.mxu0 0.0
      %544 = vmatprep.subr.mxu0 0.0
      %545 = vmatpush1.msra.mxu0 0.0
      %546 = vmatprep.subr.mxu0 0.0
      %547 = vmatpush1.msra.mxu0 0.0
      %548 = vmatprep.subr.mxu0 0.0
      %549 = vmatpush1.msra.mxu0 0.0
      %550 = vmatprep.subr.mxu0 0.0
      %551 = vmatpush1.msra.mxu0 0.0
      %552 = vmatprep.subr.mxu0 0.0
      %553 = vmatpush1.msra.mxu0 0.0
      %554 = vmatprep.subr.mxu0 0.0
      %555 = vmatpush1.msra.mxu0 0.0
      %556 = vmatprep.subr.mxu0 0.0
      %557 = vmatpush1.msra.mxu0 0.0
      %558 = vmatprep.subr.mxu0 0.0
      %559 = vmatpush1.msra.mxu0 0.0
      %560 = vmatprep.subr.mxu0 0.0
      %561 = vmatpush1.msra.mxu0 0.0
      %562 = vmatprep.subr.mxu0 0.0
      %563 = vmatpush1.msra.mxu0 0.0
      %564 = vmatprep.subr.mxu0 0.0
      %565 = vmatpush1.msra.mxu0 0.0
      %566 = vmatprep.subr.mxu0 0.0
      %567 = vmatpush1.msra.mxu0 0.0
      %568 = vmatprep.subr.mxu0 0.0
      %569 = vmatpush1.msra.mxu0 0.0
      %570 = vmatprep.subr.mxu0 0.0
      %571 = vmatpush1.msra.mxu0 0.0
      %572 = vmatprep.subr.mxu0 0.0
      %573 = vmatpush1.msra.mxu0 0.0
      %574 = vmatprep.subr.mxu0 0.0
      %575 = vmatpush1.msra.mxu0 0.0
      %576 = vmatprep.subr.mxu0 0.0
      %577 = vmatpush1.msra.mxu0 0.0
      %578 = vmatprep.subr.mxu0 0.0
      %579 = vmatpush1.msra.mxu0 0.0
      %580 = vmatprep.mubr.f32.mxu0 0.0
      %581 = vmatmul.mubr.f32.gmra.mrb[0].mxu0 %v514
      %v582 = vpop.f32.mrb[0].mxu0
      %v583 = vadd.f32 0.0, %v582
      %v584 = vpop.f32.mrb[0].mxu0
      %585 = vdwg.mxu0
      %v586 = vmax.f32 %v583, 0.0
      %v587 = vld [vmem:[%s2] sm:$0xf]
      %vm588 = vcmask 31744
      %v590 = vsel %vm588, %v586, 0
      %vm592 = vcmask 1043456
      %v594 = vsel %vm592, %v587, 0
      %596 = vmatprep.subr.mxu0 0.0
      %597 = vmatpush1.msra.mxu0 %v594
      %598 = vmatprep.subr.mxu0 0.0
      %599 = vmatpush1.msra.mxu0 0.0
      %600 = vmatprep.subr.mxu0 0.0
      %601 = vmatpush1.msra.mxu0 0.0
      %602 = vmatprep.subr.mxu0 0.0
      %603 = vmatpush1.msra.mxu0 0.0
      %604 = vmatprep.subr.mxu0 0.0
      %605 = vmatpush1.msra.mxu0 0.0
      %606 = vmatprep.subr.mxu0 0.0
      %607 = vmatpush1.msra.mxu0 0.0
      %608 = vmatprep.subr.mxu0 0.0
      %609 = vmatpush1.msra.mxu0 0.0
      %610 = vmatprep.subr.mxu0 0.0
      %611 = vmatpush1.msra.mxu0 0.0
      %612 = vmatprep.subr.mxu0 0.0
      %613 = vmatpush1.msra.mxu0 0.0
      %614 = vmatprep.subr.mxu0 0.0
      %615 = vmatpush1.msra.mxu0 0.0
      %616 = vmatprep.subr.mxu0 0.0
      %617 = vmatpush1.msra.mxu0 0.0
      %618 = vmatprep.subr.mxu0 0.0
      %619 = vmatpush1.msra.mxu0 0.0
      %620 = vmatprep.subr.mxu0 0.0
      %621 = vmatpush1.msra.mxu0 0.0
      %622 = vmatprep.subr.mxu0 0.0
      %623 = vmatpush1.msra.mxu0 0.0
      %624 = vmatprep.subr.mxu0 0.0
      %625 = vmatpush1.msra.mxu0 0.0
      %626 = vmatprep.subr.mxu0 0.0
      %627 = vmatpush1.msra.mxu0 0.0
      %628 = vmatprep.subr.mxu0 0.0
      %629 = vmatpush1.msra.mxu0 0.0
      %630 = vmatprep.subr.mxu0 0.0
      %631 = vmatpush1.msra.mxu0 0.0
      %632 = vmatprep.subr.mxu0 0.0
      %633 = vmatpush1.msra.mxu0 0.0
      %634 = vmatprep.subr.mxu0 0.0
      %635 = vmatpush1.msra.mxu0 0.0
      %636 = vmatprep.subr.mxu0 0.0
      %637 = vmatpush1.msra.mxu0 0.0
      %638 = vmatprep.subr.mxu0 0.0
      %639 = vmatpush1.msra.mxu0 0.0
      %640 = vmatprep.subr.mxu0 0.0
      %641 = vmatpush1.msra.mxu0 0.0
      %642 = vmatprep.subr.mxu0 0.0
      %643 = vmatpush1.msra.mxu0 0.0
      %644 = vmatprep.subr.mxu0 0.0
      %645 = vmatpush1.msra.mxu0 0.0
      %646 = vmatprep.subr.mxu0 0.0
      %647 = vmatpush1.msra.mxu0 0.0
      %648 = vmatprep.subr.mxu0 0.0
      %649 = vmatpush1.msra.mxu0 0.0
      %650 = vmatprep.subr.mxu0 0.0
      %651 = vmatpush1.msra.mxu0 0.0
      %652 = vmatprep.subr.mxu0 0.0
      %653 = vmatpush1.msra.mxu0 0.0
      %654 = vmatprep.subr.mxu0 0.0
      %655 = vmatpush1.msra.mxu0 0.0
      %656 = vmatprep.subr.mxu0 0.0
      %657 = vmatpush1.msra.mxu0 0.0
      %658 = vmatprep.subr.mxu0 0.0
      %659 = vmatpush1.msra.mxu0 0.0
      %660 = vmatprep.mubr.f32.mxu0 0.0
      %661 = vmatmul.mubr.f32.gmra.mrb[0].mxu0 %v590
      %v662 = vpop.f32.mrb[0].mxu0
      %v663 = vadd.f32 0.0, %v662
      %v664 = vpop.f32.mrb[0].mxu0
      %665 = vdwg.mxu0
      %v666 = vxor.u32 %v663, 2147483648
      %v667 = vmul.f32 %v666, 1.442695
      %v668 = vpow.pop %v667
      %v669 = vadd.f32 %v668, 1.0
      %v670 = vrcp.pop %v669
      %v671 = vmul.f32 1.0, %v670
      %v672 = vlaneseq
      %v673 = vshrl.u32 %v672, 7
      %v674 = vsub.s32 0, %v673
      %v675 = vrot.slane %v671, %v674
      %v676 = vmul.f32 %v465, %v675
      %v677 = vmul.f32 %v466, %v675
      %v678 = vmul.f32 %v467, %v675
      %v679 = vmul.f32 %v468, %v675
      %v680 = vmul.f32 %v469, %v675
      %v681 = vmul.f32 %v470, %v675
      %v682 = vmul.f32 %v471, %v675
      %v683 = vmul.f32 %v472, %v675
      %v684 = vsel %vm481, %v676, 0.0
      %v685 = vsel %vm481, %v677, 0.0
      %v686 = vadd.f32 %v684, %v685
      %v687 = vsel %vm481, %v678, 0.0
      %v688 = vadd.f32 %v686, %v687
      %v689 = vsel %vm481, %v679, 0.0
      %v690 = vadd.f32 %v688, %v689
      %v691 = vsel %vm481, %v680, 0.0
      %v692 = vadd.f32 %v690, %v691
      %v693 = vsel %vm481, %v681, 0.0
      %v694 = vadd.f32 %v692, %v693
      %v695 = vsel %vm481, %v682, 0.0
      %v696 = vadd.f32 %v694, %v695
      %v697 = vsel %vm481, %v683, 0.0
      %v698 = vadd.f32 %v696, %v697
      %v699 = vrot.slane %v698, 4
      %v700 = vadd.f32 %v698, %v699
      %v701 = vrot.slane %v700, 2
      %v702 = vadd.f32 %v700, %v701
      %v703 = vrot.slane %v702, 1
      %v704 = vadd.f32 %v702, %v703
      %v705 = vmul.f32 %v704, %v503
      %v706 = vld [vmem:[%s3] sm:$0xff]
      %v707 = vld [vmem:[%s3 + $0x8] sm:$0xff]
      %v708 = vld [vmem:[%s3 + $0x10] sm:$0xff]
      %v709 = vld [vmem:[%s3 + $0x18] sm:$0xff]
      %v710 = vld [vmem:[%s3 + $0x20] sm:$0xff]
      %v711 = vld [vmem:[%s3 + $0x28] sm:$0xff]
      %v712 = vld [vmem:[%s3 + $0x30] sm:$0xff]
      %v713 = vld [vmem:[%s3 + $0x38] sm:$0xff]
      %v715 = vsel %vm481, %v705, 0
      %717 = vmatprep.subr.mxu0 0.0
      %718 = vmatpush1.msra.mxu0 %v706
      %719 = vmatprep.subr.mxu0 0.0
      %720 = vmatpush1.msra.mxu0 %v707
      %721 = vmatprep.subr.mxu0 0.0
      %722 = vmatpush1.msra.mxu0 %v708
      %723 = vmatprep.subr.mxu0 0.0
      %724 = vmatpush1.msra.mxu0 %v709
      %725 = vmatprep.subr.mxu0 0.0
      %726 = vmatpush1.msra.mxu0 %v710
      %727 = vmatprep.subr.mxu0 0.0
      %728 = vmatpush1.msra.mxu0 %v711
      %729 = vmatprep.subr.mxu0 0.0
      %730 = vmatpush1.msra.mxu0 %v712
      %731 = vmatprep.subr.mxu0 0.0
      %732 = vmatpush1.msra.mxu0 %v713
      %733 = vmatprep.subr.mxu0 0.0
      %734 = vmatpush1.msra.mxu0 0.0
      %735 = vmatprep.subr.mxu0 0.0
      %736 = vmatpush1.msra.mxu0 0.0
      %737 = vmatprep.subr.mxu0 0.0
      %738 = vmatpush1.msra.mxu0 0.0
      %739 = vmatprep.subr.mxu0 0.0
      %740 = vmatpush1.msra.mxu0 0.0
      %741 = vmatprep.subr.mxu0 0.0
      %742 = vmatpush1.msra.mxu0 0.0
      %743 = vmatprep.subr.mxu0 0.0
      %744 = vmatpush1.msra.mxu0 0.0
      %745 = vmatprep.subr.mxu0 0.0
      %746 = vmatpush1.msra.mxu0 0.0
      %747 = vmatprep.subr.mxu0 0.0
      %748 = vmatpush1.msra.mxu0 0.0
      %749 = vmatprep.subr.mxu0 0.0
      %750 = vmatpush1.msra.mxu0 0.0
      %751 = vmatprep.subr.mxu0 0.0
      %752 = vmatpush1.msra.mxu0 0.0
      %753 = vmatprep.subr.mxu0 0.0
      %754 = vmatpush1.msra.mxu0 0.0
      %755 = vmatprep.subr.mxu0 0.0
      %756 = vmatpush1.msra.mxu0 0.0
      %757 = vmatprep.subr.mxu0 0.0
      %758 = vmatpush1.msra.mxu0 0.0
      %759 = vmatprep.subr.mxu0 0.0
      %760 = vmatpush1.msra.mxu0 0.0
      %761 = vmatprep.subr.mxu0 0.0
      %762 = vmatpush1.msra.mxu0 0.0
      %763 = vmatprep.subr.mxu0 0.0
      %764 = vmatpush1.msra.mxu0 0.0
      %765 = vmatprep.subr.mxu0 0.0
      %766 = vmatpush1.msra.mxu0 0.0
      %767 = vmatprep.subr.mxu0 0.0
      %768 = vmatpush1.msra.mxu0 0.0
      %769 = vmatprep.subr.mxu0 0.0
      %770 = vmatpush1.msra.mxu0 0.0
      %771 = vmatprep.subr.mxu0 0.0
      %772 = vmatpush1.msra.mxu0 0.0
      %773 = vmatprep.subr.mxu0 0.0
      %774 = vmatpush1.msra.mxu0 0.0
      %775 = vmatprep.subr.mxu0 0.0
      %776 = vmatpush1.msra.mxu0 0.0
      %777 = vmatprep.subr.mxu0 0.0
      %778 = vmatpush1.msra.mxu0 0.0
      %779 = vmatprep.subr.mxu0 0.0
      %780 = vmatpush1.msra.mxu0 0.0
      %781 = vmatprep.mubr.f32.mxu0 0.0
      %782 = vmatmul.mubr.f32.gmra.mrb[0].mxu0 %v715
      %v783 = vpop.f32.mrb[0].mxu0
      %v784 = vadd.f32 0.0, %v783
      %v785 = vpop.f32.mrb[0].mxu0
      %786 = vdwg.mxu0
      %v787 = vmax.f32 %v784, 0.0
      %v788 = vld [vmem:[%s4] sm:$0xf]
      %v790 = vsel %vm588, %v787, 0
      %v793 = vsel %vm592, %v788, 0
      %795 = vmatprep.subr.mxu0 0.0
      %796 = vmatpush1.msra.mxu0 %v793
      %797 = vmatprep.subr.mxu0 0.0
      %798 = vmatpush1.msra.mxu0 0.0
      %799 = vmatprep.subr.mxu0 0.0
      %800 = vmatpush1.msra.mxu0 0.0
      %801 = vmatprep.subr.mxu0 0.0
      %802 = vmatpush1.msra.mxu0 0.0
      %803 = vmatprep.subr.mxu0 0.0
      %804 = vmatpush1.msra.mxu0 0.0
      %805 = vmatprep.subr.mxu0 0.0
      %806 = vmatpush1.msra.mxu0 0.0
      %807 = vmatprep.subr.mxu0 0.0
      %808 = vmatpush1.msra.mxu0 0.0
      %809 = vmatprep.subr.mxu0 0.0
      %810 = vmatpush1.msra.mxu0 0.0
      %811 = vmatprep.subr.mxu0 0.0
      %812 = vmatpush1.msra.mxu0 0.0
      %813 = vmatprep.subr.mxu0 0.0
      %814 = vmatpush1.msra.mxu0 0.0
      %815 = vmatprep.subr.mxu0 0.0
      %816 = vmatpush1.msra.mxu0 0.0
      %817 = vmatprep.subr.mxu0 0.0
      %818 = vmatpush1.msra.mxu0 0.0
      %819 = vmatprep.subr.mxu0 0.0
      %820 = vmatpush1.msra.mxu0 0.0
      %821 = vmatprep.subr.mxu0 0.0
      %822 = vmatpush1.msra.mxu0 0.0
      %823 = vmatprep.subr.mxu0 0.0
      %824 = vmatpush1.msra.mxu0 0.0
      %825 = vmatprep.subr.mxu0 0.0
      %826 = vmatpush1.msra.mxu0 0.0
      %827 = vmatprep.subr.mxu0 0.0
      %828 = vmatpush1.msra.mxu0 0.0
      %829 = vmatprep.subr.mxu0 0.0
      %830 = vmatpush1.msra.mxu0 0.0
      %831 = vmatprep.subr.mxu0 0.0
      %832 = vmatpush1.msra.mxu0 0.0
      %833 = vmatprep.subr.mxu0 0.0
      %834 = vmatpush1.msra.mxu0 0.0
      %835 = vmatprep.subr.mxu0 0.0
      %836 = vmatpush1.msra.mxu0 0.0
      %837 = vmatprep.subr.mxu0 0.0
      %838 = vmatpush1.msra.mxu0 0.0
      %839 = vmatprep.subr.mxu0 0.0
      %840 = vmatpush1.msra.mxu0 0.0
      %841 = vmatprep.subr.mxu0 0.0
      %842 = vmatpush1.msra.mxu0 0.0
      %843 = vmatprep.subr.mxu0 0.0
      %844 = vmatpush1.msra.mxu0 0.0
      %845 = vmatprep.subr.mxu0 0.0
      %846 = vmatpush1.msra.mxu0 0.0
      %847 = vmatprep.subr.mxu0 0.0
      %848 = vmatpush1.msra.mxu0 0.0
      %849 = vmatprep.subr.mxu0 0.0
      %850 = vmatpush1.msra.mxu0 0.0
      %851 = vmatprep.subr.mxu0 0.0
      %852 = vmatpush1.msra.mxu0 0.0
      %853 = vmatprep.subr.mxu0 0.0
      %854 = vmatpush1.msra.mxu0 0.0
      %855 = vmatprep.subr.mxu0 0.0
      %856 = vmatpush1.msra.mxu0 0.0
      %857 = vmatprep.subr.mxu0 0.0
      %858 = vmatpush1.msra.mxu0 0.0
      %859 = vmatprep.mubr.f32.mxu0 0.0
      %860 = vmatmul.mubr.f32.gmra.mrb[0].mxu0 %v790
      %v861 = vpop.f32.mrb[0].mxu0
      %v862 = vadd.f32 0.0, %v861
      %v863 = vpop.f32.mrb[0].mxu0
      %864 = vdwg.mxu0
      %v865 = vxor.u32 %v862, 2147483648
      %v866 = vmul.f32 %v865, 1.442695
      %v867 = vpow.pop %v866
      %v868 = vadd.f32 %v867, 1.0
      %v869 = vrcp.pop %v868
      %v870 = vmul.f32 1.0, %v869
      %v871 = vlaneseq
      %v872 = vshrl.u32 %v871, 7
      %v873 = vsub.s32 0, %v872
      %v874 = vrot.slane %v870, %v873
      %v875 = vmul.f32 %v676, %v874
      %v876 = vmul.f32 %v677, %v874
      %v877 = vmul.f32 %v678, %v874
      %v878 = vmul.f32 %v679, %v874
      %v879 = vmul.f32 %v680, %v874
      %v880 = vmul.f32 %v681, %v874
      %v881 = vmul.f32 %v682, %v874
      %v882 = vmul.f32 %v683, %v874
      %883 = vst.msk [vmem:[#allocation2] sm:$0xff] %vm481, 0.0
      %vm884 = vcmask 521216
      %885 = vst.msk [vmem:[#allocation2 + $0x8] sm:$0x3f] %vm884, 0.0
      %886 = vst.msk [vmem:[#allocation2 + $0x10] sm:$0xff] %vm481, 0.0
      %887 = vst.msk [vmem:[#allocation2 + $0x18] sm:$0x3f] %vm884, 0.0
      %888 = vst.msk [vmem:[#allocation2 + $0x20] sm:$0xff] %vm481, 0.0
      %889 = vst.msk [vmem:[#allocation2 + $0x28] sm:$0x3f] %vm884, 0.0
      %890 = vst.msk [vmem:[#allocation2 + $0x30] sm:$0xff] %vm481, 0.0
      %891 = vst.msk [vmem:[#allocation2 + $0x38] sm:$0x3f] %vm884, 0.0
      %892 = vst.msk [vmem:[#allocation2 + $0x40] sm:$0xff] %vm481, 0.0
      %893 = vst.msk [vmem:[#allocation2 + $0x48] sm:$0x3f] %vm884, 0.0
      %894 = vst.msk [vmem:[#allocation2 + $0x50] sm:$0xff] %vm481, 0.0
      %895 = vst.msk [vmem:[#allocation2 + $0x58] sm:$0x3f] %vm884, 0.0
      %896 = vst.msk [vmem:[#allocation2 + $0x60] sm:$0xff] %vm481, 0.0
      %897 = vst.msk [vmem:[#allocation2 + $0x68] sm:$0x3f] %vm884, 0.0
      %898 = vst.msk [vmem:[#allocation2 + $0x70] sm:$0xff] %vm481, 0.0
      %899 = vst.msk [vmem:[#allocation2 + $0x78] sm:$0x3f] %vm884, 0.0
      %900 = vst.msk [vmem:[#allocation2 + $0x80] sm:$0xff] %vm481, 0.0
      %901 = vst.msk [vmem:[#allocation2 + $0x88] sm:$0x3f] %vm884, 0.0
      %902 = vst.msk [vmem:[#allocation2 + $0x90] sm:$0xff] %vm481, 0.0
      %903 = vst.msk [vmem:[#allocation2 + $0x98] sm:$0x3f] %vm884, 0.0
      %904 = vst.msk [vmem:[#allocation2 + $0xa0] sm:$0xff] %vm481, 0.0
      %905 = vst.msk [vmem:[#allocation2 + $0xa8] sm:$0x3f] %vm884, 0.0
      %906 = vst.msk [vmem:[#allocation2 + $0xb0] sm:$0xff] %vm481, 0.0
      %907 = vst.msk [vmem:[#allocation2 + $0xb8] sm:$0x3f] %vm884, 0.0
      %908 = vst.msk [vmem:[#allocation2 + $0xc0] sm:$0xff] %vm481, 0.0
      %909 = vst.msk [vmem:[#allocation2 + $0xc8] sm:$0x3f] %vm884, 0.0
      %910 = vst.msk [vmem:[#allocation2 + $0xd0] sm:$0xff] %vm481, 0.0
      %911 = vst.msk [vmem:[#allocation2 + $0xd8] sm:$0x3f] %vm884, 0.0
      %s912 = scalar_lea.vmem [#allocation2], 48
      %913 = vst.msk [vmem:[%s912 + $0x3] sm:$0xff] %vm481, %v676
      %914 = vst.msk [vmem:[%s912 + $0x13] sm:$0xff] %vm481, %v677
      %915 = vst.msk [vmem:[%s912 + $0x23] sm:$0xff] %vm481, %v678
      %916 = vst.msk [vmem:[%s912 + $0x33] sm:$0xff] %vm481, %v679
      %917 = vst.msk [vmem:[%s912 + $0x43] sm:$0xff] %vm481, %v680
      %918 = vst.msk [vmem:[%s912 + $0x53] sm:$0xff] %vm481, %v681
      %919 = vst.msk [vmem:[%s912 + $0x63] sm:$0xff] %vm481, %v682
      %920 = vst.msk [vmem:[%s912 + $0x73] sm:$0xff] %vm481, %v683
      %v921 = vld [vmem:[#allocation2] sm:$0xff]
      %v922 = vld [vmem:[#allocation2 + $0x10] sm:$0xff]
      %v923 = vld [vmem:[#allocation2 + $0x20] sm:$0xff]
      %v924 = vld [vmem:[#allocation2 + $0x30] sm:$0xff]
      %v925 = vld [vmem:[#allocation2 + $0x40] sm:$0xff]
      %v926 = vld [vmem:[#allocation2 + $0x50] sm:$0xff]
      %v927 = vld [vmem:[#allocation2 + $0x60] sm:$0xff]
      %v928 = vld [vmem:[#allocation2 + $0x70] sm:$0xff]
      %v929 = vld [vmem:[%s5] sm:$0x1]
      %v931 = vlaneseq
      %v932 = vshrl.u32 %v931, 7
      %v933 = vsub.s32 0, %v932
      %v934 = vrot.slane %v929, %v933
      %v936 = vmul.f32 %v921, %v934
      %v937 = vmul.f32 %v922, %v934
      %v938 = vmul.f32 %v923, %v934
      %v939 = vmul.f32 %v924, %v934
      %v940 = vmul.f32 %v925, %v934
      %v941 = vmul.f32 %v926, %v934
      %v942 = vmul.f32 %v927, %v934
      %v943 = vmul.f32 %v928, %v934
      %v944 = vadd.f32 %v936, 0.0
      %v945 = vadd.f32 %v937, 0.0
      %v946 = vadd.f32 %v938, 0.0
      %v947 = vadd.f32 %v939, 0.0
      %v948 = vadd.f32 %v940, 0.0
      %v949 = vadd.f32 %v941, 0.0
      %v950 = vadd.f32 %v942, 0.0
      %v951 = vadd.f32 %v943, 0.0
      %v952 = vld [vmem:[#allocation2 + $0x1] sm:$0xff]
      %v953 = vld [vmem:[#allocation2 + $0x11] sm:$0xff]
      %v954 = vld [vmem:[#allocation2 + $0x21] sm:$0xff]
      %v955 = vld [vmem:[#allocation2 + $0x31] sm:$0xff]
      %v956 = vld [vmem:[#allocation2 + $0x41] sm:$0xff]
      %v957 = vld [vmem:[#allocation2 + $0x51] sm:$0xff]
      %v958 = vld [vmem:[#allocation2 + $0x61] sm:$0xff]
      %v959 = vld [vmem:[#allocation2 + $0x71] sm:$0xff]
      %s960 = scalar_lea.vmem %s5, 1
      %v961 = vld [vmem:[%s960] sm:$0x1]
      %v963 = vlaneseq
      %v964 = vshrl.u32 %v963, 7
      %v965 = vsub.s32 0, %v964
      %v966 = vrot.slane %v961, %v965
      %v968 = vmul.f32 %v952, %v966
      %v969 = vmul.f32 %v953, %v966
      %v970 = vmul.f32 %v954, %v966
      %v971 = vmul.f32 %v955, %v966
      %v972 = vmul.f32 %v956, %v966
      %v973 = vmul.f32 %v957, %v966
      %v974 = vmul.f32 %v958, %v966
      %v975 = vmul.f32 %v959, %v966
      %v976 = vadd.f32 %v944, %v968
      %v977 = vadd.f32 %v945, %v969
      %v978 = vadd.f32 %v946, %v970
      %v979 = vadd.f32 %v947, %v971
      %v980 = vadd.f32 %v948, %v972
      %v981 = vadd.f32 %v949, %v973
      %v982 = vadd.f32 %v950, %v974
      %v983 = vadd.f32 %v951, %v975
      %v984 = vld [vmem:[#allocation2 + $0x2] sm:$0xff]
      %v985 = vld [vmem:[#allocation2 + $0x12] sm:$0xff]
      %v986 = vld [vmem:[#allocation2 + $0x22] sm:$0xff]
      %v987 = vld [vmem:[#allocation2 + $0x32] sm:$0xff]
      %v988 = vld [vmem:[#allocation2 + $0x42] sm:$0xff]
      %v989 = vld [vmem:[#allocation2 + $0x52] sm:$0xff]
      %v990 = vld [vmem:[#allocation2 + $0x62] sm:$0xff]
      %v991 = vld [vmem:[#allocation2 + $0x72] sm:$0xff]
      %s992 = scalar_lea.vmem %s5, 2
      %v993 = vld [vmem:[%s992] sm:$0x1]
      %v995 = vlaneseq
      %v996 = vshrl.u32 %v995, 7
      %v997 = vsub.s32 0, %v996
      %v998 = vrot.slane %v993, %v997
      %v1000 = vmul.f32 %v984, %v998
      %v1001 = vmul.f32 %v985, %v998
      %v1002 = vmul.f32 %v986, %v998
      %v1003 = vmul.f32 %v987, %v998
      %v1004 = vmul.f32 %v988, %v998
      %v1005 = vmul.f32 %v989, %v998
      %v1006 = vmul.f32 %v990, %v998
      %v1007 = vmul.f32 %v991, %v998
      %v1008 = vadd.f32 %v976, %v1000
      %v1009 = vadd.f32 %v977, %v1001
      %v1010 = vadd.f32 %v978, %v1002
      %v1011 = vadd.f32 %v979, %v1003
      %v1012 = vadd.f32 %v980, %v1004
      %v1013 = vadd.f32 %v981, %v1005
      %v1014 = vadd.f32 %v982, %v1006
      %v1015 = vadd.f32 %v983, %v1007
      %v1016 = vld [vmem:[#allocation2 + $0x3] sm:$0xff]
      %v1017 = vld [vmem:[#allocation2 + $0x13] sm:$0xff]
      %v1018 = vld [vmem:[#allocation2 + $0x23] sm:$0xff]
      %v1019 = vld [vmem:[#allocation2 + $0x33] sm:$0xff]
      %v1020 = vld [vmem:[#allocation2 + $0x43] sm:$0xff]
      %v1021 = vld [vmem:[#allocation2 + $0x53] sm:$0xff]
      %v1022 = vld [vmem:[#allocation2 + $0x63] sm:$0xff]
      %v1023 = vld [vmem:[#allocation2 + $0x73] sm:$0xff]
      %s1024 = scalar_lea.vmem %s5, 3
      %v1025 = vld [vmem:[%s1024] sm:$0x1]
      %v1027 = vlaneseq
      %v1028 = vshrl.u32 %v1027, 7
      %v1029 = vsub.s32 0, %v1028
      %v1030 = vrot.slane %v1025, %v1029
      %v1032 = vmul.f32 %v1016, %v1030
      %v1033 = vmul.f32 %v1017, %v1030
      %v1034 = vmul.f32 %v1018, %v1030
      %v1035 = vmul.f32 %v1019, %v1030
      %v1036 = vmul.f32 %v1020, %v1030
      %v1037 = vmul.f32 %v1021, %v1030
      %v1038 = vmul.f32 %v1022, %v1030
      %v1039 = vmul.f32 %v1023, %v1030
      %v1040 = vadd.f32 %v1008, %v1032
      %v1041 = vadd.f32 %v1009, %v1033
      %v1042 = vadd.f32 %v1010, %v1034
      %v1043 = vadd.f32 %v1011, %v1035
      %v1044 = vadd.f32 %v1012, %v1036
      %v1045 = vadd.f32 %v1013, %v1037
      %v1046 = vadd.f32 %v1014, %v1038
      %v1047 = vadd.f32 %v1015, %v1039
      %v1048 = vld [vmem:[#allocation2 + $0x4] sm:$0xff]
      %v1049 = vld [vmem:[#allocation2 + $0x14] sm:$0xff]
      %v1050 = vld [vmem:[#allocation2 + $0x24] sm:$0xff]
      %v1051 = vld [vmem:[#allocation2 + $0x34] sm:$0xff]
      %v1052 = vld [vmem:[#allocation2 + $0x44] sm:$0xff]
      %v1053 = vld [vmem:[#allocation2 + $0x54] sm:$0xff]
      %v1054 = vld [vmem:[#allocation2 + $0x64] sm:$0xff]
      %v1055 = vld [vmem:[#allocation2 + $0x74] sm:$0xff]
      %s1056 = scalar_lea.vmem %s5, 4
      %v1057 = vld [vmem:[%s1056] sm:$0x1]
      %v1059 = vlaneseq
      %v1060 = vshrl.u32 %v1059, 7
      %v1061 = vsub.s32 0, %v1060
      %v1062 = vrot.slane %v1057, %v1061
      %v1064 = vmul.f32 %v1048, %v1062
      %v1065 = vmul.f32 %v1049, %v1062
      %v1066 = vmul.f32 %v1050, %v1062
      %v1067 = vmul.f32 %v1051, %v1062
      %v1068 = vmul.f32 %v1052, %v1062
      %v1069 = vmul.f32 %v1053, %v1062
      %v1070 = vmul.f32 %v1054, %v1062
      %v1071 = vmul.f32 %v1055, %v1062
      %v1072 = vadd.f32 %v1040, %v1064
      %v1073 = vadd.f32 %v1041, %v1065
      %v1074 = vadd.f32 %v1042, %v1066
      %v1075 = vadd.f32 %v1043, %v1067
      %v1076 = vadd.f32 %v1044, %v1068
      %v1077 = vadd.f32 %v1045, %v1069
      %v1078 = vadd.f32 %v1046, %v1070
      %v1079 = vadd.f32 %v1047, %v1071
      %v1080 = vld [vmem:[#allocation2 + $0x5] sm:$0xff]
      %v1081 = vld [vmem:[#allocation2 + $0x15] sm:$0xff]
      %v1082 = vld [vmem:[#allocation2 + $0x25] sm:$0xff]
      %v1083 = vld [vmem:[#allocation2 + $0x35] sm:$0xff]
      %v1084 = vld [vmem:[#allocation2 + $0x45] sm:$0xff]
      %v1085 = vld [vmem:[#allocation2 + $0x55] sm:$0xff]
      %v1086 = vld [vmem:[#allocation2 + $0x65] sm:$0xff]
      %v1087 = vld [vmem:[#allocation2 + $0x75] sm:$0xff]
      %s1088 = scalar_lea.vmem %s5, 5
      %v1089 = vld [vmem:[%s1088] sm:$0x1]
      %v1091 = vlaneseq
      %v1092 = vshrl.u32 %v1091, 7
      %v1093 = vsub.s32 0, %v1092
      %v1094 = vrot.slane %v1089, %v1093
      %v1096 = vmul.f32 %v1080, %v1094
      %v1097 = vmul.f32 %v1081, %v1094
      %v1098 = vmul.f32 %v1082, %v1094
      %v1099 = vmul.f32 %v1083, %v1094
      %v1100 = vmul.f32 %v1084, %v1094
      %v1101 = vmul.f32 %v1085, %v1094
      %v1102 = vmul.f32 %v1086, %v1094
      %v1103 = vmul.f32 %v1087, %v1094
      %v1104 = vadd.f32 %v1072, %v1096
      %v1105 = vadd.f32 %v1073, %v1097
      %v1106 = vadd.f32 %v1074, %v1098
      %v1107 = vadd.f32 %v1075, %v1099
      %v1108 = vadd.f32 %v1076, %v1100
      %v1109 = vadd.f32 %v1077, %v1101
      %v1110 = vadd.f32 %v1078, %v1102
      %v1111 = vadd.f32 %v1079, %v1103
      %v1112 = vld [vmem:[#allocation2 + $0x6] sm:$0xff]
      %v1113 = vld [vmem:[#allocation2 + $0x16] sm:$0xff]
      %v1114 = vld [vmem:[#allocation2 + $0x26] sm:$0xff]
      %v1115 = vld [vmem:[#allocation2 + $0x36] sm:$0xff]
      %v1116 = vld [vmem:[#allocation2 + $0x46] sm:$0xff]
      %v1117 = vld [vmem:[#allocation2 + $0x56] sm:$0xff]
      %v1118 = vld [vmem:[#allocation2 + $0x66] sm:$0xff]
      %v1119 = vld [vmem:[#allocation2 + $0x76] sm:$0xff]
      %s1120 = scalar_lea.vmem %s5, 6
      %v1121 = vld [vmem:[%s1120] sm:$0x1]
      %v1123 = vlaneseq
      %v1124 = vshrl.u32 %v1123, 7
      %v1125 = vsub.s32 0, %v1124
      %v1126 = vrot.slane %v1121, %v1125
      %v1128 = vmul.f32 %v1112, %v1126
      %v1129 = vmul.f32 %v1113, %v1126
      %v1130 = vmul.f32 %v1114, %v1126
      %v1131 = vmul.f32 %v1115, %v1126
      %v1132 = vmul.f32 %v1116, %v1126
      %v1133 = vmul.f32 %v1117, %v1126
      %v1134 = vmul.f32 %v1118, %v1126
      %v1135 = vmul.f32 %v1119, %v1126
      %v1136 = vadd.f32 %v1104, %v1128
      %v1137 = vadd.f32 %v1105, %v1129
      %v1138 = vadd.f32 %v1106, %v1130
      %v1139 = vadd.f32 %v1107, %v1131
      %v1140 = vadd.f32 %v1108, %v1132
      %v1141 = vadd.f32 %v1109, %v1133
      %v1142 = vadd.f32 %v1110, %v1134
      %v1143 = vadd.f32 %v1111, %v1135
      %s1144 = scalar_lea.vmem [#allocation2], 16
      %v1145 = vld [vmem:[%s1144] sm:$0xff]
      %v1146 = vld [vmem:[%s1144 + $0x10] sm:$0xff]
      %v1147 = vld [vmem:[%s1144 + $0x20] sm:$0xff]
      %v1148 = vld [vmem:[%s1144 + $0x30] sm:$0xff]
      %v1149 = vld [vmem:[%s1144 + $0x40] sm:$0xff]
      %v1150 = vld [vmem:[%s1144 + $0x50] sm:$0xff]
      %v1151 = vld [vmem:[%s1144 + $0x60] sm:$0xff]
      %v1152 = vld [vmem:[%s1144 + $0x70] sm:$0xff]
      %s1153 = scalar_lea.vmem %s5, 7
      %v1154 = vld [vmem:[%s1153] sm:$0x1]
      %v1156 = vlaneseq
      %v1157 = vshrl.u32 %v1156, 7
      %v1158 = vsub.s32 0, %v1157
      %v1159 = vrot.slane %v1154, %v1158
      %v1161 = vmul.f32 %v1145, %v1159
      %v1162 = vmul.f32 %v1146, %v1159
      %v1163 = vmul.f32 %v1147, %v1159
      %v1164 = vmul.f32 %v1148, %v1159
      %v1165 = vmul.f32 %v1149, %v1159
      %v1166 = vmul.f32 %v1150, %v1159
      %v1167 = vmul.f32 %v1151, %v1159
      %v1168 = vmul.f32 %v1152, %v1159
      %v1169 = vadd.f32 %v1136, %v1161
      %v1170 = vadd.f32 %v1137, %v1162
      %v1171 = vadd.f32 %v1138, %v1163
      %v1172 = vadd.f32 %v1139, %v1164
      %v1173 = vadd.f32 %v1140, %v1165
      %v1174 = vadd.f32 %v1141, %v1166
      %v1175 = vadd.f32 %v1142, %v1167
      %v1176 = vadd.f32 %v1143, %v1168
      %v1177 = vld [vmem:[%s1144 + $0x1] sm:$0xff]
      %v1178 = vld [vmem:[%s1144 + $0x11] sm:$0xff]
      %v1179 = vld [vmem:[%s1144 + $0x21] sm:$0xff]
      %v1180 = vld [vmem:[%s1144 + $0x31] sm:$0xff]
      %v1181 = vld [vmem:[%s1144 + $0x41] sm:$0xff]
      %v1182 = vld [vmem:[%s1144 + $0x51] sm:$0xff]
      %v1183 = vld [vmem:[%s1144 + $0x61] sm:$0xff]
      %v1184 = vld [vmem:[%s1144 + $0x71] sm:$0xff]
      %s1185 = scalar_lea.vmem %s5, 8
      %v1186 = vld [vmem:[%s1185] sm:$0x1]
      %v1188 = vlaneseq
      %v1189 = vshrl.u32 %v1188, 7
      %v1190 = vsub.s32 0, %v1189
      %v1191 = vrot.slane %v1186, %v1190
      %v1193 = vmul.f32 %v1177, %v1191
      %v1194 = vmul.f32 %v1178, %v1191
      %v1195 = vmul.f32 %v1179, %v1191
      %v1196 = vmul.f32 %v1180, %v1191
      %v1197 = vmul.f32 %v1181, %v1191
      %v1198 = vmul.f32 %v1182, %v1191
      %v1199 = vmul.f32 %v1183, %v1191
      %v1200 = vmul.f32 %v1184, %v1191
      %v1201 = vadd.f32 %v1169, %v1193
      %v1202 = vadd.f32 %v1170, %v1194
      %v1203 = vadd.f32 %v1171, %v1195
      %v1204 = vadd.f32 %v1172, %v1196
      %v1205 = vadd.f32 %v1173, %v1197
      %v1206 = vadd.f32 %v1174, %v1198
      %v1207 = vadd.f32 %v1175, %v1199
      %v1208 = vadd.f32 %v1176, %v1200
      %v1209 = vld [vmem:[%s1144 + $0x2] sm:$0xff]
      %v1210 = vld [vmem:[%s1144 + $0x12] sm:$0xff]
      %v1211 = vld [vmem:[%s1144 + $0x22] sm:$0xff]
      %v1212 = vld [vmem:[%s1144 + $0x32] sm:$0xff]
      %v1213 = vld [vmem:[%s1144 + $0x42] sm:$0xff]
      %v1214 = vld [vmem:[%s1144 + $0x52] sm:$0xff]
      %v1215 = vld [vmem:[%s1144 + $0x62] sm:$0xff]
      %v1216 = vld [vmem:[%s1144 + $0x72] sm:$0xff]
      %s1217 = scalar_lea.vmem %s5, 9
      %v1218 = vld [vmem:[%s1217] sm:$0x1]
      %v1220 = vlaneseq
      %v1221 = vshrl.u32 %v1220, 7
      %v1222 = vsub.s32 0, %v1221
      %v1223 = vrot.slane %v1218, %v1222
      %v1225 = vmul.f32 %v1209, %v1223
      %v1226 = vmul.f32 %v1210, %v1223
      %v1227 = vmul.f32 %v1211, %v1223
      %v1228 = vmul.f32 %v1212, %v1223
      %v1229 = vmul.f32 %v1213, %v1223
      %v1230 = vmul.f32 %v1214, %v1223
      %v1231 = vmul.f32 %v1215, %v1223
      %v1232 = vmul.f32 %v1216, %v1223
      %v1233 = vadd.f32 %v1201, %v1225
      %v1234 = vadd.f32 %v1202, %v1226
      %v1235 = vadd.f32 %v1203, %v1227
      %v1236 = vadd.f32 %v1204, %v1228
      %v1237 = vadd.f32 %v1205, %v1229
      %v1238 = vadd.f32 %v1206, %v1230
      %v1239 = vadd.f32 %v1207, %v1231
      %v1240 = vadd.f32 %v1208, %v1232
      %v1241 = vld [vmem:[%s1144 + $0x3] sm:$0xff]
      %v1242 = vld [vmem:[%s1144 + $0x13] sm:$0xff]
      %v1243 = vld [vmem:[%s1144 + $0x23] sm:$0xff]
      %v1244 = vld [vmem:[%s1144 + $0x33] sm:$0xff]
      %v1245 = vld [vmem:[%s1144 + $0x43] sm:$0xff]
      %v1246 = vld [vmem:[%s1144 + $0x53] sm:$0xff]
      %v1247 = vld [vmem:[%s1144 + $0x63] sm:$0xff]
      %v1248 = vld [vmem:[%s1144 + $0x73] sm:$0xff]
      %s1249 = scalar_lea.vmem %s5, 10
      %v1250 = vld [vmem:[%s1249] sm:$0x1]
      %v1252 = vlaneseq
      %v1253 = vshrl.u32 %v1252, 7
      %v1254 = vsub.s32 0, %v1253
      %v1255 = vrot.slane %v1250, %v1254
      %v1257 = vmul.f32 %v1241, %v1255
      %v1258 = vmul.f32 %v1242, %v1255
      %v1259 = vmul.f32 %v1243, %v1255
      %v1260 = vmul.f32 %v1244, %v1255
      %v1261 = vmul.f32 %v1245, %v1255
      %v1262 = vmul.f32 %v1246, %v1255
      %v1263 = vmul.f32 %v1247, %v1255
      %v1264 = vmul.f32 %v1248, %v1255
      %v1265 = vadd.f32 %v1233, %v1257
      %v1266 = vadd.f32 %v1234, %v1258
      %v1267 = vadd.f32 %v1235, %v1259
      %v1268 = vadd.f32 %v1236, %v1260
      %v1269 = vadd.f32 %v1237, %v1261
      %v1270 = vadd.f32 %v1238, %v1262
      %v1271 = vadd.f32 %v1239, %v1263
      %v1272 = vadd.f32 %v1240, %v1264
      %v1273 = vld [vmem:[%s1144 + $0x4] sm:$0xff]
      %v1274 = vld [vmem:[%s1144 + $0x14] sm:$0xff]
      %v1275 = vld [vmem:[%s1144 + $0x24] sm:$0xff]
      %v1276 = vld [vmem:[%s1144 + $0x34] sm:$0xff]
      %v1277 = vld [vmem:[%s1144 + $0x44] sm:$0xff]
      %v1278 = vld [vmem:[%s1144 + $0x54] sm:$0xff]
      %v1279 = vld [vmem:[%s1144 + $0x64] sm:$0xff]
      %v1280 = vld [vmem:[%s1144 + $0x74] sm:$0xff]
      %s1281 = scalar_lea.vmem %s5, 11
      %v1282 = vld [vmem:[%s1281] sm:$0x1]
      %v1284 = vlaneseq
      %v1285 = vshrl.u32 %v1284, 7
      %v1286 = vsub.s32 0, %v1285
      %v1287 = vrot.slane %v1282, %v1286
      %v1289 = vmul.f32 %v1273, %v1287
      %v1290 = vmul.f32 %v1274, %v1287
      %v1291 = vmul.f32 %v1275, %v1287
      %v1292 = vmul.f32 %v1276, %v1287
      %v1293 = vmul.f32 %v1277, %v1287
      %v1294 = vmul.f32 %v1278, %v1287
      %v1295 = vmul.f32 %v1279, %v1287
      %v1296 = vmul.f32 %v1280, %v1287
      %v1297 = vadd.f32 %v1265, %v1289
      %v1298 = vadd.f32 %v1266, %v1290
      %v1299 = vadd.f32 %v1267, %v1291
      %v1300 = vadd.f32 %v1268, %v1292
      %v1301 = vadd.f32 %v1269, %v1293
      %v1302 = vadd.f32 %v1270, %v1294
      %v1303 = vadd.f32 %v1271, %v1295
      %v1304 = vadd.f32 %v1272, %v1296
      %v1305 = vld [vmem:[%s1144 + $0x5] sm:$0xff]
      %v1306 = vld [vmem:[%s1144 + $0x15] sm:$0xff]
      %v1307 = vld [vmem:[%s1144 + $0x25] sm:$0xff]
      %v1308 = vld [vmem:[%s1144 + $0x35] sm:$0xff]
      %v1309 = vld [vmem:[%s1144 + $0x45] sm:$0xff]
      %v1310 = vld [vmem:[%s1144 + $0x55] sm:$0xff]
      %v1311 = vld [vmem:[%s1144 + $0x65] sm:$0xff]
      %v1312 = vld [vmem:[%s1144 + $0x75] sm:$0xff]
      %s1313 = scalar_lea.vmem %s5, 12
      %v1314 = vld [vmem:[%s1313] sm:$0x1]
      %v1316 = vlaneseq
      %v1317 = vshrl.u32 %v1316, 7
      %v1318 = vsub.s32 0, %v1317
      %v1319 = vrot.slane %v1314, %v1318
      %v1321 = vmul.f32 %v1305, %v1319
      %v1322 = vmul.f32 %v1306, %v1319
      %v1323 = vmul.f32 %v1307, %v1319
      %v1324 = vmul.f32 %v1308, %v1319
      %v1325 = vmul.f32 %v1309, %v1319
      %v1326 = vmul.f32 %v1310, %v1319
      %v1327 = vmul.f32 %v1311, %v1319
      %v1328 = vmul.f32 %v1312, %v1319
      %v1329 = vadd.f32 %v1297, %v1321
      %v1330 = vadd.f32 %v1298, %v1322
      %v1331 = vadd.f32 %v1299, %v1323
      %v1332 = vadd.f32 %v1300, %v1324
      %v1333 = vadd.f32 %v1301, %v1325
      %v1334 = vadd.f32 %v1302, %v1326
      %v1335 = vadd.f32 %v1303, %v1327
      %v1336 = vadd.f32 %v1304, %v1328
      %v1337 = vld [vmem:[%s1144 + $0x6] sm:$0xff]
      %v1338 = vld [vmem:[%s1144 + $0x16] sm:$0xff]
      %v1339 = vld [vmem:[%s1144 + $0x26] sm:$0xff]
      %v1340 = vld [vmem:[%s1144 + $0x36] sm:$0xff]
      %v1341 = vld [vmem:[%s1144 + $0x46] sm:$0xff]
      %v1342 = vld [vmem:[%s1144 + $0x56] sm:$0xff]
      %v1343 = vld [vmem:[%s1144 + $0x66] sm:$0xff]
      %v1344 = vld [vmem:[%s1144 + $0x76] sm:$0xff]
      %s1345 = scalar_lea.vmem %s5, 13
      %v1346 = vld [vmem:[%s1345] sm:$0x1]
      %v1348 = vlaneseq
      %v1349 = vshrl.u32 %v1348, 7
      %v1350 = vsub.s32 0, %v1349
      %v1351 = vrot.slane %v1346, %v1350
      %v1353 = vmul.f32 %v1337, %v1351
      %v1354 = vmul.f32 %v1338, %v1351
      %v1355 = vmul.f32 %v1339, %v1351
      %v1356 = vmul.f32 %v1340, %v1351
      %v1357 = vmul.f32 %v1341, %v1351
      %v1358 = vmul.f32 %v1342, %v1351
      %v1359 = vmul.f32 %v1343, %v1351
      %v1360 = vmul.f32 %v1344, %v1351
      %v1361 = vadd.f32 %v1329, %v1353
      %v1362 = vadd.f32 %v1330, %v1354
      %v1363 = vadd.f32 %v1331, %v1355
      %v1364 = vadd.f32 %v1332, %v1356
      %v1365 = vadd.f32 %v1333, %v1357
      %v1366 = vadd.f32 %v1334, %v1358
      %v1367 = vadd.f32 %v1335, %v1359
      %v1368 = vadd.f32 %v1336, %v1360
      %s1369 = scalar_lea.vmem [#allocation2], 32
      %v1370 = vld [vmem:[%s1369] sm:$0xff]
      %v1371 = vld [vmem:[%s1369 + $0x10] sm:$0xff]
      %v1372 = vld [vmem:[%s1369 + $0x20] sm:$0xff]
      %v1373 = vld [vmem:[%s1369 + $0x30] sm:$0xff]
      %v1374 = vld [vmem:[%s1369 + $0x40] sm:$0xff]
      %v1375 = vld [vmem:[%s1369 + $0x50] sm:$0xff]
      %v1376 = vld [vmem:[%s1369 + $0x60] sm:$0xff]
      %v1377 = vld [vmem:[%s1369 + $0x70] sm:$0xff]
      %s1378 = scalar_lea.vmem %s5, 14
      %v1379 = vld [vmem:[%s1378] sm:$0x1]
      %v1381 = vlaneseq
      %v1382 = vshrl.u32 %v1381, 7
      %v1383 = vsub.s32 0, %v1382
      %v1384 = vrot.slane %v1379, %v1383
      %v1386 = vmul.f32 %v1370, %v1384
      %v1387 = vmul.f32 %v1371, %v1384
      %v1388 = vmul.f32 %v1372, %v1384
      %v1389 = vmul.f32 %v1373, %v1384
      %v1390 = vmul.f32 %v1374, %v1384
      %v1391 = vmul.f32 %v1375, %v1384
      %v1392 = vmul.f32 %v1376, %v1384
      %v1393 = vmul.f32 %v1377, %v1384
      %v1394 = vadd.f32 %v1361, %v1386
      %v1395 = vadd.f32 %v1362, %v1387
      %v1396 = vadd.f32 %v1363, %v1388
      %v1397 = vadd.f32 %v1364, %v1389
      %v1398 = vadd.f32 %v1365, %v1390
      %v1399 = vadd.f32 %v1366, %v1391
      %v1400 = vadd.f32 %v1367, %v1392
      %v1401 = vadd.f32 %v1368, %v1393
      %v1402 = vld [vmem:[%s1369 + $0x1] sm:$0xff]
      %v1403 = vld [vmem:[%s1369 + $0x11] sm:$0xff]
      %v1404 = vld [vmem:[%s1369 + $0x21] sm:$0xff]
      %v1405 = vld [vmem:[%s1369 + $0x31] sm:$0xff]
      %v1406 = vld [vmem:[%s1369 + $0x41] sm:$0xff]
      %v1407 = vld [vmem:[%s1369 + $0x51] sm:$0xff]
      %v1408 = vld [vmem:[%s1369 + $0x61] sm:$0xff]
      %v1409 = vld [vmem:[%s1369 + $0x71] sm:$0xff]
      %s1410 = scalar_lea.vmem %s5, 15
      %v1411 = vld [vmem:[%s1410] sm:$0x1]
      %v1413 = vlaneseq
      %v1414 = vshrl.u32 %v1413, 7
      %v1415 = vsub.s32 0, %v1414
      %v1416 = vrot.slane %v1411, %v1415
      %v1418 = vmul.f32 %v1402, %v1416
      %v1419 = vmul.f32 %v1403, %v1416
      %v1420 = vmul.f32 %v1404, %v1416
      %v1421 = vmul.f32 %v1405, %v1416
      %v1422 = vmul.f32 %v1406, %v1416
      %v1423 = vmul.f32 %v1407, %v1416
      %v1424 = vmul.f32 %v1408, %v1416
      %v1425 = vmul.f32 %v1409, %v1416
      %v1426 = vadd.f32 %v1394, %v1418
      %v1427 = vadd.f32 %v1395, %v1419
      %v1428 = vadd.f32 %v1396, %v1420
      %v1429 = vadd.f32 %v1397, %v1421
      %v1430 = vadd.f32 %v1398, %v1422
      %v1431 = vadd.f32 %v1399, %v1423
      %v1432 = vadd.f32 %v1400, %v1424
      %v1433 = vadd.f32 %v1401, %v1425
      %v1434 = vld [vmem:[%s1369 + $0x2] sm:$0xff]
      %v1435 = vld [vmem:[%s1369 + $0x12] sm:$0xff]
      %v1436 = vld [vmem:[%s1369 + $0x22] sm:$0xff]
      %v1437 = vld [vmem:[%s1369 + $0x32] sm:$0xff]
      %v1438 = vld [vmem:[%s1369 + $0x42] sm:$0xff]
      %v1439 = vld [vmem:[%s1369 + $0x52] sm:$0xff]
      %v1440 = vld [vmem:[%s1369 + $0x62] sm:$0xff]
      %v1441 = vld [vmem:[%s1369 + $0x72] sm:$0xff]
      %s1442 = scalar_lea.vmem %s5, 16
      %v1443 = vld [vmem:[%s1442] sm:$0x1]
      %v1445 = vlaneseq
      %v1446 = vshrl.u32 %v1445, 7
      %v1447 = vsub.s32 0, %v1446
      %v1448 = vrot.slane %v1443, %v1447
      %v1450 = vmul.f32 %v1434, %v1448
      %v1451 = vmul.f32 %v1435, %v1448
      %v1452 = vmul.f32 %v1436, %v1448
      %v1453 = vmul.f32 %v1437, %v1448
      %v1454 = vmul.f32 %v1438, %v1448
      %v1455 = vmul.f32 %v1439, %v1448
      %v1456 = vmul.f32 %v1440, %v1448
      %v1457 = vmul.f32 %v1441, %v1448
      %v1458 = vadd.f32 %v1426, %v1450
      %v1459 = vadd.f32 %v1427, %v1451
      %v1460 = vadd.f32 %v1428, %v1452
      %v1461 = vadd.f32 %v1429, %v1453
      %v1462 = vadd.f32 %v1430, %v1454
      %v1463 = vadd.f32 %v1431, %v1455
      %v1464 = vadd.f32 %v1432, %v1456
      %v1465 = vadd.f32 %v1433, %v1457
      %v1466 = vld [vmem:[%s1369 + $0x3] sm:$0xff]
      %v1467 = vld [vmem:[%s1369 + $0x13] sm:$0xff]
      %v1468 = vld [vmem:[%s1369 + $0x23] sm:$0xff]
      %v1469 = vld [vmem:[%s1369 + $0x33] sm:$0xff]
      %v1470 = vld [vmem:[%s1369 + $0x43] sm:$0xff]
      %v1471 = vld [vmem:[%s1369 + $0x53] sm:$0xff]
      %v1472 = vld [vmem:[%s1369 + $0x63] sm:$0xff]
      %v1473 = vld [vmem:[%s1369 + $0x73] sm:$0xff]
      %s1474 = scalar_lea.vmem %s5, 17
      %v1475 = vld [vmem:[%s1474] sm:$0x1]
      %v1477 = vlaneseq
      %v1478 = vshrl.u32 %v1477, 7
      %v1479 = vsub.s32 0, %v1478
      %v1480 = vrot.slane %v1475, %v1479
      %v1482 = vmul.f32 %v1466, %v1480
      %v1483 = vmul.f32 %v1467, %v1480
      %v1484 = vmul.f32 %v1468, %v1480
      %v1485 = vmul.f32 %v1469, %v1480
      %v1486 = vmul.f32 %v1470, %v1480
      %v1487 = vmul.f32 %v1471, %v1480
      %v1488 = vmul.f32 %v1472, %v1480
      %v1489 = vmul.f32 %v1473, %v1480
      %v1490 = vadd.f32 %v1458, %v1482
      %v1491 = vadd.f32 %v1459, %v1483
      %v1492 = vadd.f32 %v1460, %v1484
      %v1493 = vadd.f32 %v1461, %v1485
      %v1494 = vadd.f32 %v1462, %v1486
      %v1495 = vadd.f32 %v1463, %v1487
      %v1496 = vadd.f32 %v1464, %v1488
      %v1497 = vadd.f32 %v1465, %v1489
      %v1498 = vld [vmem:[%s1369 + $0x4] sm:$0xff]
      %v1499 = vld [vmem:[%s1369 + $0x14] sm:$0xff]
      %v1500 = vld [vmem:[%s1369 + $0x24] sm:$0xff]
      %v1501 = vld [vmem:[%s1369 + $0x34] sm:$0xff]
      %v1502 = vld [vmem:[%s1369 + $0x44] sm:$0xff]
      %v1503 = vld [vmem:[%s1369 + $0x54] sm:$0xff]
      %v1504 = vld [vmem:[%s1369 + $0x64] sm:$0xff]
      %v1505 = vld [vmem:[%s1369 + $0x74] sm:$0xff]
      %s1506 = scalar_lea.vmem %s5, 18
      %v1507 = vld [vmem:[%s1506] sm:$0x1]
      %v1509 = vlaneseq
      %v1510 = vshrl.u32 %v1509, 7
      %v1511 = vsub.s32 0, %v1510
      %v1512 = vrot.slane %v1507, %v1511
      %v1514 = vmul.f32 %v1498, %v1512
      %v1515 = vmul.f32 %v1499, %v1512
      %v1516 = vmul.f32 %v1500, %v1512
      %v1517 = vmul.f32 %v1501, %v1512
      %v1518 = vmul.f32 %v1502, %v1512
      %v1519 = vmul.f32 %v1503, %v1512
      %v1520 = vmul.f32 %v1504, %v1512
      %v1521 = vmul.f32 %v1505, %v1512
      %v1522 = vadd.f32 %v1490, %v1514
      %v1523 = vadd.f32 %v1491, %v1515
      %v1524 = vadd.f32 %v1492, %v1516
      %v1525 = vadd.f32 %v1493, %v1517
      %v1526 = vadd.f32 %v1494, %v1518
      %v1527 = vadd.f32 %v1495, %v1519
      %v1528 = vadd.f32 %v1496, %v1520
      %v1529 = vadd.f32 %v1497, %v1521
      %v1530 = vld [vmem:[%s1369 + $0x5] sm:$0xff]
      %v1531 = vld [vmem:[%s1369 + $0x15] sm:$0xff]
      %v1532 = vld [vmem:[%s1369 + $0x25] sm:$0xff]
      %v1533 = vld [vmem:[%s1369 + $0x35] sm:$0xff]
      %v1534 = vld [vmem:[%s1369 + $0x45] sm:$0xff]
      %v1535 = vld [vmem:[%s1369 + $0x55] sm:$0xff]
      %v1536 = vld [vmem:[%s1369 + $0x65] sm:$0xff]
      %v1537 = vld [vmem:[%s1369 + $0x75] sm:$0xff]
      %s1538 = scalar_lea.vmem %s5, 19
      %v1539 = vld [vmem:[%s1538] sm:$0x1]
      %v1541 = vlaneseq
      %v1542 = vshrl.u32 %v1541, 7
      %v1543 = vsub.s32 0, %v1542
      %v1544 = vrot.slane %v1539, %v1543
      %v1546 = vmul.f32 %v1530, %v1544
      %v1547 = vmul.f32 %v1531, %v1544
      %v1548 = vmul.f32 %v1532, %v1544
      %v1549 = vmul.f32 %v1533, %v1544
      %v1550 = vmul.f32 %v1534, %v1544
      %v1551 = vmul.f32 %v1535, %v1544
      %v1552 = vmul.f32 %v1536, %v1544
      %v1553 = vmul.f32 %v1537, %v1544
      %v1554 = vadd.f32 %v1522, %v1546
      %v1555 = vadd.f32 %v1523, %v1547
      %v1556 = vadd.f32 %v1524, %v1548
      %v1557 = vadd.f32 %v1525, %v1549
      %v1558 = vadd.f32 %v1526, %v1550
      %v1559 = vadd.f32 %v1527, %v1551
      %v1560 = vadd.f32 %v1528, %v1552
      %v1561 = vadd.f32 %v1529, %v1553
      %v1562 = vld [vmem:[%s1369 + $0x6] sm:$0xff]
      %v1563 = vld [vmem:[%s1369 + $0x16] sm:$0xff]
      %v1564 = vld [vmem:[%s1369 + $0x26] sm:$0xff]
      %v1565 = vld [vmem:[%s1369 + $0x36] sm:$0xff]
      %v1566 = vld [vmem:[%s1369 + $0x46] sm:$0xff]
      %v1567 = vld [vmem:[%s1369 + $0x56] sm:$0xff]
      %v1568 = vld [vmem:[%s1369 + $0x66] sm:$0xff]
      %v1569 = vld [vmem:[%s1369 + $0x76] sm:$0xff]
      %s1570 = scalar_lea.vmem %s5, 20
      %v1571 = vld [vmem:[%s1570] sm:$0x1]
      %v1573 = vlaneseq
      %v1574 = vshrl.u32 %v1573, 7
      %v1575 = vsub.s32 0, %v1574
      %v1576 = vrot.slane %v1571, %v1575
      %v1578 = vmul.f32 %v1562, %v1576
      %v1579 = vmul.f32 %v1563, %v1576
      %v1580 = vmul.f32 %v1564, %v1576
      %v1581 = vmul.f32 %v1565, %v1576
      %v1582 = vmul.f32 %v1566, %v1576
      %v1583 = vmul.f32 %v1567, %v1576
      %v1584 = vmul.f32 %v1568, %v1576
      %v1585 = vmul.f32 %v1569, %v1576
      %v1586 = vadd.f32 %v1554, %v1578
      %v1587 = vadd.f32 %v1555, %v1579
      %v1588 = vadd.f32 %v1556, %v1580
      %v1589 = vadd.f32 %v1557, %v1581
      %v1590 = vadd.f32 %v1558, %v1582
      %v1591 = vadd.f32 %v1559, %v1583
      %v1592 = vadd.f32 %v1560, %v1584
      %v1593 = vadd.f32 %v1561, %v1585
      %v1594 = vld [vmem:[%s912] sm:$0xff]
      %v1595 = vld [vmem:[%s912 + $0x10] sm:$0xff]
      %v1596 = vld [vmem:[%s912 + $0x20] sm:$0xff]
      %v1597 = vld [vmem:[%s912 + $0x30] sm:$0xff]
      %v1598 = vld [vmem:[%s912 + $0x40] sm:$0xff]
      %v1599 = vld [vmem:[%s912 + $0x50] sm:$0xff]
      %v1600 = vld [vmem:[%s912 + $0x60] sm:$0xff]
      %v1601 = vld [vmem:[%s912 + $0x70] sm:$0xff]
      %s1602 = scalar_lea.vmem %s5, 21
      %v1603 = vld [vmem:[%s1602] sm:$0x1]
      %v1605 = vlaneseq
      %v1606 = vshrl.u32 %v1605, 7
      %v1607 = vsub.s32 0, %v1606
      %v1608 = vrot.slane %v1603, %v1607
      %v1610 = vmul.f32 %v1594, %v1608
      %v1611 = vmul.f32 %v1595, %v1608
      %v1612 = vmul.f32 %v1596, %v1608
      %v1613 = vmul.f32 %v1597, %v1608
      %v1614 = vmul.f32 %v1598, %v1608
      %v1615 = vmul.f32 %v1599, %v1608
      %v1616 = vmul.f32 %v1600, %v1608
      %v1617 = vmul.f32 %v1601, %v1608
      %v1618 = vadd.f32 %v1586, %v1610
      %v1619 = vadd.f32 %v1587, %v1611
      %v1620 = vadd.f32 %v1588, %v1612
      %v1621 = vadd.f32 %v1589, %v1613
      %v1622 = vadd.f32 %v1590, %v1614
      %v1623 = vadd.f32 %v1591, %v1615
      %v1624 = vadd.f32 %v1592, %v1616
      %v1625 = vadd.f32 %v1593, %v1617
      %v1626 = vld [vmem:[%s912 + $0x1] sm:$0xff]
      %v1627 = vld [vmem:[%s912 + $0x11] sm:$0xff]
      %v1628 = vld [vmem:[%s912 + $0x21] sm:$0xff]
      %v1629 = vld [vmem:[%s912 + $0x31] sm:$0xff]
      %v1630 = vld [vmem:[%s912 + $0x41] sm:$0xff]
      %v1631 = vld [vmem:[%s912 + $0x51] sm:$0xff]
      %v1632 = vld [vmem:[%s912 + $0x61] sm:$0xff]
      %v1633 = vld [vmem:[%s912 + $0x71] sm:$0xff]
      %s1634 = scalar_lea.vmem %s5, 22
      %v1635 = vld [vmem:[%s1634] sm:$0x1]
      %v1637 = vlaneseq
      %v1638 = vshrl.u32 %v1637, 7
      %v1639 = vsub.s32 0, %v1638
      %v1640 = vrot.slane %v1635, %v1639
      %v1642 = vmul.f32 %v1626, %v1640
      %v1643 = vmul.f32 %v1627, %v1640
      %v1644 = vmul.f32 %v1628, %v1640
      %v1645 = vmul.f32 %v1629, %v1640
      %v1646 = vmul.f32 %v1630, %v1640
      %v1647 = vmul.f32 %v1631, %v1640
      %v1648 = vmul.f32 %v1632, %v1640
      %v1649 = vmul.f32 %v1633, %v1640
      %v1650 = vadd.f32 %v1618, %v1642
      %v1651 = vadd.f32 %v1619, %v1643
      %v1652 = vadd.f32 %v1620, %v1644
      %v1653 = vadd.f32 %v1621, %v1645
      %v1654 = vadd.f32 %v1622, %v1646
      %v1655 = vadd.f32 %v1623, %v1647
      %v1656 = vadd.f32 %v1624, %v1648
      %v1657 = vadd.f32 %v1625, %v1649
      %v1658 = vld [vmem:[%s912 + $0x2] sm:$0xff]
      %v1659 = vld [vmem:[%s912 + $0x12] sm:$0xff]
      %v1660 = vld [vmem:[%s912 + $0x22] sm:$0xff]
      %v1661 = vld [vmem:[%s912 + $0x32] sm:$0xff]
      %v1662 = vld [vmem:[%s912 + $0x42] sm:$0xff]
      %v1663 = vld [vmem:[%s912 + $0x52] sm:$0xff]
      %v1664 = vld [vmem:[%s912 + $0x62] sm:$0xff]
      %v1665 = vld [vmem:[%s912 + $0x72] sm:$0xff]
      %s1666 = scalar_lea.vmem %s5, 23
      %v1667 = vld [vmem:[%s1666] sm:$0x1]
      %v1669 = vlaneseq
      %v1670 = vshrl.u32 %v1669, 7
      %v1671 = vsub.s32 0, %v1670
      %v1672 = vrot.slane %v1667, %v1671
      %v1674 = vmul.f32 %v1658, %v1672
      %v1675 = vmul.f32 %v1659, %v1672
      %v1676 = vmul.f32 %v1660, %v1672
      %v1677 = vmul.f32 %v1661, %v1672
      %v1678 = vmul.f32 %v1662, %v1672
      %v1679 = vmul.f32 %v1663, %v1672
      %v1680 = vmul.f32 %v1664, %v1672
      %v1681 = vmul.f32 %v1665, %v1672
      %v1682 = vadd.f32 %v1650, %v1674
      %v1683 = vadd.f32 %v1651, %v1675
      %v1684 = vadd.f32 %v1652, %v1676
      %v1685 = vadd.f32 %v1653, %v1677
      %v1686 = vadd.f32 %v1654, %v1678
      %v1687 = vadd.f32 %v1655, %v1679
      %v1688 = vadd.f32 %v1656, %v1680
      %v1689 = vadd.f32 %v1657, %v1681
      %v1690 = vld [vmem:[%s912 + $0x3] sm:$0xff]
      %v1691 = vld [vmem:[%s912 + $0x13] sm:$0xff]
      %v1692 = vld [vmem:[%s912 + $0x23] sm:$0xff]
      %v1693 = vld [vmem:[%s912 + $0x33] sm:$0xff]
      %v1694 = vld [vmem:[%s912 + $0x43] sm:$0xff]
      %v1695 = vld [vmem:[%s912 + $0x53] sm:$0xff]
      %v1696 = vld [vmem:[%s912 + $0x63] sm:$0xff]
      %v1697 = vld [vmem:[%s912 + $0x73] sm:$0xff]
      %s1698 = scalar_lea.vmem %s5, 24
      %v1699 = vld [vmem:[%s1698] sm:$0x1]
      %v1701 = vlaneseq
      %v1702 = vshrl.u32 %v1701, 7
      %v1703 = vsub.s32 0, %v1702
      %v1704 = vrot.slane %v1699, %v1703
      %v1706 = vmul.f32 %v1690, %v1704
      %v1707 = vmul.f32 %v1691, %v1704
      %v1708 = vmul.f32 %v1692, %v1704
      %v1709 = vmul.f32 %v1693, %v1704
      %v1710 = vmul.f32 %v1694, %v1704
      %v1711 = vmul.f32 %v1695, %v1704
      %v1712 = vmul.f32 %v1696, %v1704
      %v1713 = vmul.f32 %v1697, %v1704
      %v1714 = vadd.f32 %v1682, %v1706
      %v1715 = vadd.f32 %v1683, %v1707
      %v1716 = vadd.f32 %v1684, %v1708
      %v1717 = vadd.f32 %v1685, %v1709
      %v1718 = vadd.f32 %v1686, %v1710
      %v1719 = vadd.f32 %v1687, %v1711
      %v1720 = vadd.f32 %v1688, %v1712
      %v1721 = vadd.f32 %v1689, %v1713
      %v1722 = vld [vmem:[%s912 + $0x4] sm:$0xff]
      %v1723 = vld [vmem:[%s912 + $0x14] sm:$0xff]
      %v1724 = vld [vmem:[%s912 + $0x24] sm:$0xff]
      %v1725 = vld [vmem:[%s912 + $0x34] sm:$0xff]
      %v1726 = vld [vmem:[%s912 + $0x44] sm:$0xff]
      %v1727 = vld [vmem:[%s912 + $0x54] sm:$0xff]
      %v1728 = vld [vmem:[%s912 + $0x64] sm:$0xff]
      %v1729 = vld [vmem:[%s912 + $0x74] sm:$0xff]
      %s1730 = scalar_lea.vmem %s5, 25
      %v1731 = vld [vmem:[%s1730] sm:$0x1]
      %v1733 = vlaneseq
      %v1734 = vshrl.u32 %v1733, 7
      %v1735 = vsub.s32 0, %v1734
      %v1736 = vrot.slane %v1731, %v1735
      %v1738 = vmul.f32 %v1722, %v1736
      %v1739 = vmul.f32 %v1723, %v1736
      %v1740 = vmul.f32 %v1724, %v1736
      %v1741 = vmul.f32 %v1725, %v1736
      %v1742 = vmul.f32 %v1726, %v1736
      %v1743 = vmul.f32 %v1727, %v1736
      %v1744 = vmul.f32 %v1728, %v1736
      %v1745 = vmul.f32 %v1729, %v1736
      %v1746 = vadd.f32 %v1714, %v1738
      %v1747 = vadd.f32 %v1715, %v1739
      %v1748 = vadd.f32 %v1716, %v1740
      %v1749 = vadd.f32 %v1717, %v1741
      %v1750 = vadd.f32 %v1718, %v1742
      %v1751 = vadd.f32 %v1719, %v1743
      %v1752 = vadd.f32 %v1720, %v1744
      %v1753 = vadd.f32 %v1721, %v1745
      %v1754 = vld [vmem:[%s912 + $0x5] sm:$0xff]
      %v1755 = vld [vmem:[%s912 + $0x15] sm:$0xff]
      %v1756 = vld [vmem:[%s912 + $0x25] sm:$0xff]
      %v1757 = vld [vmem:[%s912 + $0x35] sm:$0xff]
      %v1758 = vld [vmem:[%s912 + $0x45] sm:$0xff]
      %v1759 = vld [vmem:[%s912 + $0x55] sm:$0xff]
      %v1760 = vld [vmem:[%s912 + $0x65] sm:$0xff]
      %v1761 = vld [vmem:[%s912 + $0x75] sm:$0xff]
      %s1762 = scalar_lea.vmem %s5, 26
      %v1763 = vld [vmem:[%s1762] sm:$0x1]
      %v1765 = vlaneseq
      %v1766 = vshrl.u32 %v1765, 7
      %v1767 = vsub.s32 0, %v1766
      %v1768 = vrot.slane %v1763, %v1767
      %v1770 = vmul.f32 %v1754, %v1768
      %v1771 = vmul.f32 %v1755, %v1768
      %v1772 = vmul.f32 %v1756, %v1768
      %v1773 = vmul.f32 %v1757, %v1768
      %v1774 = vmul.f32 %v1758, %v1768
      %v1775 = vmul.f32 %v1759, %v1768
      %v1776 = vmul.f32 %v1760, %v1768
      %v1777 = vmul.f32 %v1761, %v1768
      %v1778 = vadd.f32 %v1746, %v1770
      %v1779 = vadd.f32 %v1747, %v1771
      %v1780 = vadd.f32 %v1748, %v1772
      %v1781 = vadd.f32 %v1749, %v1773
      %v1782 = vadd.f32 %v1750, %v1774
      %v1783 = vadd.f32 %v1751, %v1775
      %v1784 = vadd.f32 %v1752, %v1776
      %v1785 = vadd.f32 %v1753, %v1777
      %v1786 = vld [vmem:[%s912 + $0x6] sm:$0xff]
      %v1787 = vld [vmem:[%s912 + $0x16] sm:$0xff]
      %v1788 = vld [vmem:[%s912 + $0x26] sm:$0xff]
      %v1789 = vld [vmem:[%s912 + $0x36] sm:$0xff]
      %v1790 = vld [vmem:[%s912 + $0x46] sm:$0xff]
      %v1791 = vld [vmem:[%s912 + $0x56] sm:$0xff]
      %v1792 = vld [vmem:[%s912 + $0x66] sm:$0xff]
      %v1793 = vld [vmem:[%s912 + $0x76] sm:$0xff]
      %s1794 = scalar_lea.vmem %s5, 27
      %v1795 = vld [vmem:[%s1794] sm:$0x1]
      %v1797 = vlaneseq
      %v1798 = vshrl.u32 %v1797, 7
      %v1799 = vsub.s32 0, %v1798
      %v1800 = vrot.slane %v1795, %v1799
      %v1802 = vmul.f32 %v1786, %v1800
      %v1803 = vmul.f32 %v1787, %v1800
      %v1804 = vmul.f32 %v1788, %v1800
      %v1805 = vmul.f32 %v1789, %v1800
      %v1806 = vmul.f32 %v1790, %v1800
      %v1807 = vmul.f32 %v1791, %v1800
      %v1808 = vmul.f32 %v1792, %v1800
      %v1809 = vmul.f32 %v1793, %v1800
      %v1810 = vadd.f32 %v1778, %v1802
      %v1811 = vadd.f32 %v1779, %v1803
      %v1812 = vadd.f32 %v1780, %v1804
      %v1813 = vadd.f32 %v1781, %v1805
      %v1814 = vadd.f32 %v1782, %v1806
      %v1815 = vadd.f32 %v1783, %v1807
      %v1816 = vadd.f32 %v1784, %v1808
      %v1817 = vadd.f32 %v1785, %v1809
      %s1818 = scalar_lea.vmem [#allocation2], 64
      %v1819 = vld [vmem:[%s1818] sm:$0xff]
      %v1820 = vld [vmem:[%s1818 + $0x10] sm:$0xff]
      %v1821 = vld [vmem:[%s1818 + $0x20] sm:$0xff]
      %v1822 = vld [vmem:[%s1818 + $0x30] sm:$0xff]
      %v1823 = vld [vmem:[%s1818 + $0x40] sm:$0xff]
      %v1824 = vld [vmem:[%s1818 + $0x50] sm:$0xff]
      %v1825 = vld [vmem:[%s1818 + $0x60] sm:$0xff]
      %v1826 = vld [vmem:[%s1818 + $0x70] sm:$0xff]
      %s1827 = scalar_lea.vmem %s5, 28
      %v1828 = vld [vmem:[%s1827] sm:$0x1]
      %v1830 = vlaneseq
      %v1831 = vshrl.u32 %v1830, 7
      %v1832 = vsub.s32 0, %v1831
      %v1833 = vrot.slane %v1828, %v1832
      %v1835 = vmul.f32 %v1819, %v1833
      %v1836 = vmul.f32 %v1820, %v1833
      %v1837 = vmul.f32 %v1821, %v1833
      %v1838 = vmul.f32 %v1822, %v1833
      %v1839 = vmul.f32 %v1823, %v1833
      %v1840 = vmul.f32 %v1824, %v1833
      %v1841 = vmul.f32 %v1825, %v1833
      %v1842 = vmul.f32 %v1826, %v1833
      %v1843 = vadd.f32 %v1810, %v1835
      %v1844 = vadd.f32 %v1811, %v1836
      %v1845 = vadd.f32 %v1812, %v1837
      %v1846 = vadd.f32 %v1813, %v1838
      %v1847 = vadd.f32 %v1814, %v1839
      %v1848 = vadd.f32 %v1815, %v1840
      %v1849 = vadd.f32 %v1816, %v1841
      %v1850 = vadd.f32 %v1817, %v1842
      %v1851 = vld [vmem:[%s1818 + $0x1] sm:$0xff]
      %v1852 = vld [vmem:[%s1818 + $0x11] sm:$0xff]
      %v1853 = vld [vmem:[%s1818 + $0x21] sm:$0xff]
      %v1854 = vld [vmem:[%s1818 + $0x31] sm:$0xff]
      %v1855 = vld [vmem:[%s1818 + $0x41] sm:$0xff]
      %v1856 = vld [vmem:[%s1818 + $0x51] sm:$0xff]
      %v1857 = vld [vmem:[%s1818 + $0x61] sm:$0xff]
      %v1858 = vld [vmem:[%s1818 + $0x71] sm:$0xff]
      %s1859 = scalar_lea.vmem %s5, 29
      %v1860 = vld [vmem:[%s1859] sm:$0x1]
      %v1862 = vlaneseq
      %v1863 = vshrl.u32 %v1862, 7
      %v1864 = vsub.s32 0, %v1863
      %v1865 = vrot.slane %v1860, %v1864
      %v1867 = vmul.f32 %v1851, %v1865
      %v1868 = vmul.f32 %v1852, %v1865
      %v1869 = vmul.f32 %v1853, %v1865
      %v1870 = vmul.f32 %v1854, %v1865
      %v1871 = vmul.f32 %v1855, %v1865
      %v1872 = vmul.f32 %v1856, %v1865
      %v1873 = vmul.f32 %v1857, %v1865
      %v1874 = vmul.f32 %v1858, %v1865
      %v1875 = vadd.f32 %v1843, %v1867
      %v1876 = vadd.f32 %v1844, %v1868
      %v1877 = vadd.f32 %v1845, %v1869
      %v1878 = vadd.f32 %v1846, %v1870
      %v1879 = vadd.f32 %v1847, %v1871
      %v1880 = vadd.f32 %v1848, %v1872
      %v1881 = vadd.f32 %v1849, %v1873
      %v1882 = vadd.f32 %v1850, %v1874
      %v1883 = vld [vmem:[%s1818 + $0x2] sm:$0xff]
      %v1884 = vld [vmem:[%s1818 + $0x12] sm:$0xff]
      %v1885 = vld [vmem:[%s1818 + $0x22] sm:$0xff]
      %v1886 = vld [vmem:[%s1818 + $0x32] sm:$0xff]
      %v1887 = vld [vmem:[%s1818 + $0x42] sm:$0xff]
      %v1888 = vld [vmem:[%s1818 + $0x52] sm:$0xff]
      %v1889 = vld [vmem:[%s1818 + $0x62] sm:$0xff]
      %v1890 = vld [vmem:[%s1818 + $0x72] sm:$0xff]
      %s1891 = scalar_lea.vmem %s5, 30
      %v1892 = vld [vmem:[%s1891] sm:$0x1]
      %v1894 = vlaneseq
      %v1895 = vshrl.u32 %v1894, 7
      %v1896 = vsub.s32 0, %v1895
      %v1897 = vrot.slane %v1892, %v1896
      %v1899 = vmul.f32 %v1883, %v1897
      %v1900 = vmul.f32 %v1884, %v1897
      %v1901 = vmul.f32 %v1885, %v1897
      %v1902 = vmul.f32 %v1886, %v1897
      %v1903 = vmul.f32 %v1887, %v1897
      %v1904 = vmul.f32 %v1888, %v1897
      %v1905 = vmul.f32 %v1889, %v1897
      %v1906 = vmul.f32 %v1890, %v1897
      %v1907 = vadd.f32 %v1875, %v1899
      %v1908 = vadd.f32 %v1876, %v1900
      %v1909 = vadd.f32 %v1877, %v1901
      %v1910 = vadd.f32 %v1878, %v1902
      %v1911 = vadd.f32 %v1879, %v1903
      %v1912 = vadd.f32 %v1880, %v1904
      %v1913 = vadd.f32 %v1881, %v1905
      %v1914 = vadd.f32 %v1882, %v1906
      %v1915 = vld [vmem:[%s1818 + $0x3] sm:$0xff]
      %v1916 = vld [vmem:[%s1818 + $0x13] sm:$0xff]
      %v1917 = vld [vmem:[%s1818 + $0x23] sm:$0xff]
      %v1918 = vld [vmem:[%s1818 + $0x33] sm:$0xff]
      %v1919 = vld [vmem:[%s1818 + $0x43] sm:$0xff]
      %v1920 = vld [vmem:[%s1818 + $0x53] sm:$0xff]
      %v1921 = vld [vmem:[%s1818 + $0x63] sm:$0xff]
      %v1922 = vld [vmem:[%s1818 + $0x73] sm:$0xff]
      %s1923 = scalar_lea.vmem %s5, 31
      %v1924 = vld [vmem:[%s1923] sm:$0x1]
      %v1926 = vlaneseq
      %v1927 = vshrl.u32 %v1926, 7
      %v1928 = vsub.s32 0, %v1927
      %v1929 = vrot.slane %v1924, %v1928
      %v1931 = vmul.f32 %v1915, %v1929
      %v1932 = vmul.f32 %v1916, %v1929
      %v1933 = vmul.f32 %v1917, %v1929
      %v1934 = vmul.f32 %v1918, %v1929
      %v1935 = vmul.f32 %v1919, %v1929
      %v1936 = vmul.f32 %v1920, %v1929
      %v1937 = vmul.f32 %v1921, %v1929
      %v1938 = vmul.f32 %v1922, %v1929
      %v1939 = vadd.f32 %v1907, %v1931
      %v1940 = vadd.f32 %v1908, %v1932
      %v1941 = vadd.f32 %v1909, %v1933
      %v1942 = vadd.f32 %v1910, %v1934
      %v1943 = vadd.f32 %v1911, %v1935
      %v1944 = vadd.f32 %v1912, %v1936
      %v1945 = vadd.f32 %v1913, %v1937
      %v1946 = vadd.f32 %v1914, %v1938
      %v1947 = vld [vmem:[%s1818 + $0x4] sm:$0xff]
      %v1948 = vld [vmem:[%s1818 + $0x14] sm:$0xff]
      %v1949 = vld [vmem:[%s1818 + $0x24] sm:$0xff]
      %v1950 = vld [vmem:[%s1818 + $0x34] sm:$0xff]
      %v1951 = vld [vmem:[%s1818 + $0x44] sm:$0xff]
      %v1952 = vld [vmem:[%s1818 + $0x54] sm:$0xff]
      %v1953 = vld [vmem:[%s1818 + $0x64] sm:$0xff]
      %v1954 = vld [vmem:[%s1818 + $0x74] sm:$0xff]
      %s1955 = scalar_lea.vmem %s5, 32
      %v1956 = vld [vmem:[%s1955] sm:$0x1]
      %v1958 = vlaneseq
      %v1959 = vshrl.u32 %v1958, 7
      %v1960 = vsub.s32 0, %v1959
      %v1961 = vrot.slane %v1956, %v1960
      %v1963 = vmul.f32 %v1947, %v1961
      %v1964 = vmul.f32 %v1948, %v1961
      %v1965 = vmul.f32 %v1949, %v1961
      %v1966 = vmul.f32 %v1950, %v1961
      %v1967 = vmul.f32 %v1951, %v1961
      %v1968 = vmul.f32 %v1952, %v1961
      %v1969 = vmul.f32 %v1953, %v1961
      %v1970 = vmul.f32 %v1954, %v1961
      %v1971 = vadd.f32 %v1939, %v1963
      %v1972 = vadd.f32 %v1940, %v1964
      %v1973 = vadd.f32 %v1941, %v1965
      %v1974 = vadd.f32 %v1942, %v1966
      %v1975 = vadd.f32 %v1943, %v1967
      %v1976 = vadd.f32 %v1944, %v1968
      %v1977 = vadd.f32 %v1945, %v1969
      %v1978 = vadd.f32 %v1946, %v1970
      %v1979 = vld [vmem:[%s1818 + $0x5] sm:$0xff]
      %v1980 = vld [vmem:[%s1818 + $0x15] sm:$0xff]
      %v1981 = vld [vmem:[%s1818 + $0x25] sm:$0xff]
      %v1982 = vld [vmem:[%s1818 + $0x35] sm:$0xff]
      %v1983 = vld [vmem:[%s1818 + $0x45] sm:$0xff]
      %v1984 = vld [vmem:[%s1818 + $0x55] sm:$0xff]
      %v1985 = vld [vmem:[%s1818 + $0x65] sm:$0xff]
      %v1986 = vld [vmem:[%s1818 + $0x75] sm:$0xff]
      %s1987 = scalar_lea.vmem %s5, 33
      %v1988 = vld [vmem:[%s1987] sm:$0x1]
      %v1990 = vlaneseq
      %v1991 = vshrl.u32 %v1990, 7
      %v1992 = vsub.s32 0, %v1991
      %v1993 = vrot.slane %v1988, %v1992
      %v1995 = vmul.f32 %v1979, %v1993
      %v1996 = vmul.f32 %v1980, %v1993
      %v1997 = vmul.f32 %v1981, %v1993
      %v1998 = vmul.f32 %v1982, %v1993
      %v1999 = vmul.f32 %v1983, %v1993
      %v2000 = vmul.f32 %v1984, %v1993
      %v2001 = vmul.f32 %v1985, %v1993
      %v2002 = vmul.f32 %v1986, %v1993
      %v2003 = vadd.f32 %v1971, %v1995
      %v2004 = vadd.f32 %v1972, %v1996
      %v2005 = vadd.f32 %v1973, %v1997
      %v2006 = vadd.f32 %v1974, %v1998
      %v2007 = vadd.f32 %v1975, %v1999
      %v2008 = vadd.f32 %v1976, %v2000
      %v2009 = vadd.f32 %v1977, %v2001
      %v2010 = vadd.f32 %v1978, %v2002
      %v2011 = vld [vmem:[%s1818 + $0x6] sm:$0xff]
      %v2012 = vld [vmem:[%s1818 + $0x16] sm:$0xff]
      %v2013 = vld [vmem:[%s1818 + $0x26] sm:$0xff]
      %v2014 = vld [vmem:[%s1818 + $0x36] sm:$0xff]
      %v2015 = vld [vmem:[%s1818 + $0x46] sm:$0xff]
      %v2016 = vld [vmem:[%s1818 + $0x56] sm:$0xff]
      %v2017 = vld [vmem:[%s1818 + $0x66] sm:$0xff]
      %v2018 = vld [vmem:[%s1818 + $0x76] sm:$0xff]
      %s2019 = scalar_lea.vmem %s5, 34
      %v2020 = vld [vmem:[%s2019] sm:$0x1]
      %v2022 = vlaneseq
      %v2023 = vshrl.u32 %v2022, 7
      %v2024 = vsub.s32 0, %v2023
      %v2025 = vrot.slane %v2020, %v2024
      %v2027 = vmul.f32 %v2011, %v2025
      %v2028 = vmul.f32 %v2012, %v2025
      %v2029 = vmul.f32 %v2013, %v2025
      %v2030 = vmul.f32 %v2014, %v2025
      %v2031 = vmul.f32 %v2015, %v2025
      %v2032 = vmul.f32 %v2016, %v2025
      %v2033 = vmul.f32 %v2017, %v2025
      %v2034 = vmul.f32 %v2018, %v2025
      %v2035 = vadd.f32 %v2003, %v2027
      %v2036 = vadd.f32 %v2004, %v2028
      %v2037 = vadd.f32 %v2005, %v2029
      %v2038 = vadd.f32 %v2006, %v2030
      %v2039 = vadd.f32 %v2007, %v2031
      %v2040 = vadd.f32 %v2008, %v2032
      %v2041 = vadd.f32 %v2009, %v2033
      %v2042 = vadd.f32 %v2010, %v2034
      %s2043 = scalar_lea.vmem [#allocation2], 80
      %v2044 = vld [vmem:[%s2043] sm:$0xff]
      %v2045 = vld [vmem:[%s2043 + $0x10] sm:$0xff]
      %v2046 = vld [vmem:[%s2043 + $0x20] sm:$0xff]
      %v2047 = vld [vmem:[%s2043 + $0x30] sm:$0xff]
      %v2048 = vld [vmem:[%s2043 + $0x40] sm:$0xff]
      %v2049 = vld [vmem:[%s2043 + $0x50] sm:$0xff]
      %v2050 = vld [vmem:[%s2043 + $0x60] sm:$0xff]
      %v2051 = vld [vmem:[%s2043 + $0x70] sm:$0xff]
      %s2052 = scalar_lea.vmem %s5, 35
      %v2053 = vld [vmem:[%s2052] sm:$0x1]
      %v2055 = vlaneseq
      %v2056 = vshrl.u32 %v2055, 7
      %v2057 = vsub.s32 0, %v2056
      %v2058 = vrot.slane %v2053, %v2057
      %v2060 = vmul.f32 %v2044, %v2058
      %v2061 = vmul.f32 %v2045, %v2058
      %v2062 = vmul.f32 %v2046, %v2058
      %v2063 = vmul.f32 %v2047, %v2058
      %v2064 = vmul.f32 %v2048, %v2058
      %v2065 = vmul.f32 %v2049, %v2058
      %v2066 = vmul.f32 %v2050, %v2058
      %v2067 = vmul.f32 %v2051, %v2058
      %v2068 = vadd.f32 %v2035, %v2060
      %v2069 = vadd.f32 %v2036, %v2061
      %v2070 = vadd.f32 %v2037, %v2062
      %v2071 = vadd.f32 %v2038, %v2063
      %v2072 = vadd.f32 %v2039, %v2064
      %v2073 = vadd.f32 %v2040, %v2065
      %v2074 = vadd.f32 %v2041, %v2066
      %v2075 = vadd.f32 %v2042, %v2067
      %v2076 = vld [vmem:[%s2043 + $0x1] sm:$0xff]
      %v2077 = vld [vmem:[%s2043 + $0x11] sm:$0xff]
      %v2078 = vld [vmem:[%s2043 + $0x21] sm:$0xff]
      %v2079 = vld [vmem:[%s2043 + $0x31] sm:$0xff]
      %v2080 = vld [vmem:[%s2043 + $0x41] sm:$0xff]
      %v2081 = vld [vmem:[%s2043 + $0x51] sm:$0xff]
      %v2082 = vld [vmem:[%s2043 + $0x61] sm:$0xff]
      %v2083 = vld [vmem:[%s2043 + $0x71] sm:$0xff]
      %s2084 = scalar_lea.vmem %s5, 36
      %v2085 = vld [vmem:[%s2084] sm:$0x1]
      %v2087 = vlaneseq
      %v2088 = vshrl.u32 %v2087, 7
      %v2089 = vsub.s32 0, %v2088
      %v2090 = vrot.slane %v2085, %v2089
      %v2092 = vmul.f32 %v2076, %v2090
      %v2093 = vmul.f32 %v2077, %v2090
      %v2094 = vmul.f32 %v2078, %v2090
      %v2095 = vmul.f32 %v2079, %v2090
      %v2096 = vmul.f32 %v2080, %v2090
      %v2097 = vmul.f32 %v2081, %v2090
      %v2098 = vmul.f32 %v2082, %v2090
      %v2099 = vmul.f32 %v2083, %v2090
      %v2100 = vadd.f32 %v2068, %v2092
      %v2101 = vadd.f32 %v2069, %v2093
      %v2102 = vadd.f32 %v2070, %v2094
      %v2103 = vadd.f32 %v2071, %v2095
      %v2104 = vadd.f32 %v2072, %v2096
      %v2105 = vadd.f32 %v2073, %v2097
      %v2106 = vadd.f32 %v2074, %v2098
      %v2107 = vadd.f32 %v2075, %v2099
      %v2108 = vld [vmem:[%s2043 + $0x2] sm:$0xff]
      %v2109 = vld [vmem:[%s2043 + $0x12] sm:$0xff]
      %v2110 = vld [vmem:[%s2043 + $0x22] sm:$0xff]
      %v2111 = vld [vmem:[%s2043 + $0x32] sm:$0xff]
      %v2112 = vld [vmem:[%s2043 + $0x42] sm:$0xff]
      %v2113 = vld [vmem:[%s2043 + $0x52] sm:$0xff]
      %v2114 = vld [vmem:[%s2043 + $0x62] sm:$0xff]
      %v2115 = vld [vmem:[%s2043 + $0x72] sm:$0xff]
      %s2116 = scalar_lea.vmem %s5, 37
      %v2117 = vld [vmem:[%s2116] sm:$0x1]
      %v2119 = vlaneseq
      %v2120 = vshrl.u32 %v2119, 7
      %v2121 = vsub.s32 0, %v2120
      %v2122 = vrot.slane %v2117, %v2121
      %v2124 = vmul.f32 %v2108, %v2122
      %v2125 = vmul.f32 %v2109, %v2122
      %v2126 = vmul.f32 %v2110, %v2122
      %v2127 = vmul.f32 %v2111, %v2122
      %v2128 = vmul.f32 %v2112, %v2122
      %v2129 = vmul.f32 %v2113, %v2122
      %v2130 = vmul.f32 %v2114, %v2122
      %v2131 = vmul.f32 %v2115, %v2122
      %v2132 = vadd.f32 %v2100, %v2124
      %v2133 = vadd.f32 %v2101, %v2125
      %v2134 = vadd.f32 %v2102, %v2126
      %v2135 = vadd.f32 %v2103, %v2127
      %v2136 = vadd.f32 %v2104, %v2128
      %v2137 = vadd.f32 %v2105, %v2129
      %v2138 = vadd.f32 %v2106, %v2130
      %v2139 = vadd.f32 %v2107, %v2131
      %v2140 = vld [vmem:[%s2043 + $0x3] sm:$0xff]
      %v2141 = vld [vmem:[%s2043 + $0x13] sm:$0xff]
      %v2142 = vld [vmem:[%s2043 + $0x23] sm:$0xff]
      %v2143 = vld [vmem:[%s2043 + $0x33] sm:$0xff]
      %v2144 = vld [vmem:[%s2043 + $0x43] sm:$0xff]
      %v2145 = vld [vmem:[%s2043 + $0x53] sm:$0xff]
      %v2146 = vld [vmem:[%s2043 + $0x63] sm:$0xff]
      %v2147 = vld [vmem:[%s2043 + $0x73] sm:$0xff]
      %s2148 = scalar_lea.vmem %s5, 38
      %v2149 = vld [vmem:[%s2148] sm:$0x1]
      %v2151 = vlaneseq
      %v2152 = vshrl.u32 %v2151, 7
      %v2153 = vsub.s32 0, %v2152
      %v2154 = vrot.slane %v2149, %v2153
      %v2156 = vmul.f32 %v2140, %v2154
      %v2157 = vmul.f32 %v2141, %v2154
      %v2158 = vmul.f32 %v2142, %v2154
      %v2159 = vmul.f32 %v2143, %v2154
      %v2160 = vmul.f32 %v2144, %v2154
      %v2161 = vmul.f32 %v2145, %v2154
      %v2162 = vmul.f32 %v2146, %v2154
      %v2163 = vmul.f32 %v2147, %v2154
      %v2164 = vadd.f32 %v2132, %v2156
      %v2165 = vadd.f32 %v2133, %v2157
      %v2166 = vadd.f32 %v2134, %v2158
      %v2167 = vadd.f32 %v2135, %v2159
      %v2168 = vadd.f32 %v2136, %v2160
      %v2169 = vadd.f32 %v2137, %v2161
      %v2170 = vadd.f32 %v2138, %v2162
      %v2171 = vadd.f32 %v2139, %v2163
      %v2172 = vld [vmem:[%s2043 + $0x4] sm:$0xff]
      %v2173 = vld [vmem:[%s2043 + $0x14] sm:$0xff]
      %v2174 = vld [vmem:[%s2043 + $0x24] sm:$0xff]
      %v2175 = vld [vmem:[%s2043 + $0x34] sm:$0xff]
      %v2176 = vld [vmem:[%s2043 + $0x44] sm:$0xff]
      %v2177 = vld [vmem:[%s2043 + $0x54] sm:$0xff]
      %v2178 = vld [vmem:[%s2043 + $0x64] sm:$0xff]
      %v2179 = vld [vmem:[%s2043 + $0x74] sm:$0xff]
      %s2180 = scalar_lea.vmem %s5, 39
      %v2181 = vld [vmem:[%s2180] sm:$0x1]
      %v2183 = vlaneseq
      %v2184 = vshrl.u32 %v2183, 7
      %v2185 = vsub.s32 0, %v2184
      %v2186 = vrot.slane %v2181, %v2185
      %v2188 = vmul.f32 %v2172, %v2186
      %v2189 = vmul.f32 %v2173, %v2186
      %v2190 = vmul.f32 %v2174, %v2186
      %v2191 = vmul.f32 %v2175, %v2186
      %v2192 = vmul.f32 %v2176, %v2186
      %v2193 = vmul.f32 %v2177, %v2186
      %v2194 = vmul.f32 %v2178, %v2186
      %v2195 = vmul.f32 %v2179, %v2186
      %v2196 = vadd.f32 %v2164, %v2188
      %v2197 = vadd.f32 %v2165, %v2189
      %v2198 = vadd.f32 %v2166, %v2190
      %v2199 = vadd.f32 %v2167, %v2191
      %v2200 = vadd.f32 %v2168, %v2192
      %v2201 = vadd.f32 %v2169, %v2193
      %v2202 = vadd.f32 %v2170, %v2194
      %v2203 = vadd.f32 %v2171, %v2195
      %v2204 = vld [vmem:[%s2043 + $0x5] sm:$0xff]
      %v2205 = vld [vmem:[%s2043 + $0x15] sm:$0xff]
      %v2206 = vld [vmem:[%s2043 + $0x25] sm:$0xff]
      %v2207 = vld [vmem:[%s2043 + $0x35] sm:$0xff]
      %v2208 = vld [vmem:[%s2043 + $0x45] sm:$0xff]
      %v2209 = vld [vmem:[%s2043 + $0x55] sm:$0xff]
      %v2210 = vld [vmem:[%s2043 + $0x65] sm:$0xff]
      %v2211 = vld [vmem:[%s2043 + $0x75] sm:$0xff]
      %s2212 = scalar_lea.vmem %s5, 40
      %v2213 = vld [vmem:[%s2212] sm:$0x1]
      %v2215 = vlaneseq
      %v2216 = vshrl.u32 %v2215, 7
      %v2217 = vsub.s32 0, %v2216
      %v2218 = vrot.slane %v2213, %v2217
      %v2220 = vmul.f32 %v2204, %v2218
      %v2221 = vmul.f32 %v2205, %v2218
      %v2222 = vmul.f32 %v2206, %v2218
      %v2223 = vmul.f32 %v2207, %v2218
      %v2224 = vmul.f32 %v2208, %v2218
      %v2225 = vmul.f32 %v2209, %v2218
      %v2226 = vmul.f32 %v2210, %v2218
      %v2227 = vmul.f32 %v2211, %v2218
      %v2228 = vadd.f32 %v2196, %v2220
      %v2229 = vadd.f32 %v2197, %v2221
      %v2230 = vadd.f32 %v2198, %v2222
      %v2231 = vadd.f32 %v2199, %v2223
      %v2232 = vadd.f32 %v2200, %v2224
      %v2233 = vadd.f32 %v2201, %v2225
      %v2234 = vadd.f32 %v2202, %v2226
      %v2235 = vadd.f32 %v2203, %v2227
      %v2236 = vld [vmem:[%s2043 + $0x6] sm:$0xff]
      %v2237 = vld [vmem:[%s2043 + $0x16] sm:$0xff]
      %v2238 = vld [vmem:[%s2043 + $0x26] sm:$0xff]
      %v2239 = vld [vmem:[%s2043 + $0x36] sm:$0xff]
      %v2240 = vld [vmem:[%s2043 + $0x46] sm:$0xff]
      %v2241 = vld [vmem:[%s2043 + $0x56] sm:$0xff]
      %v2242 = vld [vmem:[%s2043 + $0x66] sm:$0xff]
      %v2243 = vld [vmem:[%s2043 + $0x76] sm:$0xff]
      %s2244 = scalar_lea.vmem %s5, 41
      %v2245 = vld [vmem:[%s2244] sm:$0x1]
      %v2247 = vlaneseq
      %v2248 = vshrl.u32 %v2247, 7
      %v2249 = vsub.s32 0, %v2248
      %v2250 = vrot.slane %v2245, %v2249
      %v2252 = vmul.f32 %v2236, %v2250
      %v2253 = vmul.f32 %v2237, %v2250
      %v2254 = vmul.f32 %v2238, %v2250
      %v2255 = vmul.f32 %v2239, %v2250
      %v2256 = vmul.f32 %v2240, %v2250
      %v2257 = vmul.f32 %v2241, %v2250
      %v2258 = vmul.f32 %v2242, %v2250
      %v2259 = vmul.f32 %v2243, %v2250
      %v2260 = vadd.f32 %v2228, %v2252
      %v2261 = vadd.f32 %v2229, %v2253
      %v2262 = vadd.f32 %v2230, %v2254
      %v2263 = vadd.f32 %v2231, %v2255
      %v2264 = vadd.f32 %v2232, %v2256
      %v2265 = vadd.f32 %v2233, %v2257
      %v2266 = vadd.f32 %v2234, %v2258
      %v2267 = vadd.f32 %v2235, %v2259
      %s2268 = scalar_lea.vmem [#allocation2], 96
      %v2269 = vld [vmem:[%s2268] sm:$0xff]
      %v2270 = vld [vmem:[%s2268 + $0x10] sm:$0xff]
      %v2271 = vld [vmem:[%s2268 + $0x20] sm:$0xff]
      %v2272 = vld [vmem:[%s2268 + $0x30] sm:$0xff]
      %v2273 = vld [vmem:[%s2268 + $0x40] sm:$0xff]
      %v2274 = vld [vmem:[%s2268 + $0x50] sm:$0xff]
      %v2275 = vld [vmem:[%s2268 + $0x60] sm:$0xff]
      %v2276 = vld [vmem:[%s2268 + $0x70] sm:$0xff]
      %s2277 = scalar_lea.vmem %s5, 42
      %v2278 = vld [vmem:[%s2277] sm:$0x1]
      %v2280 = vlaneseq
      %v2281 = vshrl.u32 %v2280, 7
      %v2282 = vsub.s32 0, %v2281
      %v2283 = vrot.slane %v2278, %v2282
      %v2285 = vmul.f32 %v2269, %v2283
      %v2286 = vmul.f32 %v2270, %v2283
      %v2287 = vmul.f32 %v2271, %v2283
      %v2288 = vmul.f32 %v2272, %v2283
      %v2289 = vmul.f32 %v2273, %v2283
      %v2290 = vmul.f32 %v2274, %v2283
      %v2291 = vmul.f32 %v2275, %v2283
      %v2292 = vmul.f32 %v2276, %v2283
      %v2293 = vadd.f32 %v2260, %v2285
      %v2294 = vadd.f32 %v2261, %v2286
      %v2295 = vadd.f32 %v2262, %v2287
      %v2296 = vadd.f32 %v2263, %v2288
      %v2297 = vadd.f32 %v2264, %v2289
      %v2298 = vadd.f32 %v2265, %v2290
      %v2299 = vadd.f32 %v2266, %v2291
      %v2300 = vadd.f32 %v2267, %v2292
      %v2301 = vld [vmem:[%s2268 + $0x1] sm:$0xff]
      %v2302 = vld [vmem:[%s2268 + $0x11] sm:$0xff]
      %v2303 = vld [vmem:[%s2268 + $0x21] sm:$0xff]
      %v2304 = vld [vmem:[%s2268 + $0x31] sm:$0xff]
      %v2305 = vld [vmem:[%s2268 + $0x41] sm:$0xff]
      %v2306 = vld [vmem:[%s2268 + $0x51] sm:$0xff]
      %v2307 = vld [vmem:[%s2268 + $0x61] sm:$0xff]
      %v2308 = vld [vmem:[%s2268 + $0x71] sm:$0xff]
      %s2309 = scalar_lea.vmem %s5, 43
      %v2310 = vld [vmem:[%s2309] sm:$0x1]
      %v2312 = vlaneseq
      %v2313 = vshrl.u32 %v2312, 7
      %v2314 = vsub.s32 0, %v2313
      %v2315 = vrot.slane %v2310, %v2314
      %v2317 = vmul.f32 %v2301, %v2315
      %v2318 = vmul.f32 %v2302, %v2315
      %v2319 = vmul.f32 %v2303, %v2315
      %v2320 = vmul.f32 %v2304, %v2315
      %v2321 = vmul.f32 %v2305, %v2315
      %v2322 = vmul.f32 %v2306, %v2315
      %v2323 = vmul.f32 %v2307, %v2315
      %v2324 = vmul.f32 %v2308, %v2315
      %v2325 = vadd.f32 %v2293, %v2317
      %v2326 = vadd.f32 %v2294, %v2318
      %v2327 = vadd.f32 %v2295, %v2319
      %v2328 = vadd.f32 %v2296, %v2320
      %v2329 = vadd.f32 %v2297, %v2321
      %v2330 = vadd.f32 %v2298, %v2322
      %v2331 = vadd.f32 %v2299, %v2323
      %v2332 = vadd.f32 %v2300, %v2324
      %v2333 = vld [vmem:[%s2268 + $0x2] sm:$0xff]
      %v2334 = vld [vmem:[%s2268 + $0x12] sm:$0xff]
      %v2335 = vld [vmem:[%s2268 + $0x22] sm:$0xff]
      %v2336 = vld [vmem:[%s2268 + $0x32] sm:$0xff]
      %v2337 = vld [vmem:[%s2268 + $0x42] sm:$0xff]
      %v2338 = vld [vmem:[%s2268 + $0x52] sm:$0xff]
      %v2339 = vld [vmem:[%s2268 + $0x62] sm:$0xff]
      %v2340 = vld [vmem:[%s2268 + $0x72] sm:$0xff]
      %s2341 = scalar_lea.vmem %s5, 44
      %v2342 = vld [vmem:[%s2341] sm:$0x1]
      %v2344 = vlaneseq
      %v2345 = vshrl.u32 %v2344, 7
      %v2346 = vsub.s32 0, %v2345
      %v2347 = vrot.slane %v2342, %v2346
      %v2349 = vmul.f32 %v2333, %v2347
      %v2350 = vmul.f32 %v2334, %v2347
      %v2351 = vmul.f32 %v2335, %v2347
      %v2352 = vmul.f32 %v2336, %v2347
      %v2353 = vmul.f32 %v2337, %v2347
      %v2354 = vmul.f32 %v2338, %v2347
      %v2355 = vmul.f32 %v2339, %v2347
      %v2356 = vmul.f32 %v2340, %v2347
      %v2357 = vadd.f32 %v2325, %v2349
      %v2358 = vadd.f32 %v2326, %v2350
      %v2359 = vadd.f32 %v2327, %v2351
      %v2360 = vadd.f32 %v2328, %v2352
      %v2361 = vadd.f32 %v2329, %v2353
      %v2362 = vadd.f32 %v2330, %v2354
      %v2363 = vadd.f32 %v2331, %v2355
      %v2364 = vadd.f32 %v2332, %v2356
      %v2365 = vld [vmem:[%s2268 + $0x3] sm:$0xff]
      %v2366 = vld [vmem:[%s2268 + $0x13] sm:$0xff]
      %v2367 = vld [vmem:[%s2268 + $0x23] sm:$0xff]
      %v2368 = vld [vmem:[%s2268 + $0x33] sm:$0xff]
      %v2369 = vld [vmem:[%s2268 + $0x43] sm:$0xff]
      %v2370 = vld [vmem:[%s2268 + $0x53] sm:$0xff]
      %v2371 = vld [vmem:[%s2268 + $0x63] sm:$0xff]
      %v2372 = vld [vmem:[%s2268 + $0x73] sm:$0xff]
      %s2373 = scalar_lea.vmem %s5, 45
      %v2374 = vld [vmem:[%s2373] sm:$0x1]
      %v2376 = vlaneseq
      %v2377 = vshrl.u32 %v2376, 7
      %v2378 = vsub.s32 0, %v2377
      %v2379 = vrot.slane %v2374, %v2378
      %v2381 = vmul.f32 %v2365, %v2379
      %v2382 = vmul.f32 %v2366, %v2379
      %v2383 = vmul.f32 %v2367, %v2379
      %v2384 = vmul.f32 %v2368, %v2379
      %v2385 = vmul.f32 %v2369, %v2379
      %v2386 = vmul.f32 %v2370, %v2379
      %v2387 = vmul.f32 %v2371, %v2379
      %v2388 = vmul.f32 %v2372, %v2379
      %v2389 = vadd.f32 %v2357, %v2381
      %v2390 = vadd.f32 %v2358, %v2382
      %v2391 = vadd.f32 %v2359, %v2383
      %v2392 = vadd.f32 %v2360, %v2384
      %v2393 = vadd.f32 %v2361, %v2385
      %v2394 = vadd.f32 %v2362, %v2386
      %v2395 = vadd.f32 %v2363, %v2387
      %v2396 = vadd.f32 %v2364, %v2388
      %v2397 = vld [vmem:[%s2268 + $0x4] sm:$0xff]
      %v2398 = vld [vmem:[%s2268 + $0x14] sm:$0xff]
      %v2399 = vld [vmem:[%s2268 + $0x24] sm:$0xff]
      %v2400 = vld [vmem:[%s2268 + $0x34] sm:$0xff]
      %v2401 = vld [vmem:[%s2268 + $0x44] sm:$0xff]
      %v2402 = vld [vmem:[%s2268 + $0x54] sm:$0xff]
      %v2403 = vld [vmem:[%s2268 + $0x64] sm:$0xff]
      %v2404 = vld [vmem:[%s2268 + $0x74] sm:$0xff]
      %s2405 = scalar_lea.vmem %s5, 46
      %v2406 = vld [vmem:[%s2405] sm:$0x1]
      %v2408 = vlaneseq
      %v2409 = vshrl.u32 %v2408, 7
      %v2410 = vsub.s32 0, %v2409
      %v2411 = vrot.slane %v2406, %v2410
      %v2413 = vmul.f32 %v2397, %v2411
      %v2414 = vmul.f32 %v2398, %v2411
      %v2415 = vmul.f32 %v2399, %v2411
      %v2416 = vmul.f32 %v2400, %v2411
      %v2417 = vmul.f32 %v2401, %v2411
      %v2418 = vmul.f32 %v2402, %v2411
      %v2419 = vmul.f32 %v2403, %v2411
      %v2420 = vmul.f32 %v2404, %v2411
      %v2421 = vadd.f32 %v2389, %v2413
      %v2422 = vadd.f32 %v2390, %v2414
      %v2423 = vadd.f32 %v2391, %v2415
      %v2424 = vadd.f32 %v2392, %v2416
      %v2425 = vadd.f32 %v2393, %v2417
      %v2426 = vadd.f32 %v2394, %v2418
      %v2427 = vadd.f32 %v2395, %v2419
      %v2428 = vadd.f32 %v2396, %v2420
      %v2429 = vld [vmem:[%s2268 + $0x5] sm:$0xff]
      %v2430 = vld [vmem:[%s2268 + $0x15] sm:$0xff]
      %v2431 = vld [vmem:[%s2268 + $0x25] sm:$0xff]
      %v2432 = vld [vmem:[%s2268 + $0x35] sm:$0xff]
      %v2433 = vld [vmem:[%s2268 + $0x45] sm:$0xff]
      %v2434 = vld [vmem:[%s2268 + $0x55] sm:$0xff]
      %v2435 = vld [vmem:[%s2268 + $0x65] sm:$0xff]
      %v2436 = vld [vmem:[%s2268 + $0x75] sm:$0xff]
      %s2437 = scalar_lea.vmem %s5, 47
      %v2438 = vld [vmem:[%s2437] sm:$0x1]
      %v2440 = vlaneseq
      %v2441 = vshrl.u32 %v2440, 7
      %v2442 = vsub.s32 0, %v2441
      %v2443 = vrot.slane %v2438, %v2442
      %v2445 = vmul.f32 %v2429, %v2443
      %v2446 = vmul.f32 %v2430, %v2443
      %v2447 = vmul.f32 %v2431, %v2443
      %v2448 = vmul.f32 %v2432, %v2443
      %v2449 = vmul.f32 %v2433, %v2443
      %v2450 = vmul.f32 %v2434, %v2443
      %v2451 = vmul.f32 %v2435, %v2443
      %v2452 = vmul.f32 %v2436, %v2443
      %v2453 = vadd.f32 %v2421, %v2445
      %v2454 = vadd.f32 %v2422, %v2446
      %v2455 = vadd.f32 %v2423, %v2447
      %v2456 = vadd.f32 %v2424, %v2448
      %v2457 = vadd.f32 %v2425, %v2449
      %v2458 = vadd.f32 %v2426, %v2450
      %v2459 = vadd.f32 %v2427, %v2451
      %v2460 = vadd.f32 %v2428, %v2452
      %v2461 = vld [vmem:[%s2268 + $0x6] sm:$0xff]
      %v2462 = vld [vmem:[%s2268 + $0x16] sm:$0xff]
      %v2463 = vld [vmem:[%s2268 + $0x26] sm:$0xff]
      %v2464 = vld [vmem:[%s2268 + $0x36] sm:$0xff]
      %v2465 = vld [vmem:[%s2268 + $0x46] sm:$0xff]
      %v2466 = vld [vmem:[%s2268 + $0x56] sm:$0xff]
      %v2467 = vld [vmem:[%s2268 + $0x66] sm:$0xff]
      %v2468 = vld [vmem:[%s2268 + $0x76] sm:$0xff]
      %s2469 = scalar_lea.vmem %s5, 48
      %v2470 = vld [vmem:[%s2469] sm:$0x1]
      %v2472 = vlaneseq
      %v2473 = vshrl.u32 %v2472, 7
      %v2474 = vsub.s32 0, %v2473
      %v2475 = vrot.slane %v2470, %v2474
      %v2477 = vmul.f32 %v2461, %v2475
      %v2478 = vmul.f32 %v2462, %v2475
      %v2479 = vmul.f32 %v2463, %v2475
      %v2480 = vmul.f32 %v2464, %v2475
      %v2481 = vmul.f32 %v2465, %v2475
      %v2482 = vmul.f32 %v2466, %v2475
      %v2483 = vmul.f32 %v2467, %v2475
      %v2484 = vmul.f32 %v2468, %v2475
      %v2485 = vadd.f32 %v2453, %v2477
      %v2486 = vadd.f32 %v2454, %v2478
      %v2487 = vadd.f32 %v2455, %v2479
      %v2488 = vadd.f32 %v2456, %v2480
      %v2489 = vadd.f32 %v2457, %v2481
      %v2490 = vadd.f32 %v2458, %v2482
      %v2491 = vadd.f32 %v2459, %v2483
      %v2492 = vadd.f32 %v2460, %v2484
      %v2493 = vsel %vm481, %v2485, 0.0
      %2494 = vadd.xlane.f32.xlu0 %v2493
      %v2495 = vpop.xlane.xlu0 %2494
      %v2496 = vsel %vm481, %v2486, 0.0
      %2497 = vadd.xlane.f32.xlu0 %v2496
      %v2498 = vpop.xlane.xlu0 %2497
      %v2499 = vsel %vm481, %v2487, 0.0
      %2500 = vadd.xlane.f32.xlu0 %v2499
      %v2501 = vpop.xlane.xlu0 %2500
      %v2502 = vsel %vm481, %v2488, 0.0
      %2503 = vadd.xlane.f32.xlu0 %v2502
      %v2504 = vpop.xlane.xlu0 %2503
      %v2505 = vsel %vm481, %v2489, 0.0
      %2506 = vadd.xlane.f32.xlu0 %v2505
      %v2507 = vpop.xlane.xlu0 %2506
      %v2508 = vsel %vm481, %v2490, 0.0
      %2509 = vadd.xlane.f32.xlu0 %v2508
      %v2510 = vpop.xlane.xlu0 %2509
      %v2511 = vsel %vm481, %v2491, 0.0
      %2512 = vadd.xlane.f32.xlu0 %v2511
      %v2513 = vpop.xlane.xlu0 %2512
      %v2514 = vsel %vm481, %v2492, 0.0
      %2515 = vadd.xlane.f32.xlu0 %v2514
      %v2516 = vpop.xlane.xlu0 %2515
      %v2517 = vxor.u32 %v2495, 2147483648
      %v2518 = vxor.u32 %v2498, 2147483648
      %v2519 = vxor.u32 %v2501, 2147483648
      %v2520 = vxor.u32 %v2504, 2147483648
      %v2521 = vxor.u32 %v2507, 2147483648
      %v2522 = vxor.u32 %v2510, 2147483648
      %v2523 = vxor.u32 %v2513, 2147483648
      %v2524 = vxor.u32 %v2516, 2147483648
      %v2525 = vmul.f32 %v2517, 1.442695
      %v2526 = vpow.pop %v2525
      %v2527 = vmul.f32 %v2518, 1.442695
      %v2528 = vpow.pop %v2527
      %v2529 = vmul.f32 %v2519, 1.442695
      %v2530 = vpow.pop %v2529
      %v2531 = vmul.f32 %v2520, 1.442695
      %v2532 = vpow.pop %v2531
      %v2533 = vmul.f32 %v2521, 1.442695
      %v2534 = vpow.pop %v2533
      %v2535 = vmul.f32 %v2522, 1.442695
      %v2536 = vpow.pop %v2535
      %v2537 = vmul.f32 %v2523, 1.442695
      %v2538 = vpow.pop %v2537
      %v2539 = vmul.f32 %v2524, 1.442695
      %v2540 = vpow.pop %v2539
      %v2541 = vadd.f32 %v2526, 1.0
      %v2542 = vadd.f32 %v2528, 1.0
      %v2543 = vadd.f32 %v2530, 1.0
      %v2544 = vadd.f32 %v2532, 1.0
      %v2545 = vadd.f32 %v2534, 1.0
      %v2546 = vadd.f32 %v2536, 1.0
      %v2547 = vadd.f32 %v2538, 1.0
      %v2548 = vadd.f32 %v2540, 1.0
      %v2549 = vrcp.pop %v2541
      %v2550 = vmul.f32 1.0, %v2549
      %v2551 = vrcp.pop %v2542
      %v2552 = vmul.f32 1.0, %v2551
      %v2553 = vrcp.pop %v2543
      %v2554 = vmul.f32 1.0, %v2553
      %v2555 = vrcp.pop %v2544
      %v2556 = vmul.f32 1.0, %v2555
      %v2557 = vrcp.pop %v2545
      %v2558 = vmul.f32 1.0, %v2557
      %v2559 = vrcp.pop %v2546
      %v2560 = vmul.f32 1.0, %v2559
      %v2561 = vrcp.pop %v2547
      %v2562 = vmul.f32 1.0, %v2561
      %v2563 = vrcp.pop %v2548
      %v2564 = vmul.f32 1.0, %v2563
      %v2565 = vmul.f32 %v875, %v2550
      %v2566 = vmul.f32 %v876, %v2552
      %v2567 = vmul.f32 %v877, %v2554
      %v2568 = vmul.f32 %v878, %v2556
      %v2569 = vmul.f32 %v879, %v2558
      %v2570 = vmul.f32 %v880, %v2560
      %v2571 = vmul.f32 %v881, %v2562
      %v2572 = vmul.f32 %v882, %v2564
      %2573 = vst.msk [vmem:[#allocation3] sm:$0xff] %vm481, 0.0
      %vm2574 = vcmask 517120
      %2575 = vst.msk [vmem:[#allocation3 + $0x8] sm:$0x3] %vm2574, 0.0
      %2576 = vst.msk [vmem:[#allocation3 + $0x10] sm:$0xff] %vm481, 0.0
      %2577 = vst.msk [vmem:[#allocation3 + $0x18] sm:$0x3] %vm2574, 0.0
      %2578 = vst.msk [vmem:[#allocation3 + $0x20] sm:$0xff] %vm481, 0.0
      %2579 = vst.msk [vmem:[#allocation3 + $0x28] sm:$0x3] %vm2574, 0.0
      %2580 = vst.msk [vmem:[#allocation3 + $0x30] sm:$0xff] %vm481, 0.0
      %2581 = vst.msk [vmem:[#allocation3 + $0x38] sm:$0x3] %vm2574, 0.0
      %2582 = vst.msk [vmem:[#allocation3 + $0x40] sm:$0xff] %vm481, 0.0
      %2583 = vst.msk [vmem:[#allocation3 + $0x48] sm:$0x3] %vm2574, 0.0
      %2584 = vst.msk [vmem:[#allocation3 + $0x50] sm:$0xff] %vm481, 0.0
      %2585 = vst.msk [vmem:[#allocation3 + $0x58] sm:$0x3] %vm2574, 0.0
      %2586 = vst.msk [vmem:[#allocation3 + $0x60] sm:$0xff] %vm481, 0.0
      %2587 = vst.msk [vmem:[#allocation3 + $0x68] sm:$0x3] %vm2574, 0.0
      %2588 = vst.msk [vmem:[#allocation3 + $0x70] sm:$0xff] %vm481, 0.0
      %2589 = vst.msk [vmem:[#allocation3 + $0x78] sm:$0x3] %vm2574, 0.0
      %2590 = vst.msk [vmem:[#allocation3 + $0x80] sm:$0xff] %vm481, 0.0
      %2591 = vst.msk [vmem:[#allocation3 + $0x88] sm:$0x3] %vm2574, 0.0
      %2592 = vst.msk [vmem:[#allocation3 + $0x90] sm:$0xff] %vm481, 0.0
      %2593 = vst.msk [vmem:[#allocation3 + $0x98] sm:$0x3] %vm2574, 0.0
      %s2594 = scalar_lea.vmem [#allocation3], 16
      %2595 = vst.msk [vmem:[%s2594 + $0x1] sm:$0xff] %vm481, %v2565
      %2596 = vst.msk [vmem:[%s2594 + $0x11] sm:$0xff] %vm481, %v2566
      %2597 = vst.msk [vmem:[%s2594 + $0x21] sm:$0xff] %vm481, %v2567
      %2598 = vst.msk [vmem:[%s2594 + $0x31] sm:$0xff] %vm481, %v2568
      %2599 = vst.msk [vmem:[%s2594 + $0x41] sm:$0xff] %vm481, %v2569
      %2600 = vst.msk [vmem:[%s2594 + $0x51] sm:$0xff] %vm481, %v2570
      %2601 = vst.msk [vmem:[%s2594 + $0x61] sm:$0xff] %vm481, %v2571
      %2602 = vst.msk [vmem:[%s2594 + $0x71] sm:$0xff] %vm481, %v2572
      %v2603 = vld [vmem:[#allocation3] sm:$0xff]
      %v2604 = vld [vmem:[#allocation3 + $0x10] sm:$0xff]
      %v2605 = vld [vmem:[#allocation3 + $0x20] sm:$0xff]
      %v2606 = vld [vmem:[#allocation3 + $0x30] sm:$0xff]
      %v2607 = vld [vmem:[#allocation3 + $0x40] sm:$0xff]
      %v2608 = vld [vmem:[#allocation3 + $0x50] sm:$0xff]
      %v2609 = vld [vmem:[#allocation3 + $0x60] sm:$0xff]
      %v2610 = vld [vmem:[#allocation3 + $0x70] sm:$0xff]
      %2611 = vst.msk [vmem:[#allocation6] sm:$0xff] %vm481, %v2603
      %2612 = vst.msk [vmem:[#allocation6 + $0x28] sm:$0xff] %vm481, %v2604
      %2613 = vst.msk [vmem:[#allocation6 + $0x50] sm:$0xff] %vm481, %v2605
      %2614 = vst.msk [vmem:[#allocation6 + $0x78] sm:$0xff] %vm481, %v2606
      %2615 = vst.msk [vmem:[#allocation6 + $0xa0] sm:$0xff] %vm481, %v2607
      %2616 = vst.msk [vmem:[#allocation6 + $0xc8] sm:$0xff] %vm481, %v2608
      %2617 = vst.msk [vmem:[#allocation6 + $0xf0] sm:$0xff] %vm481, %v2609
      %2618 = vst.msk [vmem:[#allocation6 + $0x118] sm:$0xff] %vm481, %v2610
      %v2619 = vld [vmem:[#allocation3 + $0x1] sm:$0xff]
      %v2620 = vld [vmem:[#allocation3 + $0x11] sm:$0xff]
      %v2621 = vld [vmem:[#allocation3 + $0x21] sm:$0xff]
      %v2622 = vld [vmem:[#allocation3 + $0x31] sm:$0xff]
      %v2623 = vld [vmem:[#allocation3 + $0x41] sm:$0xff]
      %v2624 = vld [vmem:[#allocation3 + $0x51] sm:$0xff]
      %v2625 = vld [vmem:[#allocation3 + $0x61] sm:$0xff]
      %v2626 = vld [vmem:[#allocation3 + $0x71] sm:$0xff]
      %2635 = vrot.lane.b32.xlu0 %v2619, 64
      %v2636 = vpop.permute.xlu0 %2635
      %2637 = vrot.lane.b32.xlu0 %v2620, 64
      %v2638 = vpop.permute.xlu0 %2637
      %2639 = vrot.lane.b32.xlu0 %v2621, 64
      %v2640 = vpop.permute.xlu0 %2639
      %2641 = vrot.lane.b32.xlu0 %v2622, 64
      %v2642 = vpop.permute.xlu0 %2641
      %2643 = vrot.lane.b32.xlu0 %v2623, 64
      %v2644 = vpop.permute.xlu0 %2643
      %2645 = vrot.lane.b32.xlu0 %v2624, 64
      %v2646 = vpop.permute.xlu0 %2645
      %2647 = vrot.lane.b32.xlu0 %v2625, 64
      %v2648 = vpop.permute.xlu0 %2647
      %2649 = vrot.lane.b32.xlu0 %v2626, 64
      %v2650 = vpop.permute.xlu0 %2649
      %vm2659 = vcmask 1048064
      %2660 = vst.msk [vmem:[#allocation6] sm:$0xff] %vm2659, %v2636
      %2661 = vst.msk [vmem:[#allocation6 + $0x28] sm:$0xff] %vm2659, %v2638
      %2662 = vst.msk [vmem:[#allocation6 + $0x50] sm:$0xff] %vm2659, %v2640
      %2663 = vst.msk [vmem:[#allocation6 + $0x78] sm:$0xff] %vm2659, %v2642
      %2664 = vst.msk [vmem:[#allocation6 + $0xa0] sm:$0xff] %vm2659, %v2644
      %2665 = vst.msk [vmem:[#allocation6 + $0xc8] sm:$0xff] %vm2659, %v2646
      %2666 = vst.msk [vmem:[#allocation6 + $0xf0] sm:$0xff] %vm2659, %v2648
      %2667 = vst.msk [vmem:[#allocation6 + $0x118] sm:$0xff] %vm2659, %v2650
      %v2668 = vld [vmem:[#allocation3 + $0x2] sm:$0xff]
      %v2669 = vld [vmem:[#allocation3 + $0x12] sm:$0xff]
      %v2670 = vld [vmem:[#allocation3 + $0x22] sm:$0xff]
      %v2671 = vld [vmem:[#allocation3 + $0x32] sm:$0xff]
      %v2672 = vld [vmem:[#allocation3 + $0x42] sm:$0xff]
      %v2673 = vld [vmem:[#allocation3 + $0x52] sm:$0xff]
      %v2674 = vld [vmem:[#allocation3 + $0x62] sm:$0xff]
      %v2675 = vld [vmem:[#allocation3 + $0x72] sm:$0xff]
      %2676 = vst.msk [vmem:[#allocation6 + $0x8] sm:$0xff] %vm481, %v2668
      %2677 = vst.msk [vmem:[#allocation6 + $0x30] sm:$0xff] %vm481, %v2669
      %2678 = vst.msk [vmem:[#allocation6 + $0x58] sm:$0xff] %vm481, %v2670
      %2679 = vst.msk [vmem:[#allocation6 + $0x80] sm:$0xff] %vm481, %v2671
      %2680 = vst.msk [vmem:[#allocation6 + $0xa8] sm:$0xff] %vm481, %v2672
      %2681 = vst.msk [vmem:[#allocation6 + $0xd0] sm:$0xff] %vm481, %v2673
      %2682 = vst.msk [vmem:[#allocation6 + $0xf8] sm:$0xff] %vm481, %v2674
      %2683 = vst.msk [vmem:[#allocation6 + $0x120] sm:$0xff] %vm481, %v2675
      %v2684 = vld [vmem:[%s2594] sm:$0xff]
      %v2685 = vld [vmem:[%s2594 + $0x10] sm:$0xff]
      %v2686 = vld [vmem:[%s2594 + $0x20] sm:$0xff]
      %v2687 = vld [vmem:[%s2594 + $0x30] sm:$0xff]
      %v2688 = vld [vmem:[%s2594 + $0x40] sm:$0xff]
      %v2689 = vld [vmem:[%s2594 + $0x50] sm:$0xff]
      %v2690 = vld [vmem:[%s2594 + $0x60] sm:$0xff]
      %v2691 = vld [vmem:[%s2594 + $0x70] sm:$0xff]
      %2700 = vrot.lane.b32.xlu0 %v2684, 64
      %v2701 = vpop.permute.xlu0 %2700
      %2702 = vrot.lane.b32.xlu0 %v2685, 64
      %v2703 = vpop.permute.xlu0 %2702
      %2704 = vrot.lane.b32.xlu0 %v2686, 64
      %v2705 = vpop.permute.xlu0 %2704
      %2706 = vrot.lane.b32.xlu0 %v2687, 64
      %v2707 = vpop.permute.xlu0 %2706
      %2708 = vrot.lane.b32.xlu0 %v2688, 64
      %v2709 = vpop.permute.xlu0 %2708
      %2710 = vrot.lane.b32.xlu0 %v2689, 64
      %v2711 = vpop.permute.xlu0 %2710
      %2712 = vrot.lane.b32.xlu0 %v2690, 64
      %v2713 = vpop.permute.xlu0 %2712
      %2714 = vrot.lane.b32.xlu0 %v2691, 64
      %v2715 = vpop.permute.xlu0 %2714
      %2724 = vst.msk [vmem:[#allocation6 + $0x8] sm:$0xff] %vm2659, %v2701
      %2725 = vst.msk [vmem:[#allocation6 + $0x30] sm:$0xff] %vm2659, %v2703
      %2726 = vst.msk [vmem:[#allocation6 + $0x58] sm:$0xff] %vm2659, %v2705
      %2727 = vst.msk [vmem:[#allocation6 + $0x80] sm:$0xff] %vm2659, %v2707
      %2728 = vst.msk [vmem:[#allocation6 + $0xa8] sm:$0xff] %vm2659, %v2709
      %2729 = vst.msk [vmem:[#allocation6 + $0xd0] sm:$0xff] %vm2659, %v2711
      %2730 = vst.msk [vmem:[#allocation6 + $0xf8] sm:$0xff] %vm2659, %v2713
      %2731 = vst.msk [vmem:[#allocation6 + $0x120] sm:$0xff] %vm2659, %v2715
      %v2732 = vld [vmem:[%s2594 + $0x1] sm:$0xff]
      %v2733 = vld [vmem:[%s2594 + $0x11] sm:$0xff]
      %v2734 = vld [vmem:[%s2594 + $0x21] sm:$0xff]
      %v2735 = vld [vmem:[%s2594 + $0x31] sm:$0xff]
      %v2736 = vld [vmem:[%s2594 + $0x41] sm:$0xff]
      %v2737 = vld [vmem:[%s2594 + $0x51] sm:$0xff]
      %v2738 = vld [vmem:[%s2594 + $0x61] sm:$0xff]
      %v2739 = vld [vmem:[%s2594 + $0x71] sm:$0xff]
      %2740 = vst.msk [vmem:[#allocation6 + $0x10] sm:$0xff] %vm481, %v2732
      %2741 = vst.msk [vmem:[#allocation6 + $0x38] sm:$0xff] %vm481, %v2733
      %2742 = vst.msk [vmem:[#allocation6 + $0x60] sm:$0xff] %vm481, %v2734
      %2743 = vst.msk [vmem:[#allocation6 + $0x88] sm:$0xff] %vm481, %v2735
      %2744 = vst.msk [vmem:[#allocation6 + $0xb0] sm:$0xff] %vm481, %v2736
      %2745 = vst.msk [vmem:[#allocation6 + $0xd8] sm:$0xff] %vm481, %v2737
      %2746 = vst.msk [vmem:[#allocation6 + $0x100] sm:$0xff] %vm481, %v2738
      %2747 = vst.msk [vmem:[#allocation6 + $0x128] sm:$0xff] %vm481, %v2739
      %v2748 = vld [vmem:[%s2594 + $0x2] sm:$0xff]
      %v2749 = vld [vmem:[%s2594 + $0x12] sm:$0xff]
      %v2750 = vld [vmem:[%s2594 + $0x22] sm:$0xff]
      %v2751 = vld [vmem:[%s2594 + $0x32] sm:$0xff]
      %v2752 = vld [vmem:[%s2594 + $0x42] sm:$0xff]
      %v2753 = vld [vmem:[%s2594 + $0x52] sm:$0xff]
      %v2754 = vld [vmem:[%s2594 + $0x62] sm:$0xff]
      %v2755 = vld [vmem:[%s2594 + $0x72] sm:$0xff]
      %2764 = vrot.lane.b32.xlu0 %v2748, 64
      %v2765 = vpop.permute.xlu0 %2764
      %2766 = vrot.lane.b32.xlu0 %v2749, 64
      %v2767 = vpop.permute.xlu0 %2766
      %2768 = vrot.lane.b32.xlu0 %v2750, 64
      %v2769 = vpop.permute.xlu0 %2768
      %2770 = vrot.lane.b32.xlu0 %v2751, 64
      %v2771 = vpop.permute.xlu0 %2770
      %2772 = vrot.lane.b32.xlu0 %v2752, 64
      %v2773 = vpop.permute.xlu0 %2772
      %2774 = vrot.lane.b32.xlu0 %v2753, 64
      %v2775 = vpop.permute.xlu0 %2774
      %2776 = vrot.lane.b32.xlu0 %v2754, 64
      %v2777 = vpop.permute.xlu0 %2776
      %2778 = vrot.lane.b32.xlu0 %v2755, 64
      %v2779 = vpop.permute.xlu0 %2778
      %2788 = vst.msk [vmem:[#allocation6 + $0x10] sm:$0xff] %vm2659, %v2765
      %2789 = vst.msk [vmem:[#allocation6 + $0x38] sm:$0xff] %vm2659, %v2767
      %2790 = vst.msk [vmem:[#allocation6 + $0x60] sm:$0xff] %vm2659, %v2769
      %2791 = vst.msk [vmem:[#allocation6 + $0x88] sm:$0xff] %vm2659, %v2771
      %2792 = vst.msk [vmem:[#allocation6 + $0xb0] sm:$0xff] %vm2659, %v2773
      %2793 = vst.msk [vmem:[#allocation6 + $0xd8] sm:$0xff] %vm2659, %v2775
      %2794 = vst.msk [vmem:[#allocation6 + $0x100] sm:$0xff] %vm2659, %v2777
      %2795 = vst.msk [vmem:[#allocation6 + $0x128] sm:$0xff] %vm2659, %v2779
      %s2796 = scalar_lea.vmem [#allocation3], 32
      %v2797 = vld [vmem:[%s2796] sm:$0xff]
      %v2798 = vld [vmem:[%s2796 + $0x10] sm:$0xff]
      %v2799 = vld [vmem:[%s2796 + $0x20] sm:$0xff]
      %v2800 = vld [vmem:[%s2796 + $0x30] sm:$0xff]
      %v2801 = vld [vmem:[%s2796 + $0x40] sm:$0xff]
      %v2802 = vld [vmem:[%s2796 + $0x50] sm:$0xff]
      %v2803 = vld [vmem:[%s2796 + $0x60] sm:$0xff]
      %v2804 = vld [vmem:[%s2796 + $0x70] sm:$0xff]
      %2805 = vst.msk [vmem:[#allocation6 + $0x18] sm:$0xff] %vm481, %v2797
      %2806 = vst.msk [vmem:[#allocation6 + $0x40] sm:$0xff] %vm481, %v2798
      %2807 = vst.msk [vmem:[#allocation6 + $0x68] sm:$0xff] %vm481, %v2799
      %2808 = vst.msk [vmem:[#allocation6 + $0x90] sm:$0xff] %vm481, %v2800
      %2809 = vst.msk [vmem:[#allocation6 + $0xb8] sm:$0xff] %vm481, %v2801
      %2810 = vst.msk [vmem:[#allocation6 + $0xe0] sm:$0xff] %vm481, %v2802
      %2811 = vst.msk [vmem:[#allocation6 + $0x108] sm:$0xff] %vm481, %v2803
      %2812 = vst.msk [vmem:[#allocation6 + $0x130] sm:$0xff] %vm481, %v2804
      %v2813 = vld [vmem:[%s2796 + $0x1] sm:$0xff]
      %v2814 = vld [vmem:[%s2796 + $0x11] sm:$0xff]
      %v2815 = vld [vmem:[%s2796 + $0x21] sm:$0xff]
      %v2816 = vld [vmem:[%s2796 + $0x31] sm:$0xff]
      %v2817 = vld [vmem:[%s2796 + $0x41] sm:$0xff]
      %v2818 = vld [vmem:[%s2796 + $0x51] sm:$0xff]
      %v2819 = vld [vmem:[%s2796 + $0x61] sm:$0xff]
      %v2820 = vld [vmem:[%s2796 + $0x71] sm:$0xff]
      %2829 = vrot.lane.b32.xlu0 %v2813, 64
      %v2830 = vpop.permute.xlu0 %2829
      %2831 = vrot.lane.b32.xlu0 %v2814, 64
      %v2832 = vpop.permute.xlu0 %2831
      %2833 = vrot.lane.b32.xlu0 %v2815, 64
      %v2834 = vpop.permute.xlu0 %2833
      %2835 = vrot.lane.b32.xlu0 %v2816, 64
      %v2836 = vpop.permute.xlu0 %2835
      %2837 = vrot.lane.b32.xlu0 %v2817, 64
      %v2838 = vpop.permute.xlu0 %2837
      %2839 = vrot.lane.b32.xlu0 %v2818, 64
      %v2840 = vpop.permute.xlu0 %2839
      %2841 = vrot.lane.b32.xlu0 %v2819, 64
      %v2842 = vpop.permute.xlu0 %2841
      %2843 = vrot.lane.b32.xlu0 %v2820, 64
      %v2844 = vpop.permute.xlu0 %2843
      %2853 = vst.msk [vmem:[#allocation6 + $0x18] sm:$0xff] %vm2659, %v2830
      %2854 = vst.msk [vmem:[#allocation6 + $0x40] sm:$0xff] %vm2659, %v2832
      %2855 = vst.msk [vmem:[#allocation6 + $0x68] sm:$0xff] %vm2659, %v2834
      %2856 = vst.msk [vmem:[#allocation6 + $0x90] sm:$0xff] %vm2659, %v2836
      %2857 = vst.msk [vmem:[#allocation6 + $0xb8] sm:$0xff] %vm2659, %v2838
      %2858 = vst.msk [vmem:[#allocation6 + $0xe0] sm:$0xff] %vm2659, %v2840
      %2859 = vst.msk [vmem:[#allocation6 + $0x108] sm:$0xff] %vm2659, %v2842
      %2860 = vst.msk [vmem:[#allocation6 + $0x130] sm:$0xff] %vm2659, %v2844
      %v2861 = vld [vmem:[%s2796 + $0x2] sm:$0xff]
      %v2862 = vld [vmem:[%s2796 + $0x12] sm:$0xff]
      %v2863 = vld [vmem:[%s2796 + $0x22] sm:$0xff]
      %v2864 = vld [vmem:[%s2796 + $0x32] sm:$0xff]
      %v2865 = vld [vmem:[%s2796 + $0x42] sm:$0xff]
      %v2866 = vld [vmem:[%s2796 + $0x52] sm:$0xff]
      %v2867 = vld [vmem:[%s2796 + $0x62] sm:$0xff]
      %v2868 = vld [vmem:[%s2796 + $0x72] sm:$0xff]
      %2869 = vst.msk [vmem:[#allocation6 + $0x20] sm:$0xff] %vm481, %v2861
      %2870 = vst.msk [vmem:[#allocation6 + $0x48] sm:$0xff] %vm481, %v2862
      %2871 = vst.msk [vmem:[#allocation6 + $0x70] sm:$0xff] %vm481, %v2863
      %2872 = vst.msk [vmem:[#allocation6 + $0x98] sm:$0xff] %vm481, %v2864
      %2873 = vst.msk [vmem:[#allocation6 + $0xc0] sm:$0xff] %vm481, %v2865
      %2874 = vst.msk [vmem:[#allocation6 + $0xe8] sm:$0xff] %vm481, %v2866
      %2875 = vst.msk [vmem:[#allocation6 + $0x110] sm:$0xff] %vm481, %v2867
      %2876 = vst.msk [vmem:[#allocation6 + $0x138] sm:$0xff] %vm481, %v2868
      %v2877 = vld [vmem:[#allocation6] sm:$0xff]
      %v2878 = vld [vmem:[#allocation6 + $0x8] sm:$0xff]
      %v2879 = vld [vmem:[#allocation6 + $0x10] sm:$0xff]
      %v2880 = vld [vmem:[#allocation6 + $0x18] sm:$0xff]
      %v2881 = vld [vmem:[#allocation6 + $0x20] sm:$0xff]
      %v2882 = vld [vmem:[#allocation6 + $0x28] sm:$0xff]
      %v2883 = vld [vmem:[#allocation6 + $0x30] sm:$0xff]
      %v2884 = vld [vmem:[#allocation6 + $0x38] sm:$0xff]
      %v2885 = vld [vmem:[#allocation6 + $0x40] sm:$0xff]
      %v2886 = vld [vmem:[#allocation6 + $0x48] sm:$0xff]
      %v2887 = vld [vmem:[#allocation6 + $0x50] sm:$0xff]
      %v2888 = vld [vmem:[#allocation6 + $0x58] sm:$0xff]
      %v2889 = vld [vmem:[#allocation6 + $0x60] sm:$0xff]
      %v2890 = vld [vmem:[#allocation6 + $0x68] sm:$0xff]
      %v2891 = vld [vmem:[#allocation6 + $0x70] sm:$0xff]
      %v2892 = vld [vmem:[#allocation6 + $0x78] sm:$0xff]
      %v2893 = vld [vmem:[#allocation6 + $0x80] sm:$0xff]
      %v2894 = vld [vmem:[#allocation6 + $0x88] sm:$0xff]
      %v2895 = vld [vmem:[#allocation6 + $0x90] sm:$0xff]
      %v2896 = vld [vmem:[#allocation6 + $0x98] sm:$0xff]
      %v2897 = vld [vmem:[#allocation6 + $0xa0] sm:$0xff]
      %v2898 = vld [vmem:[#allocation6 + $0xa8] sm:$0xff]
      %v2899 = vld [vmem:[#allocation6 + $0xb0] sm:$0xff]
      %v2900 = vld [vmem:[#allocation6 + $0xb8] sm:$0xff]
      %v2901 = vld [vmem:[#allocation6 + $0xc0] sm:$0xff]
      %v2902 = vld [vmem:[#allocation6 + $0xc8] sm:$0xff]
      %v2903 = vld [vmem:[#allocation6 + $0xd0] sm:$0xff]
      %v2904 = vld [vmem:[#allocation6 + $0xd8] sm:$0xff]
      %v2905 = vld [vmem:[#allocation6 + $0xe0] sm:$0xff]
      %v2906 = vld [vmem:[#allocation6 + $0xe8] sm:$0xff]
      %v2907 = vld [vmem:[#allocation6 + $0xf0] sm:$0xff]
      %v2908 = vld [vmem:[#allocation6 + $0xf8] sm:$0xff]
      %v2909 = vld [vmem:[#allocation6 + $0x100] sm:$0xff]
      %v2910 = vld [vmem:[#allocation6 + $0x108] sm:$0xff]
      %v2911 = vld [vmem:[#allocation6 + $0x110] sm:$0xff]
      %v2912 = vld [vmem:[#allocation6 + $0x118] sm:$0xff]
      %v2913 = vld [vmem:[#allocation6 + $0x120] sm:$0xff]
      %v2914 = vld [vmem:[#allocation6 + $0x128] sm:$0xff]
      %v2915 = vld [vmem:[#allocation6 + $0x130] sm:$0xff]
      %v2916 = vld [vmem:[#allocation6 + $0x138] sm:$0xff]
      %v2917 = vld [vmem:[%s6] sm:$0xff]
      %v2918 = vld [vmem:[%s6 + $0x8] sm:$0xff]
      %v2919 = vld [vmem:[%s6 + $0x10] sm:$0xff]
      %v2920 = vld [vmem:[%s6 + $0x18] sm:$0xff]
      %v2921 = vld [vmem:[%s6 + $0x20] sm:$0xff]
      %v2922 = vld [vmem:[%s6 + $0x28] sm:$0xff]
      %v2923 = vld [vmem:[%s6 + $0x30] sm:$0xff]
      %v2924 = vld [vmem:[%s6 + $0x38] sm:$0xff]
      %v2925 = vld [vmem:[%s6 + $0x40] sm:$0xff]
      %v2926 = vld [vmem:[%s6 + $0x48] sm:$0xff]
      %v2927 = vld [vmem:[%s6 + $0x50] sm:$0xff]
      %v2928 = vld [vmem:[%s6 + $0x58] sm:$0xff]
      %v2929 = vld [vmem:[%s6 + $0x60] sm:$0xff]
      %v2930 = vld [vmem:[%s6 + $0x68] sm:$0xff]
      %v2931 = vld [vmem:[%s6 + $0x70] sm:$0xff]
      %v2932 = vld [vmem:[%s6 + $0x78] sm:$0xff]
      %v2933 = vld [vmem:[%s6 + $0x80] sm:$0xff]
      %v2934 = vld [vmem:[%s6 + $0x88] sm:$0xff]
      %v2935 = vld [vmem:[%s6 + $0x90] sm:$0xff]
      %v2936 = vld [vmem:[%s6 + $0x98] sm:$0xff]
      %v2937 = vld [vmem:[%s6 + $0xa0] sm:$0xff]
      %v2938 = vld [vmem:[%s6 + $0xa8] sm:$0xff]
      %v2939 = vld [vmem:[%s6 + $0xb0] sm:$0xff]
      %v2940 = vld [vmem:[%s6 + $0xb8] sm:$0xff]
      %v2941 = vld [vmem:[%s6 + $0xc0] sm:$0xff]
      %v2942 = vld [vmem:[%s6 + $0xc8] sm:$0xff]
      %v2943 = vld [vmem:[%s6 + $0xd0] sm:$0xff]
      %v2944 = vld [vmem:[%s6 + $0xd8] sm:$0xff]
      %v2945 = vld [vmem:[%s6 + $0xe0] sm:$0xff]
      %v2946 = vld [vmem:[%s6 + $0xe8] sm:$0xff]
      %v2947 = vld [vmem:[%s6 + $0xf0] sm:$0xff]
      %v2948 = vld [vmem:[%s6 + $0xf8] sm:$0xff]
      %v2949 = vld [vmem:[%s6 + $0x100] sm:$0xff]
      %v2950 = vld [vmem:[%s6 + $0x108] sm:$0xff]
      %v2951 = vld [vmem:[%s6 + $0x110] sm:$0xff]
      %v2952 = vld [vmem:[%s6 + $0x118] sm:$0xff]
      %v2953 = vld [vmem:[%s6 + $0x120] sm:$0xff]
      %v2954 = vld [vmem:[%s6 + $0x128] sm:$0xff]
      %v2955 = vld [vmem:[%s6 + $0x130] sm:$0xff]
      %v2956 = vld [vmem:[%s6 + $0x138] sm:$0xff]
      %v2957 = vld [vmem:[%s6 + $0x140] sm:$0xff]
      %v2958 = vld [vmem:[%s6 + $0x148] sm:$0xff]
      %v2959 = vld [vmem:[%s6 + $0x150] sm:$0xff]
      %v2960 = vld [vmem:[%s6 + $0x158] sm:$0xff]
      %v2961 = vld [vmem:[%s6 + $0x160] sm:$0xff]
      %v2962 = vld [vmem:[%s6 + $0x168] sm:$0xff]
      %v2963 = vld [vmem:[%s6 + $0x170] sm:$0xff]
      %v2964 = vld [vmem:[%s6 + $0x178] sm:$0xff]
      %v2965 = vld [vmem:[%s6 + $0x180] sm:$0xff]
      %v2966 = vld [vmem:[%s6 + $0x188] sm:$0xff]
      %v2967 = vld [vmem:[%s6 + $0x190] sm:$0xff]
      %v2968 = vld [vmem:[%s6 + $0x198] sm:$0xff]
      %v2969 = vld [vmem:[%s6 + $0x1a0] sm:$0xff]
      %v2970 = vld [vmem:[%s6 + $0x1a8] sm:$0xff]
      %v2971 = vld [vmem:[%s6 + $0x1b0] sm:$0xff]
      %v2972 = vld [vmem:[%s6 + $0x1b8] sm:$0xff]
      %v2973 = vld [vmem:[%s6 + $0x1c0] sm:$0xff]
      %v2974 = vld [vmem:[%s6 + $0x1c8] sm:$0xff]
      %v2975 = vld [vmem:[%s6 + $0x1d0] sm:$0xff]
      %v2976 = vld [vmem:[%s6 + $0x1d8] sm:$0xff]
      %v2977 = vld [vmem:[%s6 + $0x1e0] sm:$0xff]
      %v2978 = vld [vmem:[%s6 + $0x1e8] sm:$0xff]
      %v2979 = vld [vmem:[%s6 + $0x1f0] sm:$0xff]
      %v2980 = vld [vmem:[%s6 + $0x1f8] sm:$0xff]
      %v2981 = vld [vmem:[%s6 + $0x200] sm:$0xff]
      %v2982 = vld [vmem:[%s6 + $0x208] sm:$0xff]
      %v2983 = vld [vmem:[%s6 + $0x210] sm:$0xff]
      %v2984 = vld [vmem:[%s6 + $0x218] sm:$0xff]
      %v2985 = vld [vmem:[%s6 + $0x220] sm:$0xff]
      %v2986 = vld [vmem:[%s6 + $0x228] sm:$0xff]
      %v2987 = vld [vmem:[%s6 + $0x230] sm:$0xff]
      %v2988 = vld [vmem:[%s6 + $0x238] sm:$0xff]
      %v2989 = vld [vmem:[%s7] sm:$0x1]
      %v2991 = vlaneseq
      %v2992 = vshrl.u32 %v2991, 7
      %v2993 = vsub.s32 0, %v2992
      %v2994 = vrot.slane %v2989, %v2993
      %v2997 = vsel %vm481, %v2881, 0
      %v3000 = vsel %vm481, %v2886, 0
      %v3003 = vsel %vm481, %v2891, 0
      %v3006 = vsel %vm481, %v2896, 0
      %v3009 = vsel %vm481, %v2901, 0
      %v3012 = vsel %vm481, %v2906, 0
      %v3015 = vsel %vm481, %v2911, 0
      %v3018 = vsel %vm481, %v2916, 0
      %3020 = vmatprep.subr.mxu0 0.0
      %3021 = vmatpush1.msra.mxu0 %v2917
      %3022 = vmatprep.subr.mxu0 0.0
      %3023 = vmatpush1.msra.mxu0 %v2918
      %3024 = vmatprep.subr.mxu0 0.0
      %3025 = vmatpush1.msra.mxu0 %v2919
      %3026 = vmatprep.subr.mxu0 0.0
      %3027 = vmatpush1.msra.mxu0 %v2920
      %3028 = vmatprep.subr.mxu0 0.0
      %3029 = vmatpush1.msra.mxu0 %v2921
      %3030 = vmatprep.subr.mxu0 0.0
      %3031 = vmatpush1.msra.mxu0 %v2922
      %3032 = vmatprep.subr.mxu0 0.0
      %3033 = vmatpush1.msra.mxu0 %v2923
      %3034 = vmatprep.subr.mxu0 0.0
      %3035 = vmatpush1.msra.mxu0 %v2924
      %3036 = vmatprep.subr.mxu0 0.0
      %3037 = vmatpush1.msra.mxu0 %v2925
      %3038 = vmatprep.subr.mxu0 0.0
      %3039 = vmatpush1.msra.mxu0 %v2926
      %3040 = vmatprep.subr.mxu0 0.0
      %3041 = vmatpush1.msra.mxu0 %v2927
      %3042 = vmatprep.subr.mxu0 0.0
      %3043 = vmatpush1.msra.mxu0 %v2928
      %3044 = vmatprep.subr.mxu0 0.0
      %3045 = vmatpush1.msra.mxu0 %v2929
      %3046 = vmatprep.subr.mxu0 0.0
      %3047 = vmatpush1.msra.mxu0 %v2930
      %3048 = vmatprep.subr.mxu0 0.0
      %3049 = vmatpush1.msra.mxu0 %v2931
      %3050 = vmatprep.subr.mxu0 0.0
      %3051 = vmatpush1.msra.mxu0 %v2932
      %3052 = vmatprep.subr.mxu0 0.0
      %3053 = vmatpush1.msra.mxu0 %v2933
      %3054 = vmatprep.subr.mxu0 0.0
      %3055 = vmatpush1.msra.mxu0 %v2934
      %3056 = vmatprep.subr.mxu0 0.0
      %3057 = vmatpush1.msra.mxu0 %v2935
      %3058 = vmatprep.subr.mxu0 0.0
      %3059 = vmatpush1.msra.mxu0 %v2936
      %3060 = vmatprep.subr.mxu0 0.0
      %3061 = vmatpush1.msra.mxu0 %v2937
      %3062 = vmatprep.subr.mxu0 0.0
      %3063 = vmatpush1.msra.mxu0 %v2938
      %3064 = vmatprep.subr.mxu0 0.0
      %3065 = vmatpush1.msra.mxu0 %v2939
      %3066 = vmatprep.subr.mxu0 0.0
      %3067 = vmatpush1.msra.mxu0 %v2940
      %3068 = vmatprep.subr.mxu0 0.0
      %3069 = vmatpush1.msra.mxu0 %v2941
      %3070 = vmatprep.subr.mxu0 0.0
      %3071 = vmatpush1.msra.mxu0 %v2942
      %3072 = vmatprep.subr.mxu0 0.0
      %3073 = vmatpush1.msra.mxu0 %v2943
      %3074 = vmatprep.subr.mxu0 0.0
      %3075 = vmatpush1.msra.mxu0 %v2944
      %3076 = vmatprep.subr.mxu0 0.0
      %3077 = vmatpush1.msra.mxu0 %v2945
      %3078 = vmatprep.subr.mxu0 0.0
      %3079 = vmatpush1.msra.mxu0 %v2946
      %3080 = vmatprep.subr.mxu0 0.0
      %3081 = vmatpush1.msra.mxu0 %v2947
      %3082 = vmatprep.subr.mxu0 0.0
      %3083 = vmatpush1.msra.mxu0 %v2948
      %3084 = vmatprep.mubr.f32.mxu0 %v2878
      %3085 = vmatmul.mubr.f32.gmra.mrb[0].mxu0 %v2877
      %v3086 = vpop.f32.mrb[0].mxu0
      %v3087 = vadd.f32 %v2994, %v3086
      %v3088 = vpop.f32.mrb[0].mxu0
      %3089 = vmatprep.mubr.f32.mxu0 %v2883
      %3090 = vmatmul.mubr.f32.gmra.mrb[0].mxu0 %v2882
      %v3091 = vpop.f32.mrb[0].mxu0
      %v3092 = vadd.f32 %v2994, %v3091
      %v3093 = vpop.f32.mrb[0].mxu0
      %3094 = vmatprep.mubr.f32.mxu0 %v2888
      %3095 = vmatmul.mubr.f32.gmra.mrb[0].mxu0 %v2887
      %v3096 = vpop.f32.mrb[0].mxu0
      %v3097 = vadd.f32 %v2994, %v3096
      %v3098 = vpop.f32.mrb[0].mxu0
      %3099 = vmatprep.mubr.f32.mxu0 %v2893
      %3100 = vmatmul.mubr.f32.gmra.mrb[0].mxu0 %v2892
      %v3101 = vpop.f32.mrb[0].mxu0
      %v3102 = vadd.f32 %v2994, %v3101
      %v3103 = vpop.f32.mrb[0].mxu0
      %3104 = vmatprep.mubr.f32.mxu0 %v2898
      %3105 = vmatmul.mubr.f32.gmra.mrb[0].mxu0 %v2897
      %v3106 = vpop.f32.mrb[0].mxu0
      %v3107 = vadd.f32 %v2994, %v3106
      %v3108 = vpop.f32.mrb[0].mxu0
      %3109 = vmatprep.mubr.f32.mxu0 %v2903
      %3110 = vmatmul.mubr.f32.gmra.mrb[0].mxu0 %v2902
      %v3111 = vpop.f32.mrb[0].mxu0
      %v3112 = vadd.f32 %v2994, %v3111
      %v3113 = vpop.f32.mrb[0].mxu0
      %3114 = vmatprep.mubr.f32.mxu0 %v2908
      %3115 = vmatmul.mubr.f32.gmra.mrb[0].mxu0 %v2907
      %v3116 = vpop.f32.mrb[0].mxu0
      %v3117 = vadd.f32 %v2994, %v3116
      %v3118 = vpop.f32.mrb[0].mxu0
      %3119 = vmatprep.mubr.f32.mxu0 %v2913
      %3120 = vmatmul.mubr.f32.gmra.mrb[0].mxu0 %v2912
      %v3121 = vpop.f32.mrb[0].mxu0
      %v3122 = vadd.f32 %v2994, %v3121
      %v3123 = vpop.f32.mrb[0].mxu0
      %3124 = vdwg.mxu0
      %3125 = vmatprep.subr.mxu0 0.0
      %3126 = vmatpush1.msra.mxu0 %v2949
      %3127 = vmatprep.subr.mxu0 0.0
      %3128 = vmatpush1.msra.mxu0 %v2950
      %3129 = vmatprep.subr.mxu0 0.0
      %3130 = vmatpush1.msra.mxu0 %v2951
      %3131 = vmatprep.subr.mxu0 0.0
      %3132 = vmatpush1.msra.mxu0 %v2952
      %3133 = vmatprep.subr.mxu0 0.0
      %3134 = vmatpush1.msra.mxu0 %v2953
      %3135 = vmatprep.subr.mxu0 0.0
      %3136 = vmatpush1.msra.mxu0 %v2954
      %3137 = vmatprep.subr.mxu0 0.0
      %3138 = vmatpush1.msra.mxu0 %v2955
      %3139 = vmatprep.subr.mxu0 0.0
      %3140 = vmatpush1.msra.mxu0 %v2956
      %3141 = vmatprep.subr.mxu0 0.0
      %3142 = vmatpush1.msra.mxu0 %v2957
      %3143 = vmatprep.subr.mxu0 0.0
      %3144 = vmatpush1.msra.mxu0 %v2958
      %3145 = vmatprep.subr.mxu0 0.0
      %3146 = vmatpush1.msra.mxu0 %v2959
      %3147 = vmatprep.subr.mxu0 0.0
      %3148 = vmatpush1.msra.mxu0 %v2960
      %3149 = vmatprep.subr.mxu0 0.0
      %3150 = vmatpush1.msra.mxu0 %v2961
      %3151 = vmatprep.subr.mxu0 0.0
      %3152 = vmatpush1.msra.mxu0 %v2962
      %3153 = vmatprep.subr.mxu0 0.0
      %3154 = vmatpush1.msra.mxu0 %v2963
      %3155 = vmatprep.subr.mxu0 0.0
      %3156 = vmatpush1.msra.mxu0 %v2964
      %3157 = vmatprep.subr.mxu0 0.0
      %3158 = vmatpush1.msra.mxu0 %v2965
      %3159 = vmatprep.subr.mxu0 0.0
      %3160 = vmatpush1.msra.mxu0 %v2966
      %3161 = vmatprep.subr.mxu0 0.0
      %3162 = vmatpush1.msra.mxu0 %v2967
      %3163 = vmatprep.subr.mxu0 0.0
      %3164 = vmatpush1.msra.mxu0 %v2968
      %3165 = vmatprep.subr.mxu0 0.0
      %3166 = vmatpush1.msra.mxu0 %v2969
      %3167 = vmatprep.subr.mxu0 0.0
      %3168 = vmatpush1.msra.mxu0 %v2970
      %3169 = vmatprep.subr.mxu0 0.0
      %3170 = vmatpush1.msra.mxu0 %v2971
      %3171 = vmatprep.subr.mxu0 0.0
      %3172 = vmatpush1.msra.mxu0 %v2972
      %3173 = vmatprep.subr.mxu0 0.0
      %3174 = vmatpush1.msra.mxu0 %v2973
      %3175 = vmatprep.subr.mxu0 0.0
      %3176 = vmatpush1.msra.mxu0 %v2974
      %3177 = vmatprep.subr.mxu0 0.0
      %3178 = vmatpush1.msra.mxu0 %v2975
      %3179 = vmatprep.subr.mxu0 0.0
      %3180 = vmatpush1.msra.mxu0 %v2976
      %3181 = vmatprep.subr.mxu0 0.0
      %3182 = vmatpush1.msra.mxu0 %v2977
      %3183 = vmatprep.subr.mxu0 0.0
      %3184 = vmatpush1.msra.mxu0 %v2978
      %3185 = vmatprep.subr.mxu0 0.0
      %3186 = vmatpush1.msra.mxu0 %v2979
      %3187 = vmatprep.subr.mxu0 0.0
      %3188 = vmatpush1.msra.mxu0 %v2980
      %3189 = vmatprep.mubr.f32.mxu0 %v2880
      %3190 = vmatmul.mubr.f32.gmra.mrb[0].mxu0 %v2879
      %v3191 = vpop.f32.mrb[0].mxu0
      %v3192 = vadd.f32 %v3087, %v3191
      %v3193 = vpop.f32.mrb[0].mxu0
      %3194 = vmatprep.mubr.f32.mxu0 %v2885
      %3195 = vmatmul.mubr.f32.gmra.mrb[0].mxu0 %v2884
      %v3196 = vpop.f32.mrb[0].mxu0
      %v3197 = vadd.f32 %v3092, %v3196
      %v3198 = vpop.f32.mrb[0].mxu0
      %3199 = vmatprep.mubr.f32.mxu0 %v2890
      %3200 = vmatmul.mubr.f32.gmra.mrb[0].mxu0 %v2889
      %v3201 = vpop.f32.mrb[0].mxu0
      %v3202 = vadd.f32 %v3097, %v3201
      %v3203 = vpop.f32.mrb[0].mxu0
      %3204 = vmatprep.mubr.f32.mxu0 %v2895
      %3205 = vmatmul.mubr.f32.gmra.mrb[0].mxu0 %v2894
      %v3206 = vpop.f32.mrb[0].mxu0
      %v3207 = vadd.f32 %v3102, %v3206
      %v3208 = vpop.f32.mrb[0].mxu0
      %3209 = vmatprep.mubr.f32.mxu0 %v2900
      %3210 = vmatmul.mubr.f32.gmra.mrb[0].mxu0 %v2899
      %v3211 = vpop.f32.mrb[0].mxu0
      %v3212 = vadd.f32 %v3107, %v3211
      %v3213 = vpop.f32.mrb[0].mxu0
      %3214 = vmatprep.mubr.f32.mxu0 %v2905
      %3215 = vmatmul.mubr.f32.gmra.mrb[0].mxu0 %v2904
      %v3216 = vpop.f32.mrb[0].mxu0
      %v3217 = vadd.f32 %v3112, %v3216
      %v3218 = vpop.f32.mrb[0].mxu0
      %3219 = vmatprep.mubr.f32.mxu0 %v2910
      %3220 = vmatmul.mubr.f32.gmra.mrb[0].mxu0 %v2909
      %v3221 = vpop.f32.mrb[0].mxu0
      %v3222 = vadd.f32 %v3117, %v3221
      %v3223 = vpop.f32.mrb[0].mxu0
      %3224 = vmatprep.mubr.f32.mxu0 %v2915
      %3225 = vmatmul.mubr.f32.gmra.mrb[0].mxu0 %v2914
      %v3226 = vpop.f32.mrb[0].mxu0
      %v3227 = vadd.f32 %v3122, %v3226
      %v3228 = vpop.f32.mrb[0].mxu0
      %3229 = vdwg.mxu0
      %3230 = vmatprep.subr.mxu0 0.0
      %3231 = vmatpush1.msra.mxu0 %v2981
      %3232 = vmatprep.subr.mxu0 0.0
      %3233 = vmatpush1.msra.mxu0 %v2982
      %3234 = vmatprep.subr.mxu0 0.0
      %3235 = vmatpush1.msra.mxu0 %v2983
      %3236 = vmatprep.subr.mxu0 0.0
      %3237 = vmatpush1.msra.mxu0 %v2984
      %3238 = vmatprep.subr.mxu0 0.0
      %3239 = vmatpush1.msra.mxu0 %v2985
      %3240 = vmatprep.subr.mxu0 0.0
      %3241 = vmatpush1.msra.mxu0 %v2986
      %3242 = vmatprep.subr.mxu0 0.0
      %3243 = vmatpush1.msra.mxu0 %v2987
      %3244 = vmatprep.subr.mxu0 0.0
      %3245 = vmatpush1.msra.mxu0 %v2988
      %3246 = vmatprep.subr.mxu0 0.0
      %3247 = vmatpush1.msra.mxu0 0.0
      %3248 = vmatprep.subr.mxu0 0.0
      %3249 = vmatpush1.msra.mxu0 0.0
      %3250 = vmatprep.subr.mxu0 0.0
      %3251 = vmatpush1.msra.mxu0 0.0
      %3252 = vmatprep.subr.mxu0 0.0
      %3253 = vmatpush1.msra.mxu0 0.0
      %3254 = vmatprep.subr.mxu0 0.0
      %3255 = vmatpush1.msra.mxu0 0.0
      %3256 = vmatprep.subr.mxu0 0.0
      %3257 = vmatpush1.msra.mxu0 0.0
      %3258 = vmatprep.subr.mxu0 0.0
      %3259 = vmatpush1.msra.mxu0 0.0
      %3260 = vmatprep.subr.mxu0 0.0
      %3261 = vmatpush1.msra.mxu0 0.0
      %3262 = vmatprep.subr.mxu0 0.0
      %3263 = vmatpush1.msra.mxu0 0.0
      %3264 = vmatprep.subr.mxu0 0.0
      %3265 = vmatpush1.msra.mxu0 0.0
      %3266 = vmatprep.subr.mxu0 0.0
      %3267 = vmatpush1.msra.mxu0 0.0
      %3268 = vmatprep.subr.mxu0 0.0
      %3269 = vmatpush1.msra.mxu0 0.0
      %3270 = vmatprep.subr.mxu0 0.0
      %3271 = vmatpush1.msra.mxu0 0.0
      %3272 = vmatprep.subr.mxu0 0.0
      %3273 = vmatpush1.msra.mxu0 0.0
      %3274 = vmatprep.subr.mxu0 0.0
      %3275 = vmatpush1.msra.mxu0 0.0
      %3276 = vmatprep.subr.mxu0 0.0
      %3277 = vmatpush1.msra.mxu0 0.0
      %3278 = vmatprep.subr.mxu0 0.0
      %3279 = vmatpush1.msra.mxu0 0.0
      %3280 = vmatprep.subr.mxu0 0.0
      %3281 = vmatpush1.msra.mxu0 0.0
      %3282 = vmatprep.subr.mxu0 0.0
      %3283 = vmatpush1.msra.mxu0 0.0
      %3284 = vmatprep.subr.mxu0 0.0
      %3285 = vmatpush1.msra.mxu0 0.0
      %3286 = vmatprep.subr.mxu0 0.0
      %3287 = vmatpush1.msra.mxu0 0.0
      %3288 = vmatprep.subr.mxu0 0.0
      %3289 = vmatpush1.msra.mxu0 0.0
      %3290 = vmatprep.subr.mxu0 0.0
      %3291 = vmatpush1.msra.mxu0 0.0
      %3292 = vmatprep.subr.mxu0 0.0
      %3293 = vmatpush1.msra.mxu0 0.0
      %3294 = vmatprep.mubr.f32.mxu0 0.0
      %3295 = vmatmul.mubr.f32.gmra.mrb[0].mxu0 %v2997
      %v3296 = vpop.f32.mrb[0].mxu0
      %v3297 = vadd.f32 %v3192, %v3296
      %v3298 = vpop.f32.mrb[0].mxu0
      %3299 = vmatprep.mubr.f32.mxu0 0.0
      %3300 = vmatmul.mubr.f32.gmra.mrb[0].mxu0 %v3000
      %v3301 = vpop.f32.mrb[0].mxu0
      %v3302 = vadd.f32 %v3197, %v3301
      %v3303 = vpop.f32.mrb[0].mxu0
      %3304 = vmatprep.mubr.f32.mxu0 0.0
      %3305 = vmatmul.mubr.f32.gmra.mrb[0].mxu0 %v3003
      %v3306 = vpop.f32.mrb[0].mxu0
      %v3307 = vadd.f32 %v3202, %v3306
      %v3308 = vpop.f32.mrb[0].mxu0
      %3309 = vmatprep.mubr.f32.mxu0 0.0
      %3310 = vmatmul.mubr.f32.gmra.mrb[0].mxu0 %v3006
      %v3311 = vpop.f32.mrb[0].mxu0
      %v3312 = vadd.f32 %v3207, %v3311
      %v3313 = vpop.f32.mrb[0].mxu0
      %3314 = vmatprep.mubr.f32.mxu0 0.0
      %3315 = vmatmul.mubr.f32.gmra.mrb[0].mxu0 %v3009
      %v3316 = vpop.f32.mrb[0].mxu0
      %v3317 = vadd.f32 %v3212, %v3316
      %v3318 = vpop.f32.mrb[0].mxu0
      %3319 = vmatprep.mubr.f32.mxu0 0.0
      %3320 = vmatmul.mubr.f32.gmra.mrb[0].mxu0 %v3012
      %v3321 = vpop.f32.mrb[0].mxu0
      %v3322 = vadd.f32 %v3217, %v3321
      %v3323 = vpop.f32.mrb[0].mxu0
      %3324 = vmatprep.mubr.f32.mxu0 0.0
      %3325 = vmatmul.mubr.f32.gmra.mrb[0].mxu0 %v3015
      %v3326 = vpop.f32.mrb[0].mxu0
      %v3327 = vadd.f32 %v3222, %v3326
      %v3328 = vpop.f32.mrb[0].mxu0
      %3329 = vmatprep.mubr.f32.mxu0 0.0
      %3330 = vmatmul.mubr.f32.gmra.mrb[0].mxu0 %v3018
      %v3331 = vpop.f32.mrb[0].mxu0
      %v3332 = vadd.f32 %v3227, %v3331
      %v3333 = vpop.f32.mrb[0].mxu0
      %3334 = vdwg.mxu0
      %v3335 = vmax.f32 %v3297, 0.0
      %v3336 = vmax.f32 %v3302, 0.0
      %v3337 = vmax.f32 %v3307, 0.0
      %v3338 = vmax.f32 %v3312, 0.0
      %v3339 = vmax.f32 %v3317, 0.0
      %v3340 = vmax.f32 %v3322, 0.0
      %v3341 = vmax.f32 %v3327, 0.0
      %v3342 = vmax.f32 %v3332, 0.0
      %3343 = vst.msk [vmem:[#allocation4] sm:$0xff] %vm481, 0.0
      %3344 = vst.msk [vmem:[#allocation4 + $0x8] sm:$0x3] %vm2574, 0.0
      %3345 = vst.msk [vmem:[#allocation4 + $0x10] sm:$0xff] %vm481, 0.0
      %3346 = vst.msk [vmem:[#allocation4 + $0x18] sm:$0x3] %vm2574, 0.0
      %3347 = vst.msk [vmem:[#allocation4 + $0x20] sm:$0xff] %vm481, 0.0
      %3348 = vst.msk [vmem:[#allocation4 + $0x28] sm:$0x3] %vm2574, 0.0
      %3349 = vst.msk [vmem:[#allocation4 + $0x30] sm:$0xff] %vm481, 0.0
      %3350 = vst.msk [vmem:[#allocation4 + $0x38] sm:$0x3] %vm2574, 0.0
      %3351 = vst.msk [vmem:[#allocation4 + $0x40] sm:$0xff] %vm481, 0.0
      %3352 = vst.msk [vmem:[#allocation4 + $0x48] sm:$0x3] %vm2574, 0.0
      %3353 = vst.msk [vmem:[#allocation4 + $0x50] sm:$0xff] %vm481, 0.0
      %3354 = vst.msk [vmem:[#allocation4 + $0x58] sm:$0x3] %vm2574, 0.0
      %3355 = vst.msk [vmem:[#allocation4 + $0x60] sm:$0xff] %vm481, 0.0
      %3356 = vst.msk [vmem:[#allocation4 + $0x68] sm:$0x3] %vm2574, 0.0
      %3357 = vst.msk [vmem:[#allocation4 + $0x70] sm:$0xff] %vm481, 0.0
      %3358 = vst.msk [vmem:[#allocation4 + $0x78] sm:$0x3] %vm2574, 0.0
      %3359 = vst.msk [vmem:[#allocation4 + $0x80] sm:$0xff] %vm481, 0.0
      %3360 = vst.msk [vmem:[#allocation4 + $0x88] sm:$0x3] %vm2574, 0.0
      %3361 = vst.msk [vmem:[#allocation4 + $0x90] sm:$0xff] %vm481, 0.0
      %3362 = vst.msk [vmem:[#allocation4 + $0x98] sm:$0x3] %vm2574, 0.0
      %s3363 = scalar_lea.vmem [#allocation4], 16
      %3364 = vst.msk [vmem:[%s3363 + $0x1] sm:$0xff] %vm481, %v3335
      %3365 = vst.msk [vmem:[%s3363 + $0x11] sm:$0xff] %vm481, %v3336
      %3366 = vst.msk [vmem:[%s3363 + $0x21] sm:$0xff] %vm481, %v3337
      %3367 = vst.msk [vmem:[%s3363 + $0x31] sm:$0xff] %vm481, %v3338
      %3368 = vst.msk [vmem:[%s3363 + $0x41] sm:$0xff] %vm481, %v3339
      %3369 = vst.msk [vmem:[%s3363 + $0x51] sm:$0xff] %vm481, %v3340
      %3370 = vst.msk [vmem:[%s3363 + $0x61] sm:$0xff] %vm481, %v3341
      %3371 = vst.msk [vmem:[%s3363 + $0x71] sm:$0xff] %vm481, %v3342
      %v3372 = vld [vmem:[#allocation4] sm:$0xff]
      %v3373 = vld [vmem:[#allocation4 + $0x10] sm:$0xff]
      %v3374 = vld [vmem:[#allocation4 + $0x20] sm:$0xff]
      %v3375 = vld [vmem:[#allocation4 + $0x30] sm:$0xff]
      %v3376 = vld [vmem:[#allocation4 + $0x40] sm:$0xff]
      %v3377 = vld [vmem:[#allocation4 + $0x50] sm:$0xff]
      %v3378 = vld [vmem:[#allocation4 + $0x60] sm:$0xff]
      %v3379 = vld [vmem:[#allocation4 + $0x70] sm:$0xff]
      %3380 = vst.msk [vmem:[#allocation7] sm:$0xff] %vm481, %v3372
      %3381 = vst.msk [vmem:[#allocation7 + $0x28] sm:$0xff] %vm481, %v3373
      %3382 = vst.msk [vmem:[#allocation7 + $0x50] sm:$0xff] %vm481, %v3374
      %3383 = vst.msk [vmem:[#allocation7 + $0x78] sm:$0xff] %vm481, %v3375
      %3384 = vst.msk [vmem:[#allocation7 + $0xa0] sm:$0xff] %vm481, %v3376
      %3385 = vst.msk [vmem:[#allocation7 + $0xc8] sm:$0xff] %vm481, %v3377
      %3386 = vst.msk [vmem:[#allocation7 + $0xf0] sm:$0xff] %vm481, %v3378
      %3387 = vst.msk [vmem:[#allocation7 + $0x118] sm:$0xff] %vm481, %v3379
      %v3388 = vld [vmem:[#allocation4 + $0x1] sm:$0xff]
      %v3389 = vld [vmem:[#allocation4 + $0x11] sm:$0xff]
      %v3390 = vld [vmem:[#allocation4 + $0x21] sm:$0xff]
      %v3391 = vld [vmem:[#allocation4 + $0x31] sm:$0xff]
      %v3392 = vld [vmem:[#allocation4 + $0x41] sm:$0xff]
      %v3393 = vld [vmem:[#allocation4 + $0x51] sm:$0xff]
      %v3394 = vld [vmem:[#allocation4 + $0x61] sm:$0xff]
      %v3395 = vld [vmem:[#allocation4 + $0x71] sm:$0xff]
      %3404 = vrot.lane.b32.xlu0 %v3388, 64
      %v3405 = vpop.permute.xlu0 %3404
      %3406 = vrot.lane.b32.xlu0 %v3389, 64
      %v3407 = vpop.permute.xlu0 %3406
      %3408 = vrot.lane.b32.xlu0 %v3390, 64
      %v3409 = vpop.permute.xlu0 %3408
      %3410 = vrot.lane.b32.xlu0 %v3391, 64
      %v3411 = vpop.permute.xlu0 %3410
      %3412 = vrot.lane.b32.xlu0 %v3392, 64
      %v3413 = vpop.permute.xlu0 %3412
      %3414 = vrot.lane.b32.xlu0 %v3393, 64
      %v3415 = vpop.permute.xlu0 %3414
      %3416 = vrot.lane.b32.xlu0 %v3394, 64
      %v3417 = vpop.permute.xlu0 %3416
      %3418 = vrot.lane.b32.xlu0 %v3395, 64
      %v3419 = vpop.permute.xlu0 %3418
      %3428 = vst.msk [vmem:[#allocation7] sm:$0xff] %vm2659, %v3405
      %3429 = vst.msk [vmem:[#allocation7 + $0x28] sm:$0xff] %vm2659, %v3407
      %3430 = vst.msk [vmem:[#allocation7 + $0x50] sm:$0xff] %vm2659, %v3409
      %3431 = vst.msk [vmem:[#allocation7 + $0x78] sm:$0xff] %vm2659, %v3411
      %3432 = vst.msk [vmem:[#allocation7 + $0xa0] sm:$0xff] %vm2659, %v3413
      %3433 = vst.msk [vmem:[#allocation7 + $0xc8] sm:$0xff] %vm2659, %v3415
      %3434 = vst.msk [vmem:[#allocation7 + $0xf0] sm:$0xff] %vm2659, %v3417
      %3435 = vst.msk [vmem:[#allocation7 + $0x118] sm:$0xff] %vm2659, %v3419
      %v3436 = vld [vmem:[#allocation4 + $0x2] sm:$0xff]
      %v3437 = vld [vmem:[#allocation4 + $0x12] sm:$0xff]
      %v3438 = vld [vmem:[#allocation4 + $0x22] sm:$0xff]
      %v3439 = vld [vmem:[#allocation4 + $0x32] sm:$0xff]
      %v3440 = vld [vmem:[#allocation4 + $0x42] sm:$0xff]
      %v3441 = vld [vmem:[#allocation4 + $0x52] sm:$0xff]
      %v3442 = vld [vmem:[#allocation4 + $0x62] sm:$0xff]
      %v3443 = vld [vmem:[#allocation4 + $0x72] sm:$0xff]
      %3444 = vst.msk [vmem:[#allocation7 + $0x8] sm:$0xff] %vm481, %v3436
      %3445 = vst.msk [vmem:[#allocation7 + $0x30] sm:$0xff] %vm481, %v3437
      %3446 = vst.msk [vmem:[#allocation7 + $0x58] sm:$0xff] %vm481, %v3438
      %3447 = vst.msk [vmem:[#allocation7 + $0x80] sm:$0xff] %vm481, %v3439
      %3448 = vst.msk [vmem:[#allocation7 + $0xa8] sm:$0xff] %vm481, %v3440
      %3449 = vst.msk [vmem:[#allocation7 + $0xd0] sm:$0xff] %vm481, %v3441
      %3450 = vst.msk [vmem:[#allocation7 + $0xf8] sm:$0xff] %vm481, %v3442
      %3451 = vst.msk [vmem:[#allocation7 + $0x120] sm:$0xff] %vm481, %v3443
      %v3452 = vld [vmem:[%s3363] sm:$0xff]
      %v3453 = vld [vmem:[%s3363 + $0x10] sm:$0xff]
      %v3454 = vld [vmem:[%s3363 + $0x20] sm:$0xff]
      %v3455 = vld [vmem:[%s3363 + $0x30] sm:$0xff]
      %v3456 = vld [vmem:[%s3363 + $0x40] sm:$0xff]
      %v3457 = vld [vmem:[%s3363 + $0x50] sm:$0xff]
      %v3458 = vld [vmem:[%s3363 + $0x60] sm:$0xff]
      %v3459 = vld [vmem:[%s3363 + $0x70] sm:$0xff]
      %3468 = vrot.lane.b32.xlu0 %v3452, 64
      %v3469 = vpop.permute.xlu0 %3468
      %3470 = vrot.lane.b32.xlu0 %v3453, 64
      %v3471 = vpop.permute.xlu0 %3470
      %3472 = vrot.lane.b32.xlu0 %v3454, 64
      %v3473 = vpop.permute.xlu0 %3472
      %3474 = vrot.lane.b32.xlu0 %v3455, 64
      %v3475 = vpop.permute.xlu0 %3474
      %3476 = vrot.lane.b32.xlu0 %v3456, 64
      %v3477 = vpop.permute.xlu0 %3476
      %3478 = vrot.lane.b32.xlu0 %v3457, 64
      %v3479 = vpop.permute.xlu0 %3478
      %3480 = vrot.lane.b32.xlu0 %v3458, 64
      %v3481 = vpop.permute.xlu0 %3480
      %3482 = vrot.lane.b32.xlu0 %v3459, 64
      %v3483 = vpop.permute.xlu0 %3482
      %3492 = vst.msk [vmem:[#allocation7 + $0x8] sm:$0xff] %vm2659, %v3469
      %3493 = vst.msk [vmem:[#allocation7 + $0x30] sm:$0xff] %vm2659, %v3471
      %3494 = vst.msk [vmem:[#allocation7 + $0x58] sm:$0xff] %vm2659, %v3473
      %3495 = vst.msk [vmem:[#allocation7 + $0x80] sm:$0xff] %vm2659, %v3475
      %3496 = vst.msk [vmem:[#allocation7 + $0xa8] sm:$0xff] %vm2659, %v3477
      %3497 = vst.msk [vmem:[#allocation7 + $0xd0] sm:$0xff] %vm2659, %v3479
      %3498 = vst.msk [vmem:[#allocation7 + $0xf8] sm:$0xff] %vm2659, %v3481
      %3499 = vst.msk [vmem:[#allocation7 + $0x120] sm:$0xff] %vm2659, %v3483
      %v3500 = vld [vmem:[%s3363 + $0x1] sm:$0xff]
      %v3501 = vld [vmem:[%s3363 + $0x11] sm:$0xff]
      %v3502 = vld [vmem:[%s3363 + $0x21] sm:$0xff]
      %v3503 = vld [vmem:[%s3363 + $0x31] sm:$0xff]
      %v3504 = vld [vmem:[%s3363 + $0x41] sm:$0xff]
      %v3505 = vld [vmem:[%s3363 + $0x51] sm:$0xff]
      %v3506 = vld [vmem:[%s3363 + $0x61] sm:$0xff]
      %v3507 = vld [vmem:[%s3363 + $0x71] sm:$0xff]
      %3508 = vst.msk [vmem:[#allocation7 + $0x10] sm:$0xff] %vm481, %v3500
      %3509 = vst.msk [vmem:[#allocation7 + $0x38] sm:$0xff] %vm481, %v3501
      %3510 = vst.msk [vmem:[#allocation7 + $0x60] sm:$0xff] %vm481, %v3502
      %3511 = vst.msk [vmem:[#allocation7 + $0x88] sm:$0xff] %vm481, %v3503
      %3512 = vst.msk [vmem:[#allocation7 + $0xb0] sm:$0xff] %vm481, %v3504
      %3513 = vst.msk [vmem:[#allocation7 + $0xd8] sm:$0xff] %vm481, %v3505
      %3514 = vst.msk [vmem:[#allocation7 + $0x100] sm:$0xff] %vm481, %v3506
      %3515 = vst.msk [vmem:[#allocation7 + $0x128] sm:$0xff] %vm481, %v3507
      %v3516 = vld [vmem:[%s3363 + $0x2] sm:$0xff]
      %v3517 = vld [vmem:[%s3363 + $0x12] sm:$0xff]
      %v3518 = vld [vmem:[%s3363 + $0x22] sm:$0xff]
      %v3519 = vld [vmem:[%s3363 + $0x32] sm:$0xff]
      %v3520 = vld [vmem:[%s3363 + $0x42] sm:$0xff]
      %v3521 = vld [vmem:[%s3363 + $0x52] sm:$0xff]
      %v3522 = vld [vmem:[%s3363 + $0x62] sm:$0xff]
      %v3523 = vld [vmem:[%s3363 + $0x72] sm:$0xff]
      %3532 = vrot.lane.b32.xlu0 %v3516, 64
      %v3533 = vpop.permute.xlu0 %3532
      %3534 = vrot.lane.b32.xlu0 %v3517, 64
      %v3535 = vpop.permute.xlu0 %3534
      %3536 = vrot.lane.b32.xlu0 %v3518, 64
      %v3537 = vpop.permute.xlu0 %3536
      %3538 = vrot.lane.b32.xlu0 %v3519, 64
      %v3539 = vpop.permute.xlu0 %3538
      %3540 = vrot.lane.b32.xlu0 %v3520, 64
      %v3541 = vpop.permute.xlu0 %3540
      %3542 = vrot.lane.b32.xlu0 %v3521, 64
      %v3543 = vpop.permute.xlu0 %3542
      %3544 = vrot.lane.b32.xlu0 %v3522, 64
      %v3545 = vpop.permute.xlu0 %3544
      %3546 = vrot.lane.b32.xlu0 %v3523, 64
      %v3547 = vpop.permute.xlu0 %3546
      %3556 = vst.msk [vmem:[#allocation7 + $0x10] sm:$0xff] %vm2659, %v3533
      %3557 = vst.msk [vmem:[#allocation7 + $0x38] sm:$0xff] %vm2659, %v3535
      %3558 = vst.msk [vmem:[#allocation7 + $0x60] sm:$0xff] %vm2659, %v3537
      %3559 = vst.msk [vmem:[#allocation7 + $0x88] sm:$0xff] %vm2659, %v3539
      %3560 = vst.msk [vmem:[#allocation7 + $0xb0] sm:$0xff] %vm2659, %v3541
      %3561 = vst.msk [vmem:[#allocation7 + $0xd8] sm:$0xff] %vm2659, %v3543
      %3562 = vst.msk [vmem:[#allocation7 + $0x100] sm:$0xff] %vm2659, %v3545
      %3563 = vst.msk [vmem:[#allocation7 + $0x128] sm:$0xff] %vm2659, %v3547
      %s3564 = scalar_lea.vmem [#allocation4], 32
      %v3565 = vld [vmem:[%s3564] sm:$0xff]
      %v3566 = vld [vmem:[%s3564 + $0x10] sm:$0xff]
      %v3567 = vld [vmem:[%s3564 + $0x20] sm:$0xff]
      %v3568 = vld [vmem:[%s3564 + $0x30] sm:$0xff]
      %v3569 = vld [vmem:[%s3564 + $0x40] sm:$0xff]
      %v3570 = vld [vmem:[%s3564 + $0x50] sm:$0xff]
      %v3571 = vld [vmem:[%s3564 + $0x60] sm:$0xff]
      %v3572 = vld [vmem:[%s3564 + $0x70] sm:$0xff]
      %3573 = vst.msk [vmem:[#allocation7 + $0x18] sm:$0xff] %vm481, %v3565
      %3574 = vst.msk [vmem:[#allocation7 + $0x40] sm:$0xff] %vm481, %v3566
      %3575 = vst.msk [vmem:[#allocation7 + $0x68] sm:$0xff] %vm481, %v3567
      %3576 = vst.msk [vmem:[#allocation7 + $0x90] sm:$0xff] %vm481, %v3568
      %3577 = vst.msk [vmem:[#allocation7 + $0xb8] sm:$0xff] %vm481, %v3569
      %3578 = vst.msk [vmem:[#allocation7 + $0xe0] sm:$0xff] %vm481, %v3570
      %3579 = vst.msk [vmem:[#allocation7 + $0x108] sm:$0xff] %vm481, %v3571
      %3580 = vst.msk [vmem:[#allocation7 + $0x130] sm:$0xff] %vm481, %v3572
      %v3581 = vld [vmem:[%s3564 + $0x1] sm:$0xff]
      %v3582 = vld [vmem:[%s3564 + $0x11] sm:$0xff]
      %v3583 = vld [vmem:[%s3564 + $0x21] sm:$0xff]
      %v3584 = vld [vmem:[%s3564 + $0x31] sm:$0xff]
      %v3585 = vld [vmem:[%s3564 + $0x41] sm:$0xff]
      %v3586 = vld [vmem:[%s3564 + $0x51] sm:$0xff]
      %v3587 = vld [vmem:[%s3564 + $0x61] sm:$0xff]
      %v3588 = vld [vmem:[%s3564 + $0x71] sm:$0xff]
      %3597 = vrot.lane.b32.xlu0 %v3581, 64
      %v3598 = vpop.permute.xlu0 %3597
      %3599 = vrot.lane.b32.xlu0 %v3582, 64
      %v3600 = vpop.permute.xlu0 %3599
      %3601 = vrot.lane.b32.xlu0 %v3583, 64
      %v3602 = vpop.permute.xlu0 %3601
      %3603 = vrot.lane.b32.xlu0 %v3584, 64
      %v3604 = vpop.permute.xlu0 %3603
      %3605 = vrot.lane.b32.xlu0 %v3585, 64
      %v3606 = vpop.permute.xlu0 %3605
      %3607 = vrot.lane.b32.xlu0 %v3586, 64
      %v3608 = vpop.permute.xlu0 %3607
      %3609 = vrot.lane.b32.xlu0 %v3587, 64
      %v3610 = vpop.permute.xlu0 %3609
      %3611 = vrot.lane.b32.xlu0 %v3588, 64
      %v3612 = vpop.permute.xlu0 %3611
      %3621 = vst.msk [vmem:[#allocation7 + $0x18] sm:$0xff] %vm2659, %v3598
      %3622 = vst.msk [vmem:[#allocation7 + $0x40] sm:$0xff] %vm2659, %v3600
      %3623 = vst.msk [vmem:[#allocation7 + $0x68] sm:$0xff] %vm2659, %v3602
      %3624 = vst.msk [vmem:[#allocation7 + $0x90] sm:$0xff] %vm2659, %v3604
      %3625 = vst.msk [vmem:[#allocation7 + $0xb8] sm:$0xff] %vm2659, %v3606
      %3626 = vst.msk [vmem:[#allocation7 + $0xe0] sm:$0xff] %vm2659, %v3608
      %3627 = vst.msk [vmem:[#allocation7 + $0x108] sm:$0xff] %vm2659, %v3610
      %3628 = vst.msk [vmem:[#allocation7 + $0x130] sm:$0xff] %vm2659, %v3612
      %v3629 = vld [vmem:[%s3564 + $0x2] sm:$0xff]
      %v3630 = vld [vmem:[%s3564 + $0x12] sm:$0xff]
      %v3631 = vld [vmem:[%s3564 + $0x22] sm:$0xff]
      %v3632 = vld [vmem:[%s3564 + $0x32] sm:$0xff]
      %v3633 = vld [vmem:[%s3564 + $0x42] sm:$0xff]
      %v3634 = vld [vmem:[%s3564 + $0x52] sm:$0xff]
      %v3635 = vld [vmem:[%s3564 + $0x62] sm:$0xff]
      %v3636 = vld [vmem:[%s3564 + $0x72] sm:$0xff]
      %3637 = vst.msk [vmem:[#allocation7 + $0x20] sm:$0xff] %vm481, %v3629
      %3638 = vst.msk [vmem:[#allocation7 + $0x48] sm:$0xff] %vm481, %v3630
      %3639 = vst.msk [vmem:[#allocation7 + $0x70] sm:$0xff] %vm481, %v3631
      %3640 = vst.msk [vmem:[#allocation7 + $0x98] sm:$0xff] %vm481, %v3632
      %3641 = vst.msk [vmem:[#allocation7 + $0xc0] sm:$0xff] %vm481, %v3633
      %3642 = vst.msk [vmem:[#allocation7 + $0xe8] sm:$0xff] %vm481, %v3634
      %3643 = vst.msk [vmem:[#allocation7 + $0x110] sm:$0xff] %vm481, %v3635
      %3644 = vst.msk [vmem:[#allocation7 + $0x138] sm:$0xff] %vm481, %v3636
      %v3645 = vld [vmem:[#allocation7] sm:$0xff]
      %v3646 = vld [vmem:[#allocation7 + $0x8] sm:$0xff]
      %v3647 = vld [vmem:[#allocation7 + $0x10] sm:$0xff]
      %v3648 = vld [vmem:[#allocation7 + $0x18] sm:$0xff]
      %v3649 = vld [vmem:[#allocation7 + $0x20] sm:$0xff]
      %v3650 = vld [vmem:[#allocation7 + $0x28] sm:$0xff]
      %v3651 = vld [vmem:[#allocation7 + $0x30] sm:$0xff]
      %v3652 = vld [vmem:[#allocation7 + $0x38] sm:$0xff]
      %v3653 = vld [vmem:[#allocation7 + $0x40] sm:$0xff]
      %v3654 = vld [vmem:[#allocation7 + $0x48] sm:$0xff]
      %v3655 = vld [vmem:[#allocation7 + $0x50] sm:$0xff]
      %v3656 = vld [vmem:[#allocation7 + $0x58] sm:$0xff]
      %v3657 = vld [vmem:[#allocation7 + $0x60] sm:$0xff]
      %v3658 = vld [vmem:[#allocation7 + $0x68] sm:$0xff]
      %v3659 = vld [vmem:[#allocation7 + $0x70] sm:$0xff]
      %v3660 = vld [vmem:[#allocation7 + $0x78] sm:$0xff]
      %v3661 = vld [vmem:[#allocation7 + $0x80] sm:$0xff]
      %v3662 = vld [vmem:[#allocation7 + $0x88] sm:$0xff]
      %v3663 = vld [vmem:[#allocation7 + $0x90] sm:$0xff]
      %v3664 = vld [vmem:[#allocation7 + $0x98] sm:$0xff]
      %v3665 = vld [vmem:[#allocation7 + $0xa0] sm:$0xff]
      %v3666 = vld [vmem:[#allocation7 + $0xa8] sm:$0xff]
      %v3667 = vld [vmem:[#allocation7 + $0xb0] sm:$0xff]
      %v3668 = vld [vmem:[#allocation7 + $0xb8] sm:$0xff]
      %v3669 = vld [vmem:[#allocation7 + $0xc0] sm:$0xff]
      %v3670 = vld [vmem:[#allocation7 + $0xc8] sm:$0xff]
      %v3671 = vld [vmem:[#allocation7 + $0xd0] sm:$0xff]
      %v3672 = vld [vmem:[#allocation7 + $0xd8] sm:$0xff]
      %v3673 = vld [vmem:[#allocation7 + $0xe0] sm:$0xff]
      %v3674 = vld [vmem:[#allocation7 + $0xe8] sm:$0xff]
      %v3675 = vld [vmem:[#allocation7 + $0xf0] sm:$0xff]
      %v3676 = vld [vmem:[#allocation7 + $0xf8] sm:$0xff]
      %v3677 = vld [vmem:[#allocation7 + $0x100] sm:$0xff]
      %v3678 = vld [vmem:[#allocation7 + $0x108] sm:$0xff]
      %v3679 = vld [vmem:[#allocation7 + $0x110] sm:$0xff]
      %v3680 = vld [vmem:[#allocation7 + $0x118] sm:$0xff]
      %v3681 = vld [vmem:[#allocation7 + $0x120] sm:$0xff]
      %v3682 = vld [vmem:[#allocation7 + $0x128] sm:$0xff]
      %v3683 = vld [vmem:[#allocation7 + $0x130] sm:$0xff]
      %v3684 = vld [vmem:[#allocation7 + $0x138] sm:$0xff]
      %v3685 = vld [vmem:[%s8] sm:$0xff]
      %v3686 = vld [vmem:[%s8 + $0x8] sm:$0xff]
      %v3687 = vld [vmem:[%s8 + $0x10] sm:$0xff]
      %v3688 = vld [vmem:[%s8 + $0x18] sm:$0xff]
      %v3689 = vld [vmem:[%s8 + $0x20] sm:$0xff]
      %v3690 = vld [vmem:[%s8 + $0x28] sm:$0xff]
      %v3691 = vld [vmem:[%s8 + $0x30] sm:$0xff]
      %v3692 = vld [vmem:[%s8 + $0x38] sm:$0xff]
      %v3693 = vld [vmem:[%s8 + $0x40] sm:$0xff]
      %v3694 = vld [vmem:[%s8 + $0x48] sm:$0xff]
      %v3695 = vld [vmem:[%s8 + $0x50] sm:$0xff]
      %v3696 = vld [vmem:[%s8 + $0x58] sm:$0xff]
      %v3697 = vld [vmem:[%s8 + $0x60] sm:$0xff]
      %v3698 = vld [vmem:[%s8 + $0x68] sm:$0xff]
      %v3699 = vld [vmem:[%s8 + $0x70] sm:$0xff]
      %v3700 = vld [vmem:[%s8 + $0x78] sm:$0xff]
      %v3701 = vld [vmem:[%s8 + $0x80] sm:$0xff]
      %v3702 = vld [vmem:[%s8 + $0x88] sm:$0xff]
      %v3703 = vld [vmem:[%s8 + $0x90] sm:$0xff]
      %v3704 = vld [vmem:[%s8 + $0x98] sm:$0xff]
      %v3705 = vld [vmem:[%s8 + $0xa0] sm:$0xff]
      %v3706 = vld [vmem:[%s8 + $0xa8] sm:$0xff]
      %v3707 = vld [vmem:[%s8 + $0xb0] sm:$0xff]
      %v3708 = vld [vmem:[%s8 + $0xb8] sm:$0xff]
      %v3709 = vld [vmem:[%s8 + $0xc0] sm:$0xff]
      %v3710 = vld [vmem:[%s8 + $0xc8] sm:$0xff]
      %v3711 = vld [vmem:[%s8 + $0xd0] sm:$0xff]
      %v3712 = vld [vmem:[%s8 + $0xd8] sm:$0xff]
      %v3713 = vld [vmem:[%s8 + $0xe0] sm:$0xff]
      %v3714 = vld [vmem:[%s8 + $0xe8] sm:$0xff]
      %v3715 = vld [vmem:[%s8 + $0xf0] sm:$0xff]
      %v3716 = vld [vmem:[%s8 + $0xf8] sm:$0xff]
      %v3717 = vld [vmem:[%s8 + $0x100] sm:$0xff]
      %v3718 = vld [vmem:[%s8 + $0x108] sm:$0xff]
      %v3719 = vld [vmem:[%s8 + $0x110] sm:$0xff]
      %v3720 = vld [vmem:[%s8 + $0x118] sm:$0xff]
      %v3721 = vld [vmem:[%s8 + $0x120] sm:$0xff]
      %v3722 = vld [vmem:[%s8 + $0x128] sm:$0xff]
      %v3723 = vld [vmem:[%s8 + $0x130] sm:$0xff]
      %v3724 = vld [vmem:[%s8 + $0x138] sm:$0xff]
      %v3725 = vld [vmem:[%s8 + $0x140] sm:$0xff]
      %v3726 = vld [vmem:[%s8 + $0x148] sm:$0xff]
      %v3727 = vld [vmem:[%s8 + $0x150] sm:$0xff]
      %v3728 = vld [vmem:[%s8 + $0x158] sm:$0xff]
      %v3729 = vld [vmem:[%s8 + $0x160] sm:$0xff]
      %v3730 = vld [vmem:[%s8 + $0x168] sm:$0xff]
      %v3731 = vld [vmem:[%s8 + $0x170] sm:$0xff]
      %v3732 = vld [vmem:[%s8 + $0x178] sm:$0xff]
      %v3733 = vld [vmem:[%s8 + $0x180] sm:$0xff]
      %v3734 = vld [vmem:[%s8 + $0x188] sm:$0xff]
      %v3735 = vld [vmem:[%s8 + $0x190] sm:$0xff]
      %v3736 = vld [vmem:[%s8 + $0x198] sm:$0xff]
      %v3737 = vld [vmem:[%s8 + $0x1a0] sm:$0xff]
      %v3738 = vld [vmem:[%s8 + $0x1a8] sm:$0xff]
      %v3739 = vld [vmem:[%s8 + $0x1b0] sm:$0xff]
      %v3740 = vld [vmem:[%s8 + $0x1b8] sm:$0xff]
      %v3741 = vld [vmem:[%s8 + $0x1c0] sm:$0xff]
      %v3742 = vld [vmem:[%s8 + $0x1c8] sm:$0xff]
      %v3743 = vld [vmem:[%s8 + $0x1d0] sm:$0xff]
      %v3744 = vld [vmem:[%s8 + $0x1d8] sm:$0xff]
      %v3745 = vld [vmem:[%s8 + $0x1e0] sm:$0xff]
      %v3746 = vld [vmem:[%s8 + $0x1e8] sm:$0xff]
      %v3747 = vld [vmem:[%s8 + $0x1f0] sm:$0xff]
      %v3748 = vld [vmem:[%s8 + $0x1f8] sm:$0xff]
      %v3749 = vld [vmem:[%s8 + $0x200] sm:$0xff]
      %v3750 = vld [vmem:[%s8 + $0x208] sm:$0xff]
      %v3751 = vld [vmem:[%s8 + $0x210] sm:$0xff]
      %v3752 = vld [vmem:[%s8 + $0x218] sm:$0xff]
      %v3753 = vld [vmem:[%s8 + $0x220] sm:$0xff]
      %v3754 = vld [vmem:[%s8 + $0x228] sm:$0xff]
      %v3755 = vld [vmem:[%s8 + $0x230] sm:$0xff]
      %v3756 = vld [vmem:[%s8 + $0x238] sm:$0xff]
      %v3757 = vld [vmem:[%s9] sm:$0x1]
      %v3759 = vlaneseq
      %v3760 = vshrl.u32 %v3759, 7
      %v3761 = vsub.s32 0, %v3760
      %v3762 = vrot.slane %v3757, %v3761
      %v3765 = vsel %vm481, %v3649, 0
      %v3768 = vsel %vm481, %v3654, 0
      %v3771 = vsel %vm481, %v3659, 0
      %v3774 = vsel %vm481, %v3664, 0
      %v3777 = vsel %vm481, %v3669, 0
      %v3780 = vsel %vm481, %v3674, 0
      %v3783 = vsel %vm481, %v3679, 0
      %v3786 = vsel %vm481, %v3684, 0
      %3788 = vmatprep.subr.mxu0 0.0
      %3789 = vmatpush1.msra.mxu0 %v3685
      %3790 = vmatprep.subr.mxu0 0.0
      %3791 = vmatpush1.msra.mxu0 %v3686
      %3792 = vmatprep.subr.mxu0 0.0
      %3793 = vmatpush1.msra.mxu0 %v3687
      %3794 = vmatprep.subr.mxu0 0.0
      %3795 = vmatpush1.msra.mxu0 %v3688
      %3796 = vmatprep.subr.mxu0 0.0
      %3797 = vmatpush1.msra.mxu0 %v3689
      %3798 = vmatprep.subr.mxu0 0.0
      %3799 = vmatpush1.msra.mxu0 %v3690
      %3800 = vmatprep.subr.mxu0 0.0
      %3801 = vmatpush1.msra.mxu0 %v3691
      %3802 = vmatprep.subr.mxu0 0.0
      %3803 = vmatpush1.msra.mxu0 %v3692
      %3804 = vmatprep.subr.mxu0 0.0
      %3805 = vmatpush1.msra.mxu0 %v3693
      %3806 = vmatprep.subr.mxu0 0.0
      %3807 = vmatpush1.msra.mxu0 %v3694
      %3808 = vmatprep.subr.mxu0 0.0
      %3809 = vmatpush1.msra.mxu0 %v3695
      %3810 = vmatprep.subr.mxu0 0.0
      %3811 = vmatpush1.msra.mxu0 %v3696
      %3812 = vmatprep.subr.mxu0 0.0
      %3813 = vmatpush1.msra.mxu0 %v3697
      %3814 = vmatprep.subr.mxu0 0.0
      %3815 = vmatpush1.msra.mxu0 %v3698
      %3816 = vmatprep.subr.mxu0 0.0
      %3817 = vmatpush1.msra.mxu0 %v3699
      %3818 = vmatprep.subr.mxu0 0.0
      %3819 = vmatpush1.msra.mxu0 %v3700
      %3820 = vmatprep.subr.mxu0 0.0
      %3821 = vmatpush1.msra.mxu0 %v3701
      %3822 = vmatprep.subr.mxu0 0.0
      %3823 = vmatpush1.msra.mxu0 %v3702
      %3824 = vmatprep.subr.mxu0 0.0
      %3825 = vmatpush1.msra.mxu0 %v3703
      %3826 = vmatprep.subr.mxu0 0.0
      %3827 = vmatpush1.msra.mxu0 %v3704
      %3828 = vmatprep.subr.mxu0 0.0
      %3829 = vmatpush1.msra.mxu0 %v3705
      %3830 = vmatprep.subr.mxu0 0.0
      %3831 = vmatpush1.msra.mxu0 %v3706
      %3832 = vmatprep.subr.mxu0 0.0
      %3833 = vmatpush1.msra.mxu0 %v3707
      %3834 = vmatprep.subr.mxu0 0.0
      %3835 = vmatpush1.msra.mxu0 %v3708
      %3836 = vmatprep.subr.mxu0 0.0
      %3837 = vmatpush1.msra.mxu0 %v3709
      %3838 = vmatprep.subr.mxu0 0.0
      %3839 = vmatpush1.msra.mxu0 %v3710
      %3840 = vmatprep.subr.mxu0 0.0
      %3841 = vmatpush1.msra.mxu0 %v3711
      %3842 = vmatprep.subr.mxu0 0.0
      %3843 = vmatpush1.msra.mxu0 %v3712
      %3844 = vmatprep.subr.mxu0 0.0
      %3845 = vmatpush1.msra.mxu0 %v3713
      %3846 = vmatprep.subr.mxu0 0.0
      %3847 = vmatpush1.msra.mxu0 %v3714
      %3848 = vmatprep.subr.mxu0 0.0
      %3849 = vmatpush1.msra.mxu0 %v3715
      %3850 = vmatprep.subr.mxu0 0.0
      %3851 = vmatpush1.msra.mxu0 %v3716
      %3852 = vmatprep.mubr.f32.mxu0 %v3646
      %3853 = vmatmul.mubr.f32.gmra.mrb[0].mxu0 %v3645
      %v3854 = vpop.f32.mrb[0].mxu0
      %v3855 = vadd.f32 %v3762, %v3854
      %v3856 = vpop.f32.mrb[0].mxu0
      %3857 = vmatprep.mubr.f32.mxu0 %v3651
      %3858 = vmatmul.mubr.f32.gmra.mrb[0].mxu0 %v3650
      %v3859 = vpop.f32.mrb[0].mxu0
      %v3860 = vadd.f32 %v3762, %v3859
      %v3861 = vpop.f32.mrb[0].mxu0
      %3862 = vmatprep.mubr.f32.mxu0 %v3656
      %3863 = vmatmul.mubr.f32.gmra.mrb[0].mxu0 %v3655
      %v3864 = vpop.f32.mrb[0].mxu0
      %v3865 = vadd.f32 %v3762, %v3864
      %v3866 = vpop.f32.mrb[0].mxu0
      %3867 = vmatprep.mubr.f32.mxu0 %v3661
      %3868 = vmatmul.mubr.f32.gmra.mrb[0].mxu0 %v3660
      %v3869 = vpop.f32.mrb[0].mxu0
      %v3870 = vadd.f32 %v3762, %v3869
      %v3871 = vpop.f32.mrb[0].mxu0
      %3872 = vmatprep.mubr.f32.mxu0 %v3666
      %3873 = vmatmul.mubr.f32.gmra.mrb[0].mxu0 %v3665
      %v3874 = vpop.f32.mrb[0].mxu0
      %v3875 = vadd.f32 %v3762, %v3874
      %v3876 = vpop.f32.mrb[0].mxu0
      %3877 = vmatprep.mubr.f32.mxu0 %v3671
      %3878 = vmatmul.mubr.f32.gmra.mrb[0].mxu0 %v3670
      %v3879 = vpop.f32.mrb[0].mxu0
      %v3880 = vadd.f32 %v3762, %v3879
      %v3881 = vpop.f32.mrb[0].mxu0
      %3882 = vmatprep.mubr.f32.mxu0 %v3676
      %3883 = vmatmul.mubr.f32.gmra.mrb[0].mxu0 %v3675
      %v3884 = vpop.f32.mrb[0].mxu0
      %v3885 = vadd.f32 %v3762, %v3884
      %v3886 = vpop.f32.mrb[0].mxu0
      %3887 = vmatprep.mubr.f32.mxu0 %v3681
      %3888 = vmatmul.mubr.f32.gmra.mrb[0].mxu0 %v3680
      %v3889 = vpop.f32.mrb[0].mxu0
      %v3890 = vadd.f32 %v3762, %v3889
      %v3891 = vpop.f32.mrb[0].mxu0
      %3892 = vdwg.mxu0
      %3893 = vmatprep.subr.mxu0 0.0
      %3894 = vmatpush1.msra.mxu0 %v3717
      %3895 = vmatprep.subr.mxu0 0.0
      %3896 = vmatpush1.msra.mxu0 %v3718
      %3897 = vmatprep.subr.mxu0 0.0
      %3898 = vmatpush1.msra.mxu0 %v3719
      %3899 = vmatprep.subr.mxu0 0.0
      %3900 = vmatpush1.msra.mxu0 %v3720
      %3901 = vmatprep.subr.mxu0 0.0
      %3902 = vmatpush1.msra.mxu0 %v3721
      %3903 = vmatprep.subr.mxu0 0.0
      %3904 = vmatpush1.msra.mxu0 %v3722
      %3905 = vmatprep.subr.mxu0 0.0
      %3906 = vmatpush1.msra.mxu0 %v3723
      %3907 = vmatprep.subr.mxu0 0.0
      %3908 = vmatpush1.msra.mxu0 %v3724
      %3909 = vmatprep.subr.mxu0 0.0
      %3910 = vmatpush1.msra.mxu0 %v3725
      %3911 = vmatprep.subr.mxu0 0.0
      %3912 = vmatpush1.msra.mxu0 %v3726
      %3913 = vmatprep.subr.mxu0 0.0
      %3914 = vmatpush1.msra.mxu0 %v3727
      %3915 = vmatprep.subr.mxu0 0.0
      %3916 = vmatpush1.msra.mxu0 %v3728
      %3917 = vmatprep.subr.mxu0 0.0
      %3918 = vmatpush1.msra.mxu0 %v3729
      %3919 = vmatprep.subr.mxu0 0.0
      %3920 = vmatpush1.msra.mxu0 %v3730
      %3921 = vmatprep.subr.mxu0 0.0
      %3922 = vmatpush1.msra.mxu0 %v3731
      %3923 = vmatprep.subr.mxu0 0.0
      %3924 = vmatpush1.msra.mxu0 %v3732
      %3925 = vmatprep.subr.mxu0 0.0
      %3926 = vmatpush1.msra.mxu0 %v3733
      %3927 = vmatprep.subr.mxu0 0.0
      %3928 = vmatpush1.msra.mxu0 %v3734
      %3929 = vmatprep.subr.mxu0 0.0
      %3930 = vmatpush1.msra.mxu0 %v3735
      %3931 = vmatprep.subr.mxu0 0.0
      %3932 = vmatpush1.msra.mxu0 %v3736
      %3933 = vmatprep.subr.mxu0 0.0
      %3934 = vmatpush1.msra.mxu0 %v3737
      %3935 = vmatprep.subr.mxu0 0.0
      %3936 = vmatpush1.msra.mxu0 %v3738
      %3937 = vmatprep.subr.mxu0 0.0
      %3938 = vmatpush1.msra.mxu0 %v3739
      %3939 = vmatprep.subr.mxu0 0.0
      %3940 = vmatpush1.msra.mxu0 %v3740
      %3941 = vmatprep.subr.mxu0 0.0
      %3942 = vmatpush1.msra.mxu0 %v3741
      %3943 = vmatprep.subr.mxu0 0.0
      %3944 = vmatpush1.msra.mxu0 %v3742
      %3945 = vmatprep.subr.mxu0 0.0
      %3946 = vmatpush1.msra.mxu0 %v3743
      %3947 = vmatprep.subr.mxu0 0.0
      %3948 = vmatpush1.msra.mxu0 %v3744
      %3949 = vmatprep.subr.mxu0 0.0
      %3950 = vmatpush1.msra.mxu0 %v3745
      %3951 = vmatprep.subr.mxu0 0.0
      %3952 = vmatpush1.msra.mxu0 %v3746
      %3953 = vmatprep.subr.mxu0 0.0
      %3954 = vmatpush1.msra.mxu0 %v3747
      %3955 = vmatprep.subr.mxu0 0.0
      %3956 = vmatpush1.msra.mxu0 %v3748
      %3957 = vmatprep.mubr.f32.mxu0 %v3648
      %3958 = vmatmul.mubr.f32.gmra.mrb[0].mxu0 %v3647
      %v3959 = vpop.f32.mrb[0].mxu0
      %v3960 = vadd.f32 %v3855, %v3959
      %v3961 = vpop.f32.mrb[0].mxu0
      %3962 = vmatprep.mubr.f32.mxu0 %v3653
      %3963 = vmatmul.mubr.f32.gmra.mrb[0].mxu0 %v3652
      %v3964 = vpop.f32.mrb[0].mxu0
      %v3965 = vadd.f32 %v3860, %v3964
      %v3966 = vpop.f32.mrb[0].mxu0
      %3967 = vmatprep.mubr.f32.mxu0 %v3658
      %3968 = vmatmul.mubr.f32.gmra.mrb[0].mxu0 %v3657
      %v3969 = vpop.f32.mrb[0].mxu0
      %v3970 = vadd.f32 %v3865, %v3969
      %v3971 = vpop.f32.mrb[0].mxu0
      %3972 = vmatprep.mubr.f32.mxu0 %v3663
      %3973 = vmatmul.mubr.f32.gmra.mrb[0].mxu0 %v3662
      %v3974 = vpop.f32.mrb[0].mxu0
      %v3975 = vadd.f32 %v3870, %v3974
      %v3976 = vpop.f32.mrb[0].mxu0
      %3977 = vmatprep.mubr.f32.mxu0 %v3668
      %3978 = vmatmul.mubr.f32.gmra.mrb[0].mxu0 %v3667
      %v3979 = vpop.f32.mrb[0].mxu0
      %v3980 = vadd.f32 %v3875, %v3979
      %v3981 = vpop.f32.mrb[0].mxu0
      %3982 = vmatprep.mubr.f32.mxu0 %v3673
      %3983 = vmatmul.mubr.f32.gmra.mrb[0].mxu0 %v3672
      %v3984 = vpop.f32.mrb[0].mxu0
      %v3985 = vadd.f32 %v3880, %v3984
      %v3986 = vpop.f32.mrb[0].mxu0
      %3987 = vmatprep.mubr.f32.mxu0 %v3678
      %3988 = vmatmul.mubr.f32.gmra.mrb[0].mxu0 %v3677
      %v3989 = vpop.f32.mrb[0].mxu0
      %v3990 = vadd.f32 %v3885, %v3989
      %v3991 = vpop.f32.mrb[0].mxu0
      %3992 = vmatprep.mubr.f32.mxu0 %v3683
      %3993 = vmatmul.mubr.f32.gmra.mrb[0].mxu0 %v3682
      %v3994 = vpop.f32.mrb[0].mxu0
      %v3995 = vadd.f32 %v3890, %v3994
      %v3996 = vpop.f32.mrb[0].mxu0
      %3997 = vdwg.mxu0
      %3998 = vmatprep.subr.mxu0 0.0
      %3999 = vmatpush1.msra.mxu0 %v3749
      %4000 = vmatprep.subr.mxu0 0.0
      %4001 = vmatpush1.msra.mxu0 %v3750
      %4002 = vmatprep.subr.mxu0 0.0
      %4003 = vmatpush1.msra.mxu0 %v3751
      %4004 = vmatprep.subr.mxu0 0.0
      %4005 = vmatpush1.msra.mxu0 %v3752
      %4006 = vmatprep.subr.mxu0 0.0
      %4007 = vmatpush1.msra.mxu0 %v3753
      %4008 = vmatprep.subr.mxu0 0.0
      %4009 = vmatpush1.msra.mxu0 %v3754
      %4010 = vmatprep.subr.mxu0 0.0
      %4011 = vmatpush1.msra.mxu0 %v3755
      %4012 = vmatprep.subr.mxu0 0.0
      %4013 = vmatpush1.msra.mxu0 %v3756
      %4014 = vmatprep.subr.mxu0 0.0
      %4015 = vmatpush1.msra.mxu0 0.0
      %4016 = vmatprep.subr.mxu0 0.0
      %4017 = vmatpush1.msra.mxu0 0.0
      %4018 = vmatprep.subr.mxu0 0.0
      %4019 = vmatpush1.msra.mxu0 0.0
      %4020 = vmatprep.subr.mxu0 0.0
      %4021 = vmatpush1.msra.mxu0 0.0
      %4022 = vmatprep.subr.mxu0 0.0
      %4023 = vmatpush1.msra.mxu0 0.0
      %4024 = vmatprep.subr.mxu0 0.0
      %4025 = vmatpush1.msra.mxu0 0.0
      %4026 = vmatprep.subr.mxu0 0.0
      %4027 = vmatpush1.msra.mxu0 0.0
      %4028 = vmatprep.subr.mxu0 0.0
      %4029 = vmatpush1.msra.mxu0 0.0
      %4030 = vmatprep.subr.mxu0 0.0
      %4031 = vmatpush1.msra.mxu0 0.0
      %4032 = vmatprep.subr.mxu0 0.0
      %4033 = vmatpush1.msra.mxu0 0.0
      %4034 = vmatprep.subr.mxu0 0.0
      %4035 = vmatpush1.msra.mxu0 0.0
      %4036 = vmatprep.subr.mxu0 0.0
      %4037 = vmatpush1.msra.mxu0 0.0
      %4038 = vmatprep.subr.mxu0 0.0
      %4039 = vmatpush1.msra.mxu0 0.0
      %4040 = vmatprep.subr.mxu0 0.0
      %4041 = vmatpush1.msra.mxu0 0.0
      %4042 = vmatprep.subr.mxu0 0.0
      %4043 = vmatpush1.msra.mxu0 0.0
      %4044 = vmatprep.subr.mxu0 0.0
      %4045 = vmatpush1.msra.mxu0 0.0
      %4046 = vmatprep.subr.mxu0 0.0
      %4047 = vmatpush1.msra.mxu0 0.0
      %4048 = vmatprep.subr.mxu0 0.0
      %4049 = vmatpush1.msra.mxu0 0.0
      %4050 = vmatprep.subr.mxu0 0.0
      %4051 = vmatpush1.msra.mxu0 0.0
      %4052 = vmatprep.subr.mxu0 0.0
      %4053 = vmatpush1.msra.mxu0 0.0
      %4054 = vmatprep.subr.mxu0 0.0
      %4055 = vmatpush1.msra.mxu0 0.0
      %4056 = vmatprep.subr.mxu0 0.0
      %4057 = vmatpush1.msra.mxu0 0.0
      %4058 = vmatprep.subr.mxu0 0.0
      %4059 = vmatpush1.msra.mxu0 0.0
      %4060 = vmatprep.subr.mxu0 0.0
      %4061 = vmatpush1.msra.mxu0 0.0
      %4062 = vmatprep.mubr.f32.mxu0 0.0
      %4063 = vmatmul.mubr.f32.gmra.mrb[0].mxu0 %v3765
      %v4064 = vpop.f32.mrb[0].mxu0
      %v4065 = vadd.f32 %v3960, %v4064
      %v4066 = vpop.f32.mrb[0].mxu0
      %4067 = vmatprep.mubr.f32.mxu0 0.0
      %4068 = vmatmul.mubr.f32.gmra.mrb[0].mxu0 %v3768
      %v4069 = vpop.f32.mrb[0].mxu0
      %v4070 = vadd.f32 %v3965, %v4069
      %v4071 = vpop.f32.mrb[0].mxu0
      %4072 = vmatprep.mubr.f32.mxu0 0.0
      %4073 = vmatmul.mubr.f32.gmra.mrb[0].mxu0 %v3771
      %v4074 = vpop.f32.mrb[0].mxu0
      %v4075 = vadd.f32 %v3970, %v4074
      %v4076 = vpop.f32.mrb[0].mxu0
      %4077 = vmatprep.mubr.f32.mxu0 0.0
      %4078 = vmatmul.mubr.f32.gmra.mrb[0].mxu0 %v3774
      %v4079 = vpop.f32.mrb[0].mxu0
      %v4080 = vadd.f32 %v3975, %v4079
      %v4081 = vpop.f32.mrb[0].mxu0
      %4082 = vmatprep.mubr.f32.mxu0 0.0
      %4083 = vmatmul.mubr.f32.gmra.mrb[0].mxu0 %v3777
      %v4084 = vpop.f32.mrb[0].mxu0
      %v4085 = vadd.f32 %v3980, %v4084
      %v4086 = vpop.f32.mrb[0].mxu0
      %4087 = vmatprep.mubr.f32.mxu0 0.0
      %4088 = vmatmul.mubr.f32.gmra.mrb[0].mxu0 %v3780
      %v4089 = vpop.f32.mrb[0].mxu0
      %v4090 = vadd.f32 %v3985, %v4089
      %v4091 = vpop.f32.mrb[0].mxu0
      %4092 = vmatprep.mubr.f32.mxu0 0.0
      %4093 = vmatmul.mubr.f32.gmra.mrb[0].mxu0 %v3783
      %v4094 = vpop.f32.mrb[0].mxu0
      %v4095 = vadd.f32 %v3990, %v4094
      %v4096 = vpop.f32.mrb[0].mxu0
      %4097 = vmatprep.mubr.f32.mxu0 0.0
      %4098 = vmatmul.mubr.f32.gmra.mrb[0].mxu0 %v3786
      %v4099 = vpop.f32.mrb[0].mxu0
      %v4100 = vadd.f32 %v3995, %v4099
      %v4101 = vpop.f32.mrb[0].mxu0
      %4102 = vdwg.mxu0
      %v4103 = vmax.f32 %v4065, 0.0
      %v4104 = vmax.f32 %v4070, 0.0
      %v4105 = vmax.f32 %v4075, 0.0
      %v4106 = vmax.f32 %v4080, 0.0
      %v4107 = vmax.f32 %v4085, 0.0
      %v4108 = vmax.f32 %v4090, 0.0
      %v4109 = vmax.f32 %v4095, 0.0
      %v4110 = vmax.f32 %v4100, 0.0
      %vm4111 = vcmask 261120
      %4112 = vst.msk [vmem:[#allocation5] sm:$0xff] %vm4111, 0.0
      %vm4113 = vcmask 254976
      %4114 = vst.msk [vmem:[#allocation5 + $0x8] sm:$0x3] %vm4113, 0.0
      %4115 = vst.msk [vmem:[#allocation5 + $0x10] sm:$0xff] %vm4111, 0.0
      %4116 = vst.msk [vmem:[#allocation5 + $0x18] sm:$0x3] %vm4113, 0.0
      %4117 = vst.msk [vmem:[#allocation5 + $0x20] sm:$0xff] %vm4111, 0.0
      %4118 = vst.msk [vmem:[#allocation5 + $0x28] sm:$0x3] %vm4113, 0.0
      %4119 = vst.msk [vmem:[#allocation5 + $0x30] sm:$0xff] %vm4111, 0.0
      %4120 = vst.msk [vmem:[#allocation5 + $0x38] sm:$0x3] %vm4113, 0.0
      %4121 = vst.msk [vmem:[#allocation5 + $0x40] sm:$0xff] %vm4111, 0.0
      %4122 = vst.msk [vmem:[#allocation5 + $0x48] sm:$0x3] %vm4113, 0.0
      %4123 = vst.msk [vmem:[#allocation5 + $0x50] sm:$0xff] %vm4111, 0.0
      %4124 = vst.msk [vmem:[#allocation5 + $0x58] sm:$0x3] %vm4113, 0.0
      %4125 = vst.msk [vmem:[#allocation5 + $0x60] sm:$0xff] %vm4111, 0.0
      %4126 = vst.msk [vmem:[#allocation5 + $0x68] sm:$0x3] %vm4113, 0.0
      %4127 = vst.msk [vmem:[#allocation5 + $0x70] sm:$0xff] %vm4111, 0.0
      %4128 = vst.msk [vmem:[#allocation5 + $0x78] sm:$0x3] %vm4113, 0.0
      %4129 = vst.msk [vmem:[#allocation5 + $0x80] sm:$0xff] %vm4111, 0.0
      %4130 = vst.msk [vmem:[#allocation5 + $0x88] sm:$0x3] %vm4113, 0.0
      %4131 = vst.msk [vmem:[#allocation5 + $0x90] sm:$0xff] %vm4111, 0.0
      %4132 = vst.msk [vmem:[#allocation5 + $0x98] sm:$0x3] %vm4113, 0.0
      %s4133 = scalar_lea.vmem [#allocation5], 16
      %4134 = vst.msk [vmem:[%s4133 + $0x1] sm:$0xff] %vm4111, %v4103
      %4135 = vst.msk [vmem:[%s4133 + $0x11] sm:$0xff] %vm4111, %v4104
      %4136 = vst.msk [vmem:[%s4133 + $0x21] sm:$0xff] %vm4111, %v4105
      %4137 = vst.msk [vmem:[%s4133 + $0x31] sm:$0xff] %vm4111, %v4106
      %4138 = vst.msk [vmem:[%s4133 + $0x41] sm:$0xff] %vm4111, %v4107
      %4139 = vst.msk [vmem:[%s4133 + $0x51] sm:$0xff] %vm4111, %v4108
      %4140 = vst.msk [vmem:[%s4133 + $0x61] sm:$0xff] %vm4111, %v4109
      %4141 = vst.msk [vmem:[%s4133 + $0x71] sm:$0xff] %vm4111, %v4110
      %v4142 = vld [vmem:[#allocation5] sm:$0xff]
      %v4143 = vld [vmem:[#allocation5 + $0x10] sm:$0xff]
      %v4144 = vld [vmem:[#allocation5 + $0x20] sm:$0xff]
      %v4145 = vld [vmem:[#allocation5 + $0x30] sm:$0xff]
      %v4146 = vld [vmem:[#allocation5 + $0x40] sm:$0xff]
      %v4147 = vld [vmem:[#allocation5 + $0x50] sm:$0xff]
      %v4148 = vld [vmem:[#allocation5 + $0x60] sm:$0xff]
      %v4149 = vld [vmem:[#allocation5 + $0x70] sm:$0xff]
      %4150 = vst.msk [vmem:[#allocation8] sm:$0xff] %vm4111, %v4142
      %4151 = vst.msk [vmem:[#allocation8 + $0x18] sm:$0xff] %vm4111, %v4143
      %4152 = vst.msk [vmem:[#allocation8 + $0x30] sm:$0xff] %vm4111, %v4144
      %4153 = vst.msk [vmem:[#allocation8 + $0x48] sm:$0xff] %vm4111, %v4145
      %4154 = vst.msk [vmem:[#allocation8 + $0x60] sm:$0xff] %vm4111, %v4146
      %4155 = vst.msk [vmem:[#allocation8 + $0x78] sm:$0xff] %vm4111, %v4147
      %4156 = vst.msk [vmem:[#allocation8 + $0x90] sm:$0xff] %vm4111, %v4148
      %4157 = vst.msk [vmem:[#allocation8 + $0xa8] sm:$0xff] %vm4111, %v4149
      %v4158 = vld [vmem:[#allocation5 + $0x1] sm:$0xff]
      %v4159 = vld [vmem:[#allocation5 + $0x11] sm:$0xff]
      %v4160 = vld [vmem:[#allocation5 + $0x21] sm:$0xff]
      %v4161 = vld [vmem:[#allocation5 + $0x31] sm:$0xff]
      %v4162 = vld [vmem:[#allocation5 + $0x41] sm:$0xff]
      %v4163 = vld [vmem:[#allocation5 + $0x51] sm:$0xff]
      %v4164 = vld [vmem:[#allocation5 + $0x61] sm:$0xff]
      %v4165 = vld [vmem:[#allocation5 + $0x71] sm:$0xff]
      %4174 = vrot.lane.b32.xlu0 %v4158, 32
      %v4175 = vpop.permute.xlu0 %4174
      %4176 = vrot.lane.b32.xlu0 %v4159, 32
      %v4177 = vpop.permute.xlu0 %4176
      %4178 = vrot.lane.b32.xlu0 %v4160, 32
      %v4179 = vpop.permute.xlu0 %4178
      %4180 = vrot.lane.b32.xlu0 %v4161, 32
      %v4181 = vpop.permute.xlu0 %4180
      %4182 = vrot.lane.b32.xlu0 %v4162, 32
      %v4183 = vpop.permute.xlu0 %4182
      %4184 = vrot.lane.b32.xlu0 %v4163, 32
      %v4185 = vpop.permute.xlu0 %4184
      %4186 = vrot.lane.b32.xlu0 %v4164, 32
      %v4187 = vpop.permute.xlu0 %4186
      %4188 = vrot.lane.b32.xlu0 %v4165, 32
      %v4189 = vpop.permute.xlu0 %4188
      %vm4198 = vcmask 523520
      %4199 = vst.msk [vmem:[#allocation8] sm:$0xff] %vm4198, %v4175
      %4200 = vst.msk [vmem:[#allocation8 + $0x18] sm:$0xff] %vm4198, %v4177
      %4201 = vst.msk [vmem:[#allocation8 + $0x30] sm:$0xff] %vm4198, %v4179
      %4202 = vst.msk [vmem:[#allocation8 + $0x48] sm:$0xff] %vm4198, %v4181
      %4203 = vst.msk [vmem:[#allocation8 + $0x60] sm:$0xff] %vm4198, %v4183
      %4204 = vst.msk [vmem:[#allocation8 + $0x78] sm:$0xff] %vm4198, %v4185
      %4205 = vst.msk [vmem:[#allocation8 + $0x90] sm:$0xff] %vm4198, %v4187
      %4206 = vst.msk [vmem:[#allocation8 + $0xa8] sm:$0xff] %vm4198, %v4189
      %v4207 = vld [vmem:[#allocation5 + $0x2] sm:$0xff]
      %v4208 = vld [vmem:[#allocation5 + $0x12] sm:$0xff]
      %v4209 = vld [vmem:[#allocation5 + $0x22] sm:$0xff]
      %v4210 = vld [vmem:[#allocation5 + $0x32] sm:$0xff]
      %v4211 = vld [vmem:[#allocation5 + $0x42] sm:$0xff]
      %v4212 = vld [vmem:[#allocation5 + $0x52] sm:$0xff]
      %v4213 = vld [vmem:[#allocation5 + $0x62] sm:$0xff]
      %v4214 = vld [vmem:[#allocation5 + $0x72] sm:$0xff]
      %4223 = vrot.lane.b32.xlu0 %v4207, 64
      %v4224 = vpop.permute.xlu0 %4223
      %4225 = vrot.lane.b32.xlu0 %v4208, 64
      %v4226 = vpop.permute.xlu0 %4225
      %4227 = vrot.lane.b32.xlu0 %v4209, 64
      %v4228 = vpop.permute.xlu0 %4227
      %4229 = vrot.lane.b32.xlu0 %v4210, 64
      %v4230 = vpop.permute.xlu0 %4229
      %4231 = vrot.lane.b32.xlu0 %v4211, 64
      %v4232 = vpop.permute.xlu0 %4231
      %4233 = vrot.lane.b32.xlu0 %v4212, 64
      %v4234 = vpop.permute.xlu0 %4233
      %4235 = vrot.lane.b32.xlu0 %v4213, 64
      %v4236 = vpop.permute.xlu0 %4235
      %4237 = vrot.lane.b32.xlu0 %v4214, 64
      %v4238 = vpop.permute.xlu0 %4237
      %vm4247 = vcmask 785920
      %4248 = vst.msk [vmem:[#allocation8] sm:$0xff] %vm4247, %v4224
      %4249 = vst.msk [vmem:[#allocation8 + $0x18] sm:$0xff] %vm4247, %v4226
      %4250 = vst.msk [vmem:[#allocation8 + $0x30] sm:$0xff] %vm4247, %v4228
      %4251 = vst.msk [vmem:[#allocation8 + $0x48] sm:$0xff] %vm4247, %v4230
      %4252 = vst.msk [vmem:[#allocation8 + $0x60] sm:$0xff] %vm4247, %v4232
      %4253 = vst.msk [vmem:[#allocation8 + $0x78] sm:$0xff] %vm4247, %v4234
      %4254 = vst.msk [vmem:[#allocation8 + $0x90] sm:$0xff] %vm4247, %v4236
      %4255 = vst.msk [vmem:[#allocation8 + $0xa8] sm:$0xff] %vm4247, %v4238
      %v4256 = vld [vmem:[%s4133] sm:$0xff]
      %v4257 = vld [vmem:[%s4133 + $0x10] sm:$0xff]
      %v4258 = vld [vmem:[%s4133 + $0x20] sm:$0xff]
      %v4259 = vld [vmem:[%s4133 + $0x30] sm:$0xff]
      %v4260 = vld [vmem:[%s4133 + $0x40] sm:$0xff]
      %v4261 = vld [vmem:[%s4133 + $0x50] sm:$0xff]
      %v4262 = vld [vmem:[%s4133 + $0x60] sm:$0xff]
      %v4263 = vld [vmem:[%s4133 + $0x70] sm:$0xff]
      %4272 = vrot.lane.b32.xlu0 %v4256, 96
      %v4273 = vpop.permute.xlu0 %4272
      %4274 = vrot.lane.b32.xlu0 %v4257, 96
      %v4275 = vpop.permute.xlu0 %4274
      %4276 = vrot.lane.b32.xlu0 %v4258, 96
      %v4277 = vpop.permute.xlu0 %4276
      %4278 = vrot.lane.b32.xlu0 %v4259, 96
      %v4279 = vpop.permute.xlu0 %4278
      %4280 = vrot.lane.b32.xlu0 %v4260, 96
      %v4281 = vpop.permute.xlu0 %4280
      %4282 = vrot.lane.b32.xlu0 %v4261, 96
      %v4283 = vpop.permute.xlu0 %4282
      %4284 = vrot.lane.b32.xlu0 %v4262, 96
      %v4285 = vpop.permute.xlu0 %4284
      %4286 = vrot.lane.b32.xlu0 %v4263, 96
      %v4287 = vpop.permute.xlu0 %4286
      %vm4296 = vcmask 1048320
      %4297 = vst.msk [vmem:[#allocation8] sm:$0xff] %vm4296, %v4273
      %4298 = vst.msk [vmem:[#allocation8 + $0x18] sm:$0xff] %vm4296, %v4275
      %4299 = vst.msk [vmem:[#allocation8 + $0x30] sm:$0xff] %vm4296, %v4277
      %4300 = vst.msk [vmem:[#allocation8 + $0x48] sm:$0xff] %vm4296, %v4279
      %4301 = vst.msk [vmem:[#allocation8 + $0x60] sm:$0xff] %vm4296, %v4281
      %4302 = vst.msk [vmem:[#allocation8 + $0x78] sm:$0xff] %vm4296, %v4283
      %4303 = vst.msk [vmem:[#allocation8 + $0x90] sm:$0xff] %vm4296, %v4285
      %4304 = vst.msk [vmem:[#allocation8 + $0xa8] sm:$0xff] %vm4296, %v4287
      %v4305 = vld [vmem:[%s4133 + $0x1] sm:$0xff]
      %v4306 = vld [vmem:[%s4133 + $0x11] sm:$0xff]
      %v4307 = vld [vmem:[%s4133 + $0x21] sm:$0xff]
      %v4308 = vld [vmem:[%s4133 + $0x31] sm:$0xff]
      %v4309 = vld [vmem:[%s4133 + $0x41] sm:$0xff]
      %v4310 = vld [vmem:[%s4133 + $0x51] sm:$0xff]
      %v4311 = vld [vmem:[%s4133 + $0x61] sm:$0xff]
      %v4312 = vld [vmem:[%s4133 + $0x71] sm:$0xff]
      %4313 = vst.msk [vmem:[#allocation8 + $0x8] sm:$0xff] %vm4111, %v4305
      %4314 = vst.msk [vmem:[#allocation8 + $0x20] sm:$0xff] %vm4111, %v4306
      %4315 = vst.msk [vmem:[#allocation8 + $0x38] sm:$0xff] %vm4111, %v4307
      %4316 = vst.msk [vmem:[#allocation8 + $0x50] sm:$0xff] %vm4111, %v4308
      %4317 = vst.msk [vmem:[#allocation8 + $0x68] sm:$0xff] %vm4111, %v4309
      %4318 = vst.msk [vmem:[#allocation8 + $0x80] sm:$0xff] %vm4111, %v4310
      %4319 = vst.msk [vmem:[#allocation8 + $0x98] sm:$0xff] %vm4111, %v4311
      %4320 = vst.msk [vmem:[#allocation8 + $0xb0] sm:$0xff] %vm4111, %v4312
      %v4321 = vld [vmem:[%s4133 + $0x2] sm:$0xff]
      %v4322 = vld [vmem:[%s4133 + $0x12] sm:$0xff]
      %v4323 = vld [vmem:[%s4133 + $0x22] sm:$0xff]
      %v4324 = vld [vmem:[%s4133 + $0x32] sm:$0xff]
      %v4325 = vld [vmem:[%s4133 + $0x42] sm:$0xff]
      %v4326 = vld [vmem:[%s4133 + $0x52] sm:$0xff]
      %v4327 = vld [vmem:[%s4133 + $0x62] sm:$0xff]
      %v4328 = vld [vmem:[%s4133 + $0x72] sm:$0xff]
      %4337 = vrot.lane.b32.xlu0 %v4321, 32
      %v4338 = vpop.permute.xlu0 %4337
      %4339 = vrot.lane.b32.xlu0 %v4322, 32
      %v4340 = vpop.permute.xlu0 %4339
      %4341 = vrot.lane.b32.xlu0 %v4323, 32
      %v4342 = vpop.permute.xlu0 %4341
      %4343 = vrot.lane.b32.xlu0 %v4324, 32
      %v4344 = vpop.permute.xlu0 %4343
      %4345 = vrot.lane.b32.xlu0 %v4325, 32
      %v4346 = vpop.permute.xlu0 %4345
      %4347 = vrot.lane.b32.xlu0 %v4326, 32
      %v4348 = vpop.permute.xlu0 %4347
      %4349 = vrot.lane.b32.xlu0 %v4327, 32
      %v4350 = vpop.permute.xlu0 %4349
      %4351 = vrot.lane.b32.xlu0 %v4328, 32
      %v4352 = vpop.permute.xlu0 %4351
      %4361 = vst.msk [vmem:[#allocation8 + $0x8] sm:$0xff] %vm4198, %v4338
      %4362 = vst.msk [vmem:[#allocation8 + $0x20] sm:$0xff] %vm4198, %v4340
      %4363 = vst.msk [vmem:[#allocation8 + $0x38] sm:$0xff] %vm4198, %v4342
      %4364 = vst.msk [vmem:[#allocation8 + $0x50] sm:$0xff] %vm4198, %v4344
      %4365 = vst.msk [vmem:[#allocation8 + $0x68] sm:$0xff] %vm4198, %v4346
      %4366 = vst.msk [vmem:[#allocation8 + $0x80] sm:$0xff] %vm4198, %v4348
      %4367 = vst.msk [vmem:[#allocation8 + $0x98] sm:$0xff] %vm4198, %v4350
      %4368 = vst.msk [vmem:[#allocation8 + $0xb0] sm:$0xff] %vm4198, %v4352
      %s4369 = scalar_lea.vmem [#allocation5], 32
      %v4370 = vld [vmem:[%s4369] sm:$0xff]
      %v4371 = vld [vmem:[%s4369 + $0x10] sm:$0xff]
      %v4372 = vld [vmem:[%s4369 + $0x20] sm:$0xff]
      %v4373 = vld [vmem:[%s4369 + $0x30] sm:$0xff]
      %v4374 = vld [vmem:[%s4369 + $0x40] sm:$0xff]
      %v4375 = vld [vmem:[%s4369 + $0x50] sm:$0xff]
      %v4376 = vld [vmem:[%s4369 + $0x60] sm:$0xff]
      %v4377 = vld [vmem:[%s4369 + $0x70] sm:$0xff]
      %4386 = vrot.lane.b32.xlu0 %v4370, 64
      %v4387 = vpop.permute.xlu0 %4386
      %4388 = vrot.lane.b32.xlu0 %v4371, 64
      %v4389 = vpop.permute.xlu0 %4388
      %4390 = vrot.lane.b32.xlu0 %v4372, 64
      %v4391 = vpop.permute.xlu0 %4390
      %4392 = vrot.lane.b32.xlu0 %v4373, 64
      %v4393 = vpop.permute.xlu0 %4392
      %4394 = vrot.lane.b32.xlu0 %v4374, 64
      %v4395 = vpop.permute.xlu0 %4394
      %4396 = vrot.lane.b32.xlu0 %v4375, 64
      %v4397 = vpop.permute.xlu0 %4396
      %4398 = vrot.lane.b32.xlu0 %v4376, 64
      %v4399 = vpop.permute.xlu0 %4398
      %4400 = vrot.lane.b32.xlu0 %v4377, 64
      %v4401 = vpop.permute.xlu0 %4400
      %4410 = vst.msk [vmem:[#allocation8 + $0x8] sm:$0xff] %vm4247, %v4387
      %4411 = vst.msk [vmem:[#allocation8 + $0x20] sm:$0xff] %vm4247, %v4389
      %4412 = vst.msk [vmem:[#allocation8 + $0x38] sm:$0xff] %vm4247, %v4391
      %4413 = vst.msk [vmem:[#allocation8 + $0x50] sm:$0xff] %vm4247, %v4393
      %4414 = vst.msk [vmem:[#allocation8 + $0x68] sm:$0xff] %vm4247, %v4395
      %4415 = vst.msk [vmem:[#allocation8 + $0x80] sm:$0xff] %vm4247, %v4397
      %4416 = vst.msk [vmem:[#allocation8 + $0x98] sm:$0xff] %vm4247, %v4399
      %4417 = vst.msk [vmem:[#allocation8 + $0xb0] sm:$0xff] %vm4247, %v4401
      %v4418 = vld [vmem:[%s4369 + $0x1] sm:$0xff]
      %v4419 = vld [vmem:[%s4369 + $0x11] sm:$0xff]
      %v4420 = vld [vmem:[%s4369 + $0x21] sm:$0xff]
      %v4421 = vld [vmem:[%s4369 + $0x31] sm:$0xff]
      %v4422 = vld [vmem:[%s4369 + $0x41] sm:$0xff]
      %v4423 = vld [vmem:[%s4369 + $0x51] sm:$0xff]
      %v4424 = vld [vmem:[%s4369 + $0x61] sm:$0xff]
      %v4425 = vld [vmem:[%s4369 + $0x71] sm:$0xff]
      %4434 = vrot.lane.b32.xlu0 %v4418, 96
      %v4435 = vpop.permute.xlu0 %4434
      %4436 = vrot.lane.b32.xlu0 %v4419, 96
      %v4437 = vpop.permute.xlu0 %4436
      %4438 = vrot.lane.b32.xlu0 %v4420, 96
      %v4439 = vpop.permute.xlu0 %4438
      %4440 = vrot.lane.b32.xlu0 %v4421, 96
      %v4441 = vpop.permute.xlu0 %4440
      %4442 = vrot.lane.b32.xlu0 %v4422, 96
      %v4443 = vpop.permute.xlu0 %4442
      %4444 = vrot.lane.b32.xlu0 %v4423, 96
      %v4445 = vpop.permute.xlu0 %4444
      %4446 = vrot.lane.b32.xlu0 %v4424, 96
      %v4447 = vpop.permute.xlu0 %4446
      %4448 = vrot.lane.b32.xlu0 %v4425, 96
      %v4449 = vpop.permute.xlu0 %4448
      %4458 = vst.msk [vmem:[#allocation8 + $0x8] sm:$0xff] %vm4296, %v4435
      %4459 = vst.msk [vmem:[#allocation8 + $0x20] sm:$0xff] %vm4296, %v4437
      %4460 = vst.msk [vmem:[#allocation8 + $0x38] sm:$0xff] %vm4296, %v4439
      %4461 = vst.msk [vmem:[#allocation8 + $0x50] sm:$0xff] %vm4296, %v4441
      %4462 = vst.msk [vmem:[#allocation8 + $0x68] sm:$0xff] %vm4296, %v4443
      %4463 = vst.msk [vmem:[#allocation8 + $0x80] sm:$0xff] %vm4296, %v4445
      %4464 = vst.msk [vmem:[#allocation8 + $0x98] sm:$0xff] %vm4296, %v4447
      %4465 = vst.msk [vmem:[#allocation8 + $0xb0] sm:$0xff] %vm4296, %v4449
      %v4466 = vld [vmem:[%s4369 + $0x2] sm:$0xff]
      %v4467 = vld [vmem:[%s4369 + $0x12] sm:$0xff]
      %v4468 = vld [vmem:[%s4369 + $0x22] sm:$0xff]
      %v4469 = vld [vmem:[%s4369 + $0x32] sm:$0xff]
      %v4470 = vld [vmem:[%s4369 + $0x42] sm:$0xff]
      %v4471 = vld [vmem:[%s4369 + $0x52] sm:$0xff]
      %v4472 = vld [vmem:[%s4369 + $0x62] sm:$0xff]
      %v4473 = vld [vmem:[%s4369 + $0x72] sm:$0xff]
      %4474 = vst.msk [vmem:[#allocation8 + $0x10] sm:$0xff] %vm4111, %v4466
      %4475 = vst.msk [vmem:[#allocation8 + $0x28] sm:$0xff] %vm4111, %v4467
      %4476 = vst.msk [vmem:[#allocation8 + $0x40] sm:$0xff] %vm4111, %v4468
      %4477 = vst.msk [vmem:[#allocation8 + $0x58] sm:$0xff] %vm4111, %v4469
      %4478 = vst.msk [vmem:[#allocation8 + $0x70] sm:$0xff] %vm4111, %v4470
      %4479 = vst.msk [vmem:[#allocation8 + $0x88] sm:$0xff] %vm4111, %v4471
      %4480 = vst.msk [vmem:[#allocation8 + $0xa0] sm:$0xff] %vm4111, %v4472
      %4481 = vst.msk [vmem:[#allocation8 + $0xb8] sm:$0xff] %vm4111, %v4473
      %v4482 = vld [vmem:[%s10] sm:$0x77]
      %v4483 = vld [vmem:[%s10 + $0x8] sm:$0x7]
      %v4484 = vld [vmem:[#allocation8] sm:$0xff]
      %v4485 = vld [vmem:[#allocation8 + $0x8] sm:$0xff]
      %v4486 = vld [vmem:[#allocation8 + $0x10] sm:$0xff]
      %v4487 = vld [vmem:[#allocation8 + $0x18] sm:$0xff]
      %v4488 = vld [vmem:[#allocation8 + $0x20] sm:$0xff]
      %v4489 = vld [vmem:[#allocation8 + $0x28] sm:$0xff]
      %v4490 = vld [vmem:[#allocation8 + $0x30] sm:$0xff]
      %v4491 = vld [vmem:[#allocation8 + $0x38] sm:$0xff]
      %v4492 = vld [vmem:[#allocation8 + $0x40] sm:$0xff]
      %v4493 = vld [vmem:[#allocation8 + $0x48] sm:$0xff]
      %v4494 = vld [vmem:[#allocation8 + $0x50] sm:$0xff]
      %v4495 = vld [vmem:[#allocation8 + $0x58] sm:$0xff]
      %v4496 = vld [vmem:[#allocation8 + $0x60] sm:$0xff]
      %v4497 = vld [vmem:[#allocation8 + $0x68] sm:$0xff]
      %v4498 = vld [vmem:[#allocation8 + $0x70] sm:$0xff]
      %v4499 = vld [vmem:[#allocation8 + $0x78] sm:$0xff]
      %v4500 = vld [vmem:[#allocation8 + $0x80] sm:$0xff]
      %v4501 = vld [vmem:[#allocation8 + $0x88] sm:$0xff]
      %v4502 = vld [vmem:[#allocation8 + $0x90] sm:$0xff]
      %v4503 = vld [vmem:[#allocation8 + $0x98] sm:$0xff]
      %v4504 = vld [vmem:[#allocation8 + $0xa0] sm:$0xff]
      %v4505 = vld [vmem:[#allocation8 + $0xa8] sm:$0xff]
      %v4506 = vld [vmem:[#allocation8 + $0xb0] sm:$0xff]
      %v4507 = vld [vmem:[#allocation8 + $0xb8] sm:$0xff]
      %v4508 = vld [vmem:[%s11] sm:$0x7]
      %4510 = vset.pattern.permute.xlu0 0
      %4511 = vperm.xlu0 %4510, %v4508
      %v4512 = vpop.permute.xlu0 %4511
      %v4516 = vcombine.high %v4482, %v4482
      %v4518 = vsel %vm4111, %v4483, 0
      %v4521 = vsel %vm4111, %v4486, 0
      %v4524 = vsel %vm4111, %v4489, 0
      %v4527 = vsel %vm4111, %v4492, 0
      %v4530 = vsel %vm4111, %v4495, 0
      %v4533 = vsel %vm4111, %v4498, 0
      %v4536 = vsel %vm4111, %v4501, 0
      %v4539 = vsel %vm4111, %v4504, 0
      %v4542 = vsel %vm4111, %v4507, 0
      %4544 = vmatprep.subr.mxu0 %v4485
      %4545 = vmatpush1.xpose.msra.mxu0 %v4484
      %4546 = vmatprep.subr.mxu0 %v4488
      %4547 = vmatpush1.xpose.msra.mxu0 %v4487
      %4548 = vmatprep.subr.mxu0 %v4491
      %4549 = vmatpush1.xpose.msra.mxu0 %v4490
      %4550 = vmatprep.subr.mxu0 %v4494
      %4551 = vmatpush1.xpose.msra.mxu0 %v4493
      %4552 = vmatprep.subr.mxu0 %v4497
      %4553 = vmatpush1.xpose.msra.mxu0 %v4496
      %4554 = vmatprep.subr.mxu0 %v4500
      %4555 = vmatpush1.xpose.msra.mxu0 %v4499
      %4556 = vmatprep.subr.mxu0 %v4503
      %4557 = vmatpush1.xpose.msra.mxu0 %v4502
      %4558 = vmatprep.subr.mxu0 %v4506
      %4559 = vmatpush1.xpose.msra.mxu0 %v4505
      %4560 = vmatprep.subr.mxu0 0.0
      %4561 = vmatpush1.xpose.msra.mxu0 0.0
      %4562 = vmatprep.subr.mxu0 0.0
      %4563 = vmatpush1.xpose.msra.mxu0 0.0
      %4564 = vmatprep.subr.mxu0 0.0
      %4565 = vmatpush1.xpose.msra.mxu0 0.0
      %4566 = vmatprep.subr.mxu0 0.0
      %4567 = vmatpush1.xpose.msra.mxu0 0.0
      %4568 = vmatprep.subr.mxu0 0.0
      %4569 = vmatpush1.xpose.msra.mxu0 0.0
      %4570 = vmatprep.subr.mxu0 0.0
      %4571 = vmatpush1.xpose.msra.mxu0 0.0
      %4572 = vmatprep.subr.mxu0 0.0
      %4573 = vmatpush1.xpose.msra.mxu0 0.0
      %4574 = vmatprep.subr.mxu0 0.0
      %4575 = vmatpush1.xpose.msra.mxu0 0.0
      %4576 = vmatprep.subr.mxu0 0.0
      %4577 = vmatpush1.xpose.msra.mxu0 0.0
      %4578 = vmatprep.subr.mxu0 0.0
      %4579 = vmatpush1.xpose.msra.mxu0 0.0
      %4580 = vmatprep.subr.mxu0 0.0
      %4581 = vmatpush1.xpose.msra.mxu0 0.0
      %4582 = vmatprep.subr.mxu0 0.0
      %4583 = vmatpush1.xpose.msra.mxu0 0.0
      %4584 = vmatprep.subr.mxu0 0.0
      %4585 = vmatpush1.xpose.msra.mxu0 0.0
      %4586 = vmatprep.subr.mxu0 0.0
      %4587 = vmatpush1.xpose.msra.mxu0 0.0
      %4588 = vmatprep.subr.mxu0 0.0
      %4589 = vmatpush1.xpose.msra.mxu0 0.0
      %4590 = vmatprep.subr.mxu0 0.0
      %4591 = vmatpush1.xpose.msra.mxu0 0.0
      %4592 = vmatprep.subr.mxu0 0.0
      %4593 = vmatpush1.xpose.msra.mxu0 0.0
      %4594 = vmatprep.subr.mxu0 0.0
      %4595 = vmatpush1.xpose.msra.mxu0 0.0
      %4596 = vmatprep.subr.mxu0 0.0
      %4597 = vmatpush1.xpose.msra.mxu0 0.0
      %4598 = vmatprep.subr.mxu0 0.0
      %4599 = vmatpush1.xpose.msra.mxu0 0.0
      %4600 = vmatprep.subr.mxu0 0.0
      %4601 = vmatpush1.xpose.msra.mxu0 0.0
      %4602 = vmatprep.subr.mxu0 0.0
      %4603 = vmatpush1.xpose.msra.mxu0 0.0
      %4604 = vmatprep.subr.mxu0 0.0
      %4605 = vmatpush1.xpose.msra.mxu0 0.0
      %4606 = vmatprep.subr.mxu0 0.0
      %4607 = vmatpush1.xpose.msra.mxu0 0.0
      %4608 = vmatprep.mubr.f32.mxu0 %v4516
      %4609 = vmatmul.mubr.f32.gmra.mrb[0].mxu0 %v4482
      %v4610 = vpop.f32.mrb[0].mxu0
      %v4611 = vadd.f32 %v4512, %v4610
      %v4612 = vpop.f32.mrb[0].mxu0
      %4613 = vdwg.mxu0
      %4614 = vmatprep.subr.mxu0 0.0
      %4615 = vmatpush1.xpose.msra.mxu0 %v4521
      %4616 = vmatprep.subr.mxu0 0.0
      %4617 = vmatpush1.xpose.msra.mxu0 %v4524
      %4618 = vmatprep.subr.mxu0 0.0
      %4619 = vmatpush1.xpose.msra.mxu0 %v4527
      %4620 = vmatprep.subr.mxu0 0.0
      %4621 = vmatpush1.xpose.msra.mxu0 %v4530
      %4622 = vmatprep.subr.mxu0 0.0
      %4623 = vmatpush1.xpose.msra.mxu0 %v4533
      %4624 = vmatprep.subr.mxu0 0.0
      %4625 = vmatpush1.xpose.msra.mxu0 %v4536
      %4626 = vmatprep.subr.mxu0 0.0
      %4627 = vmatpush1.xpose.msra.mxu0 %v4539
      %4628 = vmatprep.subr.mxu0 0.0
      %4629 = vmatpush1.xpose.msra.mxu0 %v4542
      %4630 = vmatprep.subr.mxu0 0.0
      %4631 = vmatpush1.xpose.msra.mxu0 0.0
      %4632 = vmatprep.subr.mxu0 0.0
      %4633 = vmatpush1.xpose.msra.mxu0 0.0
      %4634 = vmatprep.subr.mxu0 0.0
      %4635 = vmatpush1.xpose.msra.mxu0 0.0
      %4636 = vmatprep.subr.mxu0 0.0
      %4637 = vmatpush1.xpose.msra.mxu0 0.0
      %4638 = vmatprep.subr.mxu0 0.0
      %4639 = vmatpush1.xpose.msra.mxu0 0.0
      %4640 = vmatprep.subr.mxu0 0.0
      %4641 = vmatpush1.xpose.msra.mxu0 0.0
      %4642 = vmatprep.subr.mxu0 0.0
      %4643 = vmatpush1.xpose.msra.mxu0 0.0
      %4644 = vmatprep.subr.mxu0 0.0
      %4645 = vmatpush1.xpose.msra.mxu0 0.0
      %4646 = vmatprep.subr.mxu0 0.0
      %4647 = vmatpush1.xpose.msra.mxu0 0.0
      %4648 = vmatprep.subr.mxu0 0.0
      %4649 = vmatpush1.xpose.msra.mxu0 0.0
      %4650 = vmatprep.subr.mxu0 0.0
      %4651 = vmatpush1.xpose.msra.mxu0 0.0
      %4652 = vmatprep.subr.mxu0 0.0
      %4653 = vmatpush1.xpose.msra.mxu0 0.0
      %4654 = vmatprep.subr.mxu0 0.0
      %4655 = vmatpush1.xpose.msra.mxu0 0.0
      %4656 = vmatprep.subr.mxu0 0.0
      %4657 = vmatpush1.xpose.msra.mxu0 0.0
      %4658 = vmatprep.subr.mxu0 0.0
      %4659 = vmatpush1.xpose.msra.mxu0 0.0
      %4660 = vmatprep.subr.mxu0 0.0
      %4661 = vmatpush1.xpose.msra.mxu0 0.0
      %4662 = vmatprep.subr.mxu0 0.0
      %4663 = vmatpush1.xpose.msra.mxu0 0.0
      %4664 = vmatprep.subr.mxu0 0.0
      %4665 = vmatpush1.xpose.msra.mxu0 0.0
      %4666 = vmatprep.subr.mxu0 0.0
      %4667 = vmatpush1.xpose.msra.mxu0 0.0
      %4668 = vmatprep.subr.mxu0 0.0
      %4669 = vmatpush1.xpose.msra.mxu0 0.0
      %4670 = vmatprep.subr.mxu0 0.0
      %4671 = vmatpush1.xpose.msra.mxu0 0.0
      %4672 = vmatprep.subr.mxu0 0.0
      %4673 = vmatpush1.xpose.msra.mxu0 0.0
      %4674 = vmatprep.subr.mxu0 0.0
      %4675 = vmatpush1.xpose.msra.mxu0 0.0
      %4676 = vmatprep.subr.mxu0 0.0
      %4677 = vmatpush1.xpose.msra.mxu0 0.0
      %4678 = vmatprep.mubr.f32.mxu0 0.0
      %4679 = vmatmul.mubr.f32.gmra.mrb[0].mxu0 %v4518
      %v4680 = vpop.f32.mrb[0].mxu0
      %v4681 = vadd.f32 %v4611, %v4680
      %v4682 = vpop.f32.mrb[0].mxu0
      %4683 = vdwg.mxu0
      %v4684 = vxor.u32 %v4681, 2147483648
      %v4685 = vmul.f32 %v4684, 1.442695
      %v4686 = vpow.pop %v4685
      %v4687 = vadd.f32 %v4686, 1.0
      %v4688 = vrcp.pop %v4687
      %v4689 = vmul.f32 1.0, %v4688
      %v4690 = vld [vmem:[%s12] sm:$0xff]
      %v4691 = vld [vmem:[%s12 + $0x8] sm:$0xff]
      %v4692 = vld [vmem:[%s12 + $0x10] sm:$0xff]
      %v4693 = vld [vmem:[%s12 + $0x18] sm:$0xff]
      %v4694 = vld [vmem:[%s12 + $0x20] sm:$0xff]
      %v4695 = vld [vmem:[%s12 + $0x28] sm:$0xff]
      %v4696 = vld [vmem:[%s12 + $0x30] sm:$0xff]
      %v4697 = vld [vmem:[%s12 + $0x38] sm:$0xff]
      %v4698 = vld [vmem:[%s12 + $0x40] sm:$0xff]
      %v4699 = vld [vmem:[%s12 + $0x48] sm:$0xff]
      %v4700 = vld [vmem:[%s12 + $0x50] sm:$0xff]
      %v4701 = vld [vmem:[%s12 + $0x58] sm:$0xff]
      %v4702 = vld [vmem:[%s12 + $0x60] sm:$0xff]
      %v4703 = vld [vmem:[%s12 + $0x68] sm:$0xff]
      %v4704 = vld [vmem:[%s12 + $0x70] sm:$0xff]
      %v4705 = vld [vmem:[%s12 + $0x78] sm:$0xff]
      %v4706 = vld [vmem:[%s12 + $0x80] sm:$0xff]
      %v4707 = vld [vmem:[%s12 + $0x88] sm:$0xff]
      %v4708 = vld [vmem:[%s12 + $0x90] sm:$0xff]
      %v4709 = vld [vmem:[%s12 + $0x98] sm:$0xff]
      %v4710 = vld [vmem:[%s12 + $0xa0] sm:$0xff]
      %v4711 = vld [vmem:[%s12 + $0xa8] sm:$0xff]
      %v4712 = vld [vmem:[%s12 + $0xb0] sm:$0xff]
      %v4713 = vld [vmem:[%s12 + $0xb8] sm:$0xff]
      %v4714 = vld [vmem:[%s12 + $0xc0] sm:$0xff]
      %v4715 = vld [vmem:[%s12 + $0xc8] sm:$0xff]
      %v4716 = vld [vmem:[%s12 + $0xd0] sm:$0xff]
      %v4717 = vld [vmem:[%s12 + $0xd8] sm:$0xff]
      %v4718 = vld [vmem:[%s12 + $0xe0] sm:$0xff]
      %v4719 = vld [vmem:[%s12 + $0xe8] sm:$0xff]
      %v4720 = vld [vmem:[%s12 + $0xf0] sm:$0xff]
      %v4721 = vld [vmem:[%s12 + $0xf8] sm:$0xff]
      %v4722 = vld [vmem:[%s12 + $0x100] sm:$0xff]
      %v4723 = vld [vmem:[%s12 + $0x108] sm:$0xff]
      %v4724 = vld [vmem:[%s12 + $0x110] sm:$0xff]
      %v4725 = vld [vmem:[%s12 + $0x118] sm:$0xff]
      %v4726 = vld [vmem:[%s12 + $0x120] sm:$0xff]
      %v4727 = vld [vmem:[%s12 + $0x128] sm:$0xff]
      %v4728 = vld [vmem:[%s12 + $0x130] sm:$0xff]
      %v4729 = vld [vmem:[%s12 + $0x138] sm:$0xff]
      %v4730 = vld [vmem:[%s12 + $0x140] sm:$0xff]
      %v4731 = vld [vmem:[%s12 + $0x148] sm:$0xff]
      %v4732 = vld [vmem:[%s12 + $0x150] sm:$0xff]
      %v4733 = vld [vmem:[%s12 + $0x158] sm:$0xff]
      %v4734 = vld [vmem:[%s12 + $0x160] sm:$0xff]
      %v4735 = vld [vmem:[%s12 + $0x168] sm:$0xff]
      %v4736 = vld [vmem:[%s12 + $0x170] sm:$0xff]
      %v4737 = vld [vmem:[%s12 + $0x178] sm:$0xff]
      %v4738 = vld [vmem:[%s12 + $0x180] sm:$0xff]
      %v4739 = vld [vmem:[%s12 + $0x188] sm:$0xff]
      %v4740 = vld [vmem:[%s12 + $0x190] sm:$0xff]
      %v4741 = vld [vmem:[%s12 + $0x198] sm:$0xff]
      %v4742 = vld [vmem:[%s12 + $0x1a0] sm:$0xff]
      %v4743 = vld [vmem:[%s12 + $0x1a8] sm:$0xff]
      %v4744 = vld [vmem:[%s12 + $0x1b0] sm:$0xff]
      %v4745 = vld [vmem:[%s12 + $0x1b8] sm:$0xff]
      %v4746 = vld [vmem:[%s12 + $0x1c0] sm:$0xff]
      %v4747 = vld [vmem:[%s12 + $0x1c8] sm:$0xff]
      %v4748 = vld [vmem:[%s12 + $0x1d0] sm:$0xff]
      %v4749 = vld [vmem:[%s12 + $0x1d8] sm:$0xff]
      %v4750 = vld [vmem:[%s12 + $0x1e0] sm:$0xff]
      %v4751 = vld [vmem:[%s12 + $0x1e8] sm:$0xff]
      %v4752 = vld [vmem:[%s12 + $0x1f0] sm:$0xff]
      %v4753 = vld [vmem:[%s12 + $0x1f8] sm:$0xff]
      %v4754 = vld [vmem:[%s12 + $0x200] sm:$0xff]
      %v4755 = vld [vmem:[%s12 + $0x208] sm:$0xff]
      %v4756 = vld [vmem:[%s12 + $0x210] sm:$0xff]
      %v4757 = vld [vmem:[%s12 + $0x218] sm:$0xff]
      %v4758 = vld [vmem:[%s12 + $0x220] sm:$0xff]
      %v4759 = vld [vmem:[%s12 + $0x228] sm:$0xff]
      %v4760 = vld [vmem:[%s12 + $0x230] sm:$0xff]
      %v4761 = vld [vmem:[%s12 + $0x238] sm:$0xff]
      %v4762 = vld [vmem:[%s12 + $0x240] sm:$0xff]
      %v4763 = vld [vmem:[%s12 + $0x248] sm:$0xff]
      %v4764 = vld [vmem:[%s12 + $0x250] sm:$0xff]
      %v4765 = vld [vmem:[%s12 + $0x258] sm:$0xff]
      %v4766 = vld [vmem:[%s12 + $0x260] sm:$0xff]
      %v4767 = vld [vmem:[%s12 + $0x268] sm:$0xff]
      %v4768 = vld [vmem:[%s12 + $0x270] sm:$0xff]
      %v4769 = vld [vmem:[%s12 + $0x278] sm:$0xff]
      %v4770 = vld [vmem:[%s12 + $0x280] sm:$0xff]
      %v4771 = vld [vmem:[%s12 + $0x288] sm:$0xff]
      %v4772 = vld [vmem:[%s12 + $0x290] sm:$0xff]
      %v4773 = vld [vmem:[%s12 + $0x298] sm:$0xff]
      %v4774 = vld [vmem:[%s12 + $0x2a0] sm:$0xff]
      %v4775 = vld [vmem:[%s12 + $0x2a8] sm:$0xff]
      %v4776 = vld [vmem:[%s12 + $0x2b0] sm:$0xff]
      %v4777 = vld [vmem:[%s12 + $0x2b8] sm:$0xff]
      %v4778 = vld [vmem:[%s12 + $0x2c0] sm:$0xff]
      %v4779 = vld [vmem:[%s12 + $0x2c8] sm:$0xff]
      %v4780 = vld [vmem:[%s12 + $0x2d0] sm:$0xff]
      %v4781 = vld [vmem:[%s12 + $0x2d8] sm:$0xff]
      %v4782 = vld [vmem:[%s12 + $0x2e0] sm:$0xff]
      %v4783 = vld [vmem:[%s12 + $0x2e8] sm:$0xff]
      %v4784 = vld [vmem:[%s12 + $0x2f0] sm:$0xff]
      %v4785 = vld [vmem:[%s12 + $0x2f8] sm:$0xff]
      %v4786 = vld [vmem:[%s12 + $0x300] sm:$0xff]
      %v4787 = vld [vmem:[%s12 + $0x308] sm:$0xff]
      %v4788 = vld [vmem:[%s12 + $0x310] sm:$0xff]
      %v4789 = vld [vmem:[%s12 + $0x318] sm:$0xff]
      %v4790 = vld [vmem:[%s12 + $0x320] sm:$0xff]
      %v4791 = vld [vmem:[%s12 + $0x328] sm:$0xff]
      %v4792 = vld [vmem:[%s12 + $0x330] sm:$0xff]
      %v4793 = vld [vmem:[%s12 + $0x338] sm:$0xff]
      %v4794 = vld [vmem:[%s12 + $0x340] sm:$0xff]
      %v4795 = vld [vmem:[%s12 + $0x348] sm:$0xff]
      %v4796 = vld [vmem:[%s12 + $0x350] sm:$0xff]
      %v4797 = vld [vmem:[%s12 + $0x358] sm:$0xff]
      %v4798 = vld [vmem:[%s12 + $0x360] sm:$0xff]
      %v4799 = vld [vmem:[%s12 + $0x368] sm:$0xff]
      %v4800 = vld [vmem:[%s12 + $0x370] sm:$0xff]
      %v4801 = vld [vmem:[%s12 + $0x378] sm:$0xff]
      %v4802 = vld [vmem:[%s12 + $0x380] sm:$0xff]
      %v4803 = vld [vmem:[%s12 + $0x388] sm:$0xff]
      %v4804 = vld [vmem:[%s12 + $0x390] sm:$0xff]
      %v4805 = vld [vmem:[%s12 + $0x398] sm:$0xff]
      %v4806 = vld [vmem:[%s12 + $0x3a0] sm:$0xff]
      %v4807 = vld [vmem:[%s12 + $0x3a8] sm:$0xff]
      %v4808 = vld [vmem:[%s12 + $0x3b0] sm:$0xff]
      %v4809 = vld [vmem:[%s12 + $0x3b8] sm:$0xff]
      %v4810 = vld [vmem:[%s12 + $0x3c0] sm:$0xff]
      %v4811 = vld [vmem:[%s12 + $0x3c8] sm:$0xff]
      %v4812 = vld [vmem:[%s12 + $0x3d0] sm:$0xff]
      %v4813 = vld [vmem:[%s12 + $0x3d8] sm:$0xff]
      %v4814 = vld [vmem:[%s12 + $0x3e0] sm:$0xff]
      %v4815 = vld [vmem:[%s12 + $0x3e8] sm:$0xff]
      %v4816 = vld [vmem:[%s12 + $0x3f0] sm:$0xff]
      %v4817 = vld [vmem:[%s12 + $0x3f8] sm:$0xff]
      %v4818 = vld [vmem:[%s12 + $0x400] sm:$0xff]
      %v4819 = vld [vmem:[%s12 + $0x408] sm:$0xff]
      %v4820 = vld [vmem:[%s12 + $0x410] sm:$0xff]
      %v4821 = vld [vmem:[%s12 + $0x418] sm:$0xff]
      %v4822 = vld [vmem:[%s12 + $0x420] sm:$0xff]
      %v4823 = vld [vmem:[%s12 + $0x428] sm:$0xff]
      %v4824 = vld [vmem:[%s12 + $0x430] sm:$0xff]
      %v4825 = vld [vmem:[%s12 + $0x438] sm:$0xff]
      %v4826 = vld [vmem:[%s12 + $0x440] sm:$0xff]
      %v4827 = vld [vmem:[%s12 + $0x448] sm:$0xff]
      %v4828 = vld [vmem:[%s12 + $0x450] sm:$0xff]
      %v4829 = vld [vmem:[%s12 + $0x458] sm:$0xff]
      %v4830 = vld [vmem:[%s12 + $0x460] sm:$0xff]
      %v4831 = vld [vmem:[%s12 + $0x468] sm:$0xff]
      %v4832 = vld [vmem:[%s12 + $0x470] sm:$0xff]
      %v4833 = vld [vmem:[%s12 + $0x478] sm:$0xff]
      %v4834 = vld [vmem:[%s12 + $0x480] sm:$0xff]
      %v4835 = vld [vmem:[%s12 + $0x488] sm:$0xff]
      %v4836 = vld [vmem:[%s12 + $0x490] sm:$0xff]
      %v4837 = vld [vmem:[%s12 + $0x498] sm:$0xff]
      %v4838 = vld [vmem:[%s12 + $0x4a0] sm:$0xff]
      %v4839 = vld [vmem:[%s12 + $0x4a8] sm:$0xff]
      %v4840 = vld [vmem:[%s12 + $0x4b0] sm:$0xff]
      %v4841 = vld [vmem:[%s12 + $0x4b8] sm:$0xff]
      %v4842 = vld [vmem:[%s12 + $0x4c0] sm:$0xff]
      %v4843 = vld [vmem:[%s12 + $0x4c8] sm:$0xff]
      %v4844 = vld [vmem:[%s12 + $0x4d0] sm:$0xff]
      %v4845 = vld [vmem:[%s12 + $0x4d8] sm:$0xff]
      %v4846 = vld [vmem:[%s12 + $0x4e0] sm:$0xff]
      %v4847 = vld [vmem:[%s12 + $0x4e8] sm:$0xff]
      %v4848 = vld [vmem:[%s12 + $0x4f0] sm:$0xff]
      %v4849 = vld [vmem:[%s12 + $0x4f8] sm:$0xff]
      %v4850 = vld [vmem:[%s12 + $0x500] sm:$0xff]
      %v4851 = vld [vmem:[%s12 + $0x508] sm:$0xff]
      %v4852 = vld [vmem:[%s12 + $0x510] sm:$0xff]
      %v4853 = vld [vmem:[%s12 + $0x518] sm:$0xff]
      %v4854 = vld [vmem:[%s12 + $0x520] sm:$0xff]
      %v4855 = vld [vmem:[%s12 + $0x528] sm:$0xff]
      %v4856 = vld [vmem:[%s12 + $0x530] sm:$0xff]
      %v4857 = vld [vmem:[%s12 + $0x538] sm:$0xff]
      %v4858 = vld [vmem:[%s12 + $0x540] sm:$0xff]
      %v4859 = vld [vmem:[%s12 + $0x548] sm:$0xff]
      %v4860 = vld [vmem:[%s12 + $0x550] sm:$0xff]
      %v4861 = vld [vmem:[%s12 + $0x558] sm:$0xff]
      %v4862 = vld [vmem:[%s12 + $0x560] sm:$0xff]
      %v4863 = vld [vmem:[%s12 + $0x568] sm:$0xff]
      %v4864 = vld [vmem:[%s12 + $0x570] sm:$0xff]
      %v4865 = vld [vmem:[%s12 + $0x578] sm:$0xff]
      %v4866 = vld [vmem:[%s12 + $0x580] sm:$0xff]
      %v4867 = vld [vmem:[%s12 + $0x588] sm:$0xff]
      %v4868 = vld [vmem:[%s12 + $0x590] sm:$0xff]
      %v4869 = vld [vmem:[%s12 + $0x598] sm:$0xff]
      %v4870 = vld [vmem:[%s12 + $0x5a0] sm:$0xff]
      %v4871 = vld [vmem:[%s12 + $0x5a8] sm:$0xff]
      %v4872 = vld [vmem:[%s12 + $0x5b0] sm:$0xff]
      %v4873 = vld [vmem:[%s12 + $0x5b8] sm:$0xff]
      %v4874 = vld [vmem:[%s12 + $0x5c0] sm:$0xff]
      %v4875 = vld [vmem:[%s12 + $0x5c8] sm:$0xff]
      %v4876 = vld [vmem:[%s12 + $0x5d0] sm:$0xff]
      %v4877 = vld [vmem:[%s12 + $0x5d8] sm:$0xff]
      %v4878 = vld [vmem:[%s12 + $0x5e0] sm:$0xff]
      %v4879 = vld [vmem:[%s12 + $0x5e8] sm:$0xff]
      %v4880 = vld [vmem:[%s12 + $0x5f0] sm:$0xff]
      %v4881 = vld [vmem:[%s12 + $0x5f8] sm:$0xff]
      %v4882 = vld [vmem:[%s12 + $0x600] sm:$0xff]
      %v4883 = vld [vmem:[%s12 + $0x608] sm:$0xff]
      %v4884 = vld [vmem:[%s12 + $0x610] sm:$0xff]
      %v4885 = vld [vmem:[%s12 + $0x618] sm:$0xff]
      %v4886 = vld [vmem:[%s12 + $0x620] sm:$0xff]
      %v4887 = vld [vmem:[%s12 + $0x628] sm:$0xff]
      %v4888 = vld [vmem:[%s12 + $0x630] sm:$0xff]
      %v4889 = vld [vmem:[%s12 + $0x638] sm:$0xff]
      %v4890 = vld [vmem:[%s12 + $0x640] sm:$0xff]
      %v4891 = vld [vmem:[%s12 + $0x648] sm:$0xff]
      %v4892 = vld [vmem:[%s12 + $0x650] sm:$0xff]
      %v4893 = vld [vmem:[%s12 + $0x658] sm:$0xff]
      %v4894 = vld [vmem:[%s12 + $0x660] sm:$0xff]
      %v4895 = vld [vmem:[%s12 + $0x668] sm:$0xff]
      %v4896 = vld [vmem:[%s12 + $0x670] sm:$0xff]
      %v4897 = vld [vmem:[%s12 + $0x678] sm:$0xff]
      %v4898 = vld [vmem:[%s12 + $0x680] sm:$0xff]
      %v4899 = vld [vmem:[%s12 + $0x688] sm:$0xff]
      %v4900 = vld [vmem:[%s12 + $0x690] sm:$0xff]
      %v4901 = vld [vmem:[%s12 + $0x698] sm:$0xff]
      %v4902 = vld [vmem:[%s12 + $0x6a0] sm:$0xff]
      %v4903 = vld [vmem:[%s12 + $0x6a8] sm:$0xff]
      %v4904 = vld [vmem:[%s12 + $0x6b0] sm:$0xff]
      %v4905 = vld [vmem:[%s12 + $0x6b8] sm:$0xff]
      %v4906 = vld [vmem:[%s12 + $0x6c0] sm:$0xff]
      %v4907 = vld [vmem:[%s12 + $0x6c8] sm:$0xff]
      %v4908 = vld [vmem:[%s12 + $0x6d0] sm:$0xff]
      %v4909 = vld [vmem:[%s12 + $0x6d8] sm:$0xff]
      %v4910 = vld [vmem:[%s12 + $0x6e0] sm:$0xff]
      %v4911 = vld [vmem:[%s12 + $0x6e8] sm:$0xff]
      %v4912 = vld [vmem:[%s12 + $0x6f0] sm:$0xff]
      %v4913 = vld [vmem:[%s12 + $0x6f8] sm:$0xff]
      %v4914 = vld [vmem:[%s12 + $0x700] sm:$0xff]
      %v4915 = vld [vmem:[%s12 + $0x708] sm:$0xff]
      %v4916 = vld [vmem:[%s12 + $0x710] sm:$0xff]
      %v4917 = vld [vmem:[%s12 + $0x718] sm:$0xff]
      %v4918 = vld [vmem:[%s12 + $0x720] sm:$0xff]
      %v4919 = vld [vmem:[%s12 + $0x728] sm:$0xff]
      %v4920 = vld [vmem:[%s12 + $0x730] sm:$0xff]
      %v4921 = vld [vmem:[%s12 + $0x738] sm:$0xff]
      %v4922 = vld [vmem:[%s12 + $0x740] sm:$0xff]
      %v4923 = vld [vmem:[%s12 + $0x748] sm:$0xff]
      %v4924 = vld [vmem:[%s12 + $0x750] sm:$0xff]
      %v4925 = vld [vmem:[%s12 + $0x758] sm:$0xff]
      %v4926 = vld [vmem:[%s12 + $0x760] sm:$0xff]
      %v4927 = vld [vmem:[%s12 + $0x768] sm:$0xff]
      %v4928 = vld [vmem:[%s12 + $0x770] sm:$0xff]
      %v4929 = vld [vmem:[%s12 + $0x778] sm:$0xff]
      %v4930 = vld [vmem:[%s12 + $0x780] sm:$0xff]
      %v4931 = vld [vmem:[%s12 + $0x788] sm:$0xff]
      %v4932 = vld [vmem:[%s12 + $0x790] sm:$0xff]
      %v4933 = vld [vmem:[%s12 + $0x798] sm:$0xff]
      %v4934 = vld [vmem:[%s12 + $0x7a0] sm:$0xff]
      %v4935 = vld [vmem:[%s12 + $0x7a8] sm:$0xff]
      %v4936 = vld [vmem:[%s12 + $0x7b0] sm:$0xff]
      %v4937 = vld [vmem:[%s12 + $0x7b8] sm:$0xff]
      %v4938 = vld [vmem:[%s12 + $0x7c0] sm:$0xff]
      %v4939 = vld [vmem:[%s12 + $0x7c8] sm:$0xff]
      %v4940 = vld [vmem:[%s12 + $0x7d0] sm:$0xff]
      %v4941 = vld [vmem:[%s12 + $0x7d8] sm:$0xff]
      %v4942 = vld [vmem:[%s12 + $0x7e0] sm:$0xff]
      %v4943 = vld [vmem:[%s12 + $0x7e8] sm:$0xff]
      %v4944 = vld [vmem:[%s12 + $0x7f0] sm:$0xff]
      %v4945 = vld [vmem:[%s12 + $0x7f8] sm:$0xff]
      %v4946 = vld [vmem:[%s12 + $0x800] sm:$0xff]
      %v4947 = vld [vmem:[%s12 + $0x808] sm:$0xff]
      %v4948 = vld [vmem:[%s12 + $0x810] sm:$0xff]
      %v4949 = vld [vmem:[%s12 + $0x818] sm:$0xff]
      %v4950 = vld [vmem:[%s12 + $0x820] sm:$0xff]
      %v4951 = vld [vmem:[%s12 + $0x828] sm:$0xff]
      %v4952 = vld [vmem:[%s12 + $0x830] sm:$0xff]
      %v4953 = vld [vmem:[%s12 + $0x838] sm:$0xff]
      %v4954 = vld [vmem:[%s12 + $0x840] sm:$0xff]
      %v4955 = vld [vmem:[%s12 + $0x848] sm:$0xff]
      %v4956 = vld [vmem:[%s12 + $0x850] sm:$0xff]
      %v4957 = vld [vmem:[%s12 + $0x858] sm:$0xff]
      %v4958 = vld [vmem:[%s12 + $0x860] sm:$0xff]
      %v4959 = vld [vmem:[%s12 + $0x868] sm:$0xff]
      %v4960 = vld [vmem:[%s12 + $0x870] sm:$0xff]
      %v4961 = vld [vmem:[%s12 + $0x878] sm:$0xff]
      %v4962 = vld [vmem:[%s12 + $0x880] sm:$0xff]
      %v4963 = vld [vmem:[%s12 + $0x888] sm:$0xff]
      %v4964 = vld [vmem:[%s12 + $0x890] sm:$0xff]
      %v4965 = vld [vmem:[%s12 + $0x898] sm:$0xff]
      %v4966 = vld [vmem:[%s12 + $0x8a0] sm:$0xff]
      %v4967 = vld [vmem:[%s12 + $0x8a8] sm:$0xff]
      %v4968 = vld [vmem:[%s12 + $0x8b0] sm:$0xff]
      %v4969 = vld [vmem:[%s12 + $0x8b8] sm:$0xff]
      %v4970 = vld [vmem:[%s12 + $0x8c0] sm:$0xff]
      %v4971 = vld [vmem:[%s12 + $0x8c8] sm:$0xff]
      %v4972 = vld [vmem:[%s12 + $0x8d0] sm:$0xff]
      %v4973 = vld [vmem:[%s12 + $0x8d8] sm:$0xff]
      %v4974 = vld [vmem:[%s12 + $0x8e0] sm:$0xff]
      %v4975 = vld [vmem:[%s12 + $0x8e8] sm:$0xff]
      %v4976 = vld [vmem:[%s12 + $0x8f0] sm:$0xff]
      %v4977 = vld [vmem:[%s12 + $0x8f8] sm:$0xff]
      %v4978 = vld [vmem:[%s12 + $0x900] sm:$0xff]
      %v4979 = vld [vmem:[%s12 + $0x908] sm:$0xff]
      %v4980 = vld [vmem:[%s12 + $0x910] sm:$0xff]
      %v4981 = vld [vmem:[%s12 + $0x918] sm:$0xff]
      %v4982 = vld [vmem:[%s12 + $0x920] sm:$0xff]
      %v4983 = vld [vmem:[%s12 + $0x928] sm:$0xff]
      %v4984 = vld [vmem:[%s12 + $0x930] sm:$0xff]
      %v4985 = vld [vmem:[%s12 + $0x938] sm:$0xff]
      %v4986 = vld [vmem:[%s12 + $0x940] sm:$0xff]
      %v4987 = vld [vmem:[%s12 + $0x948] sm:$0xff]
      %v4988 = vld [vmem:[%s12 + $0x950] sm:$0xff]
      %v4989 = vld [vmem:[%s12 + $0x958] sm:$0xff]
      %v4990 = vld [vmem:[%s12 + $0x960] sm:$0xff]
      %v4991 = vld [vmem:[%s12 + $0x968] sm:$0xff]
      %v4992 = vld [vmem:[%s12 + $0x970] sm:$0xff]
      %v4993 = vld [vmem:[%s12 + $0x978] sm:$0xff]
      %v4994 = vld [vmem:[%s12 + $0x980] sm:$0xff]
      %v4995 = vld [vmem:[%s12 + $0x988] sm:$0xff]
      %v4996 = vld [vmem:[%s12 + $0x990] sm:$0xff]
      %v4997 = vld [vmem:[%s12 + $0x998] sm:$0xff]
      %v4998 = vld [vmem:[%s12 + $0x9a0] sm:$0xff]
      %v4999 = vld [vmem:[%s12 + $0x9a8] sm:$0xff]
      %v5000 = vld [vmem:[%s12 + $0x9b0] sm:$0xff]
      %v5001 = vld [vmem:[%s12 + $0x9b8] sm:$0xff]
      %v5002 = vld [vmem:[%s12 + $0x9c0] sm:$0xff]
      %v5003 = vld [vmem:[%s12 + $0x9c8] sm:$0xff]
      %v5004 = vld [vmem:[%s12 + $0x9d0] sm:$0xff]
      %v5005 = vld [vmem:[%s12 + $0x9d8] sm:$0xff]
      %v5006 = vld [vmem:[%s12 + $0x9e0] sm:$0xff]
      %v5007 = vld [vmem:[%s12 + $0x9e8] sm:$0xff]
      %v5008 = vld [vmem:[%s12 + $0x9f0] sm:$0xff]
      %v5009 = vld [vmem:[%s12 + $0x9f8] sm:$0xff]
      %v5010 = vld [vmem:[%s12 + $0xa00] sm:$0xff]
      %v5011 = vld [vmem:[%s12 + $0xa08] sm:$0xff]
      %v5012 = vld [vmem:[%s12 + $0xa10] sm:$0xff]
      %v5013 = vld [vmem:[%s12 + $0xa18] sm:$0xff]
      %v5014 = vld [vmem:[%s12 + $0xa20] sm:$0xff]
      %v5015 = vld [vmem:[%s12 + $0xa28] sm:$0xff]
      %v5016 = vld [vmem:[%s12 + $0xa30] sm:$0xff]
      %v5017 = vld [vmem:[%s12 + $0xa38] sm:$0xff]
      %v5018 = vld [vmem:[%s12 + $0xa40] sm:$0xff]
      %v5019 = vld [vmem:[%s12 + $0xa48] sm:$0xff]
      %v5020 = vld [vmem:[%s12 + $0xa50] sm:$0xff]
      %v5021 = vld [vmem:[%s12 + $0xa58] sm:$0xff]
      %v5022 = vld [vmem:[%s12 + $0xa60] sm:$0xff]
      %v5023 = vld [vmem:[%s12 + $0xa68] sm:$0xff]
      %v5024 = vld [vmem:[%s12 + $0xa70] sm:$0xff]
      %v5025 = vld [vmem:[%s12 + $0xa78] sm:$0xff]
      %v5026 = vld [vmem:[%s12 + $0xa80] sm:$0xff]
      %v5027 = vld [vmem:[%s12 + $0xa88] sm:$0xff]
      %v5028 = vld [vmem:[%s12 + $0xa90] sm:$0xff]
      %v5029 = vld [vmem:[%s12 + $0xa98] sm:$0xff]
      %v5030 = vld [vmem:[%s12 + $0xaa0] sm:$0xff]
      %v5031 = vld [vmem:[%s12 + $0xaa8] sm:$0xff]
      %v5032 = vld [vmem:[%s12 + $0xab0] sm:$0xff]
      %v5033 = vld [vmem:[%s12 + $0xab8] sm:$0xff]
      %v5034 = vld [vmem:[%s12 + $0xac0] sm:$0xff]
      %v5035 = vld [vmem:[%s12 + $0xac8] sm:$0xff]
      %v5036 = vld [vmem:[%s12 + $0xad0] sm:$0xff]
      %v5037 = vld [vmem:[%s12 + $0xad8] sm:$0xff]
      %v5038 = vld [vmem:[%s12 + $0xae0] sm:$0xff]
      %v5039 = vld [vmem:[%s12 + $0xae8] sm:$0xff]
      %v5040 = vld [vmem:[%s12 + $0xaf0] sm:$0xff]
      %v5041 = vld [vmem:[%s12 + $0xaf8] sm:$0xff]
      %v5042 = vld [vmem:[%s12 + $0xb00] sm:$0xff]
      %v5043 = vld [vmem:[%s12 + $0xb08] sm:$0xff]
      %v5044 = vld [vmem:[%s12 + $0xb10] sm:$0xff]
      %v5045 = vld [vmem:[%s12 + $0xb18] sm:$0xff]
      %v5046 = vld [vmem:[%s12 + $0xb20] sm:$0xff]
      %v5047 = vld [vmem:[%s12 + $0xb28] sm:$0xff]
      %v5048 = vld [vmem:[%s12 + $0xb30] sm:$0xff]
      %v5049 = vld [vmem:[%s12 + $0xb38] sm:$0xff]
      %v5050 = vld [vmem:[%s12 + $0xb40] sm:$0xff]
      %v5051 = vld [vmem:[%s12 + $0xb48] sm:$0xff]
      %v5052 = vld [vmem:[%s12 + $0xb50] sm:$0xff]
      %v5053 = vld [vmem:[%s12 + $0xb58] sm:$0xff]
      %v5054 = vld [vmem:[%s12 + $0xb60] sm:$0xff]
      %v5055 = vld [vmem:[%s12 + $0xb68] sm:$0xff]
      %v5056 = vld [vmem:[%s12 + $0xb70] sm:$0xff]
      %v5057 = vld [vmem:[%s12 + $0xb78] sm:$0xff]
      %v5058 = vld [vmem:[%s12 + $0xb80] sm:$0xff]
      %v5059 = vld [vmem:[%s12 + $0xb88] sm:$0xff]
      %v5060 = vld [vmem:[%s12 + $0xb90] sm:$0xff]
      %v5061 = vld [vmem:[%s12 + $0xb98] sm:$0xff]
      %v5062 = vld [vmem:[%s12 + $0xba0] sm:$0xff]
      %v5063 = vld [vmem:[%s12 + $0xba8] sm:$0xff]
      %v5064 = vld [vmem:[%s12 + $0xbb0] sm:$0xff]
      %v5065 = vld [vmem:[%s12 + $0xbb8] sm:$0xff]
      %v5066 = vld [vmem:[%s12 + $0xbc0] sm:$0xff]
      %v5067 = vld [vmem:[%s12 + $0xbc8] sm:$0xff]
      %v5068 = vld [vmem:[%s12 + $0xbd0] sm:$0xff]
      %v5069 = vld [vmem:[%s12 + $0xbd8] sm:$0xff]
      %v5070 = vld [vmem:[%s12 + $0xbe0] sm:$0xff]
      %v5071 = vld [vmem:[%s12 + $0xbe8] sm:$0xff]
      %v5072 = vld [vmem:[%s12 + $0xbf0] sm:$0xff]
      %v5073 = vld [vmem:[%s12 + $0xbf8] sm:$0xff]
      %v5074 = vld [vmem:[%s12 + $0xc00] sm:$0xff]
      %v5075 = vld [vmem:[%s12 + $0xc08] sm:$0xff]
      %v5076 = vld [vmem:[%s12 + $0xc10] sm:$0xff]
      %v5077 = vld [vmem:[%s12 + $0xc18] sm:$0xff]
      %v5078 = vld [vmem:[%s12 + $0xc20] sm:$0xff]
      %v5079 = vld [vmem:[%s12 + $0xc28] sm:$0xff]
      %v5080 = vld [vmem:[%s12 + $0xc30] sm:$0xff]
      %v5081 = vld [vmem:[%s12 + $0xc38] sm:$0xff]
      %v5082 = vld [vmem:[%s12 + $0xc40] sm:$0xff]
      %v5083 = vld [vmem:[%s12 + $0xc48] sm:$0xff]
      %v5084 = vld [vmem:[%s12 + $0xc50] sm:$0xff]
      %v5085 = vld [vmem:[%s12 + $0xc58] sm:$0xff]
      %v5086 = vld [vmem:[%s12 + $0xc60] sm:$0xff]
      %v5087 = vld [vmem:[%s12 + $0xc68] sm:$0xff]
      %v5088 = vld [vmem:[%s12 + $0xc70] sm:$0xff]
      %v5089 = vld [vmem:[%s12 + $0xc78] sm:$0xff]
      %v5090 = vld [vmem:[%s12 + $0xc80] sm:$0xff]
      %v5091 = vld [vmem:[%s12 + $0xc88] sm:$0xff]
      %v5092 = vld [vmem:[%s12 + $0xc90] sm:$0xff]
      %v5093 = vld [vmem:[%s12 + $0xc98] sm:$0xff]
      %v5094 = vld [vmem:[%s12 + $0xca0] sm:$0xff]
      %v5095 = vld [vmem:[%s12 + $0xca8] sm:$0xff]
      %v5096 = vld [vmem:[%s12 + $0xcb0] sm:$0xff]
      %v5097 = vld [vmem:[%s12 + $0xcb8] sm:$0xff]
      %v5098 = vld [vmem:[%s12 + $0xcc0] sm:$0xff]
      %v5099 = vld [vmem:[%s12 + $0xcc8] sm:$0xff]
      %v5100 = vld [vmem:[%s12 + $0xcd0] sm:$0xff]
      %v5101 = vld [vmem:[%s12 + $0xcd8] sm:$0xff]
      %v5102 = vld [vmem:[%s12 + $0xce0] sm:$0xff]
      %v5103 = vld [vmem:[%s12 + $0xce8] sm:$0xff]
      %v5104 = vld [vmem:[%s12 + $0xcf0] sm:$0xff]
      %v5105 = vld [vmem:[%s12 + $0xcf8] sm:$0xff]
      %v5106 = vld [vmem:[%s12 + $0xd00] sm:$0xff]
      %v5107 = vld [vmem:[%s12 + $0xd08] sm:$0xff]
      %v5108 = vld [vmem:[%s12 + $0xd10] sm:$0xff]
      %v5109 = vld [vmem:[%s12 + $0xd18] sm:$0xff]
      %v5110 = vld [vmem:[%s12 + $0xd20] sm:$0xff]
      %v5111 = vld [vmem:[%s12 + $0xd28] sm:$0xff]
      %v5112 = vld [vmem:[%s12 + $0xd30] sm:$0xff]
      %v5113 = vld [vmem:[%s12 + $0xd38] sm:$0xff]
      %v5114 = vld [vmem:[%s12 + $0xd40] sm:$0xff]
      %v5115 = vld [vmem:[%s12 + $0xd48] sm:$0xff]
      %v5116 = vld [vmem:[%s12 + $0xd50] sm:$0xff]
      %v5117 = vld [vmem:[%s12 + $0xd58] sm:$0xff]
      %v5118 = vld [vmem:[%s12 + $0xd60] sm:$0xff]
      %v5119 = vld [vmem:[%s12 + $0xd68] sm:$0xff]
      %v5120 = vld [vmem:[%s12 + $0xd70] sm:$0xff]
      %v5121 = vld [vmem:[%s12 + $0xd78] sm:$0xff]
      %v5122 = vld [vmem:[%s12 + $0xd80] sm:$0xff]
      %v5123 = vld [vmem:[%s12 + $0xd88] sm:$0xff]
      %v5124 = vld [vmem:[%s12 + $0xd90] sm:$0xff]
      %v5125 = vld [vmem:[%s12 + $0xd98] sm:$0xff]
      %v5126 = vld [vmem:[%s12 + $0xda0] sm:$0xff]
      %v5127 = vld [vmem:[%s12 + $0xda8] sm:$0xff]
      %v5128 = vld [vmem:[%s12 + $0xdb0] sm:$0xff]
      %v5129 = vld [vmem:[%s12 + $0xdb8] sm:$0xff]
      %v5130 = vld [vmem:[%s12 + $0xdc0] sm:$0xff]
      %v5131 = vld [vmem:[%s12 + $0xdc8] sm:$0xff]
      %v5132 = vld [vmem:[%s12 + $0xdd0] sm:$0xff]
      %v5133 = vld [vmem:[%s12 + $0xdd8] sm:$0xff]
      %v5134 = vld [vmem:[%s12 + $0xde0] sm:$0xff]
      %v5135 = vld [vmem:[%s12 + $0xde8] sm:$0xff]
      %v5136 = vld [vmem:[%s12 + $0xdf0] sm:$0xff]
      %v5137 = vld [vmem:[%s12 + $0xdf8] sm:$0xff]
      %v5138 = vld [vmem:[%s12 + $0xe00] sm:$0xff]
      %v5139 = vld [vmem:[%s12 + $0xe08] sm:$0xff]
      %v5140 = vld [vmem:[%s12 + $0xe10] sm:$0xff]
      %v5141 = vld [vmem:[%s12 + $0xe18] sm:$0xff]
      %v5142 = vld [vmem:[%s12 + $0xe20] sm:$0xff]
      %v5143 = vld [vmem:[%s12 + $0xe28] sm:$0xff]
      %v5144 = vld [vmem:[%s12 + $0xe30] sm:$0xff]
      %v5145 = vld [vmem:[%s12 + $0xe38] sm:$0xff]
      %v5146 = vld [vmem:[%s12 + $0xe40] sm:$0xff]
      %v5147 = vld [vmem:[%s12 + $0xe48] sm:$0xff]
      %v5148 = vld [vmem:[%s12 + $0xe50] sm:$0xff]
      %v5149 = vld [vmem:[%s12 + $0xe58] sm:$0xff]
      %v5150 = vld [vmem:[%s12 + $0xe60] sm:$0xff]
      %v5151 = vld [vmem:[%s12 + $0xe68] sm:$0xff]
      %v5152 = vld [vmem:[%s12 + $0xe70] sm:$0xff]
      %v5153 = vld [vmem:[%s12 + $0xe78] sm:$0xff]
      %v5154 = vld [vmem:[%s12 + $0xe80] sm:$0xff]
      %v5155 = vld [vmem:[%s12 + $0xe88] sm:$0xff]
      %v5156 = vld [vmem:[%s12 + $0xe90] sm:$0xff]
      %v5157 = vld [vmem:[%s12 + $0xe98] sm:$0xff]
      %v5158 = vld [vmem:[%s12 + $0xea0] sm:$0xff]
      %v5159 = vld [vmem:[%s12 + $0xea8] sm:$0xff]
      %v5160 = vld [vmem:[%s12 + $0xeb0] sm:$0xff]
      %v5161 = vld [vmem:[%s12 + $0xeb8] sm:$0xff]
      %v5162 = vld [vmem:[%s12 + $0xec0] sm:$0xff]
      %v5163 = vld [vmem:[%s12 + $0xec8] sm:$0xff]
      %v5164 = vld [vmem:[%s12 + $0xed0] sm:$0xff]
      %v5165 = vld [vmem:[%s12 + $0xed8] sm:$0xff]
      %v5166 = vld [vmem:[%s12 + $0xee0] sm:$0xff]
      %v5167 = vld [vmem:[%s12 + $0xee8] sm:$0xff]
      %v5168 = vld [vmem:[%s12 + $0xef0] sm:$0xff]
      %v5169 = vld [vmem:[%s12 + $0xef8] sm:$0xff]
      %v5170 = vld [vmem:[%s12 + $0xf00] sm:$0xff]
      %v5171 = vld [vmem:[%s12 + $0xf08] sm:$0xff]
      %v5172 = vld [vmem:[%s12 + $0xf10] sm:$0xff]
      %v5173 = vld [vmem:[%s12 + $0xf18] sm:$0xff]
      %v5174 = vld [vmem:[%s12 + $0xf20] sm:$0xff]
      %v5175 = vld [vmem:[%s12 + $0xf28] sm:$0xff]
      %v5176 = vld [vmem:[%s12 + $0xf30] sm:$0xff]
      %v5177 = vld [vmem:[%s12 + $0xf38] sm:$0xff]
      %v5178 = vld [vmem:[%s12 + $0xf40] sm:$0xff]
      %v5179 = vld [vmem:[%s12 + $0xf48] sm:$0xff]
      %v5180 = vld [vmem:[%s12 + $0xf50] sm:$0xff]
      %v5181 = vld [vmem:[%s12 + $0xf58] sm:$0xff]
      %v5182 = vld [vmem:[%s12 + $0xf60] sm:$0xff]
      %v5183 = vld [vmem:[%s12 + $0xf68] sm:$0xff]
      %v5184 = vld [vmem:[%s12 + $0xf70] sm:$0xff]
      %v5185 = vld [vmem:[%s12 + $0xf78] sm:$0xff]
      %v5186 = vld [vmem:[%s12 + $0xf80] sm:$0xff]
      %v5187 = vld [vmem:[%s12 + $0xf88] sm:$0xff]
      %v5188 = vld [vmem:[%s12 + $0xf90] sm:$0xff]
      %v5189 = vld [vmem:[%s12 + $0xf98] sm:$0xff]
      %v5190 = vld [vmem:[%s12 + $0xfa0] sm:$0xff]
      %v5191 = vld [vmem:[%s12 + $0xfa8] sm:$0xff]
      %v5192 = vld [vmem:[%s12 + $0xfb0] sm:$0xff]
      %v5193 = vld [vmem:[%s12 + $0xfb8] sm:$0xff]
      %v5194 = vld [vmem:[%s12 + $0xfc0] sm:$0xff]
      %v5195 = vld [vmem:[%s12 + $0xfc8] sm:$0xff]
      %v5196 = vld [vmem:[%s12 + $0xfd0] sm:$0xff]
      %v5197 = vld [vmem:[%s12 + $0xfd8] sm:$0xff]
      %v5198 = vld [vmem:[%s12 + $0xfe0] sm:$0xff]
      %v5199 = vld [vmem:[%s12 + $0xfe8] sm:$0xff]
      %v5200 = vld [vmem:[%s12 + $0xff0] sm:$0xff]
      %v5201 = vld [vmem:[%s12 + $0xff8] sm:$0xff]
      %v5202 = vld [vmem:[%s12 + $0x1000] sm:$0xff]
      %v5203 = vld [vmem:[%s12 + $0x1008] sm:$0xff]
      %v5204 = vld [vmem:[%s12 + $0x1010] sm:$0xff]
      %v5205 = vld [vmem:[%s12 + $0x1018] sm:$0xff]
      %v5206 = vld [vmem:[%s12 + $0x1020] sm:$0xff]
      %v5207 = vld [vmem:[%s12 + $0x1028] sm:$0xff]
      %v5208 = vld [vmem:[%s12 + $0x1030] sm:$0xff]
      %v5209 = vld [vmem:[%s12 + $0x1038] sm:$0xff]
      %v5210 = vld [vmem:[%s12 + $0x1040] sm:$0xff]
      %v5211 = vld [vmem:[%s12 + $0x1048] sm:$0xff]
      %v5212 = vld [vmem:[%s12 + $0x1050] sm:$0xff]
      %v5213 = vld [vmem:[%s12 + $0x1058] sm:$0xff]
      %v5214 = vld [vmem:[%s12 + $0x1060] sm:$0xff]
      %v5215 = vld [vmem:[%s12 + $0x1068] sm:$0xff]
      %v5216 = vld [vmem:[%s12 + $0x1070] sm:$0xff]
      %v5217 = vld [vmem:[%s12 + $0x1078] sm:$0xff]
      %v5218 = vld [vmem:[%s12 + $0x1080] sm:$0xff]
      %v5219 = vld [vmem:[%s12 + $0x1088] sm:$0xff]
      %v5220 = vld [vmem:[%s12 + $0x1090] sm:$0xff]
      %v5221 = vld [vmem:[%s12 + $0x1098] sm:$0xff]
      %v5222 = vld [vmem:[%s12 + $0x10a0] sm:$0xff]
      %v5223 = vld [vmem:[%s12 + $0x10a8] sm:$0xff]
      %v5224 = vld [vmem:[%s12 + $0x10b0] sm:$0xff]
      %v5225 = vld [vmem:[%s12 + $0x10b8] sm:$0xff]
      %v5226 = vld [vmem:[%s12 + $0x10c0] sm:$0xff]
      %v5227 = vld [vmem:[%s12 + $0x10c8] sm:$0xff]
      %v5228 = vld [vmem:[%s12 + $0x10d0] sm:$0xff]
      %v5229 = vld [vmem:[%s12 + $0x10d8] sm:$0xff]
      %v5230 = vld [vmem:[%s12 + $0x10e0] sm:$0xff]
      %v5231 = vld [vmem:[%s12 + $0x10e8] sm:$0xff]
      %v5232 = vld [vmem:[%s12 + $0x10f0] sm:$0xff]
      %v5233 = vld [vmem:[%s12 + $0x10f8] sm:$0xff]
      %v5234 = vld [vmem:[%s12 + $0x1100] sm:$0xff]
      %v5235 = vld [vmem:[%s12 + $0x1108] sm:$0xff]
      %v5236 = vld [vmem:[%s12 + $0x1110] sm:$0xff]
      %v5237 = vld [vmem:[%s12 + $0x1118] sm:$0xff]
      %v5238 = vld [vmem:[%s12 + $0x1120] sm:$0xff]
      %v5239 = vld [vmem:[%s12 + $0x1128] sm:$0xff]
      %v5240 = vld [vmem:[%s12 + $0x1130] sm:$0xff]
      %v5241 = vld [vmem:[%s12 + $0x1138] sm:$0xff]
      %v5242 = vld [vmem:[%s12 + $0x1140] sm:$0xff]
      %v5243 = vld [vmem:[%s12 + $0x1148] sm:$0xff]
      %v5244 = vld [vmem:[%s12 + $0x1150] sm:$0xff]
      %v5245 = vld [vmem:[%s12 + $0x1158] sm:$0xff]
      %v5246 = vld [vmem:[%s12 + $0x1160] sm:$0xff]
      %v5247 = vld [vmem:[%s12 + $0x1168] sm:$0xff]
      %v5248 = vld [vmem:[%s12 + $0x1170] sm:$0xff]
      %v5249 = vld [vmem:[%s12 + $0x1178] sm:$0xff]
      %v5250 = vld [vmem:[%s12 + $0x1180] sm:$0xff]
      %v5251 = vld [vmem:[%s12 + $0x1188] sm:$0xff]
      %v5252 = vld [vmem:[%s12 + $0x1190] sm:$0xff]
      %v5253 = vld [vmem:[%s12 + $0x1198] sm:$0xff]
      %v5254 = vld [vmem:[%s12 + $0x11a0] sm:$0xff]
      %v5255 = vld [vmem:[%s12 + $0x11a8] sm:$0xff]
      %v5256 = vld [vmem:[%s12 + $0x11b0] sm:$0xff]
      %v5257 = vld [vmem:[%s12 + $0x11b8] sm:$0xff]
      %v5258 = vld [vmem:[%s12 + $0x11c0] sm:$0xff]
      %v5259 = vld [vmem:[%s12 + $0x11c8] sm:$0xff]
      %v5260 = vld [vmem:[%s12 + $0x11d0] sm:$0xff]
      %v5261 = vld [vmem:[%s12 + $0x11d8] sm:$0xff]
      %v5262 = vld [vmem:[%s12 + $0x11e0] sm:$0xff]
      %v5263 = vld [vmem:[%s12 + $0x11e8] sm:$0xff]
      %v5264 = vld [vmem:[%s12 + $0x11f0] sm:$0xff]
      %v5265 = vld [vmem:[%s12 + $0x11f8] sm:$0xff]
      %v5266 = vld [vmem:[%s12 + $0x1200] sm:$0xff]
      %v5267 = vld [vmem:[%s12 + $0x1208] sm:$0xff]
      %v5268 = vld [vmem:[%s12 + $0x1210] sm:$0xff]
      %v5269 = vld [vmem:[%s12 + $0x1218] sm:$0xff]
      %v5270 = vld [vmem:[%s12 + $0x1220] sm:$0xff]
      %v5271 = vld [vmem:[%s12 + $0x1228] sm:$0xff]
      %v5272 = vld [vmem:[%s12 + $0x1230] sm:$0xff]
      %v5273 = vld [vmem:[%s12 + $0x1238] sm:$0xff]
      %v5274 = vld [vmem:[%s12 + $0x1240] sm:$0xff]
      %v5275 = vld [vmem:[%s12 + $0x1248] sm:$0xff]
      %v5276 = vld [vmem:[%s12 + $0x1250] sm:$0xff]
      %v5277 = vld [vmem:[%s12 + $0x1258] sm:$0xff]
      %v5278 = vld [vmem:[%s12 + $0x1260] sm:$0xff]
      %v5279 = vld [vmem:[%s12 + $0x1268] sm:$0xff]
      %v5280 = vld [vmem:[%s12 + $0x1270] sm:$0xff]
      %v5281 = vld [vmem:[%s12 + $0x1278] sm:$0xff]
      %v5282 = vld [vmem:[%s12 + $0x1280] sm:$0xff]
      %v5283 = vld [vmem:[%s12 + $0x1288] sm:$0xff]
      %v5284 = vld [vmem:[%s12 + $0x1290] sm:$0xff]
      %v5285 = vld [vmem:[%s12 + $0x1298] sm:$0xff]
      %v5286 = vld [vmem:[%s12 + $0x12a0] sm:$0xff]
      %v5287 = vld [vmem:[%s12 + $0x12a8] sm:$0xff]
      %v5288 = vld [vmem:[%s12 + $0x12b0] sm:$0xff]
      %v5289 = vld [vmem:[%s12 + $0x12b8] sm:$0xff]
      %v5290 = vld [vmem:[%s12 + $0x12c0] sm:$0xff]
      %v5291 = vld [vmem:[%s12 + $0x12c8] sm:$0xff]
      %v5292 = vld [vmem:[%s12 + $0x12d0] sm:$0xff]
      %v5293 = vld [vmem:[%s12 + $0x12d8] sm:$0xff]
      %v5294 = vld [vmem:[%s12 + $0x12e0] sm:$0xff]
      %v5295 = vld [vmem:[%s12 + $0x12e8] sm:$0xff]
      %v5296 = vld [vmem:[%s12 + $0x12f0] sm:$0xff]
      %v5297 = vld [vmem:[%s12 + $0x12f8] sm:$0xff]
      %v5298 = vld [vmem:[%s12 + $0x1300] sm:$0xff]
      %v5299 = vld [vmem:[%s12 + $0x1308] sm:$0xff]
      %v5300 = vld [vmem:[%s12 + $0x1310] sm:$0xff]
      %v5301 = vld [vmem:[%s12 + $0x1318] sm:$0xff]
      %v5302 = vld [vmem:[%s12 + $0x1320] sm:$0xff]
      %v5303 = vld [vmem:[%s12 + $0x1328] sm:$0xff]
      %v5304 = vld [vmem:[%s12 + $0x1330] sm:$0xff]
      %v5305 = vld [vmem:[%s12 + $0x1338] sm:$0xff]
      %v5306 = vld [vmem:[%s12 + $0x1340] sm:$0xff]
      %v5307 = vld [vmem:[%s12 + $0x1348] sm:$0xff]
      %v5308 = vld [vmem:[%s12 + $0x1350] sm:$0xff]
      %v5309 = vld [vmem:[%s12 + $0x1358] sm:$0xff]
      %v5310 = vld [vmem:[%s12 + $0x1360] sm:$0xff]
      %v5311 = vld [vmem:[%s12 + $0x1368] sm:$0xff]
      %v5312 = vld [vmem:[%s12 + $0x1370] sm:$0xff]
      %v5313 = vld [vmem:[%s12 + $0x1378] sm:$0xff]
      %v5314 = vld [vmem:[%s12 + $0x1380] sm:$0xff]
      %v5315 = vld [vmem:[%s12 + $0x1388] sm:$0xff]
      %v5316 = vld [vmem:[%s12 + $0x1390] sm:$0xff]
      %v5317 = vld [vmem:[%s12 + $0x1398] sm:$0xff]
      %v5318 = vld [vmem:[%s12 + $0x13a0] sm:$0xff]
      %v5319 = vld [vmem:[%s12 + $0x13a8] sm:$0xff]
      %v5320 = vld [vmem:[%s12 + $0x13b0] sm:$0xff]
      %v5321 = vld [vmem:[%s12 + $0x13b8] sm:$0xff]
      %v5323 = vsel %vm481, %v4689, 0
      %5325 = vmatprep.subr.mxu0 %v4691
      %5326 = vmatpush1.msra.mxu0 %v4690
      %5327 = vmatprep.subr.mxu0 %v4770
      %5328 = vmatpush1.msra.mxu0 %v4769
      %5329 = vmatprep.subr.mxu0 %v4849
      %5330 = vmatpush1.msra.mxu0 %v4848
      %5331 = vmatprep.subr.mxu0 %v4928
      %5332 = vmatpush1.msra.mxu0 %v4927
      %5333 = vmatprep.subr.mxu0 %v5007
      %5334 = vmatpush1.msra.mxu0 %v5006
      %5335 = vmatprep.subr.mxu0 %v5086
      %5336 = vmatpush1.msra.mxu0 %v5085
      %5337 = vmatprep.subr.mxu0 %v5165
      %5338 = vmatpush1.msra.mxu0 %v5164
      %5339 = vmatprep.subr.mxu0 %v5244
      %5340 = vmatpush1.msra.mxu0 %v5243
      %5341 = vmatprep.subr.mxu0 0.0
      %5342 = vmatpush1.msra.mxu0 0.0
      %5343 = vmatprep.subr.mxu0 0.0
      %5344 = vmatpush1.msra.mxu0 0.0
      %5345 = vmatprep.subr.mxu0 0.0
      %5346 = vmatpush1.msra.mxu0 0.0
      %5347 = vmatprep.subr.mxu0 0.0
      %5348 = vmatpush1.msra.mxu0 0.0
      %5349 = vmatprep.subr.mxu0 0.0
      %5350 = vmatpush1.msra.mxu0 0.0
      %5351 = vmatprep.subr.mxu0 0.0
      %5352 = vmatpush1.msra.mxu0 0.0
      %5353 = vmatprep.subr.mxu0 0.0
      %5354 = vmatpush1.msra.mxu0 0.0
      %5355 = vmatprep.subr.mxu0 0.0
      %5356 = vmatpush1.msra.mxu0 0.0
      %5357 = vmatprep.subr.mxu0 0.0
      %5358 = vmatpush1.msra.mxu0 0.0
      %5359 = vmatprep.subr.mxu0 0.0
      %5360 = vmatpush1.msra.mxu0 0.0
      %5361 = vmatprep.subr.mxu0 0.0
      %5362 = vmatpush1.msra.mxu0 0.0
      %5363 = vmatprep.subr.mxu0 0.0
      %5364 = vmatpush1.msra.mxu0 0.0
      %5365 = vmatprep.subr.mxu0 0.0
      %5366 = vmatpush1.msra.mxu0 0.0
      %5367 = vmatprep.subr.mxu0 0.0
      %5368 = vmatpush1.msra.mxu0 0.0
      %5369 = vmatprep.subr.mxu0 0.0
      %5370 = vmatpush1.msra.mxu0 0.0
      %5371 = vmatprep.subr.mxu0 0.0
      %5372 = vmatpush1.msra.mxu0 0.0
      %5373 = vmatprep.subr.mxu0 0.0
      %5374 = vmatpush1.msra.mxu0 0.0
      %5375 = vmatprep.subr.mxu0 0.0
      %5376 = vmatpush1.msra.mxu0 0.0
      %5377 = vmatprep.subr.mxu0 0.0
      %5378 = vmatpush1.msra.mxu0 0.0
      %5379 = vmatprep.subr.mxu0 0.0
      %5380 = vmatpush1.msra.mxu0 0.0
      %5381 = vmatprep.subr.mxu0 0.0
      %5382 = vmatpush1.msra.mxu0 0.0
      %5383 = vmatprep.subr.mxu0 0.0
      %5384 = vmatpush1.msra.mxu0 0.0
      %5385 = vmatprep.subr.mxu0 0.0
      %5386 = vmatpush1.msra.mxu0 0.0
      %5387 = vmatprep.subr.mxu0 0.0
      %5388 = vmatpush1.msra.mxu0 0.0
      %5389 = vmatprep.mubr.f32.mxu0 0.0
      %5390 = vmatmul.mubr.f32.gmra.mrb[0].mxu0 %v5323
      %v5391 = vpop.f32.mrb[0].mxu0
      %v5392 = vadd.f32 0.0, %v5391
      %v5393 = vpop.f32.mrb[0].mxu0
      %v5394 = vadd.f32 0.0, %v5393
      %5395 = vdwg.mxu0
      %5396 = vmatprep.subr.mxu0 %v4693
      %5397 = vmatpush1.msra.mxu0 %v4692
      %5398 = vmatprep.subr.mxu0 %v4772
      %5399 = vmatpush1.msra.mxu0 %v4771
      %5400 = vmatprep.subr.mxu0 %v4851
      %5401 = vmatpush1.msra.mxu0 %v4850
      %5402 = vmatprep.subr.mxu0 %v4930
      %5403 = vmatpush1.msra.mxu0 %v4929
      %5404 = vmatprep.subr.mxu0 %v5009
      %5405 = vmatpush1.msra.mxu0 %v5008
      %5406 = vmatprep.subr.mxu0 %v5088
      %5407 = vmatpush1.msra.mxu0 %v5087
      %5408 = vmatprep.subr.mxu0 %v5167
      %5409 = vmatpush1.msra.mxu0 %v5166
      %5410 = vmatprep.subr.mxu0 %v5246
      %5411 = vmatpush1.msra.mxu0 %v5245
      %5412 = vmatprep.subr.mxu0 0.0
      %5413 = vmatpush1.msra.mxu0 0.0
      %5414 = vmatprep.subr.mxu0 0.0
      %5415 = vmatpush1.msra.mxu0 0.0
      %5416 = vmatprep.subr.mxu0 0.0
      %5417 = vmatpush1.msra.mxu0 0.0
      %5418 = vmatprep.subr.mxu0 0.0
      %5419 = vmatpush1.msra.mxu0 0.0
      %5420 = vmatprep.subr.mxu0 0.0
      %5421 = vmatpush1.msra.mxu0 0.0
      %5422 = vmatprep.subr.mxu0 0.0
      %5423 = vmatpush1.msra.mxu0 0.0
      %5424 = vmatprep.subr.mxu0 0.0
      %5425 = vmatpush1.msra.mxu0 0.0
      %5426 = vmatprep.subr.mxu0 0.0
      %5427 = vmatpush1.msra.mxu0 0.0
      %5428 = vmatprep.subr.mxu0 0.0
      %5429 = vmatpush1.msra.mxu0 0.0
      %5430 = vmatprep.subr.mxu0 0.0
      %5431 = vmatpush1.msra.mxu0 0.0
      %5432 = vmatprep.subr.mxu0 0.0
      %5433 = vmatpush1.msra.mxu0 0.0
      %5434 = vmatprep.subr.mxu0 0.0
      %5435 = vmatpush1.msra.mxu0 0.0
      %5436 = vmatprep.subr.mxu0 0.0
      %5437 = vmatpush1.msra.mxu0 0.0
      %5438 = vmatprep.subr.mxu0 0.0
      %5439 = vmatpush1.msra.mxu0 0.0
      %5440 = vmatprep.subr.mxu0 0.0
      %5441 = vmatpush1.msra.mxu0 0.0
      %5442 = vmatprep.subr.mxu0 0.0
      %5443 = vmatpush1.msra.mxu0 0.0
      %5444 = vmatprep.subr.mxu0 0.0
      %5445 = vmatpush1.msra.mxu0 0.0
      %5446 = vmatprep.subr.mxu0 0.0
      %5447 = vmatpush1.msra.mxu0 0.0
      %5448 = vmatprep.subr.mxu0 0.0
      %5449 = vmatpush1.msra.mxu0 0.0
      %5450 = vmatprep.subr.mxu0 0.0
      %5451 = vmatpush1.msra.mxu0 0.0
      %5452 = vmatprep.subr.mxu0 0.0
      %5453 = vmatpush1.msra.mxu0 0.0
      %5454 = vmatprep.subr.mxu0 0.0
      %5455 = vmatpush1.msra.mxu0 0.0
      %5456 = vmatprep.subr.mxu0 0.0
      %5457 = vmatpush1.msra.mxu0 0.0
      %5458 = vmatprep.subr.mxu0 0.0
      %5459 = vmatpush1.msra.mxu0 0.0
      %5460 = vmatprep.mubr.f32.mxu0 0.0
      %5461 = vmatmul.mubr.f32.gmra.mrb[0].mxu0 %v5323
      %v5462 = vpop.f32.mrb[0].mxu0
      %v5463 = vadd.f32 0.0, %v5462
      %v5464 = vpop.f32.mrb[0].mxu0
      %v5465 = vadd.f32 0.0, %v5464
      %5466 = vdwg.mxu0
      %5467 = vmatprep.subr.mxu0 %v4695
      %5468 = vmatpush1.msra.mxu0 %v4694
      %5469 = vmatprep.subr.mxu0 %v4774
      %5470 = vmatpush1.msra.mxu0 %v4773
      %5471 = vmatprep.subr.mxu0 %v4853
      %5472 = vmatpush1.msra.mxu0 %v4852
      %5473 = vmatprep.subr.mxu0 %v4932
      %5474 = vmatpush1.msra.mxu0 %v4931
      %5475 = vmatprep.subr.mxu0 %v5011
      %5476 = vmatpush1.msra.mxu0 %v5010
      %5477 = vmatprep.subr.mxu0 %v5090
      %5478 = vmatpush1.msra.mxu0 %v5089
      %5479 = vmatprep.subr.mxu0 %v5169
      %5480 = vmatpush1.msra.mxu0 %v5168
      %5481 = vmatprep.subr.mxu0 %v5248
      %5482 = vmatpush1.msra.mxu0 %v5247
      %5483 = vmatprep.subr.mxu0 0.0
      %5484 = vmatpush1.msra.mxu0 0.0
      %5485 = vmatprep.subr.mxu0 0.0
      %5486 = vmatpush1.msra.mxu0 0.0
      %5487 = vmatprep.subr.mxu0 0.0
      %5488 = vmatpush1.msra.mxu0 0.0
      %5489 = vmatprep.subr.mxu0 0.0
      %5490 = vmatpush1.msra.mxu0 0.0
      %5491 = vmatprep.subr.mxu0 0.0
      %5492 = vmatpush1.msra.mxu0 0.0
      %5493 = vmatprep.subr.mxu0 0.0
      %5494 = vmatpush1.msra.mxu0 0.0
      %5495 = vmatprep.subr.mxu0 0.0
      %5496 = vmatpush1.msra.mxu0 0.0
      %5497 = vmatprep.subr.mxu0 0.0
      %5498 = vmatpush1.msra.mxu0 0.0
      %5499 = vmatprep.subr.mxu0 0.0
      %5500 = vmatpush1.msra.mxu0 0.0
      %5501 = vmatprep.subr.mxu0 0.0
      %5502 = vmatpush1.msra.mxu0 0.0
      %5503 = vmatprep.subr.mxu0 0.0
      %5504 = vmatpush1.msra.mxu0 0.0
      %5505 = vmatprep.subr.mxu0 0.0
      %5506 = vmatpush1.msra.mxu0 0.0
      %5507 = vmatprep.subr.mxu0 0.0
      %5508 = vmatpush1.msra.mxu0 0.0
      %5509 = vmatprep.subr.mxu0 0.0
      %5510 = vmatpush1.msra.mxu0 0.0
      %5511 = vmatprep.subr.mxu0 0.0
      %5512 = vmatpush1.msra.mxu0 0.0
      %5513 = vmatprep.subr.mxu0 0.0
      %5514 = vmatpush1.msra.mxu0 0.0
      %5515 = vmatprep.subr.mxu0 0.0
      %5516 = vmatpush1.msra.mxu0 0.0
      %5517 = vmatprep.subr.mxu0 0.0
      %5518 = vmatpush1.msra.mxu0 0.0
      %5519 = vmatprep.subr.mxu0 0.0
      %5520 = vmatpush1.msra.mxu0 0.0
      %5521 = vmatprep.subr.mxu0 0.0
      %5522 = vmatpush1.msra.mxu0 0.0
      %5523 = vmatprep.subr.mxu0 0.0
      %5524 = vmatpush1.msra.mxu0 0.0
      %5525 = vmatprep.subr.mxu0 0.0
      %5526 = vmatpush1.msra.mxu0 0.0
      %5527 = vmatprep.subr.mxu0 0.0
      %5528 = vmatpush1.msra.mxu0 0.0
      %5529 = vmatprep.subr.mxu0 0.0
      %5530 = vmatpush1.msra.mxu0 0.0
      %5531 = vmatprep.mubr.f32.mxu0 0.0
      %5532 = vmatmul.mubr.f32.gmra.mrb[0].mxu0 %v5323
      %v5533 = vpop.f32.mrb[0].mxu0
      %v5534 = vadd.f32 0.0, %v5533
      %v5535 = vpop.f32.mrb[0].mxu0
      %v5536 = vadd.f32 0.0, %v5535
      %5537 = vdwg.mxu0
      %5538 = vmatprep.subr.mxu0 %v4697
      %5539 = vmatpush1.msra.mxu0 %v4696
      %5540 = vmatprep.subr.mxu0 %v4776
      %5541 = vmatpush1.msra.mxu0 %v4775
      %5542 = vmatprep.subr.mxu0 %v4855
      %5543 = vmatpush1.msra.mxu0 %v4854
      %5544 = vmatprep.subr.mxu0 %v4934
      %5545 = vmatpush1.msra.mxu0 %v4933
      %5546 = vmatprep.subr.mxu0 %v5013
      %5547 = vmatpush1.msra.mxu0 %v5012
      %5548 = vmatprep.subr.mxu0 %v5092
      %5549 = vmatpush1.msra.mxu0 %v5091
      %5550 = vmatprep.subr.mxu0 %v5171
      %5551 = vmatpush1.msra.mxu0 %v5170
      %5552 = vmatprep.subr.mxu0 %v5250
      %5553 = vmatpush1.msra.mxu0 %v5249
      %5554 = vmatprep.subr.mxu0 0.0
      %5555 = vmatpush1.msra.mxu0 0.0
      %5556 = vmatprep.subr.mxu0 0.0
      %5557 = vmatpush1.msra.mxu0 0.0
      %5558 = vmatprep.subr.mxu0 0.0
      %5559 = vmatpush1.msra.mxu0 0.0
      %5560 = vmatprep.subr.mxu0 0.0
      %5561 = vmatpush1.msra.mxu0 0.0
      %5562 = vmatprep.subr.mxu0 0.0
      %5563 = vmatpush1.msra.mxu0 0.0
      %5564 = vmatprep.subr.mxu0 0.0
      %5565 = vmatpush1.msra.mxu0 0.0
      %5566 = vmatprep.subr.mxu0 0.0
      %5567 = vmatpush1.msra.mxu0 0.0
      %5568 = vmatprep.subr.mxu0 0.0
      %5569 = vmatpush1.msra.mxu0 0.0
      %5570 = vmatprep.subr.mxu0 0.0
      %5571 = vmatpush1.msra.mxu0 0.0
      %5572 = vmatprep.subr.mxu0 0.0
      %5573 = vmatpush1.msra.mxu0 0.0
      %5574 = vmatprep.subr.mxu0 0.0
      %5575 = vmatpush1.msra.mxu0 0.0
      %5576 = vmatprep.subr.mxu0 0.0
      %5577 = vmatpush1.msra.mxu0 0.0
      %5578 = vmatprep.subr.mxu0 0.0
      %5579 = vmatpush1.msra.mxu0 0.0
      %5580 = vmatprep.subr.mxu0 0.0
      %5581 = vmatpush1.msra.mxu0 0.0
      %5582 = vmatprep.subr.mxu0 0.0
      %5583 = vmatpush1.msra.mxu0 0.0
      %5584 = vmatprep.subr.mxu0 0.0
      %5585 = vmatpush1.msra.mxu0 0.0
      %5586 = vmatprep.subr.mxu0 0.0
      %5587 = vmatpush1.msra.mxu0 0.0
      %5588 = vmatprep.subr.mxu0 0.0
      %5589 = vmatpush1.msra.mxu0 0.0
      %5590 = vmatprep.subr.mxu0 0.0
      %5591 = vmatpush1.msra.mxu0 0.0
      %5592 = vmatprep.subr.mxu0 0.0
      %5593 = vmatpush1.msra.mxu0 0.0
      %5594 = vmatprep.subr.mxu0 0.0
      %5595 = vmatpush1.msra.mxu0 0.0
      %5596 = vmatprep.subr.mxu0 0.0
      %5597 = vmatpush1.msra.mxu0 0.0
      %5598 = vmatprep.subr.mxu0 0.0
      %5599 = vmatpush1.msra.mxu0 0.0
      %5600 = vmatprep.subr.mxu0 0.0
      %5601 = vmatpush1.msra.mxu0 0.0
      %5602 = vmatprep.mubr.f32.mxu0 0.0
      %5603 = vmatmul.mubr.f32.gmra.mrb[0].mxu0 %v5323
      %v5604 = vpop.f32.mrb[0].mxu0
      %v5605 = vadd.f32 0.0, %v5604
      %v5606 = vpop.f32.mrb[0].mxu0
      %v5607 = vadd.f32 0.0, %v5606
      %5608 = vdwg.mxu0
      %5609 = vmatprep.subr.mxu0 %v4699
      %5610 = vmatpush1.msra.mxu0 %v4698
      %5611 = vmatprep.subr.mxu0 %v4778
      %5612 = vmatpush1.msra.mxu0 %v4777
      %5613 = vmatprep.subr.mxu0 %v4857
      %5614 = vmatpush1.msra.mxu0 %v4856
      %5615 = vmatprep.subr.mxu0 %v4936
      %5616 = vmatpush1.msra.mxu0 %v4935
      %5617 = vmatprep.subr.mxu0 %v5015
      %5618 = vmatpush1.msra.mxu0 %v5014
      %5619 = vmatprep.subr.mxu0 %v5094
      %5620 = vmatpush1.msra.mxu0 %v5093
      %5621 = vmatprep.subr.mxu0 %v5173
      %5622 = vmatpush1.msra.mxu0 %v5172
      %5623 = vmatprep.subr.mxu0 %v5252
      %5624 = vmatpush1.msra.mxu0 %v5251
      %5625 = vmatprep.subr.mxu0 0.0
      %5626 = vmatpush1.msra.mxu0 0.0
      %5627 = vmatprep.subr.mxu0 0.0
      %5628 = vmatpush1.msra.mxu0 0.0
      %5629 = vmatprep.subr.mxu0 0.0
      %5630 = vmatpush1.msra.mxu0 0.0
      %5631 = vmatprep.subr.mxu0 0.0
      %5632 = vmatpush1.msra.mxu0 0.0
      %5633 = vmatprep.subr.mxu0 0.0
      %5634 = vmatpush1.msra.mxu0 0.0
      %5635 = vmatprep.subr.mxu0 0.0
      %5636 = vmatpush1.msra.mxu0 0.0
      %5637 = vmatprep.subr.mxu0 0.0
      %5638 = vmatpush1.msra.mxu0 0.0
      %5639 = vmatprep.subr.mxu0 0.0
      %5640 = vmatpush1.msra.mxu0 0.0
      %5641 = vmatprep.subr.mxu0 0.0
      %5642 = vmatpush1.msra.mxu0 0.0
      %5643 = vmatprep.subr.mxu0 0.0
      %5644 = vmatpush1.msra.mxu0 0.0
      %5645 = vmatprep.subr.mxu0 0.0
      %5646 = vmatpush1.msra.mxu0 0.0
      %5647 = vmatprep.subr.mxu0 0.0
      %5648 = vmatpush1.msra.mxu0 0.0
      %5649 = vmatprep.subr.mxu0 0.0
      %5650 = vmatpush1.msra.mxu0 0.0
      %5651 = vmatprep.subr.mxu0 0.0
      %5652 = vmatpush1.msra.mxu0 0.0
      %5653 = vmatprep.subr.mxu0 0.0
      %5654 = vmatpush1.msra.mxu0 0.0
      %5655 = vmatprep.subr.mxu0 0.0
      %5656 = vmatpush1.msra.mxu0 0.0
      %5657 = vmatprep.subr.mxu0 0.0
      %5658 = vmatpush1.msra.mxu0 0.0
      %5659 = vmatprep.subr.mxu0 0.0
      %5660 = vmatpush1.msra.mxu0 0.0
      %5661 = vmatprep.subr.mxu0 0.0
      %5662 = vmatpush1.msra.mxu0 0.0
      %5663 = vmatprep.subr.mxu0 0.0
      %5664 = vmatpush1.msra.mxu0 0.0
      %5665 = vmatprep.subr.mxu0 0.0
      %5666 = vmatpush1.msra.mxu0 0.0
      %5667 = vmatprep.subr.mxu0 0.0
      %5668 = vmatpush1.msra.mxu0 0.0
      %5669 = vmatprep.subr.mxu0 0.0
      %5670 = vmatpush1.msra.mxu0 0.0
      %5671 = vmatprep.subr.mxu0 0.0
      %5672 = vmatpush1.msra.mxu0 0.0
      %5673 = vmatprep.mubr.f32.mxu0 0.0
      %5674 = vmatmul.mubr.f32.gmra.mrb[0].mxu0 %v5323
      %v5675 = vpop.f32.mrb[0].mxu0
      %v5676 = vadd.f32 0.0, %v5675
      %v5677 = vpop.f32.mrb[0].mxu0
      %v5678 = vadd.f32 0.0, %v5677
      %5679 = vdwg.mxu0
      %5680 = vmatprep.subr.mxu0 %v4701
      %5681 = vmatpush1.msra.mxu0 %v4700
      %5682 = vmatprep.subr.mxu0 %v4780
      %5683 = vmatpush1.msra.mxu0 %v4779
      %5684 = vmatprep.subr.mxu0 %v4859
      %5685 = vmatpush1.msra.mxu0 %v4858
      %5686 = vmatprep.subr.mxu0 %v4938
      %5687 = vmatpush1.msra.mxu0 %v4937
      %5688 = vmatprep.subr.mxu0 %v5017
      %5689 = vmatpush1.msra.mxu0 %v5016
      %5690 = vmatprep.subr.mxu0 %v5096
      %5691 = vmatpush1.msra.mxu0 %v5095
      %5692 = vmatprep.subr.mxu0 %v5175
      %5693 = vmatpush1.msra.mxu0 %v5174
      %5694 = vmatprep.subr.mxu0 %v5254
      %5695 = vmatpush1.msra.mxu0 %v5253
      %5696 = vmatprep.subr.mxu0 0.0
      %5697 = vmatpush1.msra.mxu0 0.0
      %5698 = vmatprep.subr.mxu0 0.0
      %5699 = vmatpush1.msra.mxu0 0.0
      %5700 = vmatprep.subr.mxu0 0.0
      %5701 = vmatpush1.msra.mxu0 0.0
      %5702 = vmatprep.subr.mxu0 0.0
      %5703 = vmatpush1.msra.mxu0 0.0
      %5704 = vmatprep.subr.mxu0 0.0
      %5705 = vmatpush1.msra.mxu0 0.0
      %5706 = vmatprep.subr.mxu0 0.0
      %5707 = vmatpush1.msra.mxu0 0.0
      %5708 = vmatprep.subr.mxu0 0.0
      %5709 = vmatpush1.msra.mxu0 0.0
      %5710 = vmatprep.subr.mxu0 0.0
      %5711 = vmatpush1.msra.mxu0 0.0
      %5712 = vmatprep.subr.mxu0 0.0
      %5713 = vmatpush1.msra.mxu0 0.0
      %5714 = vmatprep.subr.mxu0 0.0
      %5715 = vmatpush1.msra.mxu0 0.0
      %5716 = vmatprep.subr.mxu0 0.0
      %5717 = vmatpush1.msra.mxu0 0.0
      %5718 = vmatprep.subr.mxu0 0.0
      %5719 = vmatpush1.msra.mxu0 0.0
      %5720 = vmatprep.subr.mxu0 0.0
      %5721 = vmatpush1.msra.mxu0 0.0
      %5722 = vmatprep.subr.mxu0 0.0
      %5723 = vmatpush1.msra.mxu0 0.0
      %5724 = vmatprep.subr.mxu0 0.0
      %5725 = vmatpush1.msra.mxu0 0.0
      %5726 = vmatprep.subr.mxu0 0.0
      %5727 = vmatpush1.msra.mxu0 0.0
      %5728 = vmatprep.subr.mxu0 0.0
      %5729 = vmatpush1.msra.mxu0 0.0
      %5730 = vmatprep.subr.mxu0 0.0
      %5731 = vmatpush1.msra.mxu0 0.0
      %5732 = vmatprep.subr.mxu0 0.0
      %5733 = vmatpush1.msra.mxu0 0.0
      %5734 = vmatprep.subr.mxu0 0.0
      %5735 = vmatpush1.msra.mxu0 0.0
      %5736 = vmatprep.subr.mxu0 0.0
      %5737 = vmatpush1.msra.mxu0 0.0
      %5738 = vmatprep.subr.mxu0 0.0
      %5739 = vmatpush1.msra.mxu0 0.0
      %5740 = vmatprep.subr.mxu0 0.0
      %5741 = vmatpush1.msra.mxu0 0.0
      %5742 = vmatprep.subr.mxu0 0.0
      %5743 = vmatpush1.msra.mxu0 0.0
      %5744 = vmatprep.mubr.f32.mxu0 0.0
      %5745 = vmatmul.mubr.f32.gmra.mrb[0].mxu0 %v5323
      %v5746 = vpop.f32.mrb[0].mxu0
      %v5747 = vadd.f32 0.0, %v5746
      %v5748 = vpop.f32.mrb[0].mxu0
      %v5749 = vadd.f32 0.0, %v5748
      %5750 = vdwg.mxu0
      %5751 = vmatprep.subr.mxu0 %v4703
      %5752 = vmatpush1.msra.mxu0 %v4702
      %5753 = vmatprep.subr.mxu0 %v4782
      %5754 = vmatpush1.msra.mxu0 %v4781
      %5755 = vmatprep.subr.mxu0 %v4861
      %5756 = vmatpush1.msra.mxu0 %v4860
      %5757 = vmatprep.subr.mxu0 %v4940
      %5758 = vmatpush1.msra.mxu0 %v4939
      %5759 = vmatprep.subr.mxu0 %v5019
      %5760 = vmatpush1.msra.mxu0 %v5018
      %5761 = vmatprep.subr.mxu0 %v5098
      %5762 = vmatpush1.msra.mxu0 %v5097
      %5763 = vmatprep.subr.mxu0 %v5177
      %5764 = vmatpush1.msra.mxu0 %v5176
      %5765 = vmatprep.subr.mxu0 %v5256
      %5766 = vmatpush1.msra.mxu0 %v5255
      %5767 = vmatprep.subr.mxu0 0.0
      %5768 = vmatpush1.msra.mxu0 0.0
      %5769 = vmatprep.subr.mxu0 0.0
      %5770 = vmatpush1.msra.mxu0 0.0
      %5771 = vmatprep.subr.mxu0 0.0
      %5772 = vmatpush1.msra.mxu0 0.0
      %5773 = vmatprep.subr.mxu0 0.0
      %5774 = vmatpush1.msra.mxu0 0.0
      %5775 = vmatprep.subr.mxu0 0.0
      %5776 = vmatpush1.msra.mxu0 0.0
      %5777 = vmatprep.subr.mxu0 0.0
      %5778 = vmatpush1.msra.mxu0 0.0
      %5779 = vmatprep.subr.mxu0 0.0
      %5780 = vmatpush1.msra.mxu0 0.0
      %5781 = vmatprep.subr.mxu0 0.0
      %5782 = vmatpush1.msra.mxu0 0.0
      %5783 = vmatprep.subr.mxu0 0.0
      %5784 = vmatpush1.msra.mxu0 0.0
      %5785 = vmatprep.subr.mxu0 0.0
      %5786 = vmatpush1.msra.mxu0 0.0
      %5787 = vmatprep.subr.mxu0 0.0
      %5788 = vmatpush1.msra.mxu0 0.0
      %5789 = vmatprep.subr.mxu0 0.0
      %5790 = vmatpush1.msra.mxu0 0.0
      %5791 = vmatprep.subr.mxu0 0.0
      %5792 = vmatpush1.msra.mxu0 0.0
      %5793 = vmatprep.subr.mxu0 0.0
      %5794 = vmatpush1.msra.mxu0 0.0
      %5795 = vmatprep.subr.mxu0 0.0
      %5796 = vmatpush1.msra.mxu0 0.0
      %5797 = vmatprep.subr.mxu0 0.0
      %5798 = vmatpush1.msra.mxu0 0.0
      %5799 = vmatprep.subr.mxu0 0.0
      %5800 = vmatpush1.msra.mxu0 0.0
      %5801 = vmatprep.subr.mxu0 0.0
      %5802 = vmatpush1.msra.mxu0 0.0
      %5803 = vmatprep.subr.mxu0 0.0
      %5804 = vmatpush1.msra.mxu0 0.0
      %5805 = vmatprep.subr.mxu0 0.0
      %5806 = vmatpush1.msra.mxu0 0.0
      %5807 = vmatprep.subr.mxu0 0.0
      %5808 = vmatpush1.msra.mxu0 0.0
      %5809 = vmatprep.subr.mxu0 0.0
      %5810 = vmatpush1.msra.mxu0 0.0
      %5811 = vmatprep.subr.mxu0 0.0
      %5812 = vmatpush1.msra.mxu0 0.0
      %5813 = vmatprep.subr.mxu0 0.0
      %5814 = vmatpush1.msra.mxu0 0.0
      %5815 = vmatprep.mubr.f32.mxu0 0.0
      %5816 = vmatmul.mubr.f32.gmra.mrb[0].mxu0 %v5323
      %v5817 = vpop.f32.mrb[0].mxu0
      %v5818 = vadd.f32 0.0, %v5817
      %v5819 = vpop.f32.mrb[0].mxu0
      %v5820 = vadd.f32 0.0, %v5819
      %5821 = vdwg.mxu0
      %5822 = vmatprep.subr.mxu0 %v4705
      %5823 = vmatpush1.msra.mxu0 %v4704
      %5824 = vmatprep.subr.mxu0 %v4784
      %5825 = vmatpush1.msra.mxu0 %v4783
      %5826 = vmatprep.subr.mxu0 %v4863
      %5827 = vmatpush1.msra.mxu0 %v4862
      %5828 = vmatprep.subr.mxu0 %v4942
      %5829 = vmatpush1.msra.mxu0 %v4941
      %5830 = vmatprep.subr.mxu0 %v5021
      %5831 = vmatpush1.msra.mxu0 %v5020
      %5832 = vmatprep.subr.mxu0 %v5100
      %5833 = vmatpush1.msra.mxu0 %v5099
      %5834 = vmatprep.subr.mxu0 %v5179
      %5835 = vmatpush1.msra.mxu0 %v5178
      %5836 = vmatprep.subr.mxu0 %v5258
      %5837 = vmatpush1.msra.mxu0 %v5257
      %5838 = vmatprep.subr.mxu0 0.0
      %5839 = vmatpush1.msra.mxu0 0.0
      %5840 = vmatprep.subr.mxu0 0.0
      %5841 = vmatpush1.msra.mxu0 0.0
      %5842 = vmatprep.subr.mxu0 0.0
      %5843 = vmatpush1.msra.mxu0 0.0
      %5844 = vmatprep.subr.mxu0 0.0
      %5845 = vmatpush1.msra.mxu0 0.0
      %5846 = vmatprep.subr.mxu0 0.0
      %5847 = vmatpush1.msra.mxu0 0.0
      %5848 = vmatprep.subr.mxu0 0.0
      %5849 = vmatpush1.msra.mxu0 0.0
      %5850 = vmatprep.subr.mxu0 0.0
      %5851 = vmatpush1.msra.mxu0 0.0
      %5852 = vmatprep.subr.mxu0 0.0
      %5853 = vmatpush1.msra.mxu0 0.0
      %5854 = vmatprep.subr.mxu0 0.0
      %5855 = vmatpush1.msra.mxu0 0.0
      %5856 = vmatprep.subr.mxu0 0.0
      %5857 = vmatpush1.msra.mxu0 0.0
      %5858 = vmatprep.subr.mxu0 0.0
      %5859 = vmatpush1.msra.mxu0 0.0
      %5860 = vmatprep.subr.mxu0 0.0
      %5861 = vmatpush1.msra.mxu0 0.0
      %5862 = vmatprep.subr.mxu0 0.0
      %5863 = vmatpush1.msra.mxu0 0.0
      %5864 = vmatprep.subr.mxu0 0.0
      %5865 = vmatpush1.msra.mxu0 0.0
      %5866 = vmatprep.subr.mxu0 0.0
      %5867 = vmatpush1.msra.mxu0 0.0
      %5868 = vmatprep.subr.mxu0 0.0
      %5869 = vmatpush1.msra.mxu0 0.0
      %5870 = vmatprep.subr.mxu0 0.0
      %5871 = vmatpush1.msra.mxu0 0.0
      %5872 = vmatprep.subr.mxu0 0.0
      %5873 = vmatpush1.msra.mxu0 0.0
      %5874 = vmatprep.subr.mxu0 0.0
      %5875 = vmatpush1.msra.mxu0 0.0
      %5876 = vmatprep.subr.mxu0 0.0
      %5877 = vmatpush1.msra.mxu0 0.0
      %5878 = vmatprep.subr.mxu0 0.0
      %5879 = vmatpush1.msra.mxu0 0.0
      %5880 = vmatprep.subr.mxu0 0.0
      %5881 = vmatpush1.msra.mxu0 0.0
      %5882 = vmatprep.subr.mxu0 0.0
      %5883 = vmatpush1.msra.mxu0 0.0
      %5884 = vmatprep.subr.mxu0 0.0
      %5885 = vmatpush1.msra.mxu0 0.0
      %5886 = vmatprep.mubr.f32.mxu0 0.0
      %5887 = vmatmul.mubr.f32.gmra.mrb[0].mxu0 %v5323
      %v5888 = vpop.f32.mrb[0].mxu0
      %v5889 = vadd.f32 0.0, %v5888
      %v5890 = vpop.f32.mrb[0].mxu0
      %v5891 = vadd.f32 0.0, %v5890
      %5892 = vdwg.mxu0
      %5893 = vmatprep.subr.mxu0 %v4707
      %5894 = vmatpush1.msra.mxu0 %v4706
      %5895 = vmatprep.subr.mxu0 %v4786
      %5896 = vmatpush1.msra.mxu0 %v4785
      %5897 = vmatprep.subr.mxu0 %v4865
      %5898 = vmatpush1.msra.mxu0 %v4864
      %5899 = vmatprep.subr.mxu0 %v4944
      %5900 = vmatpush1.msra.mxu0 %v4943
      %5901 = vmatprep.subr.mxu0 %v5023
      %5902 = vmatpush1.msra.mxu0 %v5022
      %5903 = vmatprep.subr.mxu0 %v5102
      %5904 = vmatpush1.msra.mxu0 %v5101
      %5905 = vmatprep.subr.mxu0 %v5181
      %5906 = vmatpush1.msra.mxu0 %v5180
      %5907 = vmatprep.subr.mxu0 %v5260
      %5908 = vmatpush1.msra.mxu0 %v5259
      %5909 = vmatprep.subr.mxu0 0.0
      %5910 = vmatpush1.msra.mxu0 0.0
      %5911 = vmatprep.subr.mxu0 0.0
      %5912 = vmatpush1.msra.mxu0 0.0
      %5913 = vmatprep.subr.mxu0 0.0
      %5914 = vmatpush1.msra.mxu0 0.0
      %5915 = vmatprep.subr.mxu0 0.0
      %5916 = vmatpush1.msra.mxu0 0.0
      %5917 = vmatprep.subr.mxu0 0.0
      %5918 = vmatpush1.msra.mxu0 0.0
      %5919 = vmatprep.subr.mxu0 0.0
      %5920 = vmatpush1.msra.mxu0 0.0
      %5921 = vmatprep.subr.mxu0 0.0
      %5922 = vmatpush1.msra.mxu0 0.0
      %5923 = vmatprep.subr.mxu0 0.0
      %5924 = vmatpush1.msra.mxu0 0.0
      %5925 = vmatprep.subr.mxu0 0.0
      %5926 = vmatpush1.msra.mxu0 0.0
      %5927 = vmatprep.subr.mxu0 0.0
      %5928 = vmatpush1.msra.mxu0 0.0
      %5929 = vmatprep.subr.mxu0 0.0
      %5930 = vmatpush1.msra.mxu0 0.0
      %5931 = vmatprep.subr.mxu0 0.0
      %5932 = vmatpush1.msra.mxu0 0.0
      %5933 = vmatprep.subr.mxu0 0.0
      %5934 = vmatpush1.msra.mxu0 0.0
      %5935 = vmatprep.subr.mxu0 0.0
      %5936 = vmatpush1.msra.mxu0 0.0
      %5937 = vmatprep.subr.mxu0 0.0
      %5938 = vmatpush1.msra.mxu0 0.0
      %5939 = vmatprep.subr.mxu0 0.0
      %5940 = vmatpush1.msra.mxu0 0.0
      %5941 = vmatprep.subr.mxu0 0.0
      %5942 = vmatpush1.msra.mxu0 0.0
      %5943 = vmatprep.subr.mxu0 0.0
      %5944 = vmatpush1.msra.mxu0 0.0
      %5945 = vmatprep.subr.mxu0 0.0
      %5946 = vmatpush1.msra.mxu0 0.0
      %5947 = vmatprep.subr.mxu0 0.0
      %5948 = vmatpush1.msra.mxu0 0.0
      %5949 = vmatprep.subr.mxu0 0.0
      %5950 = vmatpush1.msra.mxu0 0.0
      %5951 = vmatprep.subr.mxu0 0.0
      %5952 = vmatpush1.msra.mxu0 0.0
      %5953 = vmatprep.subr.mxu0 0.0
      %5954 = vmatpush1.msra.mxu0 0.0
      %5955 = vmatprep.subr.mxu0 0.0
      %5956 = vmatpush1.msra.mxu0 0.0
      %5957 = vmatprep.mubr.f32.mxu0 0.0
      %5958 = vmatmul.mubr.f32.gmra.mrb[0].mxu0 %v5323
      %v5959 = vpop.f32.mrb[0].mxu0
      %v5960 = vadd.f32 0.0, %v5959
      %v5961 = vpop.f32.mrb[0].mxu0
      %v5962 = vadd.f32 0.0, %v5961
      %5963 = vdwg.mxu0
      %5964 = vmatprep.subr.mxu0 %v4709
      %5965 = vmatpush1.msra.mxu0 %v4708
      %5966 = vmatprep.subr.mxu0 %v4788
      %5967 = vmatpush1.msra.mxu0 %v4787
      %5968 = vmatprep.subr.mxu0 %v4867
      %5969 = vmatpush1.msra.mxu0 %v4866
      %5970 = vmatprep.subr.mxu0 %v4946
      %5971 = vmatpush1.msra.mxu0 %v4945
      %5972 = vmatprep.subr.mxu0 %v5025
      %5973 = vmatpush1.msra.mxu0 %v5024
      %5974 = vmatprep.subr.mxu0 %v5104
      %5975 = vmatpush1.msra.mxu0 %v5103
      %5976 = vmatprep.subr.mxu0 %v5183
      %5977 = vmatpush1.msra.mxu0 %v5182
      %5978 = vmatprep.subr.mxu0 %v5262
      %5979 = vmatpush1.msra.mxu0 %v5261
      %5980 = vmatprep.subr.mxu0 0.0
      %5981 = vmatpush1.msra.mxu0 0.0
      %5982 = vmatprep.subr.mxu0 0.0
      %5983 = vmatpush1.msra.mxu0 0.0
      %5984 = vmatprep.subr.mxu0 0.0
      %5985 = vmatpush1.msra.mxu0 0.0
      %5986 = vmatprep.subr.mxu0 0.0
      %5987 = vmatpush1.msra.mxu0 0.0
      %5988 = vmatprep.subr.mxu0 0.0
      %5989 = vmatpush1.msra.mxu0 0.0
      %5990 = vmatprep.subr.mxu0 0.0
      %5991 = vmatpush1.msra.mxu0 0.0
      %5992 = vmatprep.subr.mxu0 0.0
      %5993 = vmatpush1.msra.mxu0 0.0
      %5994 = vmatprep.subr.mxu0 0.0
      %5995 = vmatpush1.msra.mxu0 0.0
      %5996 = vmatprep.subr.mxu0 0.0
      %5997 = vmatpush1.msra.mxu0 0.0
      %5998 = vmatprep.subr.mxu0 0.0
      %5999 = vmatpush1.msra.mxu0 0.0
      %6000 = vmatprep.subr.mxu0 0.0
      %6001 = vmatpush1.msra.mxu0 0.0
      %6002 = vmatprep.subr.mxu0 0.0
      %6003 = vmatpush1.msra.mxu0 0.0
      %6004 = vmatprep.subr.mxu0 0.0
      %6005 = vmatpush1.msra.mxu0 0.0
      %6006 = vmatprep.subr.mxu0 0.0
      %6007 = vmatpush1.msra.mxu0 0.0
      %6008 = vmatprep.subr.mxu0 0.0
      %6009 = vmatpush1.msra.mxu0 0.0
      %6010 = vmatprep.subr.mxu0 0.0
      %6011 = vmatpush1.msra.mxu0 0.0
      %6012 = vmatprep.subr.mxu0 0.0
      %6013 = vmatpush1.msra.mxu0 0.0
      %6014 = vmatprep.subr.mxu0 0.0
      %6015 = vmatpush1.msra.mxu0 0.0
      %6016 = vmatprep.subr.mxu0 0.0
      %6017 = vmatpush1.msra.mxu0 0.0
      %6018 = vmatprep.subr.mxu0 0.0
      %6019 = vmatpush1.msra.mxu0 0.0
      %6020 = vmatprep.subr.mxu0 0.0
      %6021 = vmatpush1.msra.mxu0 0.0
      %6022 = vmatprep.subr.mxu0 0.0
      %6023 = vmatpush1.msra.mxu0 0.0
      %6024 = vmatprep.subr.mxu0 0.0
      %6025 = vmatpush1.msra.mxu0 0.0
      %6026 = vmatprep.subr.mxu0 0.0
      %6027 = vmatpush1.msra.mxu0 0.0
      %6028 = vmatprep.mubr.f32.mxu0 0.0
      %6029 = vmatmul.mubr.f32.gmra.mrb[0].mxu0 %v5323
      %v6030 = vpop.f32.mrb[0].mxu0
      %v6031 = vadd.f32 0.0, %v6030
      %v6032 = vpop.f32.mrb[0].mxu0
      %v6033 = vadd.f32 0.0, %v6032
      %6034 = vdwg.mxu0
      %6035 = vmatprep.subr.mxu0 %v4711
      %6036 = vmatpush1.msra.mxu0 %v4710
      %6037 = vmatprep.subr.mxu0 %v4790
      %6038 = vmatpush1.msra.mxu0 %v4789
      %6039 = vmatprep.subr.mxu0 %v4869
      %6040 = vmatpush1.msra.mxu0 %v4868
      %6041 = vmatprep.subr.mxu0 %v4948
      %6042 = vmatpush1.msra.mxu0 %v4947
      %6043 = vmatprep.subr.mxu0 %v5027
      %6044 = vmatpush1.msra.mxu0 %v5026
      %6045 = vmatprep.subr.mxu0 %v5106
      %6046 = vmatpush1.msra.mxu0 %v5105
      %6047 = vmatprep.subr.mxu0 %v5185
      %6048 = vmatpush1.msra.mxu0 %v5184
      %6049 = vmatprep.subr.mxu0 %v5264
      %6050 = vmatpush1.msra.mxu0 %v5263
      %6051 = vmatprep.subr.mxu0 0.0
      %6052 = vmatpush1.msra.mxu0 0.0
      %6053 = vmatprep.subr.mxu0 0.0
      %6054 = vmatpush1.msra.mxu0 0.0
      %6055 = vmatprep.subr.mxu0 0.0
      %6056 = vmatpush1.msra.mxu0 0.0
      %6057 = vmatprep.subr.mxu0 0.0
      %6058 = vmatpush1.msra.mxu0 0.0
      %6059 = vmatprep.subr.mxu0 0.0
      %6060 = vmatpush1.msra.mxu0 0.0
      %6061 = vmatprep.subr.mxu0 0.0
      %6062 = vmatpush1.msra.mxu0 0.0
      %6063 = vmatprep.subr.mxu0 0.0
      %6064 = vmatpush1.msra.mxu0 0.0
      %6065 = vmatprep.subr.mxu0 0.0
      %6066 = vmatpush1.msra.mxu0 0.0
      %6067 = vmatprep.subr.mxu0 0.0
      %6068 = vmatpush1.msra.mxu0 0.0
      %6069 = vmatprep.subr.mxu0 0.0
      %6070 = vmatpush1.msra.mxu0 0.0
      %6071 = vmatprep.subr.mxu0 0.0
      %6072 = vmatpush1.msra.mxu0 0.0
      %6073 = vmatprep.subr.mxu0 0.0
      %6074 = vmatpush1.msra.mxu0 0.0
      %6075 = vmatprep.subr.mxu0 0.0
      %6076 = vmatpush1.msra.mxu0 0.0
      %6077 = vmatprep.subr.mxu0 0.0
      %6078 = vmatpush1.msra.mxu0 0.0
      %6079 = vmatprep.subr.mxu0 0.0
      %6080 = vmatpush1.msra.mxu0 0.0
      %6081 = vmatprep.subr.mxu0 0.0
      %6082 = vmatpush1.msra.mxu0 0.0
      %6083 = vmatprep.subr.mxu0 0.0
      %6084 = vmatpush1.msra.mxu0 0.0
      %6085 = vmatprep.subr.mxu0 0.0
      %6086 = vmatpush1.msra.mxu0 0.0
      %6087 = vmatprep.subr.mxu0 0.0
      %6088 = vmatpush1.msra.mxu0 0.0
      %6089 = vmatprep.subr.mxu0 0.0
      %6090 = vmatpush1.msra.mxu0 0.0
      %6091 = vmatprep.subr.mxu0 0.0
      %6092 = vmatpush1.msra.mxu0 0.0
      %6093 = vmatprep.subr.mxu0 0.0
      %6094 = vmatpush1.msra.mxu0 0.0
      %6095 = vmatprep.subr.mxu0 0.0
      %6096 = vmatpush1.msra.mxu0 0.0
      %6097 = vmatprep.subr.mxu0 0.0
      %6098 = vmatpush1.msra.mxu0 0.0
      %6099 = vmatprep.mubr.f32.mxu0 0.0
      %6100 = vmatmul.mubr.f32.gmra.mrb[0].mxu0 %v5323
      %v6101 = vpop.f32.mrb[0].mxu0
      %v6102 = vadd.f32 0.0, %v6101
      %v6103 = vpop.f32.mrb[0].mxu0
      %v6104 = vadd.f32 0.0, %v6103
      %6105 = vdwg.mxu0
      %6106 = vmatprep.subr.mxu0 %v4713
      %6107 = vmatpush1.msra.mxu0 %v4712
      %6108 = vmatprep.subr.mxu0 %v4792
      %6109 = vmatpush1.msra.mxu0 %v4791
      %6110 = vmatprep.subr.mxu0 %v4871
      %6111 = vmatpush1.msra.mxu0 %v4870
      %6112 = vmatprep.subr.mxu0 %v4950
      %6113 = vmatpush1.msra.mxu0 %v4949
      %6114 = vmatprep.subr.mxu0 %v5029
      %6115 = vmatpush1.msra.mxu0 %v5028
      %6116 = vmatprep.subr.mxu0 %v5108
      %6117 = vmatpush1.msra.mxu0 %v5107
      %6118 = vmatprep.subr.mxu0 %v5187
      %6119 = vmatpush1.msra.mxu0 %v5186
      %6120 = vmatprep.subr.mxu0 %v5266
      %6121 = vmatpush1.msra.mxu0 %v5265
      %6122 = vmatprep.subr.mxu0 0.0
      %6123 = vmatpush1.msra.mxu0 0.0
      %6124 = vmatprep.subr.mxu0 0.0
      %6125 = vmatpush1.msra.mxu0 0.0
      %6126 = vmatprep.subr.mxu0 0.0
      %6127 = vmatpush1.msra.mxu0 0.0
      %6128 = vmatprep.subr.mxu0 0.0
      %6129 = vmatpush1.msra.mxu0 0.0
      %6130 = vmatprep.subr.mxu0 0.0
      %6131 = vmatpush1.msra.mxu0 0.0
      %6132 = vmatprep.subr.mxu0 0.0
      %6133 = vmatpush1.msra.mxu0 0.0
      %6134 = vmatprep.subr.mxu0 0.0
      %6135 = vmatpush1.msra.mxu0 0.0
      %6136 = vmatprep.subr.mxu0 0.0
      %6137 = vmatpush1.msra.mxu0 0.0
      %6138 = vmatprep.subr.mxu0 0.0
      %6139 = vmatpush1.msra.mxu0 0.0
      %6140 = vmatprep.subr.mxu0 0.0
      %6141 = vmatpush1.msra.mxu0 0.0
      %6142 = vmatprep.subr.mxu0 0.0
      %6143 = vmatpush1.msra.mxu0 0.0
      %6144 = vmatprep.subr.mxu0 0.0
      %6145 = vmatpush1.msra.mxu0 0.0
      %6146 = vmatprep.subr.mxu0 0.0
      %6147 = vmatpush1.msra.mxu0 0.0
      %6148 = vmatprep.subr.mxu0 0.0
      %6149 = vmatpush1.msra.mxu0 0.0
      %6150 = vmatprep.subr.mxu0 0.0
      %6151 = vmatpush1.msra.mxu0 0.0
      %6152 = vmatprep.subr.mxu0 0.0
      %6153 = vmatpush1.msra.mxu0 0.0
      %6154 = vmatprep.subr.mxu0 0.0
      %6155 = vmatpush1.msra.mxu0 0.0
      %6156 = vmatprep.subr.mxu0 0.0
      %6157 = vmatpush1.msra.mxu0 0.0
      %6158 = vmatprep.subr.mxu0 0.0
      %6159 = vmatpush1.msra.mxu0 0.0
      %6160 = vmatprep.subr.mxu0 0.0
      %6161 = vmatpush1.msra.mxu0 0.0
      %6162 = vmatprep.subr.mxu0 0.0
      %6163 = vmatpush1.msra.mxu0 0.0
      %6164 = vmatprep.subr.mxu0 0.0
      %6165 = vmatpush1.msra.mxu0 0.0
      %6166 = vmatprep.subr.mxu0 0.0
      %6167 = vmatpush1.msra.mxu0 0.0
      %6168 = vmatprep.subr.mxu0 0.0
      %6169 = vmatpush1.msra.mxu0 0.0
      %6170 = vmatprep.mubr.f32.mxu0 0.0
      %6171 = vmatmul.mubr.f32.gmra.mrb[0].mxu0 %v5323
      %v6172 = vpop.f32.mrb[0].mxu0
      %v6173 = vadd.f32 0.0, %v6172
      %v6174 = vpop.f32.mrb[0].mxu0
      %v6175 = vadd.f32 0.0, %v6174
      %6176 = vdwg.mxu0
      %6177 = vmatprep.subr.mxu0 %v4715
      %6178 = vmatpush1.msra.mxu0 %v4714
      %6179 = vmatprep.subr.mxu0 %v4794
      %6180 = vmatpush1.msra.mxu0 %v4793
      %6181 = vmatprep.subr.mxu0 %v4873
      %6182 = vmatpush1.msra.mxu0 %v4872
      %6183 = vmatprep.subr.mxu0 %v4952
      %6184 = vmatpush1.msra.mxu0 %v4951
      %6185 = vmatprep.subr.mxu0 %v5031
      %6186 = vmatpush1.msra.mxu0 %v5030
      %6187 = vmatprep.subr.mxu0 %v5110
      %6188 = vmatpush1.msra.mxu0 %v5109
      %6189 = vmatprep.subr.mxu0 %v5189
      %6190 = vmatpush1.msra.mxu0 %v5188
      %6191 = vmatprep.subr.mxu0 %v5268
      %6192 = vmatpush1.msra.mxu0 %v5267
      %6193 = vmatprep.subr.mxu0 0.0
      %6194 = vmatpush1.msra.mxu0 0.0
      %6195 = vmatprep.subr.mxu0 0.0
      %6196 = vmatpush1.msra.mxu0 0.0
      %6197 = vmatprep.subr.mxu0 0.0
      %6198 = vmatpush1.msra.mxu0 0.0
      %6199 = vmatprep.subr.mxu0 0.0
      %6200 = vmatpush1.msra.mxu0 0.0
      %6201 = vmatprep.subr.mxu0 0.0
      %6202 = vmatpush1.msra.mxu0 0.0
      %6203 = vmatprep.subr.mxu0 0.0
      %6204 = vmatpush1.msra.mxu0 0.0
      %6205 = vmatprep.subr.mxu0 0.0
      %6206 = vmatpush1.msra.mxu0 0.0
      %6207 = vmatprep.subr.mxu0 0.0
      %6208 = vmatpush1.msra.mxu0 0.0
      %6209 = vmatprep.subr.mxu0 0.0
      %6210 = vmatpush1.msra.mxu0 0.0
      %6211 = vmatprep.subr.mxu0 0.0
      %6212 = vmatpush1.msra.mxu0 0.0
      %6213 = vmatprep.subr.mxu0 0.0
      %6214 = vmatpush1.msra.mxu0 0.0
      %6215 = vmatprep.subr.mxu0 0.0
      %6216 = vmatpush1.msra.mxu0 0.0
      %6217 = vmatprep.subr.mxu0 0.0
      %6218 = vmatpush1.msra.mxu0 0.0
      %6219 = vmatprep.subr.mxu0 0.0
      %6220 = vmatpush1.msra.mxu0 0.0
      %6221 = vmatprep.subr.mxu0 0.0
      %6222 = vmatpush1.msra.mxu0 0.0
      %6223 = vmatprep.subr.mxu0 0.0
      %6224 = vmatpush1.msra.mxu0 0.0
      %6225 = vmatprep.subr.mxu0 0.0
      %6226 = vmatpush1.msra.mxu0 0.0
      %6227 = vmatprep.subr.mxu0 0.0
      %6228 = vmatpush1.msra.mxu0 0.0
      %6229 = vmatprep.subr.mxu0 0.0
      %6230 = vmatpush1.msra.mxu0 0.0
      %6231 = vmatprep.subr.mxu0 0.0
      %6232 = vmatpush1.msra.mxu0 0.0
      %6233 = vmatprep.subr.mxu0 0.0
      %6234 = vmatpush1.msra.mxu0 0.0
      %6235 = vmatprep.subr.mxu0 0.0
      %6236 = vmatpush1.msra.mxu0 0.0
      %6237 = vmatprep.subr.mxu0 0.0
      %6238 = vmatpush1.msra.mxu0 0.0
      %6239 = vmatprep.subr.mxu0 0.0
      %6240 = vmatpush1.msra.mxu0 0.0
      %6241 = vmatprep.mubr.f32.mxu0 0.0
      %6242 = vmatmul.mubr.f32.gmra.mrb[0].mxu0 %v5323
      %v6243 = vpop.f32.mrb[0].mxu0
      %v6244 = vadd.f32 0.0, %v6243
      %v6245 = vpop.f32.mrb[0].mxu0
      %v6246 = vadd.f32 0.0, %v6245
      %6247 = vdwg.mxu0
      %6248 = vmatprep.subr.mxu0 %v4717
      %6249 = vmatpush1.msra.mxu0 %v4716
      %6250 = vmatprep.subr.mxu0 %v4796
      %6251 = vmatpush1.msra.mxu0 %v4795
      %6252 = vmatprep.subr.mxu0 %v4875
      %6253 = vmatpush1.msra.mxu0 %v4874
      %6254 = vmatprep.subr.mxu0 %v4954
      %6255 = vmatpush1.msra.mxu0 %v4953
      %6256 = vmatprep.subr.mxu0 %v5033
      %6257 = vmatpush1.msra.mxu0 %v5032
      %6258 = vmatprep.subr.mxu0 %v5112
      %6259 = vmatpush1.msra.mxu0 %v5111
      %6260 = vmatprep.subr.mxu0 %v5191
      %6261 = vmatpush1.msra.mxu0 %v5190
      %6262 = vmatprep.subr.mxu0 %v5270
      %6263 = vmatpush1.msra.mxu0 %v5269
      %6264 = vmatprep.subr.mxu0 0.0
      %6265 = vmatpush1.msra.mxu0 0.0
      %6266 = vmatprep.subr.mxu0 0.0
      %6267 = vmatpush1.msra.mxu0 0.0
      %6268 = vmatprep.subr.mxu0 0.0
      %6269 = vmatpush1.msra.mxu0 0.0
      %6270 = vmatprep.subr.mxu0 0.0
      %6271 = vmatpush1.msra.mxu0 0.0
      %6272 = vmatprep.subr.mxu0 0.0
      %6273 = vmatpush1.msra.mxu0 0.0
      %6274 = vmatprep.subr.mxu0 0.0
      %6275 = vmatpush1.msra.mxu0 0.0
      %6276 = vmatprep.subr.mxu0 0.0
      %6277 = vmatpush1.msra.mxu0 0.0
      %6278 = vmatprep.subr.mxu0 0.0
      %6279 = vmatpush1.msra.mxu0 0.0
      %6280 = vmatprep.subr.mxu0 0.0
      %6281 = vmatpush1.msra.mxu0 0.0
      %6282 = vmatprep.subr.mxu0 0.0
      %6283 = vmatpush1.msra.mxu0 0.0
      %6284 = vmatprep.subr.mxu0 0.0
      %6285 = vmatpush1.msra.mxu0 0.0
      %6286 = vmatprep.subr.mxu0 0.0
      %6287 = vmatpush1.msra.mxu0 0.0
      %6288 = vmatprep.subr.mxu0 0.0
      %6289 = vmatpush1.msra.mxu0 0.0
      %6290 = vmatprep.subr.mxu0 0.0
      %6291 = vmatpush1.msra.mxu0 0.0
      %6292 = vmatprep.subr.mxu0 0.0
      %6293 = vmatpush1.msra.mxu0 0.0
      %6294 = vmatprep.subr.mxu0 0.0
      %6295 = vmatpush1.msra.mxu0 0.0
      %6296 = vmatprep.subr.mxu0 0.0
      %6297 = vmatpush1.msra.mxu0 0.0
      %6298 = vmatprep.subr.mxu0 0.0
      %6299 = vmatpush1.msra.mxu0 0.0
      %6300 = vmatprep.subr.mxu0 0.0
      %6301 = vmatpush1.msra.mxu0 0.0
      %6302 = vmatprep.subr.mxu0 0.0
      %6303 = vmatpush1.msra.mxu0 0.0
      %6304 = vmatprep.subr.mxu0 0.0
      %6305 = vmatpush1.msra.mxu0 0.0
      %6306 = vmatprep.subr.mxu0 0.0
      %6307 = vmatpush1.msra.mxu0 0.0
      %6308 = vmatprep.subr.mxu0 0.0
      %6309 = vmatpush1.msra.mxu0 0.0
      %6310 = vmatprep.subr.mxu0 0.0
      %6311 = vmatpush1.msra.mxu0 0.0
      %6312 = vmatprep.mubr.f32.mxu0 0.0
      %6313 = vmatmul.mubr.f32.gmra.mrb[0].mxu0 %v5323
      %v6314 = vpop.f32.mrb[0].mxu0
      %v6315 = vadd.f32 0.0, %v6314
      %v6316 = vpop.f32.mrb[0].mxu0
      %v6317 = vadd.f32 0.0, %v6316
      %6318 = vdwg.mxu0
      %6319 = vmatprep.subr.mxu0 %v4719
      %6320 = vmatpush1.msra.mxu0 %v4718
      %6321 = vmatprep.subr.mxu0 %v4798
      %6322 = vmatpush1.msra.mxu0 %v4797
      %6323 = vmatprep.subr.mxu0 %v4877
      %6324 = vmatpush1.msra.mxu0 %v4876
      %6325 = vmatprep.subr.mxu0 %v4956
      %6326 = vmatpush1.msra.mxu0 %v4955
      %6327 = vmatprep.subr.mxu0 %v5035
      %6328 = vmatpush1.msra.mxu0 %v5034
      %6329 = vmatprep.subr.mxu0 %v5114
      %6330 = vmatpush1.msra.mxu0 %v5113
      %6331 = vmatprep.subr.mxu0 %v5193
      %6332 = vmatpush1.msra.mxu0 %v5192
      %6333 = vmatprep.subr.mxu0 %v5272
      %6334 = vmatpush1.msra.mxu0 %v5271
      %6335 = vmatprep.subr.mxu0 0.0
      %6336 = vmatpush1.msra.mxu0 0.0
      %6337 = vmatprep.subr.mxu0 0.0
      %6338 = vmatpush1.msra.mxu0 0.0
      %6339 = vmatprep.subr.mxu0 0.0
      %6340 = vmatpush1.msra.mxu0 0.0
      %6341 = vmatprep.subr.mxu0 0.0
      %6342 = vmatpush1.msra.mxu0 0.0
      %6343 = vmatprep.subr.mxu0 0.0
      %6344 = vmatpush1.msra.mxu0 0.0
      %6345 = vmatprep.subr.mxu0 0.0
      %6346 = vmatpush1.msra.mxu0 0.0
      %6347 = vmatprep.subr.mxu0 0.0
      %6348 = vmatpush1.msra.mxu0 0.0
      %6349 = vmatprep.subr.mxu0 0.0
      %6350 = vmatpush1.msra.mxu0 0.0
      %6351 = vmatprep.subr.mxu0 0.0
      %6352 = vmatpush1.msra.mxu0 0.0
      %6353 = vmatprep.subr.mxu0 0.0
      %6354 = vmatpush1.msra.mxu0 0.0
      %6355 = vmatprep.subr.mxu0 0.0
      %6356 = vmatpush1.msra.mxu0 0.0
      %6357 = vmatprep.subr.mxu0 0.0
      %6358 = vmatpush1.msra.mxu0 0.0
      %6359 = vmatprep.subr.mxu0 0.0
      %6360 = vmatpush1.msra.mxu0 0.0
      %6361 = vmatprep.subr.mxu0 0.0
      %6362 = vmatpush1.msra.mxu0 0.0
      %6363 = vmatprep.subr.mxu0 0.0
      %6364 = vmatpush1.msra.mxu0 0.0
      %6365 = vmatprep.subr.mxu0 0.0
      %6366 = vmatpush1.msra.mxu0 0.0
      %6367 = vmatprep.subr.mxu0 0.0
      %6368 = vmatpush1.msra.mxu0 0.0
      %6369 = vmatprep.subr.mxu0 0.0
      %6370 = vmatpush1.msra.mxu0 0.0
      %6371 = vmatprep.subr.mxu0 0.0
      %6372 = vmatpush1.msra.mxu0 0.0
      %6373 = vmatprep.subr.mxu0 0.0
      %6374 = vmatpush1.msra.mxu0 0.0
      %6375 = vmatprep.subr.mxu0 0.0
      %6376 = vmatpush1.msra.mxu0 0.0
      %6377 = vmatprep.subr.mxu0 0.0
      %6378 = vmatpush1.msra.mxu0 0.0
      %6379 = vmatprep.subr.mxu0 0.0
      %6380 = vmatpush1.msra.mxu0 0.0
      %6381 = vmatprep.subr.mxu0 0.0
      %6382 = vmatpush1.msra.mxu0 0.0
      %6383 = vmatprep.mubr.f32.mxu0 0.0
      %6384 = vmatmul.mubr.f32.gmra.mrb[0].mxu0 %v5323
      %v6385 = vpop.f32.mrb[0].mxu0
      %v6386 = vadd.f32 0.0, %v6385
      %v6387 = vpop.f32.mrb[0].mxu0
      %v6388 = vadd.f32 0.0, %v6387
      %6389 = vdwg.mxu0
      %6390 = vmatprep.subr.mxu0 %v4721
      %6391 = vmatpush1.msra.mxu0 %v4720
      %6392 = vmatprep.subr.mxu0 %v4800
      %6393 = vmatpush1.msra.mxu0 %v4799
      %6394 = vmatprep.subr.mxu0 %v4879
      %6395 = vmatpush1.msra.mxu0 %v4878
      %6396 = vmatprep.subr.mxu0 %v4958
      %6397 = vmatpush1.msra.mxu0 %v4957
      %6398 = vmatprep.subr.mxu0 %v5037
      %6399 = vmatpush1.msra.mxu0 %v5036
      %6400 = vmatprep.subr.mxu0 %v5116
      %6401 = vmatpush1.msra.mxu0 %v5115
      %6402 = vmatprep.subr.mxu0 %v5195
      %6403 = vmatpush1.msra.mxu0 %v5194
      %6404 = vmatprep.subr.mxu0 %v5274
      %6405 = vmatpush1.msra.mxu0 %v5273
      %6406 = vmatprep.subr.mxu0 0.0
      %6407 = vmatpush1.msra.mxu0 0.0
      %6408 = vmatprep.subr.mxu0 0.0
      %6409 = vmatpush1.msra.mxu0 0.0
      %6410 = vmatprep.subr.mxu0 0.0
      %6411 = vmatpush1.msra.mxu0 0.0
      %6412 = vmatprep.subr.mxu0 0.0
      %6413 = vmatpush1.msra.mxu0 0.0
      %6414 = vmatprep.subr.mxu0 0.0
      %6415 = vmatpush1.msra.mxu0 0.0
      %6416 = vmatprep.subr.mxu0 0.0
      %6417 = vmatpush1.msra.mxu0 0.0
      %6418 = vmatprep.subr.mxu0 0.0
      %6419 = vmatpush1.msra.mxu0 0.0
      %6420 = vmatprep.subr.mxu0 0.0
      %6421 = vmatpush1.msra.mxu0 0.0
      %6422 = vmatprep.subr.mxu0 0.0
      %6423 = vmatpush1.msra.mxu0 0.0
      %6424 = vmatprep.subr.mxu0 0.0
      %6425 = vmatpush1.msra.mxu0 0.0
      %6426 = vmatprep.subr.mxu0 0.0
      %6427 = vmatpush1.msra.mxu0 0.0
      %6428 = vmatprep.subr.mxu0 0.0
      %6429 = vmatpush1.msra.mxu0 0.0
      %6430 = vmatprep.subr.mxu0 0.0
      %6431 = vmatpush1.msra.mxu0 0.0
      %6432 = vmatprep.subr.mxu0 0.0
      %6433 = vmatpush1.msra.mxu0 0.0
      %6434 = vmatprep.subr.mxu0 0.0
      %6435 = vmatpush1.msra.mxu0 0.0
      %6436 = vmatprep.subr.mxu0 0.0
      %6437 = vmatpush1.msra.mxu0 0.0
      %6438 = vmatprep.subr.mxu0 0.0
      %6439 = vmatpush1.msra.mxu0 0.0
      %6440 = vmatprep.subr.mxu0 0.0
      %6441 = vmatpush1.msra.mxu0 0.0
      %6442 = vmatprep.subr.mxu0 0.0
      %6443 = vmatpush1.msra.mxu0 0.0
      %6444 = vmatprep.subr.mxu0 0.0
      %6445 = vmatpush1.msra.mxu0 0.0
      %6446 = vmatprep.subr.mxu0 0.0
      %6447 = vmatpush1.msra.mxu0 0.0
      %6448 = vmatprep.subr.mxu0 0.0
      %6449 = vmatpush1.msra.mxu0 0.0
      %6450 = vmatprep.subr.mxu0 0.0
      %6451 = vmatpush1.msra.mxu0 0.0
      %6452 = vmatprep.subr.mxu0 0.0
      %6453 = vmatpush1.msra.mxu0 0.0
      %6454 = vmatprep.mubr.f32.mxu0 0.0
      %6455 = vmatmul.mubr.f32.gmra.mrb[0].mxu0 %v5323
      %v6456 = vpop.f32.mrb[0].mxu0
      %v6457 = vadd.f32 0.0, %v6456
      %v6458 = vpop.f32.mrb[0].mxu0
      %v6459 = vadd.f32 0.0, %v6458
      %6460 = vdwg.mxu0
      %6461 = vmatprep.subr.mxu0 %v4723
      %6462 = vmatpush1.msra.mxu0 %v4722
      %6463 = vmatprep.subr.mxu0 %v4802
      %6464 = vmatpush1.msra.mxu0 %v4801
      %6465 = vmatprep.subr.mxu0 %v4881
      %6466 = vmatpush1.msra.mxu0 %v4880
      %6467 = vmatprep.subr.mxu0 %v4960
      %6468 = vmatpush1.msra.mxu0 %v4959
      %6469 = vmatprep.subr.mxu0 %v5039
      %6470 = vmatpush1.msra.mxu0 %v5038
      %6471 = vmatprep.subr.mxu0 %v5118
      %6472 = vmatpush1.msra.mxu0 %v5117
      %6473 = vmatprep.subr.mxu0 %v5197
      %6474 = vmatpush1.msra.mxu0 %v5196
      %6475 = vmatprep.subr.mxu0 %v5276
      %6476 = vmatpush1.msra.mxu0 %v5275
      %6477 = vmatprep.subr.mxu0 0.0
      %6478 = vmatpush1.msra.mxu0 0.0
      %6479 = vmatprep.subr.mxu0 0.0
      %6480 = vmatpush1.msra.mxu0 0.0
      %6481 = vmatprep.subr.mxu0 0.0
      %6482 = vmatpush1.msra.mxu0 0.0
      %6483 = vmatprep.subr.mxu0 0.0
      %6484 = vmatpush1.msra.mxu0 0.0
      %6485 = vmatprep.subr.mxu0 0.0
      %6486 = vmatpush1.msra.mxu0 0.0
      %6487 = vmatprep.subr.mxu0 0.0
      %6488 = vmatpush1.msra.mxu0 0.0
      %6489 = vmatprep.subr.mxu0 0.0
      %6490 = vmatpush1.msra.mxu0 0.0
      %6491 = vmatprep.subr.mxu0 0.0
      %6492 = vmatpush1.msra.mxu0 0.0
      %6493 = vmatprep.subr.mxu0 0.0
      %6494 = vmatpush1.msra.mxu0 0.0
      %6495 = vmatprep.subr.mxu0 0.0
      %6496 = vmatpush1.msra.mxu0 0.0
      %6497 = vmatprep.subr.mxu0 0.0
      %6498 = vmatpush1.msra.mxu0 0.0
      %6499 = vmatprep.subr.mxu0 0.0
      %6500 = vmatpush1.msra.mxu0 0.0
      %6501 = vmatprep.subr.mxu0 0.0
      %6502 = vmatpush1.msra.mxu0 0.0
      %6503 = vmatprep.subr.mxu0 0.0
      %6504 = vmatpush1.msra.mxu0 0.0
      %6505 = vmatprep.subr.mxu0 0.0
      %6506 = vmatpush1.msra.mxu0 0.0
      %6507 = vmatprep.subr.mxu0 0.0
      %6508 = vmatpush1.msra.mxu0 0.0
      %6509 = vmatprep.subr.mxu0 0.0
      %6510 = vmatpush1.msra.mxu0 0.0
      %6511 = vmatprep.subr.mxu0 0.0
      %6512 = vmatpush1.msra.mxu0 0.0
      %6513 = vmatprep.subr.mxu0 0.0
      %6514 = vmatpush1.msra.mxu0 0.0
      %6515 = vmatprep.subr.mxu0 0.0
      %6516 = vmatpush1.msra.mxu0 0.0
      %6517 = vmatprep.subr.mxu0 0.0
      %6518 = vmatpush1.msra.mxu0 0.0
      %6519 = vmatprep.subr.mxu0 0.0
      %6520 = vmatpush1.msra.mxu0 0.0
      %6521 = vmatprep.subr.mxu0 0.0
      %6522 = vmatpush1.msra.mxu0 0.0
      %6523 = vmatprep.subr.mxu0 0.0
      %6524 = vmatpush1.msra.mxu0 0.0
      %6525 = vmatprep.mubr.f32.mxu0 0.0
      %6526 = vmatmul.mubr.f32.gmra.mrb[0].mxu0 %v5323
      %v6527 = vpop.f32.mrb[0].mxu0
      %v6528 = vadd.f32 0.0, %v6527
      %v6529 = vpop.f32.mrb[0].mxu0
      %v6530 = vadd.f32 0.0, %v6529
      %6531 = vdwg.mxu0
      %6532 = vmatprep.subr.mxu0 %v4725
      %6533 = vmatpush1.msra.mxu0 %v4724
      %6534 = vmatprep.subr.mxu0 %v4804
      %6535 = vmatpush1.msra.mxu0 %v4803
      %6536 = vmatprep.subr.mxu0 %v4883
      %6537 = vmatpush1.msra.mxu0 %v4882
      %6538 = vmatprep.subr.mxu0 %v4962
      %6539 = vmatpush1.msra.mxu0 %v4961
      %6540 = vmatprep.subr.mxu0 %v5041
      %6541 = vmatpush1.msra.mxu0 %v5040
      %6542 = vmatprep.subr.mxu0 %v5120
      %6543 = vmatpush1.msra.mxu0 %v5119
      %6544 = vmatprep.subr.mxu0 %v5199
      %6545 = vmatpush1.msra.mxu0 %v5198
      %6546 = vmatprep.subr.mxu0 %v5278
      %6547 = vmatpush1.msra.mxu0 %v5277
      %6548 = vmatprep.subr.mxu0 0.0
      %6549 = vmatpush1.msra.mxu0 0.0
      %6550 = vmatprep.subr.mxu0 0.0
      %6551 = vmatpush1.msra.mxu0 0.0
      %6552 = vmatprep.subr.mxu0 0.0
      %6553 = vmatpush1.msra.mxu0 0.0
      %6554 = vmatprep.subr.mxu0 0.0
      %6555 = vmatpush1.msra.mxu0 0.0
      %6556 = vmatprep.subr.mxu0 0.0
      %6557 = vmatpush1.msra.mxu0 0.0
      %6558 = vmatprep.subr.mxu0 0.0
      %6559 = vmatpush1.msra.mxu0 0.0
      %6560 = vmatprep.subr.mxu0 0.0
      %6561 = vmatpush1.msra.mxu0 0.0
      %6562 = vmatprep.subr.mxu0 0.0
      %6563 = vmatpush1.msra.mxu0 0.0
      %6564 = vmatprep.subr.mxu0 0.0
      %6565 = vmatpush1.msra.mxu0 0.0
      %6566 = vmatprep.subr.mxu0 0.0
      %6567 = vmatpush1.msra.mxu0 0.0
      %6568 = vmatprep.subr.mxu0 0.0
      %6569 = vmatpush1.msra.mxu0 0.0
      %6570 = vmatprep.subr.mxu0 0.0
      %6571 = vmatpush1.msra.mxu0 0.0
      %6572 = vmatprep.subr.mxu0 0.0
      %6573 = vmatpush1.msra.mxu0 0.0
      %6574 = vmatprep.subr.mxu0 0.0
      %6575 = vmatpush1.msra.mxu0 0.0
      %6576 = vmatprep.subr.mxu0 0.0
      %6577 = vmatpush1.msra.mxu0 0.0
      %6578 = vmatprep.subr.mxu0 0.0
      %6579 = vmatpush1.msra.mxu0 0.0
      %6580 = vmatprep.subr.mxu0 0.0
      %6581 = vmatpush1.msra.mxu0 0.0
      %6582 = vmatprep.subr.mxu0 0.0
      %6583 = vmatpush1.msra.mxu0 0.0
      %6584 = vmatprep.subr.mxu0 0.0
      %6585 = vmatpush1.msra.mxu0 0.0
      %6586 = vmatprep.subr.mxu0 0.0
      %6587 = vmatpush1.msra.mxu0 0.0
      %6588 = vmatprep.subr.mxu0 0.0
      %6589 = vmatpush1.msra.mxu0 0.0
      %6590 = vmatprep.subr.mxu0 0.0
      %6591 = vmatpush1.msra.mxu0 0.0
      %6592 = vmatprep.subr.mxu0 0.0
      %6593 = vmatpush1.msra.mxu0 0.0
      %6594 = vmatprep.subr.mxu0 0.0
      %6595 = vmatpush1.msra.mxu0 0.0
      %6596 = vmatprep.mubr.f32.mxu0 0.0
      %6597 = vmatmul.mubr.f32.gmra.mrb[0].mxu0 %v5323
      %v6598 = vpop.f32.mrb[0].mxu0
      %v6599 = vadd.f32 0.0, %v6598
      %v6600 = vpop.f32.mrb[0].mxu0
      %v6601 = vadd.f32 0.0, %v6600
      %6602 = vdwg.mxu0
      %6603 = vmatprep.subr.mxu0 %v4727
      %6604 = vmatpush1.msra.mxu0 %v4726
      %6605 = vmatprep.subr.mxu0 %v4806
      %6606 = vmatpush1.msra.mxu0 %v4805
      %6607 = vmatprep.subr.mxu0 %v4885
      %6608 = vmatpush1.msra.mxu0 %v4884
      %6609 = vmatprep.subr.mxu0 %v4964
      %6610 = vmatpush1.msra.mxu0 %v4963
      %6611 = vmatprep.subr.mxu0 %v5043
      %6612 = vmatpush1.msra.mxu0 %v5042
      %6613 = vmatprep.subr.mxu0 %v5122
      %6614 = vmatpush1.msra.mxu0 %v5121
      %6615 = vmatprep.subr.mxu0 %v5201
      %6616 = vmatpush1.msra.mxu0 %v5200
      %6617 = vmatprep.subr.mxu0 %v5280
      %6618 = vmatpush1.msra.mxu0 %v5279
      %6619 = vmatprep.subr.mxu0 0.0
      %6620 = vmatpush1.msra.mxu0 0.0
      %6621 = vmatprep.subr.mxu0 0.0
      %6622 = vmatpush1.msra.mxu0 0.0
      %6623 = vmatprep.subr.mxu0 0.0
      %6624 = vmatpush1.msra.mxu0 0.0
      %6625 = vmatprep.subr.mxu0 0.0
      %6626 = vmatpush1.msra.mxu0 0.0
      %6627 = vmatprep.subr.mxu0 0.0
      %6628 = vmatpush1.msra.mxu0 0.0
      %6629 = vmatprep.subr.mxu0 0.0
      %6630 = vmatpush1.msra.mxu0 0.0
      %6631 = vmatprep.subr.mxu0 0.0
      %6632 = vmatpush1.msra.mxu0 0.0
      %6633 = vmatprep.subr.mxu0 0.0
      %6634 = vmatpush1.msra.mxu0 0.0
      %6635 = vmatprep.subr.mxu0 0.0
      %6636 = vmatpush1.msra.mxu0 0.0
      %6637 = vmatprep.subr.mxu0 0.0
      %6638 = vmatpush1.msra.mxu0 0.0
      %6639 = vmatprep.subr.mxu0 0.0
      %6640 = vmatpush1.msra.mxu0 0.0
      %6641 = vmatprep.subr.mxu0 0.0
      %6642 = vmatpush1.msra.mxu0 0.0
      %6643 = vmatprep.subr.mxu0 0.0
      %6644 = vmatpush1.msra.mxu0 0.0
      %6645 = vmatprep.subr.mxu0 0.0
      %6646 = vmatpush1.msra.mxu0 0.0
      %6647 = vmatprep.subr.mxu0 0.0
      %6648 = vmatpush1.msra.mxu0 0.0
      %6649 = vmatprep.subr.mxu0 0.0
      %6650 = vmatpush1.msra.mxu0 0.0
      %6651 = vmatprep.subr.mxu0 0.0
      %6652 = vmatpush1.msra.mxu0 0.0
      %6653 = vmatprep.subr.mxu0 0.0
      %6654 = vmatpush1.msra.mxu0 0.0
      %6655 = vmatprep.subr.mxu0 0.0
      %6656 = vmatpush1.msra.mxu0 0.0
      %6657 = vmatprep.subr.mxu0 0.0
      %6658 = vmatpush1.msra.mxu0 0.0
      %6659 = vmatprep.subr.mxu0 0.0
      %6660 = vmatpush1.msra.mxu0 0.0
      %6661 = vmatprep.subr.mxu0 0.0
      %6662 = vmatpush1.msra.mxu0 0.0
      %6663 = vmatprep.subr.mxu0 0.0
      %6664 = vmatpush1.msra.mxu0 0.0
      %6665 = vmatprep.subr.mxu0 0.0
      %6666 = vmatpush1.msra.mxu0 0.0
      %6667 = vmatprep.mubr.f32.mxu0 0.0
      %6668 = vmatmul.mubr.f32.gmra.mrb[0].mxu0 %v5323
      %v6669 = vpop.f32.mrb[0].mxu0
      %v6670 = vadd.f32 0.0, %v6669
      %v6671 = vpop.f32.mrb[0].mxu0
      %v6672 = vadd.f32 0.0, %v6671
      %6673 = vdwg.mxu0
      %6674 = vmatprep.subr.mxu0 %v4729
      %6675 = vmatpush1.msra.mxu0 %v4728
      %6676 = vmatprep.subr.mxu0 %v4808
      %6677 = vmatpush1.msra.mxu0 %v4807
      %6678 = vmatprep.subr.mxu0 %v4887
      %6679 = vmatpush1.msra.mxu0 %v4886
      %6680 = vmatprep.subr.mxu0 %v4966
      %6681 = vmatpush1.msra.mxu0 %v4965
      %6682 = vmatprep.subr.mxu0 %v5045
      %6683 = vmatpush1.msra.mxu0 %v5044
      %6684 = vmatprep.subr.mxu0 %v5124
      %6685 = vmatpush1.msra.mxu0 %v5123
      %6686 = vmatprep.subr.mxu0 %v5203
      %6687 = vmatpush1.msra.mxu0 %v5202
      %6688 = vmatprep.subr.mxu0 %v5282
      %6689 = vmatpush1.msra.mxu0 %v5281
      %6690 = vmatprep.subr.mxu0 0.0
      %6691 = vmatpush1.msra.mxu0 0.0
      %6692 = vmatprep.subr.mxu0 0.0
      %6693 = vmatpush1.msra.mxu0 0.0
      %6694 = vmatprep.subr.mxu0 0.0
      %6695 = vmatpush1.msra.mxu0 0.0
      %6696 = vmatprep.subr.mxu0 0.0
      %6697 = vmatpush1.msra.mxu0 0.0
      %6698 = vmatprep.subr.mxu0 0.0
      %6699 = vmatpush1.msra.mxu0 0.0
      %6700 = vmatprep.subr.mxu0 0.0
      %6701 = vmatpush1.msra.mxu0 0.0
      %6702 = vmatprep.subr.mxu0 0.0
      %6703 = vmatpush1.msra.mxu0 0.0
      %6704 = vmatprep.subr.mxu0 0.0
      %6705 = vmatpush1.msra.mxu0 0.0
      %6706 = vmatprep.subr.mxu0 0.0
      %6707 = vmatpush1.msra.mxu0 0.0
      %6708 = vmatprep.subr.mxu0 0.0
      %6709 = vmatpush1.msra.mxu0 0.0
      %6710 = vmatprep.subr.mxu0 0.0
      %6711 = vmatpush1.msra.mxu0 0.0
      %6712 = vmatprep.subr.mxu0 0.0
      %6713 = vmatpush1.msra.mxu0 0.0
      %6714 = vmatprep.subr.mxu0 0.0
      %6715 = vmatpush1.msra.mxu0 0.0
      %6716 = vmatprep.subr.mxu0 0.0
      %6717 = vmatpush1.msra.mxu0 0.0
      %6718 = vmatprep.subr.mxu0 0.0
      %6719 = vmatpush1.msra.mxu0 0.0
      %6720 = vmatprep.subr.mxu0 0.0
      %6721 = vmatpush1.msra.mxu0 0.0
      %6722 = vmatprep.subr.mxu0 0.0
      %6723 = vmatpush1.msra.mxu0 0.0
      %6724 = vmatprep.subr.mxu0 0.0
      %6725 = vmatpush1.msra.mxu0 0.0
      %6726 = vmatprep.subr.mxu0 0.0
      %6727 = vmatpush1.msra.mxu0 0.0
      %6728 = vmatprep.subr.mxu0 0.0
      %6729 = vmatpush1.msra.mxu0 0.0
      %6730 = vmatprep.subr.mxu0 0.0
      %6731 = vmatpush1.msra.mxu0 0.0
      %6732 = vmatprep.subr.mxu0 0.0
      %6733 = vmatpush1.msra.mxu0 0.0
      %6734 = vmatprep.subr.mxu0 0.0
      %6735 = vmatpush1.msra.mxu0 0.0
      %6736 = vmatprep.subr.mxu0 0.0
      %6737 = vmatpush1.msra.mxu0 0.0
      %6738 = vmatprep.mubr.f32.mxu0 0.0
      %6739 = vmatmul.mubr.f32.gmra.mrb[0].mxu0 %v5323
      %v6740 = vpop.f32.mrb[0].mxu0
      %v6741 = vadd.f32 0.0, %v6740
      %v6742 = vpop.f32.mrb[0].mxu0
      %v6743 = vadd.f32 0.0, %v6742
      %6744 = vdwg.mxu0
      %6745 = vmatprep.subr.mxu0 %v4731
      %6746 = vmatpush1.msra.mxu0 %v4730
      %6747 = vmatprep.subr.mxu0 %v4810
      %6748 = vmatpush1.msra.mxu0 %v4809
      %6749 = vmatprep.subr.mxu0 %v4889
      %6750 = vmatpush1.msra.mxu0 %v4888
      %6751 = vmatprep.subr.mxu0 %v4968
      %6752 = vmatpush1.msra.mxu0 %v4967
      %6753 = vmatprep.subr.mxu0 %v5047
      %6754 = vmatpush1.msra.mxu0 %v5046
      %6755 = vmatprep.subr.mxu0 %v5126
      %6756 = vmatpush1.msra.mxu0 %v5125
      %6757 = vmatprep.subr.mxu0 %v5205
      %6758 = vmatpush1.msra.mxu0 %v5204
      %6759 = vmatprep.subr.mxu0 %v5284
      %6760 = vmatpush1.msra.mxu0 %v5283
      %6761 = vmatprep.subr.mxu0 0.0
      %6762 = vmatpush1.msra.mxu0 0.0
      %6763 = vmatprep.subr.mxu0 0.0
      %6764 = vmatpush1.msra.mxu0 0.0
      %6765 = vmatprep.subr.mxu0 0.0
      %6766 = vmatpush1.msra.mxu0 0.0
      %6767 = vmatprep.subr.mxu0 0.0
      %6768 = vmatpush1.msra.mxu0 0.0
      %6769 = vmatprep.subr.mxu0 0.0
      %6770 = vmatpush1.msra.mxu0 0.0
      %6771 = vmatprep.subr.mxu0 0.0
      %6772 = vmatpush1.msra.mxu0 0.0
      %6773 = vmatprep.subr.mxu0 0.0
      %6774 = vmatpush1.msra.mxu0 0.0
      %6775 = vmatprep.subr.mxu0 0.0
      %6776 = vmatpush1.msra.mxu0 0.0
      %6777 = vmatprep.subr.mxu0 0.0
      %6778 = vmatpush1.msra.mxu0 0.0
      %6779 = vmatprep.subr.mxu0 0.0
      %6780 = vmatpush1.msra.mxu0 0.0
      %6781 = vmatprep.subr.mxu0 0.0
      %6782 = vmatpush1.msra.mxu0 0.0
      %6783 = vmatprep.subr.mxu0 0.0
      %6784 = vmatpush1.msra.mxu0 0.0
      %6785 = vmatprep.subr.mxu0 0.0
      %6786 = vmatpush1.msra.mxu0 0.0
      %6787 = vmatprep.subr.mxu0 0.0
      %6788 = vmatpush1.msra.mxu0 0.0
      %6789 = vmatprep.subr.mxu0 0.0
      %6790 = vmatpush1.msra.mxu0 0.0
      %6791 = vmatprep.subr.mxu0 0.0
      %6792 = vmatpush1.msra.mxu0 0.0
      %6793 = vmatprep.subr.mxu0 0.0
      %6794 = vmatpush1.msra.mxu0 0.0
      %6795 = vmatprep.subr.mxu0 0.0
      %6796 = vmatpush1.msra.mxu0 0.0
      %6797 = vmatprep.subr.mxu0 0.0
      %6798 = vmatpush1.msra.mxu0 0.0
      %6799 = vmatprep.subr.mxu0 0.0
      %6800 = vmatpush1.msra.mxu0 0.0
      %6801 = vmatprep.subr.mxu0 0.0
      %6802 = vmatpush1.msra.mxu0 0.0
      %6803 = vmatprep.subr.mxu0 0.0
      %6804 = vmatpush1.msra.mxu0 0.0
      %6805 = vmatprep.subr.mxu0 0.0
      %6806 = vmatpush1.msra.mxu0 0.0
      %6807 = vmatprep.subr.mxu0 0.0
      %6808 = vmatpush1.msra.mxu0 0.0
      %6809 = vmatprep.mubr.f32.mxu0 0.0
      %6810 = vmatmul.mubr.f32.gmra.mrb[0].mxu0 %v5323
      %v6811 = vpop.f32.mrb[0].mxu0
      %v6812 = vadd.f32 0.0, %v6811
      %v6813 = vpop.f32.mrb[0].mxu0
      %v6814 = vadd.f32 0.0, %v6813
      %6815 = vdwg.mxu0
      %6816 = vmatprep.subr.mxu0 %v4733
      %6817 = vmatpush1.msra.mxu0 %v4732
      %6818 = vmatprep.subr.mxu0 %v4812
      %6819 = vmatpush1.msra.mxu0 %v4811
      %6820 = vmatprep.subr.mxu0 %v4891
      %6821 = vmatpush1.msra.mxu0 %v4890
      %6822 = vmatprep.subr.mxu0 %v4970
      %6823 = vmatpush1.msra.mxu0 %v4969
      %6824 = vmatprep.subr.mxu0 %v5049
      %6825 = vmatpush1.msra.mxu0 %v5048
      %6826 = vmatprep.subr.mxu0 %v5128
      %6827 = vmatpush1.msra.mxu0 %v5127
      %6828 = vmatprep.subr.mxu0 %v5207
      %6829 = vmatpush1.msra.mxu0 %v5206
      %6830 = vmatprep.subr.mxu0 %v5286
      %6831 = vmatpush1.msra.mxu0 %v5285
      %6832 = vmatprep.subr.mxu0 0.0
      %6833 = vmatpush1.msra.mxu0 0.0
      %6834 = vmatprep.subr.mxu0 0.0
      %6835 = vmatpush1.msra.mxu0 0.0
      %6836 = vmatprep.subr.mxu0 0.0
      %6837 = vmatpush1.msra.mxu0 0.0
      %6838 = vmatprep.subr.mxu0 0.0
      %6839 = vmatpush1.msra.mxu0 0.0
      %6840 = vmatprep.subr.mxu0 0.0
      %6841 = vmatpush1.msra.mxu0 0.0
      %6842 = vmatprep.subr.mxu0 0.0
      %6843 = vmatpush1.msra.mxu0 0.0
      %6844 = vmatprep.subr.mxu0 0.0
      %6845 = vmatpush1.msra.mxu0 0.0
      %6846 = vmatprep.subr.mxu0 0.0
      %6847 = vmatpush1.msra.mxu0 0.0
      %6848 = vmatprep.subr.mxu0 0.0
      %6849 = vmatpush1.msra.mxu0 0.0
      %6850 = vmatprep.subr.mxu0 0.0
      %6851 = vmatpush1.msra.mxu0 0.0
      %6852 = vmatprep.subr.mxu0 0.0
      %6853 = vmatpush1.msra.mxu0 0.0
      %6854 = vmatprep.subr.mxu0 0.0
      %6855 = vmatpush1.msra.mxu0 0.0
      %6856 = vmatprep.subr.mxu0 0.0
      %6857 = vmatpush1.msra.mxu0 0.0
      %6858 = vmatprep.subr.mxu0 0.0
      %6859 = vmatpush1.msra.mxu0 0.0
      %6860 = vmatprep.subr.mxu0 0.0
      %6861 = vmatpush1.msra.mxu0 0.0
      %6862 = vmatprep.subr.mxu0 0.0
      %6863 = vmatpush1.msra.mxu0 0.0
      %6864 = vmatprep.subr.mxu0 0.0
      %6865 = vmatpush1.msra.mxu0 0.0
      %6866 = vmatprep.subr.mxu0 0.0
      %6867 = vmatpush1.msra.mxu0 0.0
      %6868 = vmatprep.subr.mxu0 0.0
      %6869 = vmatpush1.msra.mxu0 0.0
      %6870 = vmatprep.subr.mxu0 0.0
      %6871 = vmatpush1.msra.mxu0 0.0
      %6872 = vmatprep.subr.mxu0 0.0
      %6873 = vmatpush1.msra.mxu0 0.0
      %6874 = vmatprep.subr.mxu0 0.0
      %6875 = vmatpush1.msra.mxu0 0.0
      %6876 = vmatprep.subr.mxu0 0.0
      %6877 = vmatpush1.msra.mxu0 0.0
      %6878 = vmatprep.subr.mxu0 0.0
      %6879 = vmatpush1.msra.mxu0 0.0
      %6880 = vmatprep.mubr.f32.mxu0 0.0
      %6881 = vmatmul.mubr.f32.gmra.mrb[0].mxu0 %v5323
      %v6882 = vpop.f32.mrb[0].mxu0
      %v6883 = vadd.f32 0.0, %v6882
      %v6884 = vpop.f32.mrb[0].mxu0
      %v6885 = vadd.f32 0.0, %v6884
      %6886 = vdwg.mxu0
      %6887 = vmatprep.subr.mxu0 %v4735
      %6888 = vmatpush1.msra.mxu0 %v4734
      %6889 = vmatprep.subr.mxu0 %v4814
      %6890 = vmatpush1.msra.mxu0 %v4813
      %6891 = vmatprep.subr.mxu0 %v4893
      %6892 = vmatpush1.msra.mxu0 %v4892
      %6893 = vmatprep.subr.mxu0 %v4972
      %6894 = vmatpush1.msra.mxu0 %v4971
      %6895 = vmatprep.subr.mxu0 %v5051
      %6896 = vmatpush1.msra.mxu0 %v5050
      %6897 = vmatprep.subr.mxu0 %v5130
      %6898 = vmatpush1.msra.mxu0 %v5129
      %6899 = vmatprep.subr.mxu0 %v5209
      %6900 = vmatpush1.msra.mxu0 %v5208
      %6901 = vmatprep.subr.mxu0 %v5288
      %6902 = vmatpush1.msra.mxu0 %v5287
      %6903 = vmatprep.subr.mxu0 0.0
      %6904 = vmatpush1.msra.mxu0 0.0
      %6905 = vmatprep.subr.mxu0 0.0
      %6906 = vmatpush1.msra.mxu0 0.0
      %6907 = vmatprep.subr.mxu0 0.0
      %6908 = vmatpush1.msra.mxu0 0.0
      %6909 = vmatprep.subr.mxu0 0.0
      %6910 = vmatpush1.msra.mxu0 0.0
      %6911 = vmatprep.subr.mxu0 0.0
      %6912 = vmatpush1.msra.mxu0 0.0
      %6913 = vmatprep.subr.mxu0 0.0
      %6914 = vmatpush1.msra.mxu0 0.0
      %6915 = vmatprep.subr.mxu0 0.0
      %6916 = vmatpush1.msra.mxu0 0.0
      %6917 = vmatprep.subr.mxu0 0.0
      %6918 = vmatpush1.msra.mxu0 0.0
      %6919 = vmatprep.subr.mxu0 0.0
      %6920 = vmatpush1.msra.mxu0 0.0
      %6921 = vmatprep.subr.mxu0 0.0
      %6922 = vmatpush1.msra.mxu0 0.0
      %6923 = vmatprep.subr.mxu0 0.0
      %6924 = vmatpush1.msra.mxu0 0.0
      %6925 = vmatprep.subr.mxu0 0.0
      %6926 = vmatpush1.msra.mxu0 0.0
      %6927 = vmatprep.subr.mxu0 0.0
      %6928 = vmatpush1.msra.mxu0 0.0
      %6929 = vmatprep.subr.mxu0 0.0
      %6930 = vmatpush1.msra.mxu0 0.0
      %6931 = vmatprep.subr.mxu0 0.0
      %6932 = vmatpush1.msra.mxu0 0.0
      %6933 = vmatprep.subr.mxu0 0.0
      %6934 = vmatpush1.msra.mxu0 0.0
      %6935 = vmatprep.subr.mxu0 0.0
      %6936 = vmatpush1.msra.mxu0 0.0
      %6937 = vmatprep.subr.mxu0 0.0
      %6938 = vmatpush1.msra.mxu0 0.0
      %6939 = vmatprep.subr.mxu0 0.0
      %6940 = vmatpush1.msra.mxu0 0.0
      %6941 = vmatprep.subr.mxu0 0.0
      %6942 = vmatpush1.msra.mxu0 0.0
      %6943 = vmatprep.subr.mxu0 0.0
      %6944 = vmatpush1.msra.mxu0 0.0
      %6945 = vmatprep.subr.mxu0 0.0
      %6946 = vmatpush1.msra.mxu0 0.0
      %6947 = vmatprep.subr.mxu0 0.0
      %6948 = vmatpush1.msra.mxu0 0.0
      %6949 = vmatprep.subr.mxu0 0.0
      %6950 = vmatpush1.msra.mxu0 0.0
      %6951 = vmatprep.mubr.f32.mxu0 0.0
      %6952 = vmatmul.mubr.f32.gmra.mrb[0].mxu0 %v5323
      %v6953 = vpop.f32.mrb[0].mxu0
      %v6954 = vadd.f32 0.0, %v6953
      %v6955 = vpop.f32.mrb[0].mxu0
      %v6956 = vadd.f32 0.0, %v6955
      %6957 = vdwg.mxu0
      %6958 = vmatprep.subr.mxu0 %v4737
      %6959 = vmatpush1.msra.mxu0 %v4736
      %6960 = vmatprep.subr.mxu0 %v4816
      %6961 = vmatpush1.msra.mxu0 %v4815
      %6962 = vmatprep.subr.mxu0 %v4895
      %6963 = vmatpush1.msra.mxu0 %v4894
      %6964 = vmatprep.subr.mxu0 %v4974
      %6965 = vmatpush1.msra.mxu0 %v4973
      %6966 = vmatprep.subr.mxu0 %v5053
      %6967 = vmatpush1.msra.mxu0 %v5052
      %6968 = vmatprep.subr.mxu0 %v5132
      %6969 = vmatpush1.msra.mxu0 %v5131
      %6970 = vmatprep.subr.mxu0 %v5211
      %6971 = vmatpush1.msra.mxu0 %v5210
      %6972 = vmatprep.subr.mxu0 %v5290
      %6973 = vmatpush1.msra.mxu0 %v5289
      %6974 = vmatprep.subr.mxu0 0.0
      %6975 = vmatpush1.msra.mxu0 0.0
      %6976 = vmatprep.subr.mxu0 0.0
      %6977 = vmatpush1.msra.mxu0 0.0
      %6978 = vmatprep.subr.mxu0 0.0
      %6979 = vmatpush1.msra.mxu0 0.0
      %6980 = vmatprep.subr.mxu0 0.0
      %6981 = vmatpush1.msra.mxu0 0.0
      %6982 = vmatprep.subr.mxu0 0.0
      %6983 = vmatpush1.msra.mxu0 0.0
      %6984 = vmatprep.subr.mxu0 0.0
      %6985 = vmatpush1.msra.mxu0 0.0
      %6986 = vmatprep.subr.mxu0 0.0
      %6987 = vmatpush1.msra.mxu0 0.0
      %6988 = vmatprep.subr.mxu0 0.0
      %6989 = vmatpush1.msra.mxu0 0.0
      %6990 = vmatprep.subr.mxu0 0.0
      %6991 = vmatpush1.msra.mxu0 0.0
      %6992 = vmatprep.subr.mxu0 0.0
      %6993 = vmatpush1.msra.mxu0 0.0
      %6994 = vmatprep.subr.mxu0 0.0
      %6995 = vmatpush1.msra.mxu0 0.0
      %6996 = vmatprep.subr.mxu0 0.0
      %6997 = vmatpush1.msra.mxu0 0.0
      %6998 = vmatprep.subr.mxu0 0.0
      %6999 = vmatpush1.msra.mxu0 0.0
      %7000 = vmatprep.subr.mxu0 0.0
      %7001 = vmatpush1.msra.mxu0 0.0
      %7002 = vmatprep.subr.mxu0 0.0
      %7003 = vmatpush1.msra.mxu0 0.0
      %7004 = vmatprep.subr.mxu0 0.0
      %7005 = vmatpush1.msra.mxu0 0.0
      %7006 = vmatprep.subr.mxu0 0.0
      %7007 = vmatpush1.msra.mxu0 0.0
      %7008 = vmatprep.subr.mxu0 0.0
      %7009 = vmatpush1.msra.mxu0 0.0
      %7010 = vmatprep.subr.mxu0 0.0
      %7011 = vmatpush1.msra.mxu0 0.0
      %7012 = vmatprep.subr.mxu0 0.0
      %7013 = vmatpush1.msra.mxu0 0.0
      %7014 = vmatprep.subr.mxu0 0.0
      %7015 = vmatpush1.msra.mxu0 0.0
      %7016 = vmatprep.subr.mxu0 0.0
      %7017 = vmatpush1.msra.mxu0 0.0
      %7018 = vmatprep.subr.mxu0 0.0
      %7019 = vmatpush1.msra.mxu0 0.0
      %7020 = vmatprep.subr.mxu0 0.0
      %7021 = vmatpush1.msra.mxu0 0.0
      %7022 = vmatprep.mubr.f32.mxu0 0.0
      %7023 = vmatmul.mubr.f32.gmra.mrb[0].mxu0 %v5323
      %v7024 = vpop.f32.mrb[0].mxu0
      %v7025 = vadd.f32 0.0, %v7024
      %v7026 = vpop.f32.mrb[0].mxu0
      %v7027 = vadd.f32 0.0, %v7026
      %7028 = vdwg.mxu0
      %7029 = vmatprep.subr.mxu0 %v4739
      %7030 = vmatpush1.msra.mxu0 %v4738
      %7031 = vmatprep.subr.mxu0 %v4818
      %7032 = vmatpush1.msra.mxu0 %v4817
      %7033 = vmatprep.subr.mxu0 %v4897
      %7034 = vmatpush1.msra.mxu0 %v4896
      %7035 = vmatprep.subr.mxu0 %v4976
      %7036 = vmatpush1.msra.mxu0 %v4975
      %7037 = vmatprep.subr.mxu0 %v5055
      %7038 = vmatpush1.msra.mxu0 %v5054
      %7039 = vmatprep.subr.mxu0 %v5134
      %7040 = vmatpush1.msra.mxu0 %v5133
      %7041 = vmatprep.subr.mxu0 %v5213
      %7042 = vmatpush1.msra.mxu0 %v5212
      %7043 = vmatprep.subr.mxu0 %v5292
      %7044 = vmatpush1.msra.mxu0 %v5291
      %7045 = vmatprep.subr.mxu0 0.0
      %7046 = vmatpush1.msra.mxu0 0.0
      %7047 = vmatprep.subr.mxu0 0.0
      %7048 = vmatpush1.msra.mxu0 0.0
      %7049 = vmatprep.subr.mxu0 0.0
      %7050 = vmatpush1.msra.mxu0 0.0
      %7051 = vmatprep.subr.mxu0 0.0
      %7052 = vmatpush1.msra.mxu0 0.0
      %7053 = vmatprep.subr.mxu0 0.0
      %7054 = vmatpush1.msra.mxu0 0.0
      %7055 = vmatprep.subr.mxu0 0.0
      %7056 = vmatpush1.msra.mxu0 0.0
      %7057 = vmatprep.subr.mxu0 0.0
      %7058 = vmatpush1.msra.mxu0 0.0
      %7059 = vmatprep.subr.mxu0 0.0
      %7060 = vmatpush1.msra.mxu0 0.0
      %7061 = vmatprep.subr.mxu0 0.0
      %7062 = vmatpush1.msra.mxu0 0.0
      %7063 = vmatprep.subr.mxu0 0.0
      %7064 = vmatpush1.msra.mxu0 0.0
      %7065 = vmatprep.subr.mxu0 0.0
      %7066 = vmatpush1.msra.mxu0 0.0
      %7067 = vmatprep.subr.mxu0 0.0
      %7068 = vmatpush1.msra.mxu0 0.0
      %7069 = vmatprep.subr.mxu0 0.0
      %7070 = vmatpush1.msra.mxu0 0.0
      %7071 = vmatprep.subr.mxu0 0.0
      %7072 = vmatpush1.msra.mxu0 0.0
      %7073 = vmatprep.subr.mxu0 0.0
      %7074 = vmatpush1.msra.mxu0 0.0
      %7075 = vmatprep.subr.mxu0 0.0
      %7076 = vmatpush1.msra.mxu0 0.0
      %7077 = vmatprep.subr.mxu0 0.0
      %7078 = vmatpush1.msra.mxu0 0.0
      %7079 = vmatprep.subr.mxu0 0.0
      %7080 = vmatpush1.msra.mxu0 0.0
      %7081 = vmatprep.subr.mxu0 0.0
      %7082 = vmatpush1.msra.mxu0 0.0
      %7083 = vmatprep.subr.mxu0 0.0
      %7084 = vmatpush1.msra.mxu0 0.0
      %7085 = vmatprep.subr.mxu0 0.0
      %7086 = vmatpush1.msra.mxu0 0.0
      %7087 = vmatprep.subr.mxu0 0.0
      %7088 = vmatpush1.msra.mxu0 0.0
      %7089 = vmatprep.subr.mxu0 0.0
      %7090 = vmatpush1.msra.mxu0 0.0
      %7091 = vmatprep.subr.mxu0 0.0
      %7092 = vmatpush1.msra.mxu0 0.0
      %7093 = vmatprep.mubr.f32.mxu0 0.0
      %7094 = vmatmul.mubr.f32.gmra.mrb[0].mxu0 %v5323
      %v7095 = vpop.f32.mrb[0].mxu0
      %v7096 = vadd.f32 0.0, %v7095
      %v7097 = vpop.f32.mrb[0].mxu0
      %v7098 = vadd.f32 0.0, %v7097
      %7099 = vdwg.mxu0
      %7100 = vmatprep.subr.mxu0 %v4741
      %7101 = vmatpush1.msra.mxu0 %v4740
      %7102 = vmatprep.subr.mxu0 %v4820
      %7103 = vmatpush1.msra.mxu0 %v4819
      %7104 = vmatprep.subr.mxu0 %v4899
      %7105 = vmatpush1.msra.mxu0 %v4898
      %7106 = vmatprep.subr.mxu0 %v4978
      %7107 = vmatpush1.msra.mxu0 %v4977
      %7108 = vmatprep.subr.mxu0 %v5057
      %7109 = vmatpush1.msra.mxu0 %v5056
      %7110 = vmatprep.subr.mxu0 %v5136
      %7111 = vmatpush1.msra.mxu0 %v5135
      %7112 = vmatprep.subr.mxu0 %v5215
      %7113 = vmatpush1.msra.mxu0 %v5214
      %7114 = vmatprep.subr.mxu0 %v5294
      %7115 = vmatpush1.msra.mxu0 %v5293
      %7116 = vmatprep.subr.mxu0 0.0
      %7117 = vmatpush1.msra.mxu0 0.0
      %7118 = vmatprep.subr.mxu0 0.0
      %7119 = vmatpush1.msra.mxu0 0.0
      %7120 = vmatprep.subr.mxu0 0.0
      %7121 = vmatpush1.msra.mxu0 0.0
      %7122 = vmatprep.subr.mxu0 0.0
      %7123 = vmatpush1.msra.mxu0 0.0
      %7124 = vmatprep.subr.mxu0 0.0
      %7125 = vmatpush1.msra.mxu0 0.0
      %7126 = vmatprep.subr.mxu0 0.0
      %7127 = vmatpush1.msra.mxu0 0.0
      %7128 = vmatprep.subr.mxu0 0.0
      %7129 = vmatpush1.msra.mxu0 0.0
      %7130 = vmatprep.subr.mxu0 0.0
      %7131 = vmatpush1.msra.mxu0 0.0
      %7132 = vmatprep.subr.mxu0 0.0
      %7133 = vmatpush1.msra.mxu0 0.0
      %7134 = vmatprep.subr.mxu0 0.0
      %7135 = vmatpush1.msra.mxu0 0.0
      %7136 = vmatprep.subr.mxu0 0.0
      %7137 = vmatpush1.msra.mxu0 0.0
      %7138 = vmatprep.subr.mxu0 0.0
      %7139 = vmatpush1.msra.mxu0 0.0
      %7140 = vmatprep.subr.mxu0 0.0
      %7141 = vmatpush1.msra.mxu0 0.0
      %7142 = vmatprep.subr.mxu0 0.0
      %7143 = vmatpush1.msra.mxu0 0.0
      %7144 = vmatprep.subr.mxu0 0.0
      %7145 = vmatpush1.msra.mxu0 0.0
      %7146 = vmatprep.subr.mxu0 0.0
      %7147 = vmatpush1.msra.mxu0 0.0
      %7148 = vmatprep.subr.mxu0 0.0
      %7149 = vmatpush1.msra.mxu0 0.0
      %7150 = vmatprep.subr.mxu0 0.0
      %7151 = vmatpush1.msra.mxu0 0.0
      %7152 = vmatprep.subr.mxu0 0.0
      %7153 = vmatpush1.msra.mxu0 0.0
      %7154 = vmatprep.subr.mxu0 0.0
      %7155 = vmatpush1.msra.mxu0 0.0
      %7156 = vmatprep.subr.mxu0 0.0
      %7157 = vmatpush1.msra.mxu0 0.0
      %7158 = vmatprep.subr.mxu0 0.0
      %7159 = vmatpush1.msra.mxu0 0.0
      %7160 = vmatprep.subr.mxu0 0.0
      %7161 = vmatpush1.msra.mxu0 0.0
      %7162 = vmatprep.subr.mxu0 0.0
      %7163 = vmatpush1.msra.mxu0 0.0
      %7164 = vmatprep.mubr.f32.mxu0 0.0
      %7165 = vmatmul.mubr.f32.gmra.mrb[0].mxu0 %v5323
      %v7166 = vpop.f32.mrb[0].mxu0
      %v7167 = vadd.f32 0.0, %v7166
      %v7168 = vpop.f32.mrb[0].mxu0
      %v7169 = vadd.f32 0.0, %v7168
      %7170 = vdwg.mxu0
      %7171 = vmatprep.subr.mxu0 %v4743
      %7172 = vmatpush1.msra.mxu0 %v4742
      %7173 = vmatprep.subr.mxu0 %v4822
      %7174 = vmatpush1.msra.mxu0 %v4821
      %7175 = vmatprep.subr.mxu0 %v4901
      %7176 = vmatpush1.msra.mxu0 %v4900
      %7177 = vmatprep.subr.mxu0 %v4980
      %7178 = vmatpush1.msra.mxu0 %v4979
      %7179 = vmatprep.subr.mxu0 %v5059
      %7180 = vmatpush1.msra.mxu0 %v5058
      %7181 = vmatprep.subr.mxu0 %v5138
      %7182 = vmatpush1.msra.mxu0 %v5137
      %7183 = vmatprep.subr.mxu0 %v5217
      %7184 = vmatpush1.msra.mxu0 %v5216
      %7185 = vmatprep.subr.mxu0 %v5296
      %7186 = vmatpush1.msra.mxu0 %v5295
      %7187 = vmatprep.subr.mxu0 0.0
      %7188 = vmatpush1.msra.mxu0 0.0
      %7189 = vmatprep.subr.mxu0 0.0
      %7190 = vmatpush1.msra.mxu0 0.0
      %7191 = vmatprep.subr.mxu0 0.0
      %7192 = vmatpush1.msra.mxu0 0.0
      %7193 = vmatprep.subr.mxu0 0.0
      %7194 = vmatpush1.msra.mxu0 0.0
      %7195 = vmatprep.subr.mxu0 0.0
      %7196 = vmatpush1.msra.mxu0 0.0
      %7197 = vmatprep.subr.mxu0 0.0
      %7198 = vmatpush1.msra.mxu0 0.0
      %7199 = vmatprep.subr.mxu0 0.0
      %7200 = vmatpush1.msra.mxu0 0.0
      %7201 = vmatprep.subr.mxu0 0.0
      %7202 = vmatpush1.msra.mxu0 0.0
      %7203 = vmatprep.subr.mxu0 0.0
      %7204 = vmatpush1.msra.mxu0 0.0
      %7205 = vmatprep.subr.mxu0 0.0
      %7206 = vmatpush1.msra.mxu0 0.0
      %7207 = vmatprep.subr.mxu0 0.0
      %7208 = vmatpush1.msra.mxu0 0.0
      %7209 = vmatprep.subr.mxu0 0.0
      %7210 = vmatpush1.msra.mxu0 0.0
      %7211 = vmatprep.subr.mxu0 0.0
      %7212 = vmatpush1.msra.mxu0 0.0
      %7213 = vmatprep.subr.mxu0 0.0
      %7214 = vmatpush1.msra.mxu0 0.0
      %7215 = vmatprep.subr.mxu0 0.0
      %7216 = vmatpush1.msra.mxu0 0.0
      %7217 = vmatprep.subr.mxu0 0.0
      %7218 = vmatpush1.msra.mxu0 0.0
      %7219 = vmatprep.subr.mxu0 0.0
      %7220 = vmatpush1.msra.mxu0 0.0
      %7221 = vmatprep.subr.mxu0 0.0
      %7222 = vmatpush1.msra.mxu0 0.0
      %7223 = vmatprep.subr.mxu0 0.0
      %7224 = vmatpush1.msra.mxu0 0.0
      %7225 = vmatprep.subr.mxu0 0.0
      %7226 = vmatpush1.msra.mxu0 0.0
      %7227 = vmatprep.subr.mxu0 0.0
      %7228 = vmatpush1.msra.mxu0 0.0
      %7229 = vmatprep.subr.mxu0 0.0
      %7230 = vmatpush1.msra.mxu0 0.0
      %7231 = vmatprep.subr.mxu0 0.0
      %7232 = vmatpush1.msra.mxu0 0.0
      %7233 = vmatprep.subr.mxu0 0.0
      %7234 = vmatpush1.msra.mxu0 0.0
      %7235 = vmatprep.mubr.f32.mxu0 0.0
      %7236 = vmatmul.mubr.f32.gmra.mrb[0].mxu0 %v5323
      %v7237 = vpop.f32.mrb[0].mxu0
      %v7238 = vadd.f32 0.0, %v7237
      %v7239 = vpop.f32.mrb[0].mxu0
      %v7240 = vadd.f32 0.0, %v7239
      %7241 = vdwg.mxu0
      %7242 = vmatprep.subr.mxu0 %v4745
      %7243 = vmatpush1.msra.mxu0 %v4744
      %7244 = vmatprep.subr.mxu0 %v4824
      %7245 = vmatpush1.msra.mxu0 %v4823
      %7246 = vmatprep.subr.mxu0 %v4903
      %7247 = vmatpush1.msra.mxu0 %v4902
      %7248 = vmatprep.subr.mxu0 %v4982
      %7249 = vmatpush1.msra.mxu0 %v4981
      %7250 = vmatprep.subr.mxu0 %v5061
      %7251 = vmatpush1.msra.mxu0 %v5060
      %7252 = vmatprep.subr.mxu0 %v5140
      %7253 = vmatpush1.msra.mxu0 %v5139
      %7254 = vmatprep.subr.mxu0 %v5219
      %7255 = vmatpush1.msra.mxu0 %v5218
      %7256 = vmatprep.subr.mxu0 %v5298
      %7257 = vmatpush1.msra.mxu0 %v5297
      %7258 = vmatprep.subr.mxu0 0.0
      %7259 = vmatpush1.msra.mxu0 0.0
      %7260 = vmatprep.subr.mxu0 0.0
      %7261 = vmatpush1.msra.mxu0 0.0
      %7262 = vmatprep.subr.mxu0 0.0
      %7263 = vmatpush1.msra.mxu0 0.0
      %7264 = vmatprep.subr.mxu0 0.0
      %7265 = vmatpush1.msra.mxu0 0.0
      %7266 = vmatprep.subr.mxu0 0.0
      %7267 = vmatpush1.msra.mxu0 0.0
      %7268 = vmatprep.subr.mxu0 0.0
      %7269 = vmatpush1.msra.mxu0 0.0
      %7270 = vmatprep.subr.mxu0 0.0
      %7271 = vmatpush1.msra.mxu0 0.0
      %7272 = vmatprep.subr.mxu0 0.0
      %7273 = vmatpush1.msra.mxu0 0.0
      %7274 = vmatprep.subr.mxu0 0.0
      %7275 = vmatpush1.msra.mxu0 0.0
      %7276 = vmatprep.subr.mxu0 0.0
      %7277 = vmatpush1.msra.mxu0 0.0
      %7278 = vmatprep.subr.mxu0 0.0
      %7279 = vmatpush1.msra.mxu0 0.0
      %7280 = vmatprep.subr.mxu0 0.0
      %7281 = vmatpush1.msra.mxu0 0.0
      %7282 = vmatprep.subr.mxu0 0.0
      %7283 = vmatpush1.msra.mxu0 0.0
      %7284 = vmatprep.subr.mxu0 0.0
      %7285 = vmatpush1.msra.mxu0 0.0
      %7286 = vmatprep.subr.mxu0 0.0
      %7287 = vmatpush1.msra.mxu0 0.0
      %7288 = vmatprep.subr.mxu0 0.0
      %7289 = vmatpush1.msra.mxu0 0.0
      %7290 = vmatprep.subr.mxu0 0.0
      %7291 = vmatpush1.msra.mxu0 0.0
      %7292 = vmatprep.subr.mxu0 0.0
      %7293 = vmatpush1.msra.mxu0 0.0
      %7294 = vmatprep.subr.mxu0 0.0
      %7295 = vmatpush1.msra.mxu0 0.0
      %7296 = vmatprep.subr.mxu0 0.0
      %7297 = vmatpush1.msra.mxu0 0.0
      %7298 = vmatprep.subr.mxu0 0.0
      %7299 = vmatpush1.msra.mxu0 0.0
      %7300 = vmatprep.subr.mxu0 0.0
      %7301 = vmatpush1.msra.mxu0 0.0
      %7302 = vmatprep.subr.mxu0 0.0
      %7303 = vmatpush1.msra.mxu0 0.0
      %7304 = vmatprep.subr.mxu0 0.0
      %7305 = vmatpush1.msra.mxu0 0.0
      %7306 = vmatprep.mubr.f32.mxu0 0.0
      %7307 = vmatmul.mubr.f32.gmra.mrb[0].mxu0 %v5323
      %v7308 = vpop.f32.mrb[0].mxu0
      %v7309 = vadd.f32 0.0, %v7308
      %v7310 = vpop.f32.mrb[0].mxu0
      %v7311 = vadd.f32 0.0, %v7310
      %7312 = vdwg.mxu0
      %7313 = vmatprep.subr.mxu0 %v4747
      %7314 = vmatpush1.msra.mxu0 %v4746
      %7315 = vmatprep.subr.mxu0 %v4826
      %7316 = vmatpush1.msra.mxu0 %v4825
      %7317 = vmatprep.subr.mxu0 %v4905
      %7318 = vmatpush1.msra.mxu0 %v4904
      %7319 = vmatprep.subr.mxu0 %v4984
      %7320 = vmatpush1.msra.mxu0 %v4983
      %7321 = vmatprep.subr.mxu0 %v5063
      %7322 = vmatpush1.msra.mxu0 %v5062
      %7323 = vmatprep.subr.mxu0 %v5142
      %7324 = vmatpush1.msra.mxu0 %v5141
      %7325 = vmatprep.subr.mxu0 %v5221
      %7326 = vmatpush1.msra.mxu0 %v5220
      %7327 = vmatprep.subr.mxu0 %v5300
      %7328 = vmatpush1.msra.mxu0 %v5299
      %7329 = vmatprep.subr.mxu0 0.0
      %7330 = vmatpush1.msra.mxu0 0.0
      %7331 = vmatprep.subr.mxu0 0.0
      %7332 = vmatpush1.msra.mxu0 0.0
      %7333 = vmatprep.subr.mxu0 0.0
      %7334 = vmatpush1.msra.mxu0 0.0
      %7335 = vmatprep.subr.mxu0 0.0
      %7336 = vmatpush1.msra.mxu0 0.0
      %7337 = vmatprep.subr.mxu0 0.0
      %7338 = vmatpush1.msra.mxu0 0.0
      %7339 = vmatprep.subr.mxu0 0.0
      %7340 = vmatpush1.msra.mxu0 0.0
      %7341 = vmatprep.subr.mxu0 0.0
      %7342 = vmatpush1.msra.mxu0 0.0
      %7343 = vmatprep.subr.mxu0 0.0
      %7344 = vmatpush1.msra.mxu0 0.0
      %7345 = vmatprep.subr.mxu0 0.0
      %7346 = vmatpush1.msra.mxu0 0.0
      %7347 = vmatprep.subr.mxu0 0.0
      %7348 = vmatpush1.msra.mxu0 0.0
      %7349 = vmatprep.subr.mxu0 0.0
      %7350 = vmatpush1.msra.mxu0 0.0
      %7351 = vmatprep.subr.mxu0 0.0
      %7352 = vmatpush1.msra.mxu0 0.0
      %7353 = vmatprep.subr.mxu0 0.0
      %7354 = vmatpush1.msra.mxu0 0.0
      %7355 = vmatprep.subr.mxu0 0.0
      %7356 = vmatpush1.msra.mxu0 0.0
      %7357 = vmatprep.subr.mxu0 0.0
      %7358 = vmatpush1.msra.mxu0 0.0
      %7359 = vmatprep.subr.mxu0 0.0
      %7360 = vmatpush1.msra.mxu0 0.0
      %7361 = vmatprep.subr.mxu0 0.0
      %7362 = vmatpush1.msra.mxu0 0.0
      %7363 = vmatprep.subr.mxu0 0.0
      %7364 = vmatpush1.msra.mxu0 0.0
      %7365 = vmatprep.subr.mxu0 0.0
      %7366 = vmatpush1.msra.mxu0 0.0
      %7367 = vmatprep.subr.mxu0 0.0
      %7368 = vmatpush1.msra.mxu0 0.0
      %7369 = vmatprep.subr.mxu0 0.0
      %7370 = vmatpush1.msra.mxu0 0.0
      %7371 = vmatprep.subr.mxu0 0.0
      %7372 = vmatpush1.msra.mxu0 0.0
      %7373 = vmatprep.subr.mxu0 0.0
      %7374 = vmatpush1.msra.mxu0 0.0
      %7375 = vmatprep.subr.mxu0 0.0
      %7376 = vmatpush1.msra.mxu0 0.0
      %7377 = vmatprep.mubr.f32.mxu0 0.0
      %7378 = vmatmul.mubr.f32.gmra.mrb[0].mxu0 %v5323
      %v7379 = vpop.f32.mrb[0].mxu0
      %v7380 = vadd.f32 0.0, %v7379
      %v7381 = vpop.f32.mrb[0].mxu0
      %v7382 = vadd.f32 0.0, %v7381
      %7383 = vdwg.mxu0
      %7384 = vmatprep.subr.mxu0 %v4749
      %7385 = vmatpush1.msra.mxu0 %v4748
      %7386 = vmatprep.subr.mxu0 %v4828
      %7387 = vmatpush1.msra.mxu0 %v4827
      %7388 = vmatprep.subr.mxu0 %v4907
      %7389 = vmatpush1.msra.mxu0 %v4906
      %7390 = vmatprep.subr.mxu0 %v4986
      %7391 = vmatpush1.msra.mxu0 %v4985
      %7392 = vmatprep.subr.mxu0 %v5065
      %7393 = vmatpush1.msra.mxu0 %v5064
      %7394 = vmatprep.subr.mxu0 %v5144
      %7395 = vmatpush1.msra.mxu0 %v5143
      %7396 = vmatprep.subr.mxu0 %v5223
      %7397 = vmatpush1.msra.mxu0 %v5222
      %7398 = vmatprep.subr.mxu0 %v5302
      %7399 = vmatpush1.msra.mxu0 %v5301
      %7400 = vmatprep.subr.mxu0 0.0
      %7401 = vmatpush1.msra.mxu0 0.0
      %7402 = vmatprep.subr.mxu0 0.0
      %7403 = vmatpush1.msra.mxu0 0.0
      %7404 = vmatprep.subr.mxu0 0.0
      %7405 = vmatpush1.msra.mxu0 0.0
      %7406 = vmatprep.subr.mxu0 0.0
      %7407 = vmatpush1.msra.mxu0 0.0
      %7408 = vmatprep.subr.mxu0 0.0
      %7409 = vmatpush1.msra.mxu0 0.0
      %7410 = vmatprep.subr.mxu0 0.0
      %7411 = vmatpush1.msra.mxu0 0.0
      %7412 = vmatprep.subr.mxu0 0.0
      %7413 = vmatpush1.msra.mxu0 0.0
      %7414 = vmatprep.subr.mxu0 0.0
      %7415 = vmatpush1.msra.mxu0 0.0
      %7416 = vmatprep.subr.mxu0 0.0
      %7417 = vmatpush1.msra.mxu0 0.0
      %7418 = vmatprep.subr.mxu0 0.0
      %7419 = vmatpush1.msra.mxu0 0.0
      %7420 = vmatprep.subr.mxu0 0.0
      %7421 = vmatpush1.msra.mxu0 0.0
      %7422 = vmatprep.subr.mxu0 0.0
      %7423 = vmatpush1.msra.mxu0 0.0
      %7424 = vmatprep.subr.mxu0 0.0
      %7425 = vmatpush1.msra.mxu0 0.0
      %7426 = vmatprep.subr.mxu0 0.0
      %7427 = vmatpush1.msra.mxu0 0.0
      %7428 = vmatprep.subr.mxu0 0.0
      %7429 = vmatpush1.msra.mxu0 0.0
      %7430 = vmatprep.subr.mxu0 0.0
      %7431 = vmatpush1.msra.mxu0 0.0
      %7432 = vmatprep.subr.mxu0 0.0
      %7433 = vmatpush1.msra.mxu0 0.0
      %7434 = vmatprep.subr.mxu0 0.0
      %7435 = vmatpush1.msra.mxu0 0.0
      %7436 = vmatprep.subr.mxu0 0.0
      %7437 = vmatpush1.msra.mxu0 0.0
      %7438 = vmatprep.subr.mxu0 0.0
      %7439 = vmatpush1.msra.mxu0 0.0
      %7440 = vmatprep.subr.mxu0 0.0
      %7441 = vmatpush1.msra.mxu0 0.0
      %7442 = vmatprep.subr.mxu0 0.0
      %7443 = vmatpush1.msra.mxu0 0.0
      %7444 = vmatprep.subr.mxu0 0.0
      %7445 = vmatpush1.msra.mxu0 0.0
      %7446 = vmatprep.subr.mxu0 0.0
      %7447 = vmatpush1.msra.mxu0 0.0
      %7448 = vmatprep.mubr.f32.mxu0 0.0
      %7449 = vmatmul.mubr.f32.gmra.mrb[0].mxu0 %v5323
      %v7450 = vpop.f32.mrb[0].mxu0
      %v7451 = vadd.f32 0.0, %v7450
      %v7452 = vpop.f32.mrb[0].mxu0
      %v7453 = vadd.f32 0.0, %v7452
      %7454 = vdwg.mxu0
      %7455 = vmatprep.subr.mxu0 %v4751
      %7456 = vmatpush1.msra.mxu0 %v4750
      %7457 = vmatprep.subr.mxu0 %v4830
      %7458 = vmatpush1.msra.mxu0 %v4829
      %7459 = vmatprep.subr.mxu0 %v4909
      %7460 = vmatpush1.msra.mxu0 %v4908
      %7461 = vmatprep.subr.mxu0 %v4988
      %7462 = vmatpush1.msra.mxu0 %v4987
      %7463 = vmatprep.subr.mxu0 %v5067
      %7464 = vmatpush1.msra.mxu0 %v5066
      %7465 = vmatprep.subr.mxu0 %v5146
      %7466 = vmatpush1.msra.mxu0 %v5145
      %7467 = vmatprep.subr.mxu0 %v5225
      %7468 = vmatpush1.msra.mxu0 %v5224
      %7469 = vmatprep.subr.mxu0 %v5304
      %7470 = vmatpush1.msra.mxu0 %v5303
      %7471 = vmatprep.subr.mxu0 0.0
      %7472 = vmatpush1.msra.mxu0 0.0
      %7473 = vmatprep.subr.mxu0 0.0
      %7474 = vmatpush1.msra.mxu0 0.0
      %7475 = vmatprep.subr.mxu0 0.0
      %7476 = vmatpush1.msra.mxu0 0.0
      %7477 = vmatprep.subr.mxu0 0.0
      %7478 = vmatpush1.msra.mxu0 0.0
      %7479 = vmatprep.subr.mxu0 0.0
      %7480 = vmatpush1.msra.mxu0 0.0
      %7481 = vmatprep.subr.mxu0 0.0
      %7482 = vmatpush1.msra.mxu0 0.0
      %7483 = vmatprep.subr.mxu0 0.0
      %7484 = vmatpush1.msra.mxu0 0.0
      %7485 = vmatprep.subr.mxu0 0.0
      %7486 = vmatpush1.msra.mxu0 0.0
      %7487 = vmatprep.subr.mxu0 0.0
      %7488 = vmatpush1.msra.mxu0 0.0
      %7489 = vmatprep.subr.mxu0 0.0
      %7490 = vmatpush1.msra.mxu0 0.0
      %7491 = vmatprep.subr.mxu0 0.0
      %7492 = vmatpush1.msra.mxu0 0.0
      %7493 = vmatprep.subr.mxu0 0.0
      %7494 = vmatpush1.msra.mxu0 0.0
      %7495 = vmatprep.subr.mxu0 0.0
      %7496 = vmatpush1.msra.mxu0 0.0
      %7497 = vmatprep.subr.mxu0 0.0
      %7498 = vmatpush1.msra.mxu0 0.0
      %7499 = vmatprep.subr.mxu0 0.0
      %7500 = vmatpush1.msra.mxu0 0.0
      %7501 = vmatprep.subr.mxu0 0.0
      %7502 = vmatpush1.msra.mxu0 0.0
      %7503 = vmatprep.subr.mxu0 0.0
      %7504 = vmatpush1.msra.mxu0 0.0
      %7505 = vmatprep.subr.mxu0 0.0
      %7506 = vmatpush1.msra.mxu0 0.0
      %7507 = vmatprep.subr.mxu0 0.0
      %7508 = vmatpush1.msra.mxu0 0.0
      %7509 = vmatprep.subr.mxu0 0.0
      %7510 = vmatpush1.msra.mxu0 0.0
      %7511 = vmatprep.subr.mxu0 0.0
      %7512 = vmatpush1.msra.mxu0 0.0
      %7513 = vmatprep.subr.mxu0 0.0
      %7514 = vmatpush1.msra.mxu0 0.0
      %7515 = vmatprep.subr.mxu0 0.0
      %7516 = vmatpush1.msra.mxu0 0.0
      %7517 = vmatprep.subr.mxu0 0.0
      %7518 = vmatpush1.msra.mxu0 0.0
      %7519 = vmatprep.mubr.f32.mxu0 0.0
      %7520 = vmatmul.mubr.f32.gmra.mrb[0].mxu0 %v5323
      %v7521 = vpop.f32.mrb[0].mxu0
      %v7522 = vadd.f32 0.0, %v7521
      %v7523 = vpop.f32.mrb[0].mxu0
      %v7524 = vadd.f32 0.0, %v7523
      %7525 = vdwg.mxu0
      %7526 = vmatprep.subr.mxu0 %v4753
      %7527 = vmatpush1.msra.mxu0 %v4752
      %7528 = vmatprep.subr.mxu0 %v4832
      %7529 = vmatpush1.msra.mxu0 %v4831
      %7530 = vmatprep.subr.mxu0 %v4911
      %7531 = vmatpush1.msra.mxu0 %v4910
      %7532 = vmatprep.subr.mxu0 %v4990
      %7533 = vmatpush1.msra.mxu0 %v4989
      %7534 = vmatprep.subr.mxu0 %v5069
      %7535 = vmatpush1.msra.mxu0 %v5068
      %7536 = vmatprep.subr.mxu0 %v5148
      %7537 = vmatpush1.msra.mxu0 %v5147
      %7538 = vmatprep.subr.mxu0 %v5227
      %7539 = vmatpush1.msra.mxu0 %v5226
      %7540 = vmatprep.subr.mxu0 %v5306
      %7541 = vmatpush1.msra.mxu0 %v5305
      %7542 = vmatprep.subr.mxu0 0.0
      %7543 = vmatpush1.msra.mxu0 0.0
      %7544 = vmatprep.subr.mxu0 0.0
      %7545 = vmatpush1.msra.mxu0 0.0
      %7546 = vmatprep.subr.mxu0 0.0
      %7547 = vmatpush1.msra.mxu0 0.0
      %7548 = vmatprep.subr.mxu0 0.0
      %7549 = vmatpush1.msra.mxu0 0.0
      %7550 = vmatprep.subr.mxu0 0.0
      %7551 = vmatpush1.msra.mxu0 0.0
      %7552 = vmatprep.subr.mxu0 0.0
      %7553 = vmatpush1.msra.mxu0 0.0
      %7554 = vmatprep.subr.mxu0 0.0
      %7555 = vmatpush1.msra.mxu0 0.0
      %7556 = vmatprep.subr.mxu0 0.0
      %7557 = vmatpush1.msra.mxu0 0.0
      %7558 = vmatprep.subr.mxu0 0.0
      %7559 = vmatpush1.msra.mxu0 0.0
      %7560 = vmatprep.subr.mxu0 0.0
      %7561 = vmatpush1.msra.mxu0 0.0
      %7562 = vmatprep.subr.mxu0 0.0
      %7563 = vmatpush1.msra.mxu0 0.0
      %7564 = vmatprep.subr.mxu0 0.0
      %7565 = vmatpush1.msra.mxu0 0.0
      %7566 = vmatprep.subr.mxu0 0.0
      %7567 = vmatpush1.msra.mxu0 0.0
      %7568 = vmatprep.subr.mxu0 0.0
      %7569 = vmatpush1.msra.mxu0 0.0
      %7570 = vmatprep.subr.mxu0 0.0
      %7571 = vmatpush1.msra.mxu0 0.0
      %7572 = vmatprep.subr.mxu0 0.0
      %7573 = vmatpush1.msra.mxu0 0.0
      %7574 = vmatprep.subr.mxu0 0.0
      %7575 = vmatpush1.msra.mxu0 0.0
      %7576 = vmatprep.subr.mxu0 0.0
      %7577 = vmatpush1.msra.mxu0 0.0
      %7578 = vmatprep.subr.mxu0 0.0
      %7579 = vmatpush1.msra.mxu0 0.0
      %7580 = vmatprep.subr.mxu0 0.0
      %7581 = vmatpush1.msra.mxu0 0.0
      %7582 = vmatprep.subr.mxu0 0.0
      %7583 = vmatpush1.msra.mxu0 0.0
      %7584 = vmatprep.subr.mxu0 0.0
      %7585 = vmatpush1.msra.mxu0 0.0
      %7586 = vmatprep.subr.mxu0 0.0
      %7587 = vmatpush1.msra.mxu0 0.0
      %7588 = vmatprep.subr.mxu0 0.0
      %7589 = vmatpush1.msra.mxu0 0.0
      %7590 = vmatprep.mubr.f32.mxu0 0.0
      %7591 = vmatmul.mubr.f32.gmra.mrb[0].mxu0 %v5323
      %v7592 = vpop.f32.mrb[0].mxu0
      %v7593 = vadd.f32 0.0, %v7592
      %v7594 = vpop.f32.mrb[0].mxu0
      %v7595 = vadd.f32 0.0, %v7594
      %7596 = vdwg.mxu0
      %7597 = vmatprep.subr.mxu0 %v4755
      %7598 = vmatpush1.msra.mxu0 %v4754
      %7599 = vmatprep.subr.mxu0 %v4834
      %7600 = vmatpush1.msra.mxu0 %v4833
      %7601 = vmatprep.subr.mxu0 %v4913
      %7602 = vmatpush1.msra.mxu0 %v4912
      %7603 = vmatprep.subr.mxu0 %v4992
      %7604 = vmatpush1.msra.mxu0 %v4991
      %7605 = vmatprep.subr.mxu0 %v5071
      %7606 = vmatpush1.msra.mxu0 %v5070
      %7607 = vmatprep.subr.mxu0 %v5150
      %7608 = vmatpush1.msra.mxu0 %v5149
      %7609 = vmatprep.subr.mxu0 %v5229
      %7610 = vmatpush1.msra.mxu0 %v5228
      %7611 = vmatprep.subr.mxu0 %v5308
      %7612 = vmatpush1.msra.mxu0 %v5307
      %7613 = vmatprep.subr.mxu0 0.0
      %7614 = vmatpush1.msra.mxu0 0.0
      %7615 = vmatprep.subr.mxu0 0.0
      %7616 = vmatpush1.msra.mxu0 0.0
      %7617 = vmatprep.subr.mxu0 0.0
      %7618 = vmatpush1.msra.mxu0 0.0
      %7619 = vmatprep.subr.mxu0 0.0
      %7620 = vmatpush1.msra.mxu0 0.0
      %7621 = vmatprep.subr.mxu0 0.0
      %7622 = vmatpush1.msra.mxu0 0.0
      %7623 = vmatprep.subr.mxu0 0.0
      %7624 = vmatpush1.msra.mxu0 0.0
      %7625 = vmatprep.subr.mxu0 0.0
      %7626 = vmatpush1.msra.mxu0 0.0
      %7627 = vmatprep.subr.mxu0 0.0
      %7628 = vmatpush1.msra.mxu0 0.0
      %7629 = vmatprep.subr.mxu0 0.0
      %7630 = vmatpush1.msra.mxu0 0.0
      %7631 = vmatprep.subr.mxu0 0.0
      %7632 = vmatpush1.msra.mxu0 0.0
      %7633 = vmatprep.subr.mxu0 0.0
      %7634 = vmatpush1.msra.mxu0 0.0
      %7635 = vmatprep.subr.mxu0 0.0
      %7636 = vmatpush1.msra.mxu0 0.0
      %7637 = vmatprep.subr.mxu0 0.0
      %7638 = vmatpush1.msra.mxu0 0.0
      %7639 = vmatprep.subr.mxu0 0.0
      %7640 = vmatpush1.msra.mxu0 0.0
      %7641 = vmatprep.subr.mxu0 0.0
      %7642 = vmatpush1.msra.mxu0 0.0
      %7643 = vmatprep.subr.mxu0 0.0
      %7644 = vmatpush1.msra.mxu0 0.0
      %7645 = vmatprep.subr.mxu0 0.0
      %7646 = vmatpush1.msra.mxu0 0.0
      %7647 = vmatprep.subr.mxu0 0.0
      %7648 = vmatpush1.msra.mxu0 0.0
      %7649 = vmatprep.subr.mxu0 0.0
      %7650 = vmatpush1.msra.mxu0 0.0
      %7651 = vmatprep.subr.mxu0 0.0
      %7652 = vmatpush1.msra.mxu0 0.0
      %7653 = vmatprep.subr.mxu0 0.0
      %7654 = vmatpush1.msra.mxu0 0.0
      %7655 = vmatprep.subr.mxu0 0.0
      %7656 = vmatpush1.msra.mxu0 0.0
      %7657 = vmatprep.subr.mxu0 0.0
      %7658 = vmatpush1.msra.mxu0 0.0
      %7659 = vmatprep.subr.mxu0 0.0
      %7660 = vmatpush1.msra.mxu0 0.0
      %7661 = vmatprep.mubr.f32.mxu0 0.0
      %7662 = vmatmul.mubr.f32.gmra.mrb[0].mxu0 %v5323
      %v7663 = vpop.f32.mrb[0].mxu0
      %v7664 = vadd.f32 0.0, %v7663
      %v7665 = vpop.f32.mrb[0].mxu0
      %v7666 = vadd.f32 0.0, %v7665
      %7667 = vdwg.mxu0
      %7668 = vmatprep.subr.mxu0 %v4757
      %7669 = vmatpush1.msra.mxu0 %v4756
      %7670 = vmatprep.subr.mxu0 %v4836
      %7671 = vmatpush1.msra.mxu0 %v4835
      %7672 = vmatprep.subr.mxu0 %v4915
      %7673 = vmatpush1.msra.mxu0 %v4914
      %7674 = vmatprep.subr.mxu0 %v4994
      %7675 = vmatpush1.msra.mxu0 %v4993
      %7676 = vmatprep.subr.mxu0 %v5073
      %7677 = vmatpush1.msra.mxu0 %v5072
      %7678 = vmatprep.subr.mxu0 %v5152
      %7679 = vmatpush1.msra.mxu0 %v5151
      %7680 = vmatprep.subr.mxu0 %v5231
      %7681 = vmatpush1.msra.mxu0 %v5230
      %7682 = vmatprep.subr.mxu0 %v5310
      %7683 = vmatpush1.msra.mxu0 %v5309
      %7684 = vmatprep.subr.mxu0 0.0
      %7685 = vmatpush1.msra.mxu0 0.0
      %7686 = vmatprep.subr.mxu0 0.0
      %7687 = vmatpush1.msra.mxu0 0.0
      %7688 = vmatprep.subr.mxu0 0.0
      %7689 = vmatpush1.msra.mxu0 0.0
      %7690 = vmatprep.subr.mxu0 0.0
      %7691 = vmatpush1.msra.mxu0 0.0
      %7692 = vmatprep.subr.mxu0 0.0
      %7693 = vmatpush1.msra.mxu0 0.0
      %7694 = vmatprep.subr.mxu0 0.0
      %7695 = vmatpush1.msra.mxu0 0.0
      %7696 = vmatprep.subr.mxu0 0.0
      %7697 = vmatpush1.msra.mxu0 0.0
      %7698 = vmatprep.subr.mxu0 0.0
      %7699 = vmatpush1.msra.mxu0 0.0
      %7700 = vmatprep.subr.mxu0 0.0
      %7701 = vmatpush1.msra.mxu0 0.0
      %7702 = vmatprep.subr.mxu0 0.0
      %7703 = vmatpush1.msra.mxu0 0.0
      %7704 = vmatprep.subr.mxu0 0.0
      %7705 = vmatpush1.msra.mxu0 0.0
      %7706 = vmatprep.subr.mxu0 0.0
      %7707 = vmatpush1.msra.mxu0 0.0
      %7708 = vmatprep.subr.mxu0 0.0
      %7709 = vmatpush1.msra.mxu0 0.0
      %7710 = vmatprep.subr.mxu0 0.0
      %7711 = vmatpush1.msra.mxu0 0.0
      %7712 = vmatprep.subr.mxu0 0.0
      %7713 = vmatpush1.msra.mxu0 0.0
      %7714 = vmatprep.subr.mxu0 0.0
      %7715 = vmatpush1.msra.mxu0 0.0
      %7716 = vmatprep.subr.mxu0 0.0
      %7717 = vmatpush1.msra.mxu0 0.0
      %7718 = vmatprep.subr.mxu0 0.0
      %7719 = vmatpush1.msra.mxu0 0.0
      %7720 = vmatprep.subr.mxu0 0.0
      %7721 = vmatpush1.msra.mxu0 0.0
      %7722 = vmatprep.subr.mxu0 0.0
      %7723 = vmatpush1.msra.mxu0 0.0
      %7724 = vmatprep.subr.mxu0 0.0
      %7725 = vmatpush1.msra.mxu0 0.0
      %7726 = vmatprep.subr.mxu0 0.0
      %7727 = vmatpush1.msra.mxu0 0.0
      %7728 = vmatprep.subr.mxu0 0.0
      %7729 = vmatpush1.msra.mxu0 0.0
      %7730 = vmatprep.subr.mxu0 0.0
      %7731 = vmatpush1.msra.mxu0 0.0
      %7732 = vmatprep.mubr.f32.mxu0 0.0
      %7733 = vmatmul.mubr.f32.gmra.mrb[0].mxu0 %v5323
      %v7734 = vpop.f32.mrb[0].mxu0
      %v7735 = vadd.f32 0.0, %v7734
      %v7736 = vpop.f32.mrb[0].mxu0
      %v7737 = vadd.f32 0.0, %v7736
      %7738 = vdwg.mxu0
      %7739 = vmatprep.subr.mxu0 %v4759
      %7740 = vmatpush1.msra.mxu0 %v4758
      %7741 = vmatprep.subr.mxu0 %v4838
      %7742 = vmatpush1.msra.mxu0 %v4837
      %7743 = vmatprep.subr.mxu0 %v4917
      %7744 = vmatpush1.msra.mxu0 %v4916
      %7745 = vmatprep.subr.mxu0 %v4996
      %7746 = vmatpush1.msra.mxu0 %v4995
      %7747 = vmatprep.subr.mxu0 %v5075
      %7748 = vmatpush1.msra.mxu0 %v5074
      %7749 = vmatprep.subr.mxu0 %v5154
      %7750 = vmatpush1.msra.mxu0 %v5153
      %7751 = vmatprep.subr.mxu0 %v5233
      %7752 = vmatpush1.msra.mxu0 %v5232
      %7753 = vmatprep.subr.mxu0 %v5312
      %7754 = vmatpush1.msra.mxu0 %v5311
      %7755 = vmatprep.subr.mxu0 0.0
      %7756 = vmatpush1.msra.mxu0 0.0
      %7757 = vmatprep.subr.mxu0 0.0
      %7758 = vmatpush1.msra.mxu0 0.0
      %7759 = vmatprep.subr.mxu0 0.0
      %7760 = vmatpush1.msra.mxu0 0.0
      %7761 = vmatprep.subr.mxu0 0.0
      %7762 = vmatpush1.msra.mxu0 0.0
      %7763 = vmatprep.subr.mxu0 0.0
      %7764 = vmatpush1.msra.mxu0 0.0
      %7765 = vmatprep.subr.mxu0 0.0
      %7766 = vmatpush1.msra.mxu0 0.0
      %7767 = vmatprep.subr.mxu0 0.0
      %7768 = vmatpush1.msra.mxu0 0.0
      %7769 = vmatprep.subr.mxu0 0.0
      %7770 = vmatpush1.msra.mxu0 0.0
      %7771 = vmatprep.subr.mxu0 0.0
      %7772 = vmatpush1.msra.mxu0 0.0
      %7773 = vmatprep.subr.mxu0 0.0
      %7774 = vmatpush1.msra.mxu0 0.0
      %7775 = vmatprep.subr.mxu0 0.0
      %7776 = vmatpush1.msra.mxu0 0.0
      %7777 = vmatprep.subr.mxu0 0.0
      %7778 = vmatpush1.msra.mxu0 0.0
      %7779 = vmatprep.subr.mxu0 0.0
      %7780 = vmatpush1.msra.mxu0 0.0
      %7781 = vmatprep.subr.mxu0 0.0
      %7782 = vmatpush1.msra.mxu0 0.0
      %7783 = vmatprep.subr.mxu0 0.0
      %7784 = vmatpush1.msra.mxu0 0.0
      %7785 = vmatprep.subr.mxu0 0.0
      %7786 = vmatpush1.msra.mxu0 0.0
      %7787 = vmatprep.subr.mxu0 0.0
      %7788 = vmatpush1.msra.mxu0 0.0
      %7789 = vmatprep.subr.mxu0 0.0
      %7790 = vmatpush1.msra.mxu0 0.0
      %7791 = vmatprep.subr.mxu0 0.0
      %7792 = vmatpush1.msra.mxu0 0.0
      %7793 = vmatprep.subr.mxu0 0.0
      %7794 = vmatpush1.msra.mxu0 0.0
      %7795 = vmatprep.subr.mxu0 0.0
      %7796 = vmatpush1.msra.mxu0 0.0
      %7797 = vmatprep.subr.mxu0 0.0
      %7798 = vmatpush1.msra.mxu0 0.0
      %7799 = vmatprep.subr.mxu0 0.0
      %7800 = vmatpush1.msra.mxu0 0.0
      %7801 = vmatprep.subr.mxu0 0.0
      %7802 = vmatpush1.msra.mxu0 0.0
      %7803 = vmatprep.mubr.f32.mxu0 0.0
      %7804 = vmatmul.mubr.f32.gmra.mrb[0].mxu0 %v5323
      %v7805 = vpop.f32.mrb[0].mxu0
      %v7806 = vadd.f32 0.0, %v7805
      %v7807 = vpop.f32.mrb[0].mxu0
      %v7808 = vadd.f32 0.0, %v7807
      %7809 = vdwg.mxu0
      %7810 = vmatprep.subr.mxu0 %v4761
      %7811 = vmatpush1.msra.mxu0 %v4760
      %7812 = vmatprep.subr.mxu0 %v4840
      %7813 = vmatpush1.msra.mxu0 %v4839
      %7814 = vmatprep.subr.mxu0 %v4919
      %7815 = vmatpush1.msra.mxu0 %v4918
      %7816 = vmatprep.subr.mxu0 %v4998
      %7817 = vmatpush1.msra.mxu0 %v4997
      %7818 = vmatprep.subr.mxu0 %v5077
      %7819 = vmatpush1.msra.mxu0 %v5076
      %7820 = vmatprep.subr.mxu0 %v5156
      %7821 = vmatpush1.msra.mxu0 %v5155
      %7822 = vmatprep.subr.mxu0 %v5235
      %7823 = vmatpush1.msra.mxu0 %v5234
      %7824 = vmatprep.subr.mxu0 %v5314
      %7825 = vmatpush1.msra.mxu0 %v5313
      %7826 = vmatprep.subr.mxu0 0.0
      %7827 = vmatpush1.msra.mxu0 0.0
      %7828 = vmatprep.subr.mxu0 0.0
      %7829 = vmatpush1.msra.mxu0 0.0
      %7830 = vmatprep.subr.mxu0 0.0
      %7831 = vmatpush1.msra.mxu0 0.0
      %7832 = vmatprep.subr.mxu0 0.0
      %7833 = vmatpush1.msra.mxu0 0.0
      %7834 = vmatprep.subr.mxu0 0.0
      %7835 = vmatpush1.msra.mxu0 0.0
      %7836 = vmatprep.subr.mxu0 0.0
      %7837 = vmatpush1.msra.mxu0 0.0
      %7838 = vmatprep.subr.mxu0 0.0
      %7839 = vmatpush1.msra.mxu0 0.0
      %7840 = vmatprep.subr.mxu0 0.0
      %7841 = vmatpush1.msra.mxu0 0.0
      %7842 = vmatprep.subr.mxu0 0.0
      %7843 = vmatpush1.msra.mxu0 0.0
      %7844 = vmatprep.subr.mxu0 0.0
      %7845 = vmatpush1.msra.mxu0 0.0
      %7846 = vmatprep.subr.mxu0 0.0
      %7847 = vmatpush1.msra.mxu0 0.0
      %7848 = vmatprep.subr.mxu0 0.0
      %7849 = vmatpush1.msra.mxu0 0.0
      %7850 = vmatprep.subr.mxu0 0.0
      %7851 = vmatpush1.msra.mxu0 0.0
      %7852 = vmatprep.subr.mxu0 0.0
      %7853 = vmatpush1.msra.mxu0 0.0
      %7854 = vmatprep.subr.mxu0 0.0
      %7855 = vmatpush1.msra.mxu0 0.0
      %7856 = vmatprep.subr.mxu0 0.0
      %7857 = vmatpush1.msra.mxu0 0.0
      %7858 = vmatprep.subr.mxu0 0.0
      %7859 = vmatpush1.msra.mxu0 0.0
      %7860 = vmatprep.subr.mxu0 0.0
      %7861 = vmatpush1.msra.mxu0 0.0
      %7862 = vmatprep.subr.mxu0 0.0
      %7863 = vmatpush1.msra.mxu0 0.0
      %7864 = vmatprep.subr.mxu0 0.0
      %7865 = vmatpush1.msra.mxu0 0.0
      %7866 = vmatprep.subr.mxu0 0.0
      %7867 = vmatpush1.msra.mxu0 0.0
      %7868 = vmatprep.subr.mxu0 0.0
      %7869 = vmatpush1.msra.mxu0 0.0
      %7870 = vmatprep.subr.mxu0 0.0
      %7871 = vmatpush1.msra.mxu0 0.0
      %7872 = vmatprep.subr.mxu0 0.0
      %7873 = vmatpush1.msra.mxu0 0.0
      %7874 = vmatprep.mubr.f32.mxu0 0.0
      %7875 = vmatmul.mubr.f32.gmra.mrb[0].mxu0 %v5323
      %v7876 = vpop.f32.mrb[0].mxu0
      %v7877 = vadd.f32 0.0, %v7876
      %v7878 = vpop.f32.mrb[0].mxu0
      %v7879 = vadd.f32 0.0, %v7878
      %7880 = vdwg.mxu0
      %7881 = vmatprep.subr.mxu0 %v4763
      %7882 = vmatpush1.msra.mxu0 %v4762
      %7883 = vmatprep.subr.mxu0 %v4842
      %7884 = vmatpush1.msra.mxu0 %v4841
      %7885 = vmatprep.subr.mxu0 %v4921
      %7886 = vmatpush1.msra.mxu0 %v4920
      %7887 = vmatprep.subr.mxu0 %v5000
      %7888 = vmatpush1.msra.mxu0 %v4999
      %7889 = vmatprep.subr.mxu0 %v5079
      %7890 = vmatpush1.msra.mxu0 %v5078
      %7891 = vmatprep.subr.mxu0 %v5158
      %7892 = vmatpush1.msra.mxu0 %v5157
      %7893 = vmatprep.subr.mxu0 %v5237
      %7894 = vmatpush1.msra.mxu0 %v5236
      %7895 = vmatprep.subr.mxu0 %v5316
      %7896 = vmatpush1.msra.mxu0 %v5315
      %7897 = vmatprep.subr.mxu0 0.0
      %7898 = vmatpush1.msra.mxu0 0.0
      %7899 = vmatprep.subr.mxu0 0.0
      %7900 = vmatpush1.msra.mxu0 0.0
      %7901 = vmatprep.subr.mxu0 0.0
      %7902 = vmatpush1.msra.mxu0 0.0
      %7903 = vmatprep.subr.mxu0 0.0
      %7904 = vmatpush1.msra.mxu0 0.0
      %7905 = vmatprep.subr.mxu0 0.0
      %7906 = vmatpush1.msra.mxu0 0.0
      %7907 = vmatprep.subr.mxu0 0.0
      %7908 = vmatpush1.msra.mxu0 0.0
      %7909 = vmatprep.subr.mxu0 0.0
      %7910 = vmatpush1.msra.mxu0 0.0
      %7911 = vmatprep.subr.mxu0 0.0
      %7912 = vmatpush1.msra.mxu0 0.0
      %7913 = vmatprep.subr.mxu0 0.0
      %7914 = vmatpush1.msra.mxu0 0.0
      %7915 = vmatprep.subr.mxu0 0.0
      %7916 = vmatpush1.msra.mxu0 0.0
      %7917 = vmatprep.subr.mxu0 0.0
      %7918 = vmatpush1.msra.mxu0 0.0
      %7919 = vmatprep.subr.mxu0 0.0
      %7920 = vmatpush1.msra.mxu0 0.0
      %7921 = vmatprep.subr.mxu0 0.0
      %7922 = vmatpush1.msra.mxu0 0.0
      %7923 = vmatprep.subr.mxu0 0.0
      %7924 = vmatpush1.msra.mxu0 0.0
      %7925 = vmatprep.subr.mxu0 0.0
      %7926 = vmatpush1.msra.mxu0 0.0
      %7927 = vmatprep.subr.mxu0 0.0
      %7928 = vmatpush1.msra.mxu0 0.0
      %7929 = vmatprep.subr.mxu0 0.0
      %7930 = vmatpush1.msra.mxu0 0.0
      %7931 = vmatprep.subr.mxu0 0.0
      %7932 = vmatpush1.msra.mxu0 0.0
      %7933 = vmatprep.subr.mxu0 0.0
      %7934 = vmatpush1.msra.mxu0 0.0
      %7935 = vmatprep.subr.mxu0 0.0
      %7936 = vmatpush1.msra.mxu0 0.0
      %7937 = vmatprep.subr.mxu0 0.0
      %7938 = vmatpush1.msra.mxu0 0.0
      %7939 = vmatprep.subr.mxu0 0.0
      %7940 = vmatpush1.msra.mxu0 0.0
      %7941 = vmatprep.subr.mxu0 0.0
      %7942 = vmatpush1.msra.mxu0 0.0
      %7943 = vmatprep.subr.mxu0 0.0
      %7944 = vmatpush1.msra.mxu0 0.0
      %7945 = vmatprep.mubr.f32.mxu0 0.0
      %7946 = vmatmul.mubr.f32.gmra.mrb[0].mxu0 %v5323
      %v7947 = vpop.f32.mrb[0].mxu0
      %v7948 = vadd.f32 0.0, %v7947
      %v7949 = vpop.f32.mrb[0].mxu0
      %v7950 = vadd.f32 0.0, %v7949
      %7951 = vdwg.mxu0
      %7952 = vmatprep.subr.mxu0 %v4765
      %7953 = vmatpush1.msra.mxu0 %v4764
      %7954 = vmatprep.subr.mxu0 %v4844
      %7955 = vmatpush1.msra.mxu0 %v4843
      %7956 = vmatprep.subr.mxu0 %v4923
      %7957 = vmatpush1.msra.mxu0 %v4922
      %7958 = vmatprep.subr.mxu0 %v5002
      %7959 = vmatpush1.msra.mxu0 %v5001
      %7960 = vmatprep.subr.mxu0 %v5081
      %7961 = vmatpush1.msra.mxu0 %v5080
      %7962 = vmatprep.subr.mxu0 %v5160
      %7963 = vmatpush1.msra.mxu0 %v5159
      %7964 = vmatprep.subr.mxu0 %v5239
      %7965 = vmatpush1.msra.mxu0 %v5238
      %7966 = vmatprep.subr.mxu0 %v5318
      %7967 = vmatpush1.msra.mxu0 %v5317
      %7968 = vmatprep.subr.mxu0 0.0
      %7969 = vmatpush1.msra.mxu0 0.0
      %7970 = vmatprep.subr.mxu0 0.0
      %7971 = vmatpush1.msra.mxu0 0.0
      %7972 = vmatprep.subr.mxu0 0.0
      %7973 = vmatpush1.msra.mxu0 0.0
      %7974 = vmatprep.subr.mxu0 0.0
      %7975 = vmatpush1.msra.mxu0 0.0
      %7976 = vmatprep.subr.mxu0 0.0
      %7977 = vmatpush1.msra.mxu0 0.0
      %7978 = vmatprep.subr.mxu0 0.0
      %7979 = vmatpush1.msra.mxu0 0.0
      %7980 = vmatprep.subr.mxu0 0.0
      %7981 = vmatpush1.msra.mxu0 0.0
      %7982 = vmatprep.subr.mxu0 0.0
      %7983 = vmatpush1.msra.mxu0 0.0
      %7984 = vmatprep.subr.mxu0 0.0
      %7985 = vmatpush1.msra.mxu0 0.0
      %7986 = vmatprep.subr.mxu0 0.0
      %7987 = vmatpush1.msra.mxu0 0.0
      %7988 = vmatprep.subr.mxu0 0.0
      %7989 = vmatpush1.msra.mxu0 0.0
      %7990 = vmatprep.subr.mxu0 0.0
      %7991 = vmatpush1.msra.mxu0 0.0
      %7992 = vmatprep.subr.mxu0 0.0
      %7993 = vmatpush1.msra.mxu0 0.0
      %7994 = vmatprep.subr.mxu0 0.0
      %7995 = vmatpush1.msra.mxu0 0.0
      %7996 = vmatprep.subr.mxu0 0.0
      %7997 = vmatpush1.msra.mxu0 0.0
      %7998 = vmatprep.subr.mxu0 0.0
      %7999 = vmatpush1.msra.mxu0 0.0
      %8000 = vmatprep.subr.mxu0 0.0
      %8001 = vmatpush1.msra.mxu0 0.0
      %8002 = vmatprep.subr.mxu0 0.0
      %8003 = vmatpush1.msra.mxu0 0.0
      %8004 = vmatprep.subr.mxu0 0.0
      %8005 = vmatpush1.msra.mxu0 0.0
      %8006 = vmatprep.subr.mxu0 0.0
      %8007 = vmatpush1.msra.mxu0 0.0
      %8008 = vmatprep.subr.mxu0 0.0
      %8009 = vmatpush1.msra.mxu0 0.0
      %8010 = vmatprep.subr.mxu0 0.0
      %8011 = vmatpush1.msra.mxu0 0.0
      %8012 = vmatprep.subr.mxu0 0.0
      %8013 = vmatpush1.msra.mxu0 0.0
      %8014 = vmatprep.subr.mxu0 0.0
      %8015 = vmatpush1.msra.mxu0 0.0
      %8016 = vmatprep.mubr.f32.mxu0 0.0
      %8017 = vmatmul.mubr.f32.gmra.mrb[0].mxu0 %v5323
      %v8018 = vpop.f32.mrb[0].mxu0
      %v8019 = vadd.f32 0.0, %v8018
      %v8020 = vpop.f32.mrb[0].mxu0
      %v8021 = vadd.f32 0.0, %v8020
      %8022 = vdwg.mxu0
      %8023 = vmatprep.subr.mxu0 %v4767
      %8024 = vmatpush1.msra.mxu0 %v4766
      %8025 = vmatprep.subr.mxu0 %v4846
      %8026 = vmatpush1.msra.mxu0 %v4845
      %8027 = vmatprep.subr.mxu0 %v4925
      %8028 = vmatpush1.msra.mxu0 %v4924
      %8029 = vmatprep.subr.mxu0 %v5004
      %8030 = vmatpush1.msra.mxu0 %v5003
      %8031 = vmatprep.subr.mxu0 %v5083
      %8032 = vmatpush1.msra.mxu0 %v5082
      %8033 = vmatprep.subr.mxu0 %v5162
      %8034 = vmatpush1.msra.mxu0 %v5161
      %8035 = vmatprep.subr.mxu0 %v5241
      %8036 = vmatpush1.msra.mxu0 %v5240
      %8037 = vmatprep.subr.mxu0 %v5320
      %8038 = vmatpush1.msra.mxu0 %v5319
      %8039 = vmatprep.subr.mxu0 0.0
      %8040 = vmatpush1.msra.mxu0 0.0
      %8041 = vmatprep.subr.mxu0 0.0
      %8042 = vmatpush1.msra.mxu0 0.0
      %8043 = vmatprep.subr.mxu0 0.0
      %8044 = vmatpush1.msra.mxu0 0.0
      %8045 = vmatprep.subr.mxu0 0.0
      %8046 = vmatpush1.msra.mxu0 0.0
      %8047 = vmatprep.subr.mxu0 0.0
      %8048 = vmatpush1.msra.mxu0 0.0
      %8049 = vmatprep.subr.mxu0 0.0
      %8050 = vmatpush1.msra.mxu0 0.0
      %8051 = vmatprep.subr.mxu0 0.0
      %8052 = vmatpush1.msra.mxu0 0.0
      %8053 = vmatprep.subr.mxu0 0.0
      %8054 = vmatpush1.msra.mxu0 0.0
      %8055 = vmatprep.subr.mxu0 0.0
      %8056 = vmatpush1.msra.mxu0 0.0
      %8057 = vmatprep.subr.mxu0 0.0
      %8058 = vmatpush1.msra.mxu0 0.0
      %8059 = vmatprep.subr.mxu0 0.0
      %8060 = vmatpush1.msra.mxu0 0.0
      %8061 = vmatprep.subr.mxu0 0.0
      %8062 = vmatpush1.msra.mxu0 0.0
      %8063 = vmatprep.subr.mxu0 0.0
      %8064 = vmatpush1.msra.mxu0 0.0
      %8065 = vmatprep.subr.mxu0 0.0
      %8066 = vmatpush1.msra.mxu0 0.0
      %8067 = vmatprep.subr.mxu0 0.0
      %8068 = vmatpush1.msra.mxu0 0.0
      %8069 = vmatprep.subr.mxu0 0.0
      %8070 = vmatpush1.msra.mxu0 0.0
      %8071 = vmatprep.subr.mxu0 0.0
      %8072 = vmatpush1.msra.mxu0 0.0
      %8073 = vmatprep.subr.mxu0 0.0
      %8074 = vmatpush1.msra.mxu0 0.0
      %8075 = vmatprep.subr.mxu0 0.0
      %8076 = vmatpush1.msra.mxu0 0.0
      %8077 = vmatprep.subr.mxu0 0.0
      %8078 = vmatpush1.msra.mxu0 0.0
      %8079 = vmatprep.subr.mxu0 0.0
      %8080 = vmatpush1.msra.mxu0 0.0
      %8081 = vmatprep.subr.mxu0 0.0
      %8082 = vmatpush1.msra.mxu0 0.0
      %8083 = vmatprep.subr.mxu0 0.0
      %8084 = vmatpush1.msra.mxu0 0.0
      %8085 = vmatprep.subr.mxu0 0.0
      %8086 = vmatpush1.msra.mxu0 0.0
      %8087 = vmatprep.mubr.f32.mxu0 0.0
      %8088 = vmatmul.mubr.f32.gmra.mrb[0].mxu0 %v5323
      %v8089 = vpop.f32.mrb[0].mxu0
      %v8090 = vadd.f32 0.0, %v8089
      %v8091 = vpop.f32.mrb[0].mxu0
      %v8092 = vadd.f32 0.0, %v8091
      %8093 = vdwg.mxu0
      %8094 = vmatprep.subr.mxu0 0.0
      %8095 = vmatpush1.msra.mxu0 %v4768
      %8096 = vmatprep.subr.mxu0 0.0
      %8097 = vmatpush1.msra.mxu0 %v4847
      %8098 = vmatprep.subr.mxu0 0.0
      %8099 = vmatpush1.msra.mxu0 %v4926
      %8100 = vmatprep.subr.mxu0 0.0
      %8101 = vmatpush1.msra.mxu0 %v5005
      %8102 = vmatprep.subr.mxu0 0.0
      %8103 = vmatpush1.msra.mxu0 %v5084
      %8104 = vmatprep.subr.mxu0 0.0
      %8105 = vmatpush1.msra.mxu0 %v5163
      %8106 = vmatprep.subr.mxu0 0.0
      %8107 = vmatpush1.msra.mxu0 %v5242
      %8108 = vmatprep.subr.mxu0 0.0
      %8109 = vmatpush1.msra.mxu0 %v5321
      %8110 = vmatprep.subr.mxu0 0.0
      %8111 = vmatpush1.msra.mxu0 0.0
      %8112 = vmatprep.subr.mxu0 0.0
      %8113 = vmatpush1.msra.mxu0 0.0
      %8114 = vmatprep.subr.mxu0 0.0
      %8115 = vmatpush1.msra.mxu0 0.0
      %8116 = vmatprep.subr.mxu0 0.0
      %8117 = vmatpush1.msra.mxu0 0.0
      %8118 = vmatprep.subr.mxu0 0.0
      %8119 = vmatpush1.msra.mxu0 0.0
      %8120 = vmatprep.subr.mxu0 0.0
      %8121 = vmatpush1.msra.mxu0 0.0
      %8122 = vmatprep.subr.mxu0 0.0
      %8123 = vmatpush1.msra.mxu0 0.0
      %8124 = vmatprep.subr.mxu0 0.0
      %8125 = vmatpush1.msra.mxu0 0.0
      %8126 = vmatprep.subr.mxu0 0.0
      %8127 = vmatpush1.msra.mxu0 0.0
      %8128 = vmatprep.subr.mxu0 0.0
      %8129 = vmatpush1.msra.mxu0 0.0
      %8130 = vmatprep.subr.mxu0 0.0
      %8131 = vmatpush1.msra.mxu0 0.0
      %8132 = vmatprep.subr.mxu0 0.0
      %8133 = vmatpush1.msra.mxu0 0.0
      %8134 = vmatprep.subr.mxu0 0.0
      %8135 = vmatpush1.msra.mxu0 0.0
      %8136 = vmatprep.subr.mxu0 0.0
      %8137 = vmatpush1.msra.mxu0 0.0
      %8138 = vmatprep.subr.mxu0 0.0
      %8139 = vmatpush1.msra.mxu0 0.0
      %8140 = vmatprep.subr.mxu0 0.0
      %8141 = vmatpush1.msra.mxu0 0.0
      %8142 = vmatprep.subr.mxu0 0.0
      %8143 = vmatpush1.msra.mxu0 0.0
      %8144 = vmatprep.subr.mxu0 0.0
      %8145 = vmatpush1.msra.mxu0 0.0
      %8146 = vmatprep.subr.mxu0 0.0
      %8147 = vmatpush1.msra.mxu0 0.0
      %8148 = vmatprep.subr.mxu0 0.0
      %8149 = vmatpush1.msra.mxu0 0.0
      %8150 = vmatprep.subr.mxu0 0.0
      %8151 = vmatpush1.msra.mxu0 0.0
      %8152 = vmatprep.subr.mxu0 0.0
      %8153 = vmatpush1.msra.mxu0 0.0
      %8154 = vmatprep.subr.mxu0 0.0
      %8155 = vmatpush1.msra.mxu0 0.0
      %8156 = vmatprep.subr.mxu0 0.0
      %8157 = vmatpush1.msra.mxu0 0.0
      %8158 = vmatprep.mubr.f32.mxu0 0.0
      %8159 = vmatmul.mubr.f32.gmra.mrb[0].mxu0 %v5323
      %v8160 = vpop.f32.mrb[0].mxu0
      %v8161 = vadd.f32 0.0, %v8160
      %v8162 = vpop.f32.mrb[0].mxu0
      %8163 = vdwg.mxu0
      %v8242 = vcombine.low %v5392, %v5394
      %v8243 = vcombine.low %v5463, %v5465
      %v8244 = vcombine.low %v5534, %v5536
      %v8245 = vcombine.low %v5605, %v5607
      %v8246 = vcombine.low %v5676, %v5678
      %v8247 = vcombine.low %v5747, %v5749
      %v8248 = vcombine.low %v5818, %v5820
      %v8249 = vcombine.low %v5889, %v5891
      %v8250 = vcombine.low %v5960, %v5962
      %v8251 = vcombine.low %v6031, %v6033
      %v8252 = vcombine.low %v6102, %v6104
      %v8253 = vcombine.low %v6173, %v6175
      %v8254 = vcombine.low %v6244, %v6246
      %v8255 = vcombine.low %v6315, %v6317
      %v8256 = vcombine.low %v6386, %v6388
      %v8257 = vcombine.low %v6457, %v6459
      %v8258 = vcombine.low %v6528, %v6530
      %v8259 = vcombine.low %v6599, %v6601
      %v8260 = vcombine.low %v6670, %v6672
      %v8261 = vcombine.low %v6741, %v6743
      %v8262 = vcombine.low %v6812, %v6814
      %v8263 = vcombine.low %v6883, %v6885
      %v8264 = vcombine.low %v6954, %v6956
      %v8265 = vcombine.low %v7025, %v7027
      %v8266 = vcombine.low %v7096, %v7098
      %v8267 = vcombine.low %v7167, %v7169
      %v8268 = vcombine.low %v7238, %v7240
      %v8269 = vcombine.low %v7309, %v7311
      %v8270 = vcombine.low %v7380, %v7382
      %v8271 = vcombine.low %v7451, %v7453
      %v8272 = vcombine.low %v7522, %v7524
      %v8273 = vcombine.low %v7593, %v7595
      %v8274 = vcombine.low %v7664, %v7666
      %v8275 = vcombine.low %v7735, %v7737
      %v8276 = vcombine.low %v7806, %v7808
      %v8277 = vcombine.low %v7877, %v7879
      %v8278 = vcombine.low %v7948, %v7950
      %v8279 = vcombine.low %v8019, %v8021
      %v8280 = vcombine.low %v8090, %v8092
      %8320 = vst [vmem:[%s440] sm:$0x77] %v8242
      %8321 = vst [vmem:[%s440 + $0x8] sm:$0x77] %v8243
      %8322 = vst [vmem:[%s440 + $0x10] sm:$0x77] %v8244
      %8323 = vst [vmem:[%s440 + $0x18] sm:$0x77] %v8245
      %8324 = vst [vmem:[%s440 + $0x20] sm:$0x77] %v8246
      %8325 = vst [vmem:[%s440 + $0x28] sm:$0x77] %v8247
      %8326 = vst [vmem:[%s440 + $0x30] sm:$0x77] %v8248
      %8327 = vst [vmem:[%s440 + $0x38] sm:$0x77] %v8249
      %8328 = vst [vmem:[%s440 + $0x40] sm:$0x77] %v8250
      %8329 = vst [vmem:[%s440 + $0x48] sm:$0x77] %v8251
      %8330 = vst [vmem:[%s440 + $0x50] sm:$0x77] %v8252
      %8331 = vst [vmem:[%s440 + $0x58] sm:$0x77] %v8253
      %8332 = vst [vmem:[%s440 + $0x60] sm:$0x77] %v8254
      %8333 = vst [vmem:[%s440 + $0x68] sm:$0x77] %v8255
      %8334 = vst [vmem:[%s440 + $0x70] sm:$0x77] %v8256
      %8335 = vst [vmem:[%s440 + $0x78] sm:$0x77] %v8257
      %8336 = vst [vmem:[%s440 + $0x80] sm:$0x77] %v8258
      %8337 = vst [vmem:[%s440 + $0x88] sm:$0x77] %v8259
      %8338 = vst [vmem:[%s440 + $0x90] sm:$0x77] %v8260
      %8339 = vst [vmem:[%s440 + $0x98] sm:$0x77] %v8261
      %8340 = vst [vmem:[%s440 + $0xa0] sm:$0x77] %v8262
      %8341 = vst [vmem:[%s440 + $0xa8] sm:$0x77] %v8263
      %8342 = vst [vmem:[%s440 + $0xb0] sm:$0x77] %v8264
      %8343 = vst [vmem:[%s440 + $0xb8] sm:$0x77] %v8265
      %8344 = vst [vmem:[%s440 + $0xc0] sm:$0x77] %v8266
      %8345 = vst [vmem:[%s440 + $0xc8] sm:$0x77] %v8267
      %8346 = vst [vmem:[%s440 + $0xd0] sm:$0x77] %v8268
      %8347 = vst [vmem:[%s440 + $0xd8] sm:$0x77] %v8269
      %8348 = vst [vmem:[%s440 + $0xe0] sm:$0x77] %v8270
      %8349 = vst [vmem:[%s440 + $0xe8] sm:$0x77] %v8271
      %8350 = vst [vmem:[%s440 + $0xf0] sm:$0x77] %v8272
      %8351 = vst [vmem:[%s440 + $0xf8] sm:$0x77] %v8273
      %8352 = vst [vmem:[%s440 + $0x100] sm:$0x77] %v8274
      %8353 = vst [vmem:[%s440 + $0x108] sm:$0x77] %v8275
      %8354 = vst [vmem:[%s440 + $0x110] sm:$0x77] %v8276
      %8355 = vst [vmem:[%s440 + $0x118] sm:$0x77] %v8277
      %8356 = vst [vmem:[%s440 + $0x120] sm:$0x77] %v8278
      %8357 = vst [vmem:[%s440 + $0x128] sm:$0x77] %v8279
      %8358 = vst [vmem:[%s440 + $0x130] sm:$0x77] %v8280
      %vm8359 = vcmask 124928
      %8360 = vst.msk [vmem:[%s440 + $0x138] sm:$0x7] %vm8359, %v8161
      %p8361 = scmp.lt.s32.totalorder %s24, 1
      %s8362 = scalar_select %p8361, %s24, 1
      %s8363 = smul.addr %s8362, 79
      %s8364 = smul.addr %s8363, 4
      %s8365 = scalar_lea.vmem %s13, %s8364
      // Predicated region
      $region73: #{vision_module_forward.1} parent=71 // pred_check
        %p8366 = pneg %p320
      $region74: #{vision_module_forward.1} parent=71 // pred_check_branch
        %8368 = sbr.rel (%p8366) target = $region76
      $region75: #{vision_module_forward.1} parent=71 // pred_region
        _
      $region76: #{vision_module_forward.1} parent=71 // pred_fallthru
        _
    $region72: #{vision_module_forward.1} parent=5 // pred_fallthru
      _
    %p8369 = scmp.le.s32.totalorder 2, %s19
    // Predicated region
    $region77: #{vision_module_forward.1} parent=5 // pred_check
      %p8370 = pneg %p8369
    $region78: #{vision_module_forward.1} parent=5 // pred_check_branch
      %8372 = sbr.rel (%p8370) target = $region80
    $region79: #{vision_module_forward.1} parent=5 // pred_region
      %s8373 = ssub.s32 %s19, 2
      // Predicated region
      $region81: #{vision_module_forward.1} parent=79 // pred_check
        %p8374 = pneg %p326
      $region82: #{vision_module_forward.1} parent=79 // pred_check_branch
        %8376 = sbr.rel (%p8374) target = $region84
      $region83: #{vision_module_forward.1} parent=79 // pred_region
        %p8377 = scmp.lt.s32.totalorder %s25, 1
        %s8378 = scalar_select %p8377, %s25, 1
        %s8379 = smul.addr %s8378, 79
        %s8380 = smul.addr %s8379, 4
        %s8381 = scalar_lea.vmem %s13, %s8380
      $region84: #{vision_module_forward.1} parent=79 // pred_fallthru
        _
    $region80: #{vision_module_forward.1} parent=5 // pred_fallthru
      _
  $region6: #{vision_module_forward.1} parent=0 // loop_footer
    %s23 = sadd.s32 1, %s19
  $region7: #{vision_module_forward.1} parent=0 // loop_footer_branch
    %18 = sbr.rel target = $region3
  $region8: #{vision_module_forward.1} parent=0 // loop_exit
    _

</llo_original>
